<compile_context>
chip_gen: v7x
topology: tpu7x:2x2x1
jax: 0.10.0
libtpu: 0.0.40
codegen_flags: <defaults>
</compile_context>

<pallas_src>
import jax
import jax.numpy as jnp
import numpy as np
from jax.experimental import pallas as pl
from jax.experimental.pallas import tpu as pltpu

_BN_EPS = 1e-5
_LANES = 128


def _round_up(x, m):
    return (x + m - 1) // m * m


def _pick_row_tile(h, w, target_rows=512):
    """Largest divisor of `h` whose row tile (th * w rows) is <= ~target_rows."""
    th = max(1, min(h, target_rows // max(w, 1)))
    while h % th:
        th -= 1
    return th


def _conv_stats_kernel(v0_ref, v1_ref, v2_ref, w_ref, y_ref, ps_ref):
    """3x3 conv tile (9 shifted MXU matmuls) + per-tile channel sum / sum-of-squares.

    v{0,1,2}_ref: (1, TH, W+2, Cin) bf16  row-shifted views of the padded input
    w_ref:        (3, 3, Cin, Cp)   bf16  weights, zero-padded to Cp=128 lanes
    y_ref:        (TH*W, Cp)        f32   pre-BN conv output tile
    ps_ref:       (1, 2, Cp)        f32   [sum, sum_sq] over this tile's rows
    """
    th = v0_ref.shape[1]
    wd = v0_ref.shape[2] - 2            # output width
    cin = v0_ref.shape[3]
    cp = w_ref.shape[3]

    acc = jnp.zeros((th * wd, cp), jnp.float32)
    for ky, v_ref in enumerate((v0_ref, v1_ref, v2_ref)):
        xv = v_ref[0]                                    # (TH, W+2, Cin) bf16
        for kx in range(3):
            patch = xv[:, kx:kx + wd, :].reshape(th * wd, cin)
            acc = acc + jnp.dot(patch, w_ref[ky, kx],
                                preferred_element_type=jnp.float32)

    y_ref[...] = acc
    s = jnp.sum(acc, axis=0, keepdims=True)              # (1, Cp)
    sq = jnp.sum(acc * acc, axis=0, keepdims=True)       # (1, Cp)
    ps_ref[...] = jnp.concatenate([s, sq], axis=0).reshape(1, 2, cp)


def _bn_relu_kernel(y_ref, scale_ref, shift_ref, o_ref):
    """Elementwise y * scale + shift, then ReLU.  All f32 (VPU path)."""
    o_ref[...] = jnp.maximum(y_ref[...] * scale_ref[...] + shift_ref[...], 0.0)


def conv3x3_bn_relu(x_nhwc, w, b, gamma, beta, eps=_BN_EPS):
    """Conv2d(3x3, pad=1, bias) + BatchNorm2d (training batch stats) + ReLU.

    x_nhwc: (N, H, W, Cin) f32;  w: (3, 3, Cin, Cout) f32 (HWIO);
    b, gamma, beta: (Cout,) f32.  Returns (N, H, W, Cout) f32.
    """
    del b  # Exact: BN's batch-mean subtraction cancels the conv bias.
    n, h, w_dim, cin = x_nhwc.shape
    cout = w.shape[-1]
    cp = _round_up(cout, _LANES)        # lane-dense channel axis
    th = _pick_row_tile(h, w_dim)       # row tile (divides H)
    ht = h // th
    m = n * h * w_dim

    # Spatial zero-pad + bf16 cast (MXU operands). Three row-shifted views
    # provide the vertical taps, so no 9x im2col matrix is materialized.
    xp = jnp.pad(x_nhwc, ((0, 0), (1, 1), (1, 1), (0, 0))).astype(jnp.bfloat16)
    v0 = xp[:, 0:h]                     # (N, H, W+2, Cin)
    v1 = xp[:, 1:h + 1]
    v2 = xp[:, 2:h + 2]

    wp = (jnp.zeros((3, 3, cin, cp), jnp.float32)
          .at[..., :cout].set(w).astype(jnp.bfloat16))

    view_spec = pl.BlockSpec((1, th, w_dim + 2, cin), lambda i, t: (i, t, 0, 0))
    conv_cost = pl.CostEstimate(
        flops=2 * m * 9 * cin * cp,
        transcendentals=0,
        bytes_accessed=(3 * n * h * (w_dim + 2) * cin * 2    # bf16 input views
                        + 9 * cin * cp * 2                    # weights
                        + m * cp * 4                          # conv output
                        + n * ht * 2 * cp * 4))               # partial stats

    # Pass 1: tiled conv (pipelined over a (batch, row-tile) grid) + partial stats.
    y2d, psums = pl.pallas_call(
        _conv_stats_kernel,
        out_shape=(jax.ShapeDtypeStruct((m, cp), jnp.float32),
                   jax.ShapeDtypeStruct((n * ht, 2, cp), jnp.float32)),
        grid=(n, ht),
        in_specs=[view_spec, view_spec, view_spec,
                  pl.BlockSpec((3, 3, cin, cp), lambda i, t: (0, 0, 0, 0))],
        out_specs=(pl.BlockSpec((th * w_dim, cp), lambda i, t: (i * ht + t, 0)),
                   pl.BlockSpec((1, 2, cp), lambda i, t: (i * ht + t, 0, 0))),
        compiler_params=pltpu.CompilerParams(
            dimension_semantics=("parallel", "parallel"),
            vmem_limit_bytes=32 * 1024 * 1024),
        cost_estimate=conv_cost,
    )(v0, v1, v2, wp)

    # Tiny global reduction (2*Cp scalars) -> BN scale / shift in f32.
    sums = jnp.sum(psums, axis=0)                         # (2, Cp)
    mean = sums[0] / m
    var = jnp.maximum(sums[1] / m - mean * mean, 0.0)     # biased variance
    gp = jnp.zeros((cp,), jnp.float32).at[:cout].set(gamma)
    bp = jnp.zeros((cp,), jnp.float32).at[:cout].set(beta)
    scale = gp * jax.lax.rsqrt(var + eps)
    shift = bp - mean * scale
    scale2 = scale.reshape(1, cp)
    shift2 = shift.reshape(1, cp)

    # Pass 2: tiled elementwise normalize + ReLU.
    tm = th * w_dim
    out2d = pl.pallas_call(
        _bn_relu_kernel,
        out_shape=jax.ShapeDtypeStruct((m, cp), jnp.float32),
        grid=(m // tm,),
        in_specs=[pl.BlockSpec((tm, cp), lambda i: (i, 0)),
                  pl.BlockSpec((1, cp), lambda i: (0, 0)),
                  pl.BlockSpec((1, cp), lambda i: (0, 0))],
        out_specs=pl.BlockSpec((tm, cp), lambda i: (i, 0)),
        compiler_params=pltpu.CompilerParams(
            dimension_semantics=("parallel",),
            vmem_limit_bytes=32 * 1024 * 1024),
        cost_estimate=pl.CostEstimate(flops=2 * m * cp, transcendentals=0,
                                      bytes_accessed=2 * m * cp * 4),
    )(y2d, scale2, shift2)

    return out2d[:, :cout].reshape(n, h, w_dim, cout)


def conv_block(x_nchw, params):
    """ConvBlock.forward: NCHW in -> NCHW out (PyTorch convention)."""
    w1, b1, g1, be1, w2, b2, g2, be2 = params
    x = jnp.transpose(x_nchw, (0, 2, 3, 1))      # NCHW -> NHWC
    y = conv3x3_bn_relu(x, w1, b1, g1, be1)
    # TODO(synk): fuse layer-2's conv pass with layer-1's normalize pass so the
    # intermediate activation makes a single HBM round trip.
    y = conv3x3_bn_relu(y, w2, b2, g2, be2)
    return jnp.transpose(y, (0, 3, 1, 2))        # NHWC -> NCHW


# --- pure-JAX reference (correctness check; mirrors the kernel's bf16 MXU casts) ---
def _ref_layer(x_nhwc, w, b, gamma, beta, eps=_BN_EPS):
    y = jax.lax.conv_general_dilated(
        x_nhwc.astype(jnp.bfloat16), w.astype(jnp.bfloat16),
        window_strides=(1, 1), padding="SAME",
        dimension_numbers=("NHWC", "HWIO", "NHWC"),
        preferred_element_type=jnp.float32)
    y = y + b                      # bias kept here; BN cancels it exactly
    mean = jnp.mean(y, axis=(0, 1, 2), keepdims=True)
    var = jnp.mean((y - mean) ** 2, axis=(0, 1, 2), keepdims=True)
    y = (y - mean) * jax.lax.rsqrt(var + eps) * gamma + beta
    return jnp.maximum(y, 0.0)


def _ref_conv_block(x_nchw, params):
    w1, b1, g1, be1, w2, b2, g2, be2 = params
    x = jnp.transpose(x_nchw, (0, 2, 3, 1))
    y = _ref_layer(x, w1, b1, g1, be1)
    y = _ref_layer(y, w2, b2, g2, be2)
    return jnp.transpose(y, (0, 3, 1, 2))


if __name__ == "__main__":
    in_channels, out_channels = 4, 8
    n, h, w = 2, 16, 16

    key = jax.random.PRNGKey(0)
    k_x, k_w1, k_b1, k_w2, k_b2 = jax.random.split(key, 5)

    x = jax.random.normal(k_x, (n, in_channels, h, w), dtype=jnp.float32)

    # Deterministic synthetic parameters (shapes follow the PyTorch module).
    w1 = jax.random.normal(k_w1, (3, 3, in_channels, out_channels), jnp.float32) * 0.1
    b1 = jax.random.normal(k_b1, (out_channels,), jnp.float32) * 0.1
    g1 = jnp.ones((out_channels,), jnp.float32)      # BatchNorm weight init
    be1 = jnp.zeros((out_channels,), jnp.float32)    # BatchNorm bias init
    w2 = jax.random.normal(k_w2, (3, 3, out_channels, out_channels), jnp.float32) * 0.1
    b2 = jax.random.normal(k_b2, (out_channels,), jnp.float32) * 0.1
    g2 = jnp.ones((out_channels,), jnp.float32)
    be2 = jnp.zeros((out_channels,), jnp.float32)

    params = (w1, b1, g1, be1, w2, b2, g2, be2)

    out = jax.block_until_ready(jax.jit(conv_block)(x, params))
    ref = jax.block_until_ready(_ref_conv_block(x, params))

    assert out.shape == (n, out_channels, h, w)
    # bf16 MXU operands (f32 accumulation) -> slightly looser tolerance than pure f32.
    assert np.allclose(np.asarray(out), np.asarray(ref), rtol=2e-2, atol=2e-2)

    print("KERNEL_OK")
</pallas_src>

<mosaic_0001>
module attributes {stable_mosaic.version = 11 : i64} {
  func.func @_conv_stats_kernel(%arg0: i32, %arg1: i32, %arg2: memref<1x16x18x4xbf16, #tpu.memory_space<vmem>>, %arg3: memref<1x16x18x4xbf16, #tpu.memory_space<vmem>>, %arg4: memref<1x16x18x4xbf16, #tpu.memory_space<vmem>>, %arg5: memref<3x3x4x128xbf16, #tpu.memory_space<vmem>>, %arg6: memref<256x128xf32, #tpu.memory_space<vmem>>, %arg7: memref<1x2x128xf32, #tpu.memory_space<vmem>>) attributes {dimension_semantics = [#tpu.dimension_semantics<parallel>, #tpu.dimension_semantics<parallel>], iteration_bounds = array<i64: 2, 1>, scalar_prefetch = 0 : i64, scratch_operands = 0 : i64, tpu.core_type = #tpu.core_type<tc>, window_params = [{transform_indices = @transform_0, window_bounds = array<i64: 1, 16, 18, 4>}, {transform_indices = @transform_1, window_bounds = array<i64: 1, 16, 18, 4>}, {transform_indices = @transform_2, window_bounds = array<i64: 1, 16, 18, 4>}, {pipeline_mode = #tpu.pipeline_mode<synchronous>, transform_indices = @transform_3, window_bounds = array<i64: 3, 3, 4, 128>}, {transform_indices = @transform_4, window_bounds = array<i64: 256, 128>}, {transform_indices = @transform_5, window_bounds = array<i64: 1, 2, 128>}]} {
    %cst = arith.constant 0.000000e+00 : f32
    %0 = vector.broadcast %cst : f32 to vector<256x128xf32>
    %c0 = arith.constant 0 : index
    %c0_0 = arith.constant 0 : index
    %c0_1 = arith.constant 0 : index
    %c0_2 = arith.constant 0 : index
    %1 = vector.load %arg2[%c0, %c0_0, %c0_1, %c0_2] : memref<1x16x18x4xbf16, #tpu.memory_space<vmem>>, vector<1x16x18x4xbf16>
    %2 = vector.shape_cast %1 : vector<1x16x18x4xbf16> to vector<16x18x4xbf16>
    %3 = vector.extract_strided_slice %2 {offsets = [0, 0, 0], sizes = [16, 16, 4], strides = [1, 1, 1]} : vector<16x18x4xbf16> to vector<16x16x4xbf16>
    %4 = vector.shape_cast %3 : vector<16x16x4xbf16> to vector<256x4xbf16>
    %c0_3 = arith.constant 0 : index
    %c0_4 = arith.constant 0 : index
    %c0_5 = arith.constant 0 : index
    %c0_6 = arith.constant 0 : index
    %5 = vector.load %arg5[%c0_3, %c0_4, %c0_5, %c0_6] : memref<3x3x4x128xbf16, #tpu.memory_space<vmem>>, vector<1x1x4x128xbf16>
    %6 = vector.shape_cast %5 : vector<1x1x4x128xbf16> to vector<4x128xbf16>
    %cst_7 = arith.constant dense<0.000000e+00> : vector<256x128xf32>
    %7 = tpu.matmul %4, %6, %cst_7 {dimension_numbers = #tpu.dot_dimension_numbers<[1], [0], [0], [1], [0, 0, 1, 1], [], []>} : vector<256x4xbf16>, vector<4x128xbf16>, vector<256x128xf32> -> vector<256x128xf32>
    %8 = arith.addf %0, %7 : vector<256x128xf32>
    %9 = vector.extract_strided_slice %2 {offsets = [0, 1, 0], sizes = [16, 16, 4], strides = [1, 1, 1]} : vector<16x18x4xbf16> to vector<16x16x4xbf16>
    %10 = vector.shape_cast %9 : vector<16x16x4xbf16> to vector<256x4xbf16>
    %c0_8 = arith.constant 0 : index
    %c1 = arith.constant 1 : index
    %c0_9 = arith.constant 0 : index
    %c0_10 = arith.constant 0 : index
    %11 = vector.load %arg5[%c0_8, %c1, %c0_9, %c0_10] : memref<3x3x4x128xbf16, #tpu.memory_space<vmem>>, vector<1x1x4x128xbf16>
    %12 = vector.shape_cast %11 : vector<1x1x4x128xbf16> to vector<4x128xbf16>
    %cst_11 = arith.constant dense<0.000000e+00> : vector<256x128xf32>
    %13 = tpu.matmul %10, %12, %cst_11 {dimension_numbers = #tpu.dot_dimension_numbers<[1], [0], [0], [1], [0, 0, 1, 1], [], []>} : vector<256x4xbf16>, vector<4x128xbf16>, vector<256x128xf32> -> vector<256x128xf32>
    %14 = arith.addf %8, %13 : vector<256x128xf32>
    %15 = vector.extract_strided_slice %2 {offsets = [0, 2, 0], sizes = [16, 16, 4], strides = [1, 1, 1]} : vector<16x18x4xbf16> to vector<16x16x4xbf16>
    %16 = vector.shape_cast %15 : vector<16x16x4xbf16> to vector<256x4xbf16>
    %c0_12 = arith.constant 0 : index
    %c2 = arith.constant 2 : index
    %c0_13 = arith.constant 0 : index
    %c0_14 = arith.constant 0 : index
    %17 = vector.load %arg5[%c0_12, %c2, %c0_13, %c0_14] : memref<3x3x4x128xbf16, #tpu.memory_space<vmem>>, vector<1x1x4x128xbf16>
    %18 = vector.shape_cast %17 : vector<1x1x4x128xbf16> to vector<4x128xbf16>
    %cst_15 = arith.constant dense<0.000000e+00> : vector<256x128xf32>
    %19 = tpu.matmul %16, %18, %cst_15 {dimension_numbers = #tpu.dot_dimension_numbers<[1], [0], [0], [1], [0, 0, 1, 1], [], []>} : vector<256x4xbf16>, vector<4x128xbf16>, vector<256x128xf32> -> vector<256x128xf32>
    %20 = arith.addf %14, %19 : vector<256x128xf32>
    %c0_16 = arith.constant 0 : index
    %c0_17 = arith.constant 0 : index
    %c0_18 = arith.constant 0 : index
    %c0_19 = arith.constant 0 : index
    %21 = vector.load %arg3[%c0_16, %c0_17, %c0_18, %c0_19] : memref<1x16x18x4xbf16, #tpu.memory_space<vmem>>, vector<1x16x18x4xbf16>
    %22 = vector.shape_cast %21 : vector<1x16x18x4xbf16> to vector<16x18x4xbf16>
    %23 = vector.extract_strided_slice %22 {offsets = [0, 0, 0], sizes = [16, 16, 4], strides = [1, 1, 1]} : vector<16x18x4xbf16> to vector<16x16x4xbf16>
    %24 = vector.shape_cast %23 : vector<16x16x4xbf16> to vector<256x4xbf16>
    %c1_20 = arith.constant 1 : index
    %c0_21 = arith.constant 0 : index
    %c0_22 = arith.constant 0 : index
    %c0_23 = arith.constant 0 : index
    %25 = vector.load %arg5[%c1_20, %c0_21, %c0_22, %c0_23] : memref<3x3x4x128xbf16, #tpu.memory_space<vmem>>, vector<1x1x4x128xbf16>
    %26 = vector.shape_cast %25 : vector<1x1x4x128xbf16> to vector<4x128xbf16>
    %cst_24 = arith.constant dense<0.000000e+00> : vector<256x128xf32>
    %27 = tpu.matmul %24, %26, %cst_24 {dimension_numbers = #tpu.dot_dimension_numbers<[1], [0], [0], [1], [0, 0, 1, 1], [], []>} : vector<256x4xbf16>, vector<4x128xbf16>, vector<256x128xf32> -> vector<256x128xf32>
    %28 = arith.addf %20, %27 : vector<256x128xf32>
    %29 = vector.extract_strided_slice %22 {offsets = [0, 1, 0], sizes = [16, 16, 4], strides = [1, 1, 1]} : vector<16x18x4xbf16> to vector<16x16x4xbf16>
    %30 = vector.shape_cast %29 : vector<16x16x4xbf16> to vector<256x4xbf16>
    %c1_25 = arith.constant 1 : index
    %c1_26 = arith.constant 1 : index
    %c0_27 = arith.constant 0 : index
    %c0_28 = arith.constant 0 : index
    %31 = vector.load %arg5[%c1_25, %c1_26, %c0_27, %c0_28] : memref<3x3x4x128xbf16, #tpu.memory_space<vmem>>, vector<1x1x4x128xbf16>
    %32 = vector.shape_cast %31 : vector<1x1x4x128xbf16> to vector<4x128xbf16>
    %cst_29 = arith.constant dense<0.000000e+00> : vector<256x128xf32>
    %33 = tpu.matmul %30, %32, %cst_29 {dimension_numbers = #tpu.dot_dimension_numbers<[1], [0], [0], [1], [0, 0, 1, 1], [], []>} : vector<256x4xbf16>, vector<4x128xbf16>, vector<256x128xf32> -> vector<256x128xf32>
    %34 = arith.addf %28, %33 : vector<256x128xf32>
    %35 = vector.extract_strided_slice %22 {offsets = [0, 2, 0], sizes = [16, 16, 4], strides = [1, 1, 1]} : vector<16x18x4xbf16> to vector<16x16x4xbf16>
    %36 = vector.shape_cast %35 : vector<16x16x4xbf16> to vector<256x4xbf16>
    %c1_30 = arith.constant 1 : index
    %c2_31 = arith.constant 2 : index
    %c0_32 = arith.constant 0 : index
    %c0_33 = arith.constant 0 : index
    %37 = vector.load %arg5[%c1_30, %c2_31, %c0_32, %c0_33] : memref<3x3x4x128xbf16, #tpu.memory_space<vmem>>, vector<1x1x4x128xbf16>
    %38 = vector.shape_cast %37 : vector<1x1x4x128xbf16> to vector<4x128xbf16>
    %cst_34 = arith.constant dense<0.000000e+00> : vector<256x128xf32>
    %39 = tpu.matmul %36, %38, %cst_34 {dimension_numbers = #tpu.dot_dimension_numbers<[1], [0], [0], [1], [0, 0, 1, 1], [], []>} : vector<256x4xbf16>, vector<4x128xbf16>, vector<256x128xf32> -> vector<256x128xf32>
    %40 = arith.addf %34, %39 : vector<256x128xf32>
    %c0_35 = arith.constant 0 : index
    %c0_36 = arith.constant 0 : index
    %c0_37 = arith.constant 0 : index
    %c0_38 = arith.constant 0 : index
    %41 = vector.load %arg4[%c0_35, %c0_36, %c0_37, %c0_38] : memref<1x16x18x4xbf16, #tpu.memory_space<vmem>>, vector<1x16x18x4xbf16>
    %42 = vector.shape_cast %41 : vector<1x16x18x4xbf16> to vector<16x18x4xbf16>
    %43 = vector.extract_strided_slice %42 {offsets = [0, 0, 0], sizes = [16, 16, 4], strides = [1, 1, 1]} : vector<16x18x4xbf16> to vector<16x16x4xbf16>
    %44 = vector.shape_cast %43 : vector<16x16x4xbf16> to vector<256x4xbf16>
    %c2_39 = arith.constant 2 : index
    %c0_40 = arith.constant 0 : index
    %c0_41 = arith.constant 0 : index
    %c0_42 = arith.constant 0 : index
    %45 = vector.load %arg5[%c2_39, %c0_40, %c0_41, %c0_42] : memref<3x3x4x128xbf16, #tpu.memory_space<vmem>>, vector<1x1x4x128xbf16>
    %46 = vector.shape_cast %45 : vector<1x1x4x128xbf16> to vector<4x128xbf16>
    %cst_43 = arith.constant dense<0.000000e+00> : vector<256x128xf32>
    %47 = tpu.matmul %44, %46, %cst_43 {dimension_numbers = #tpu.dot_dimension_numbers<[1], [0], [0], [1], [0, 0, 1, 1], [], []>} : vector<256x4xbf16>, vector<4x128xbf16>, vector<256x128xf32> -> vector<256x128xf32>
    %48 = arith.addf %40, %47 : vector<256x128xf32>
    %49 = vector.extract_strided_slice %42 {offsets = [0, 1, 0], sizes = [16, 16, 4], strides = [1, 1, 1]} : vector<16x18x4xbf16> to vector<16x16x4xbf16>
    %50 = vector.shape_cast %49 : vector<16x16x4xbf16> to vector<256x4xbf16>
    %c2_44 = arith.constant 2 : index
    %c1_45 = arith.constant 1 : index
    %c0_46 = arith.constant 0 : index
    %c0_47 = arith.constant 0 : index
    %51 = vector.load %arg5[%c2_44, %c1_45, %c0_46, %c0_47] : memref<3x3x4x128xbf16, #tpu.memory_space<vmem>>, vector<1x1x4x128xbf16>
    %52 = vector.shape_cast %51 : vector<1x1x4x128xbf16> to vector<4x128xbf16>
    %cst_48 = arith.constant dense<0.000000e+00> : vector<256x128xf32>
    %53 = tpu.matmul %50, %52, %cst_48 {dimension_numbers = #tpu.dot_dimension_numbers<[1], [0], [0], [1], [0, 0, 1, 1], [], []>} : vector<256x4xbf16>, vector<4x128xbf16>, vector<256x128xf32> -> vector<256x128xf32>
    %54 = arith.addf %48, %53 : vector<256x128xf32>
    %55 = vector.extract_strided_slice %42 {offsets = [0, 2, 0], sizes = [16, 16, 4], strides = [1, 1, 1]} : vector<16x18x4xbf16> to vector<16x16x4xbf16>
    %56 = vector.shape_cast %55 : vector<16x16x4xbf16> to vector<256x4xbf16>
    %c2_49 = arith.constant 2 : index
    %c2_50 = arith.constant 2 : index
    %c0_51 = arith.constant 0 : index
    %c0_52 = arith.constant 0 : index
    %57 = vector.load %arg5[%c2_49, %c2_50, %c0_51, %c0_52] : memref<3x3x4x128xbf16, #tpu.memory_space<vmem>>, vector<1x1x4x128xbf16>
    %58 = vector.shape_cast %57 : vector<1x1x4x128xbf16> to vector<4x128xbf16>
    %cst_53 = arith.constant dense<0.000000e+00> : vector<256x128xf32>
    %59 = tpu.matmul %56, %58, %cst_53 {dimension_numbers = #tpu.dot_dimension_numbers<[1], [0], [0], [1], [0, 0, 1, 1], [], []>} : vector<256x4xbf16>, vector<4x128xbf16>, vector<256x128xf32> -> vector<256x128xf32>
    %60 = arith.addf %54, %59 : vector<256x128xf32>
    %c0_54 = arith.constant 0 : index
    %c0_55 = arith.constant 0 : index
    %61 = vector.load %arg6[%c0_54, %c0_55] : memref<256x128xf32, #tpu.memory_space<vmem>>, vector<256x128xf32>
    tpu.vector_store %arg6[%c0_54, %c0_55], %60 {strides = array<i32>} : memref<256x128xf32, #tpu.memory_space<vmem>>, vector<256x128xf32>,
    %cst_56 = arith.constant dense<0.000000e+00> : vector<128xf32>
    %62 = vector.multi_reduction <add>, %60, %cst_56 [0] : vector<256x128xf32> to vector<128xf32>
    %63 = vector.shape_cast %62 : vector<128xf32> to vector<1x128xf32>
    %64 = arith.mulf %60, %60 : vector<256x128xf32>
    %cst_57 = arith.constant dense<0.000000e+00> : vector<128xf32>
    %65 = vector.multi_reduction <add>, %64, %cst_57 [0] : vector<256x128xf32> to vector<128xf32>
    %66 = vector.shape_cast %65 : vector<128xf32> to vector<1x128xf32>
    %67 = tpu.concatenate %63, %66 in 0 : vector<1x128xf32>, vector<1x128xf32> -> vector<2x128xf32>
    %68 = vector.shape_cast %67 : vector<2x128xf32> to vector<1x2x128xf32>
    %c0_58 = arith.constant 0 : index
    %c0_59 = arith.constant 0 : index
    %c0_60 = arith.constant 0 : index
    %69 = vector.load %arg7[%c0_58, %c0_59, %c0_60] : memref<1x2x128xf32, #tpu.memory_space<vmem>>, vector<1x2x128xf32>
    tpu.vector_store %arg7[%c0_58, %c0_59, %c0_60], %68 {strides = array<i32>} : memref<1x2x128xf32, #tpu.memory_space<vmem>>, vector<1x2x128xf32>,
    return
  }
  func.func @transform_0(%arg0: i32, %arg1: i32) -> (i32, i32, i32, i32) {
    %c0_i32 = arith.constant 0 : i32
    %c0_i32_0 = arith.constant 0 : i32
    %c0_i32_1 = arith.constant 0 : i32
    return %arg0, %arg1, %c0_i32, %c0_i32_0 : i32, i32, i32, i32
  }
  func.func @transform_1(%arg0: i32, %arg1: i32) -> (i32, i32, i32, i32) {
    %c0_i32 = arith.constant 0 : i32
    %c0_i32_0 = arith.constant 0 : i32
    %c0_i32_1 = arith.constant 0 : i32
    return %arg0, %arg1, %c0_i32, %c0_i32_0 : i32, i32, i32, i32
  }
  func.func @transform_2(%arg0: i32, %arg1: i32) -> (i32, i32, i32, i32) {
    %c0_i32 = arith.constant 0 : i32
    %c0_i32_0 = arith.constant 0 : i32
    %c0_i32_1 = arith.constant 0 : i32
    return %arg0, %arg1, %c0_i32, %c0_i32_0 : i32, i32, i32, i32
  }
  func.func @transform_3(%arg0: i32, %arg1: i32) -> (i32, i32, i32, i32) {
    %c0_i32 = arith.constant 0 : i32
    %c0_i32_0 = arith.constant 0 : i32
    %c0_i32_1 = arith.constant 0 : i32
    %c0_i32_2 = arith.constant 0 : i32
    %c0_i32_3 = arith.constant 0 : i32
    return %c0_i32, %c0_i32_0, %c0_i32_1, %c0_i32_2 : i32, i32, i32, i32
  }
  func.func @transform_4(%arg0: i32, %arg1: i32) -> (i32, i32) {
    %c1_i32 = arith.constant 1 : i32
    %0 = arith.muli %arg0, %c1_i32 : i32
    %1 = arith.addi %0, %arg1 : i32
    %c0_i32 = arith.constant 0 : i32
    %c0_i32_0 = arith.constant 0 : i32
    return %1, %c0_i32 : i32, i32
  }
  func.func @transform_5(%arg0: i32, %arg1: i32) -> (i32, i32, i32) {
    %c1_i32 = arith.constant 1 : i32
    %0 = arith.muli %arg0, %c1_i32 : i32
    %1 = arith.addi %0, %arg1 : i32
    %c0_i32 = arith.constant 0 : i32
    %c0_i32_0 = arith.constant 0 : i32
    %c0_i32_1 = arith.constant 0 : i32
    return %1, %c0_i32, %c0_i32_0 : i32, i32, i32
  }
}

module attributes {stable_mosaic.version = 11 : i64} {
  func.func @_bn_relu_kernel(%arg0: i32, %arg1: memref<256x128xf32, #tpu.memory_space<vmem>>, %arg2: memref<1x128xf32, #tpu.memory_space<vmem>>, %arg3: memref<1x128xf32, #tpu.memory_space<vmem>>, %arg4: memref<256x128xf32, #tpu.memory_space<vmem>>) attributes {dimension_semantics = [#tpu.dimension_semantics<parallel>], iteration_bounds = array<i64: 2>, scalar_prefetch = 0 : i64, scratch_operands = 0 : i64, tpu.core_type = #tpu.core_type<tc>, window_params = [{transform_indices = @transform_0, window_bounds = array<i64: 256, 128>}, {pipeline_mode = #tpu.pipeline_mode<synchronous>, transform_indices = @transform_1, window_bounds = array<i64: 1, 128>}, {pipeline_mode = #tpu.pipeline_mode<synchronous>, transform_indices = @transform_2, window_bounds = array<i64: 1, 128>}, {transform_indices = @transform_3, window_bounds = array<i64: 256, 128>}]} {
    %c0 = arith.constant 0 : index
    %c0_0 = arith.constant 0 : index
    %0 = vector.load %arg1[%c0, %c0_0] : memref<256x128xf32, #tpu.memory_space<vmem>>, vector<256x128xf32>
    %c0_1 = arith.constant 0 : index
    %c0_2 = arith.constant 0 : index
    %1 = vector.load %arg2[%c0_1, %c0_2] : memref<1x128xf32, #tpu.memory_space<vmem>>, vector<1x128xf32>
    %2 = vector.broadcast %1 : vector<1x128xf32> to vector<256x128xf32>
    %3 = arith.mulf %0, %2 : vector<256x128xf32>
    %c0_3 = arith.constant 0 : index
    %c0_4 = arith.constant 0 : index
    %4 = vector.load %arg3[%c0_3, %c0_4] : memref<1x128xf32, #tpu.memory_space<vmem>>, vector<1x128xf32>
    %5 = vector.broadcast %4 : vector<1x128xf32> to vector<256x128xf32>
    %6 = arith.addf %3, %5 : vector<256x128xf32>
    %cst = arith.constant 0.000000e+00 : f32
    %7 = vector.broadcast %cst : f32 to vector<256x128xf32>
    %8 = arith.maximumf %6, %7 : vector<256x128xf32>
    %c0_5 = arith.constant 0 : index
    %c0_6 = arith.constant 0 : index
    %9 = vector.load %arg4[%c0_5, %c0_6] : memref<256x128xf32, #tpu.memory_space<vmem>>, vector<256x128xf32>
    tpu.vector_store %arg4[%c0_5, %c0_6], %8 {strides = array<i32>} : memref<256x128xf32, #tpu.memory_space<vmem>>, vector<256x128xf32>,
    return
  }
  func.func @transform_0(%arg0: i32) -> (i32, i32) {
    %c0_i32 = arith.constant 0 : i32
    %c0_i32_0 = arith.constant 0 : i32
    return %arg0, %c0_i32 : i32, i32
  }
  func.func @transform_1(%arg0: i32) -> (i32, i32) {
    %c0_i32 = arith.constant 0 : i32
    %c0_i32_0 = arith.constant 0 : i32
    %c0_i32_1 = arith.constant 0 : i32
    return %c0_i32, %c0_i32_0 : i32, i32
  }
  func.func @transform_2(%arg0: i32) -> (i32, i32) {
    %c0_i32 = arith.constant 0 : i32
    %c0_i32_0 = arith.constant 0 : i32
    %c0_i32_1 = arith.constant 0 : i32
    return %c0_i32, %c0_i32_0 : i32, i32
  }
  func.func @transform_3(%arg0: i32) -> (i32, i32) {
    %c0_i32 = arith.constant 0 : i32
    %c0_i32_0 = arith.constant 0 : i32
    return %arg0, %c0_i32 : i32, i32
  }
}

module attributes {stable_mosaic.version = 11 : i64} {
  func.func @_conv_stats_kernel(%arg0: i32, %arg1: i32, %arg2: memref<1x16x18x8xbf16, #tpu.memory_space<vmem>>, %arg3: memref<1x16x18x8xbf16, #tpu.memory_space<vmem>>, %arg4: memref<1x16x18x8xbf16, #tpu.memory_space<vmem>>, %arg5: memref<3x3x8x128xbf16, #tpu.memory_space<vmem>>, %arg6: memref<256x128xf32, #tpu.memory_space<vmem>>, %arg7: memref<1x2x128xf32, #tpu.memory_space<vmem>>) attributes {dimension_semantics = [#tpu.dimension_semantics<parallel>, #tpu.dimension_semantics<parallel>], iteration_bounds = array<i64: 2, 1>, scalar_prefetch = 0 : i64, scratch_operands = 0 : i64, tpu.core_type = #tpu.core_type<tc>, window_params = [{transform_indices = @transform_0, window_bounds = array<i64: 1, 16, 18, 8>}, {transform_indices = @transform_1, window_bounds = array<i64: 1, 16, 18, 8>}, {transform_indices = @transform_2, window_bounds = array<i64: 1, 16, 18, 8>}, {pipeline_mode = #tpu.pipeline_mode<synchronous>, transform_indices = @transform_3, window_bounds = array<i64: 3, 3, 8, 128>}, {transform_indices = @transform_4, window_bounds = array<i64: 256, 128>}, {transform_indices = @transform_5, window_bounds = array<i64: 1, 2, 128>}]} {
    %cst = arith.constant 0.000000e+00 : f32
    %0 = vector.broadcast %cst : f32 to vector<256x128xf32>
    %c0 = arith.constant 0 : index
    %c0_0 = arith.constant 0 : index
    %c0_1 = arith.constant 0 : index
    %c0_2 = arith.constant 0 : index
    %1 = vector.load %arg2[%c0, %c0_0, %c0_1, %c0_2] : memref<1x16x18x8xbf16, #tpu.memory_space<vmem>>, vector<1x16x18x8xbf16>
    %2 = vector.shape_cast %1 : vector<1x16x18x8xbf16> to vector<16x18x8xbf16>
    %3 = vector.extract_strided_slice %2 {offsets = [0, 0, 0], sizes = [16, 16, 8], strides = [1, 1, 1]} : vector<16x18x8xbf16> to vector<16x16x8xbf16>
    %4 = vector.shape_cast %3 : vector<16x16x8xbf16> to vector<256x8xbf16>
    %c0_3 = arith.constant 0 : index
    %c0_4 = arith.constant 0 : index
    %c0_5 = arith.constant 0 : index
    %c0_6 = arith.constant 0 : index
    %5 = vector.load %arg5[%c0_3, %c0_4, %c0_5, %c0_6] : memref<3x3x8x128xbf16, #tpu.memory_space<vmem>>, vector<1x1x8x128xbf16>
    %6 = vector.shape_cast %5 : vector<1x1x8x128xbf16> to vector<8x128xbf16>
    %cst_7 = arith.constant dense<0.000000e+00> : vector<256x128xf32>
    %7 = tpu.matmul %4, %6, %cst_7 {dimension_numbers = #tpu.dot_dimension_numbers<[1], [0], [0], [1], [0, 0, 1, 1], [], []>} : vector<256x8xbf16>, vector<8x128xbf16>, vector<256x128xf32> -> vector<256x128xf32>
    %8 = arith.addf %0, %7 : vector<256x128xf32>
    %9 = vector.extract_strided_slice %2 {offsets = [0, 1, 0], sizes = [16, 16, 8], strides = [1, 1, 1]} : vector<16x18x8xbf16> to vector<16x16x8xbf16>
    %10 = vector.shape_cast %9 : vector<16x16x8xbf16> to vector<256x8xbf16>
    %c0_8 = arith.constant 0 : index
    %c1 = arith.constant 1 : index
    %c0_9 = arith.constant 0 : index
    %c0_10 = arith.constant 0 : index
    %11 = vector.load %arg5[%c0_8, %c1, %c0_9, %c0_10] : memref<3x3x8x128xbf16, #tpu.memory_space<vmem>>, vector<1x1x8x128xbf16>
    %12 = vector.shape_cast %11 : vector<1x1x8x128xbf16> to vector<8x128xbf16>
    %cst_11 = arith.constant dense<0.000000e+00> : vector<256x128xf32>
    %13 = tpu.matmul %10, %12, %cst_11 {dimension_numbers = #tpu.dot_dimension_numbers<[1], [0], [0], [1], [0, 0, 1, 1], [], []>} : vector<256x8xbf16>, vector<8x128xbf16>, vector<256x128xf32> -> vector<256x128xf32>
    %14 = arith.addf %8, %13 : vector<256x128xf32>
    %15 = vector.extract_strided_slice %2 {offsets = [0, 2, 0], sizes = [16, 16, 8], strides = [1, 1, 1]} : vector<16x18x8xbf16> to vector<16x16x8xbf16>
    %16 = vector.shape_cast %15 : vector<16x16x8xbf16> to vector<256x8xbf16>
    %c0_12 = arith.constant 0 : index
    %c2 = arith.constant 2 : index
    %c0_13 = arith.constant 0 : index
    %c0_14 = arith.constant 0 : index
    %17 = vector.load %arg5[%c0_12, %c2, %c0_13, %c0_14] : memref<3x3x8x128xbf16, #tpu.memory_space<vmem>>, vector<1x1x8x128xbf16>
    %18 = vector.shape_cast %17 : vector<1x1x8x128xbf16> to vector<8x128xbf16>
    %cst_15 = arith.constant dense<0.000000e+00> : vector<256x128xf32>
    %19 = tpu.matmul %16, %18, %cst_15 {dimension_numbers = #tpu.dot_dimension_numbers<[1], [0], [0], [1], [0, 0, 1, 1], [], []>} : vector<256x8xbf16>, vector<8x128xbf16>, vector<256x128xf32> -> vector<256x128xf32>
    %20 = arith.addf %14, %19 : vector<256x128xf32>
    %c0_16 = arith.constant 0 : index
    %c0_17 = arith.constant 0 : index
    %c0_18 = arith.constant 0 : index
    %c0_19 = arith.constant 0 : index
    %21 = vector.load %arg3[%c0_16, %c0_17, %c0_18, %c0_19] : memref<1x16x18x8xbf16, #tpu.memory_space<vmem>>, vector<1x16x18x8xbf16>
    %22 = vector.shape_cast %21 : vector<1x16x18x8xbf16> to vector<16x18x8xbf16>
    %23 = vector.extract_strided_slice %22 {offsets = [0, 0, 0], sizes = [16, 16, 8], strides = [1, 1, 1]} : vector<16x18x8xbf16> to vector<16x16x8xbf16>
    %24 = vector.shape_cast %23 : vector<16x16x8xbf16> to vector<256x8xbf16>
    %c1_20 = arith.constant 1 : index
    %c0_21 = arith.constant 0 : index
    %c0_22 = arith.constant 0 : index
    %c0_23 = arith.constant 0 : index
    %25 = vector.load %arg5[%c1_20, %c0_21, %c0_22, %c0_23] : memref<3x3x8x128xbf16, #tpu.memory_space<vmem>>, vector<1x1x8x128xbf16>
    %26 = vector.shape_cast %25 : vector<1x1x8x128xbf16> to vector<8x128xbf16>
    %cst_24 = arith.constant dense<0.000000e+00> : vector<256x128xf32>
    %27 = tpu.matmul %24, %26, %cst_24 {dimension_numbers = #tpu.dot_dimension_numbers<[1], [0], [0], [1], [0, 0, 1, 1], [], []>} : vector<256x8xbf16>, vector<8x128xbf16>, vector<256x128xf32> -> vector<256x128xf32>
    %28 = arith.addf %20, %27 : vector<256x128xf32>
    %29 = vector.extract_strided_slice %22 {offsets = [0, 1, 0], sizes = [16, 16, 8], strides = [1, 1, 1]} : vector<16x18x8xbf16> to vector<16x16x8xbf16>
    %30 = vector.shape_cast %29 : vector<16x16x8xbf16> to vector<256x8xbf16>
    %c1_25 = arith.constant 1 : index
    %c1_26 = arith.constant 1 : index
    %c0_27 = arith.constant 0 : index
    %c0_28 = arith.constant 0 : index
    %31 = vector.load %arg5[%c1_25, %c1_26, %c0_27, %c0_28] : memref<3x3x8x128xbf16, #tpu.memory_space<vmem>>, vector<1x1x8x128xbf16>
    %32 = vector.shape_cast %31 : vector<1x1x8x128xbf16> to vector<8x128xbf16>
    %cst_29 = arith.constant dense<0.000000e+00> : vector<256x128xf32>
    %33 = tpu.matmul %30, %32, %cst_29 {dimension_numbers = #tpu.dot_dimension_numbers<[1], [0], [0], [1], [0, 0, 1, 1], [], []>} : vector<256x8xbf16>, vector<8x128xbf16>, vector<256x128xf32> -> vector<256x128xf32>
    %34 = arith.addf %28, %33 : vector<256x128xf32>
    %35 = vector.extract_strided_slice %22 {offsets = [0, 2, 0], sizes = [16, 16, 8], strides = [1, 1, 1]} : vector<16x18x8xbf16> to vector<16x16x8xbf16>
    %36 = vector.shape_cast %35 : vector<16x16x8xbf16> to vector<256x8xbf16>
    %c1_30 = arith.constant 1 : index
    %c2_31 = arith.constant 2 : index
    %c0_32 = arith.constant 0 : index
    %c0_33 = arith.constant 0 : index
    %37 = vector.load %arg5[%c1_30, %c2_31, %c0_32, %c0_33] : memref<3x3x8x128xbf16, #tpu.memory_space<vmem>>, vector<1x1x8x128xbf16>
    %38 = vector.shape_cast %37 : vector<1x1x8x128xbf16> to vector<8x128xbf16>
    %cst_34 = arith.constant dense<0.000000e+00> : vector<256x128xf32>
    %39 = tpu.matmul %36, %38, %cst_34 {dimension_numbers = #tpu.dot_dimension_numbers<[1], [0], [0], [1], [0, 0, 1, 1], [], []>} : vector<256x8xbf16>, vector<8x128xbf16>, vector<256x128xf32> -> vector<256x128xf32>
    %40 = arith.addf %34, %39 : vector<256x128xf32>
    %c0_35 = arith.constant 0 : index
    %c0_36 = arith.constant 0 : index
    %c0_37 = arith.constant 0 : index
    %c0_38 = arith.constant 0 : index
    %41 = vector.load %arg4[%c0_35, %c0_36, %c0_37, %c0_38] : memref<1x16x18x8xbf16, #tpu.memory_space<vmem>>, vector<1x16x18x8xbf16>
    %42 = vector.shape_cast %41 : vector<1x16x18x8xbf16> to vector<16x18x8xbf16>
    %43 = vector.extract_strided_slice %42 {offsets = [0, 0, 0], sizes = [16, 16, 8], strides = [1, 1, 1]} : vector<16x18x8xbf16> to vector<16x16x8xbf16>
    %44 = vector.shape_cast %43 : vector<16x16x8xbf16> to vector<256x8xbf16>
    %c2_39 = arith.constant 2 : index
    %c0_40 = arith.constant 0 : index
    %c0_41 = arith.constant 0 : index
    %c0_42 = arith.constant 0 : index
    %45 = vector.load %arg5[%c2_39, %c0_40, %c0_41, %c0_42] : memref<3x3x8x128xbf16, #tpu.memory_space<vmem>>, vector<1x1x8x128xbf16>
    %46 = vector.shape_cast %45 : vector<1x1x8x128xbf16> to vector<8x128xbf16>
    %cst_43 = arith.constant dense<0.000000e+00> : vector<256x128xf32>
    %47 = tpu.matmul %44, %46, %cst_43 {dimension_numbers = #tpu.dot_dimension_numbers<[1], [0], [0], [1], [0, 0, 1, 1], [], []>} : vector<256x8xbf16>, vector<8x128xbf16>, vector<256x128xf32> -> vector<256x128xf32>
    %48 = arith.addf %40, %47 : vector<256x128xf32>
    %49 = vector.extract_strided_slice %42 {offsets = [0, 1, 0], sizes = [16, 16, 8], strides = [1, 1, 1]} : vector<16x18x8xbf16> to vector<16x16x8xbf16>
    %50 = vector.shape_cast %49 : vector<16x16x8xbf16> to vector<256x8xbf16>
    %c2_44 = arith.constant 2 : index
    %c1_45 = arith.constant 1 : index
    %c0_46 = arith.constant 0 : index
    %c0_47 = arith.constant 0 : index
    %51 = vector.load %arg5[%c2_44, %c1_45, %c0_46, %c0_47] : memref<3x3x8x128xbf16, #tpu.memory_space<vmem>>, vector<1x1x8x128xbf16>
    %52 = vector.shape_cast %51 : vector<1x1x8x128xbf16> to vector<8x128xbf16>
    %cst_48 = arith.constant dense<0.000000e+00> : vector<256x128xf32>
    %53 = tpu.matmul %50, %52, %cst_48 {dimension_numbers = #tpu.dot_dimension_numbers<[1], [0], [0], [1], [0, 0, 1, 1], [], []>} : vector<256x8xbf16>, vector<8x128xbf16>, vector<256x128xf32> -> vector<256x128xf32>
    %54 = arith.addf %48, %53 : vector<256x128xf32>
    %55 = vector.extract_strided_slice %42 {offsets = [0, 2, 0], sizes = [16, 16, 8], strides = [1, 1, 1]} : vector<16x18x8xbf16> to vector<16x16x8xbf16>
    %56 = vector.shape_cast %55 : vector<16x16x8xbf16> to vector<256x8xbf16>
    %c2_49 = arith.constant 2 : index
    %c2_50 = arith.constant 2 : index
    %c0_51 = arith.constant 0 : index
    %c0_52 = arith.constant 0 : index
    %57 = vector.load %arg5[%c2_49, %c2_50, %c0_51, %c0_52] : memref<3x3x8x128xbf16, #tpu.memory_space<vmem>>, vector<1x1x8x128xbf16>
    %58 = vector.shape_cast %57 : vector<1x1x8x128xbf16> to vector<8x128xbf16>
    %cst_53 = arith.constant dense<0.000000e+00> : vector<256x128xf32>
    %59 = tpu.matmul %56, %58, %cst_53 {dimension_numbers = #tpu.dot_dimension_numbers<[1], [0], [0], [1], [0, 0, 1, 1], [], []>} : vector<256x8xbf16>, vector<8x128xbf16>, vector<256x128xf32> -> vector<256x128xf32>
    %60 = arith.addf %54, %59 : vector<256x128xf32>
    %c0_54 = arith.constant 0 : index
    %c0_55 = arith.constant 0 : index
    %61 = vector.load %arg6[%c0_54, %c0_55] : memref<256x128xf32, #tpu.memory_space<vmem>>, vector<256x128xf32>
    tpu.vector_store %arg6[%c0_54, %c0_55], %60 {strides = array<i32>} : memref<256x128xf32, #tpu.memory_space<vmem>>, vector<256x128xf32>,
    %cst_56 = arith.constant dense<0.000000e+00> : vector<128xf32>
    %62 = vector.multi_reduction <add>, %60, %cst_56 [0] : vector<256x128xf32> to vector<128xf32>
    %63 = vector.shape_cast %62 : vector<128xf32> to vector<1x128xf32>
    %64 = arith.mulf %60, %60 : vector<256x128xf32>
    %cst_57 = arith.constant dense<0.000000e+00> : vector<128xf32>
    %65 = vector.multi_reduction <add>, %64, %cst_57 [0] : vector<256x128xf32> to vector<128xf32>
    %66 = vector.shape_cast %65 : vector<128xf32> to vector<1x128xf32>
    %67 = tpu.concatenate %63, %66 in 0 : vector<1x128xf32>, vector<1x128xf32> -> vector<2x128xf32>
    %68 = vector.shape_cast %67 : vector<2x128xf32> to vector<1x2x128xf32>
    %c0_58 = arith.constant 0 : index
    %c0_59 = arith.constant 0 : index
    %c0_60 = arith.constant 0 : index
    %69 = vector.load %arg7[%c0_58, %c0_59, %c0_60] : memref<1x2x128xf32, #tpu.memory_space<vmem>>, vector<1x2x128xf32>
    tpu.vector_store %arg7[%c0_58, %c0_59, %c0_60], %68 {strides = array<i32>} : memref<1x2x128xf32, #tpu.memory_space<vmem>>, vector<1x2x128xf32>,
    return
  }
  func.func @transform_0(%arg0: i32, %arg1: i32) -> (i32, i32, i32, i32) {
    %c0_i32 = arith.constant 0 : i32
    %c0_i32_0 = arith.constant 0 : i32
    %c0_i32_1 = arith.constant 0 : i32
    return %arg0, %arg1, %c0_i32, %c0_i32_0 : i32, i32, i32, i32
  }
  func.func @transform_1(%arg0: i32, %arg1: i32) -> (i32, i32, i32, i32) {
    %c0_i32 = arith.constant 0 : i32
    %c0_i32_0 = arith.constant 0 : i32
    %c0_i32_1 = arith.constant 0 : i32
    return %arg0, %arg1, %c0_i32, %c0_i32_0 : i32, i32, i32, i32
  }
  func.func @transform_2(%arg0: i32, %arg1: i32) -> (i32, i32, i32, i32) {
    %c0_i32 = arith.constant 0 : i32
    %c0_i32_0 = arith.constant 0 : i32
    %c0_i32_1 = arith.constant 0 : i32
    return %arg0, %arg1, %c0_i32, %c0_i32_0 : i32, i32, i32, i32
  }
  func.func @transform_3(%arg0: i32, %arg1: i32) -> (i32, i32, i32, i32) {
    %c0_i32 = arith.constant 0 : i32
    %c0_i32_0 = arith.constant 0 : i32
    %c0_i32_1 = arith.constant 0 : i32
    %c0_i32_2 = arith.constant 0 : i32
    %c0_i32_3 = arith.constant 0 : i32
    return %c0_i32, %c0_i32_0, %c0_i32_1, %c0_i32_2 : i32, i32, i32, i32
  }
  func.func @transform_4(%arg0: i32, %arg1: i32) -> (i32, i32) {
    %c1_i32 = arith.constant 1 : i32
    %0 = arith.muli %arg0, %c1_i32 : i32
    %1 = arith.addi %0, %arg1 : i32
    %c0_i32 = arith.constant 0 : i32
    %c0_i32_0 = arith.constant 0 : i32
    return %1, %c0_i32 : i32, i32
  }
  func.func @transform_5(%arg0: i32, %arg1: i32) -> (i32, i32, i32) {
    %c1_i32 = arith.constant 1 : i32
    %0 = arith.muli %arg0, %c1_i32 : i32
    %1 = arith.addi %0, %arg1 : i32
    %c0_i32 = arith.constant 0 : i32
    %c0_i32_0 = arith.constant 0 : i32
    %c0_i32_1 = arith.constant 0 : i32
    return %1, %c0_i32, %c0_i32_0 : i32, i32, i32
  }
}

</mosaic_0001>

<llo_original>
// kernel: conv_block.5
$region0: #{conv_block.5}
  #allocation0 [shape = 'u32[]', space=smem, size = 0x4, offset = 0x4, fixed_abs, tag = 'smem constant byte address 0x4 - core index']
  #allocation1 [shape = 'u32[144,128]{1,0:T(1,128)}', space=vmem, size = 0x12000, scoped, tag = 'internal scratch']
  %s0 = inlined_call_operand.vmem [shape: f32[512,128], index: 0, kind: input, shape index: {}]
  %s1 = inlined_call_operand.vmem [shape: f32[1,128], index: 1, kind: input, shape index: {}]
  %s2 = inlined_call_operand.vmem [shape: f32[1,128], index: 2, kind: input, shape index: {}]
  %s3 = inlined_call_operand.vmem [shape: f32[512,128], index: 3, kind: output, shape index: {}]
  %s4 = sld [smem:[#allocation0]]
  $region45: #{conv_block.5} parent=0
    _
  %s6 = ssub.s32 1, %s4
  %s7 = scalar_select 0, %s6, %s4
  loop: start=0, step=1, limit=4
  $region2: #{conv_block.5} parent=0 // loop_pre_header
    _
  $region3: #{conv_block.5} parent=0 // loop_header
    %s9 = sphi 0, %s13
    %p10 = scmp.ge.s32.totalorder %s9, 4
    %s19 = sphi 0, %s21
    %s22 = sphi 0, %s19
    %s23 = sphi 0, %s22
    %s39 = sphi 0, %s23
    %s43 = sphi 0, %s43
    %s45 = sphi 0, %s43
    %s46 = sphi 0, %s45
    %s60 = sphi 0, %s46
    %s64 = sphi 0, %s64
    %s66 = sphi 0, %s64
    %s67 = sphi 0, %s66
    %s81 = sphi 0, %s67
    %s87 = sphi 0, %s89
    %s90 = sphi 0, %s87
    %s91 = sphi 0, %s90
    %s107 = sphi 0, %s91
  $region4: #{conv_block.5} parent=0 // loop_header_branch
    %12 = sbr.rel (%p10) target = $region8
  $region5: #{conv_block.5} parent=0 // loop_body
    %s14 = ssub.s32 %s9, 1
    %s15 = ssub.s32 %s9, 2
    %s16 = sadd.s32 %s9, 1
    %s17 = ssub.s32 %s9, %s16
    %p18 = scmp.eq.s32.totalorder %s17, 0
    %s20 = sadd.s32 %s19, 1
    %s21 = scalar_select %p18, %s19, %s20
    %p24 = pneg %p18
    %p25 = scmp.eq.s32.totalorder %s9, 1
    %p26 = por %p24, %p25
    %p27 = scmp.ne.s32.totalorder %s19, %s22
    %p28 = scmp.eq.s32.totalorder %s9, 0
    %p29 = por %p27, %p28
    %p30 = scmp.ne.s32.totalorder %s19, %s22
    %p31 = scmp.eq.s32.totalorder %s14, 1
    %p32 = por %p30, %p31
    %p33 = scmp.ne.s32.totalorder %s22, %s23
    %p34 = scmp.eq.s32.totalorder %s14, 0
    %p35 = por %p33, %p34
    %p36 = scmp.ne.s32.totalorder %s22, %s23
    %p37 = scmp.eq.s32.totalorder %s15, 1
    %p38 = por %p36, %p37
    %p40 = scmp.ne.s32.totalorder %s23, %s39
    %p41 = scmp.eq.s32.totalorder %s15, 0
    %p42 = por %p40, %p41
    %s44 = sadd.s32 %s43, 1
    %p47 = scmp.eq.s32.totalorder %s9, 1
    %p48 = scmp.ne.s32.totalorder %s43, %s45
    %p49 = scmp.eq.s32.totalorder %s9, 0
    %p50 = por %p48, %p49
    %p51 = scmp.ne.s32.totalorder %s43, %s45
    %p52 = scmp.eq.s32.totalorder %s14, 1
    %p53 = por %p51, %p52
    %p54 = scmp.ne.s32.totalorder %s45, %s46
    %p55 = scmp.eq.s32.totalorder %s14, 0
    %p56 = por %p54, %p55
    %p57 = scmp.ne.s32.totalorder %s45, %s46
    %p58 = scmp.eq.s32.totalorder %s15, 1
    %p59 = por %p57, %p58
    %p61 = scmp.ne.s32.totalorder %s46, %s60
    %p62 = scmp.eq.s32.totalorder %s15, 0
    %p63 = por %p61, %p62
    %s65 = sadd.s32 %s64, 1
    %p68 = scmp.eq.s32.totalorder %s9, 1
    %p69 = scmp.ne.s32.totalorder %s64, %s66
    %p70 = scmp.eq.s32.totalorder %s9, 0
    %p71 = por %p69, %p70
    %p72 = scmp.ne.s32.totalorder %s64, %s66
    %p73 = scmp.eq.s32.totalorder %s14, 1
    %p74 = por %p72, %p73
    %p75 = scmp.ne.s32.totalorder %s66, %s67
    %p76 = scmp.eq.s32.totalorder %s14, 0
    %p77 = por %p75, %p76
    %p78 = scmp.ne.s32.totalorder %s66, %s67
    %p79 = scmp.eq.s32.totalorder %s15, 1
    %p80 = por %p78, %p79
    %p82 = scmp.ne.s32.totalorder %s67, %s81
    %p83 = scmp.eq.s32.totalorder %s15, 0
    %p84 = por %p82, %p83
    %s85 = ssub.s32 %s9, %s16
    %p86 = scmp.eq.s32.totalorder %s85, 0
    %s88 = sadd.s32 %s87, 1
    %s89 = scalar_select %p86, %s87, %s88
    %p92 = pneg %p86
    %p93 = scmp.eq.s32.totalorder %s9, 1
    %p94 = por %p92, %p93
    %p95 = scmp.ne.s32.totalorder %s87, %s90
    %p96 = scmp.eq.s32.totalorder %s9, 0
    %p97 = por %p95, %p96
    %p98 = scmp.ne.s32.totalorder %s87, %s90
    %p99 = scmp.eq.s32.totalorder %s14, 1
    %p100 = por %p98, %p99
    %p101 = scmp.ne.s32.totalorder %s90, %s91
    %p102 = scmp.eq.s32.totalorder %s14, 0
    %p103 = por %p101, %p102
    %p104 = scmp.ne.s32.totalorder %s90, %s91
    %p105 = scmp.eq.s32.totalorder %s15, 1
    %p106 = por %p104, %p105
    %p108 = scmp.ne.s32.totalorder %s91, %s107
    %p109 = scmp.eq.s32.totalorder %s15, 0
    %p110 = por %p108, %p109
    %p111 = scmp.le.s32.totalorder 1, %s9
    %p112 = scmp.lt.s32.totalorder %s9, 3
    %p113 = pnand %p111, %p112
    %p114 = pneg %p113
    // Predicated region
    $region9: #{conv_block.5} parent=5 // pred_check
      _
    $region10: #{conv_block.5} parent=5 // pred_check_branch
      %116 = sbr.rel (%p113) target = $region12
    $region11: #{conv_block.5} parent=5 // pred_region
      %s117 = ssub.s32 %s9, 1
      // Predicated region
      $region13: #{conv_block.5} parent=11 // pred_check
        %p118 = pneg %p56
      $region14: #{conv_block.5} parent=11 // pred_check_branch
        %120 = sbr.rel (%p118) target = $region16
      $region15: #{conv_block.5} parent=11 // pred_region
        _
      $region16: #{conv_block.5} parent=11 // pred_fallthru
        _
      // Predicated region
      $region17: #{conv_block.5} parent=11 // pred_check
        %p121 = pneg %p77
      $region18: #{conv_block.5} parent=11 // pred_check_branch
        %123 = sbr.rel (%p121) target = $region20
      $region19: #{conv_block.5} parent=11 // pred_region
        _
      $region20: #{conv_block.5} parent=11 // pred_fallthru
        _
    $region12: #{conv_block.5} parent=5 // pred_fallthru
      _
    %p124 = scmp.lt.s32.totalorder %s9, 2
    // Predicated region
    $region21: #{conv_block.5} parent=5 // pred_check
      %p125 = pneg %p124
    $region22: #{conv_block.5} parent=5 // pred_check_branch
      %127 = sbr.rel (%p125) target = $region24
    $region23: #{conv_block.5} parent=5 // pred_region
      // Predicated region
      $region25: #{conv_block.5} parent=23 // pred_check
        %p128 = pneg %p29
      $region26: #{conv_block.5} parent=23 // pred_check_branch
        %130 = sbr.rel (%p128) target = $region28
      $region27: #{conv_block.5} parent=23 // pred_region
        %s131 = smul.u32 32, %s9
        %p132 = scmp.lt.s32.totalorder %s131, 63
        %s133 = scalar_select %p132, %s131, 63
        %s134 = smul.addr %s133, 8
        %s135 = scalar_lea.vmem %s0, %s134
        %s136 = smul.u32 32, %s9
      $region28: #{conv_block.5} parent=23 // pred_fallthru
        _
    $region24: #{conv_block.5} parent=5 // pred_fallthru
      _
    %p137 = scmp.le.s32.totalorder 1, %s9
    %p138 = scmp.lt.s32.totalorder %s9, 3
    %p139 = pnand %p137, %p138
    %p140 = pneg %p139
    // Predicated region
    $region29: #{conv_block.5} parent=5 // pred_check
      _
    $region30: #{conv_block.5} parent=5 // pred_check_branch
      %142 = sbr.rel (%p139) target = $region32
    $region31: #{conv_block.5} parent=5 // pred_region
      %s143 = ssub.s32 %s9, 1
      %s144 = smul.u32 32, %s14
      %p145 = scmp.lt.s32.totalorder %s144, 63
      %s146 = scalar_select %p145, %s144, 63
      %s147 = smul.addr %s146, 8
      %s148 = scalar_lea.vmem %s0, %s147
      %p149 = pneg %p35
      %p150 = pneg %p32
      %p151 = pneg %p56
      %p152 = pneg %p53
      %p153 = pneg %p77
      %p154 = pneg %p74
      %p155 = pneg %p103
      %p156 = pneg %p100
      %s157 = smul.u32 32, %s14
      %p158 = scmp.lt.s32.totalorder %s157, 63
      %s159 = scalar_select %p158, %s157, 63
      %s160 = smul.addr %s159, 8
      %s161 = scalar_lea.vmem %s3, %s160
      %s162 = smul.u32 32, %s14
      %p163 = scmp.lt.s32.totalorder %s162, 63
      %s164 = scalar_select %p163, %s162, 63
      %s165 = smul.addr %s164, 8
      %s166 = scalar_lea.vmem %s0, %s165
      %s167 = smul.u32 32, %s14
      %s168 = smul.u32 32, %s14
      %p169 = scmp.lt.s32.totalorder %s168, 63
      %s170 = scalar_select %p169, %s168, 63
      %s171 = smul.addr %s170, 8
      %s172 = scalar_lea.vmem %s3, %s171
      %s173 = smul.u32 32, %s14
      %v174 = vld [vmem:[%s166] sm:$0xff]
      %v175 = vld [vmem:[%s166 + $0x8] sm:$0xff]
      %v176 = vld [vmem:[%s166 + $0x10] sm:$0xff]
      %v177 = vld [vmem:[%s166 + $0x18] sm:$0xff]
      %v178 = vld [vmem:[%s166 + $0x20] sm:$0xff]
      %v179 = vld [vmem:[%s166 + $0x28] sm:$0xff]
      %v180 = vld [vmem:[%s166 + $0x30] sm:$0xff]
      %v181 = vld [vmem:[%s166 + $0x38] sm:$0xff]
      %v182 = vld [vmem:[%s166 + $0x40] sm:$0xff]
      %v183 = vld [vmem:[%s166 + $0x48] sm:$0xff]
      %v184 = vld [vmem:[%s166 + $0x50] sm:$0xff]
      %v185 = vld [vmem:[%s166 + $0x58] sm:$0xff]
      %v186 = vld [vmem:[%s166 + $0x60] sm:$0xff]
      %v187 = vld [vmem:[%s166 + $0x68] sm:$0xff]
      %v188 = vld [vmem:[%s166 + $0x70] sm:$0xff]
      %v189 = vld [vmem:[%s166 + $0x78] sm:$0xff]
      %v190 = vld [vmem:[%s166 + $0x80] sm:$0xff]
      %v191 = vld [vmem:[%s166 + $0x88] sm:$0xff]
      %v192 = vld [vmem:[%s166 + $0x90] sm:$0xff]
      %v193 = vld [vmem:[%s166 + $0x98] sm:$0xff]
      %v194 = vld [vmem:[%s166 + $0xa0] sm:$0xff]
      %v195 = vld [vmem:[%s166 + $0xa8] sm:$0xff]
      %v196 = vld [vmem:[%s166 + $0xb0] sm:$0xff]
      %v197 = vld [vmem:[%s166 + $0xb8] sm:$0xff]
      %v198 = vld [vmem:[%s166 + $0xc0] sm:$0xff]
      %v199 = vld [vmem:[%s166 + $0xc8] sm:$0xff]
      %v200 = vld [vmem:[%s166 + $0xd0] sm:$0xff]
      %v201 = vld [vmem:[%s166 + $0xd8] sm:$0xff]
      %v202 = vld [vmem:[%s166 + $0xe0] sm:$0xff]
      %v203 = vld [vmem:[%s166 + $0xe8] sm:$0xff]
      %v204 = vld [vmem:[%s166 + $0xf0] sm:$0xff]
      %v205 = vld [vmem:[%s166 + $0xf8] sm:$0xff]
      %v206 = vld [vmem:[%s1] sm:$0x1]
      %v208 = vlaneseq
      %v209 = vshrl.u32 %v208, 7
      %v210 = vsub.s32 0, %v209
      %v211 = vrot.slane %v206, %v210
      %v213 = vmul.f32 %v174, %v211
      %v214 = vmul.f32 %v175, %v211
      %v215 = vmul.f32 %v176, %v211
      %v216 = vmul.f32 %v177, %v211
      %v217 = vmul.f32 %v178, %v211
      %v218 = vmul.f32 %v179, %v211
      %v219 = vmul.f32 %v180, %v211
      %v220 = vmul.f32 %v181, %v211
      %v221 = vmul.f32 %v182, %v211
      %v222 = vmul.f32 %v183, %v211
      %v223 = vmul.f32 %v184, %v211
      %v224 = vmul.f32 %v185, %v211
      %v225 = vmul.f32 %v186, %v211
      %v226 = vmul.f32 %v187, %v211
      %v227 = vmul.f32 %v188, %v211
      %v228 = vmul.f32 %v189, %v211
      %v229 = vmul.f32 %v190, %v211
      %v230 = vmul.f32 %v191, %v211
      %v231 = vmul.f32 %v192, %v211
      %v232 = vmul.f32 %v193, %v211
      %v233 = vmul.f32 %v194, %v211
      %v234 = vmul.f32 %v195, %v211
      %v235 = vmul.f32 %v196, %v211
      %v236 = vmul.f32 %v197, %v211
      %v237 = vmul.f32 %v198, %v211
      %v238 = vmul.f32 %v199, %v211
      %v239 = vmul.f32 %v200, %v211
      %v240 = vmul.f32 %v201, %v211
      %v241 = vmul.f32 %v202, %v211
      %v242 = vmul.f32 %v203, %v211
      %v243 = vmul.f32 %v204, %v211
      %v244 = vmul.f32 %v205, %v211
      %v245 = vld [vmem:[%s2] sm:$0x1]
      %v247 = vlaneseq
      %v248 = vshrl.u32 %v247, 7
      %v249 = vsub.s32 0, %v248
      %v250 = vrot.slane %v245, %v249
      %v252 = vadd.f32 %v213, %v250
      %v253 = vadd.f32 %v214, %v250
      %v254 = vadd.f32 %v215, %v250
      %v255 = vadd.f32 %v216, %v250
      %v256 = vadd.f32 %v217, %v250
      %v257 = vadd.f32 %v218, %v250
      %v258 = vadd.f32 %v219, %v250
      %v259 = vadd.f32 %v220, %v250
      %v260 = vadd.f32 %v221, %v250
      %v261 = vadd.f32 %v222, %v250
      %v262 = vadd.f32 %v223, %v250
      %v263 = vadd.f32 %v224, %v250
      %v264 = vadd.f32 %v225, %v250
      %v265 = vadd.f32 %v226, %v250
      %v266 = vadd.f32 %v227, %v250
      %v267 = vadd.f32 %v228, %v250
      %v268 = vadd.f32 %v229, %v250
      %v269 = vadd.f32 %v230, %v250
      %v270 = vadd.f32 %v231, %v250
      %v271 = vadd.f32 %v232, %v250
      %v272 = vadd.f32 %v233, %v250
      %v273 = vadd.f32 %v234, %v250
      %v274 = vadd.f32 %v235, %v250
      %v275 = vadd.f32 %v236, %v250
      %v276 = vadd.f32 %v237, %v250
      %v277 = vadd.f32 %v238, %v250
      %v278 = vadd.f32 %v239, %v250
      %v279 = vadd.f32 %v240, %v250
      %v280 = vadd.f32 %v241, %v250
      %v281 = vadd.f32 %v242, %v250
      %v282 = vadd.f32 %v243, %v250
      %v283 = vadd.f32 %v244, %v250
      %v284 = vmax.f32 %v252, 0.0
      %v285 = vmax.f32 %v253, 0.0
      %v286 = vmax.f32 %v254, 0.0
      %v287 = vmax.f32 %v255, 0.0
      %v288 = vmax.f32 %v256, 0.0
      %v289 = vmax.f32 %v257, 0.0
      %v290 = vmax.f32 %v258, 0.0
      %v291 = vmax.f32 %v259, 0.0
      %v292 = vmax.f32 %v260, 0.0
      %v293 = vmax.f32 %v261, 0.0
      %v294 = vmax.f32 %v262, 0.0
      %v295 = vmax.f32 %v263, 0.0
      %v296 = vmax.f32 %v264, 0.0
      %v297 = vmax.f32 %v265, 0.0
      %v298 = vmax.f32 %v266, 0.0
      %v299 = vmax.f32 %v267, 0.0
      %v300 = vmax.f32 %v268, 0.0
      %v301 = vmax.f32 %v269, 0.0
      %v302 = vmax.f32 %v270, 0.0
      %v303 = vmax.f32 %v271, 0.0
      %v304 = vmax.f32 %v272, 0.0
      %v305 = vmax.f32 %v273, 0.0
      %v306 = vmax.f32 %v274, 0.0
      %v307 = vmax.f32 %v275, 0.0
      %v308 = vmax.f32 %v276, 0.0
      %v309 = vmax.f32 %v277, 0.0
      %v310 = vmax.f32 %v278, 0.0
      %v311 = vmax.f32 %v279, 0.0
      %v312 = vmax.f32 %v280, 0.0
      %v313 = vmax.f32 %v281, 0.0
      %v314 = vmax.f32 %v282, 0.0
      %v315 = vmax.f32 %v283, 0.0
      %316 = vst [vmem:[%s172] sm:$0xff] %v284
      %317 = vst [vmem:[%s172 + $0x8] sm:$0xff] %v285
      %318 = vst [vmem:[%s172 + $0x10] sm:$0xff] %v286
      %319 = vst [vmem:[%s172 + $0x18] sm:$0xff] %v287
      %320 = vst [vmem:[%s172 + $0x20] sm:$0xff] %v288
      %321 = vst [vmem:[%s172 + $0x28] sm:$0xff] %v289
      %322 = vst [vmem:[%s172 + $0x30] sm:$0xff] %v290
      %323 = vst [vmem:[%s172 + $0x38] sm:$0xff] %v291
      %324 = vst [vmem:[%s172 + $0x40] sm:$0xff] %v292
      %325 = vst [vmem:[%s172 + $0x48] sm:$0xff] %v293
      %326 = vst [vmem:[%s172 + $0x50] sm:$0xff] %v294
      %327 = vst [vmem:[%s172 + $0x58] sm:$0xff] %v295
      %328 = vst [vmem:[%s172 + $0x60] sm:$0xff] %v296
      %329 = vst [vmem:[%s172 + $0x68] sm:$0xff] %v297
      %330 = vst [vmem:[%s172 + $0x70] sm:$0xff] %v298
      %331 = vst [vmem:[%s172 + $0x78] sm:$0xff] %v299
      %332 = vst [vmem:[%s172 + $0x80] sm:$0xff] %v300
      %333 = vst [vmem:[%s172 + $0x88] sm:$0xff] %v301
      %334 = vst [vmem:[%s172 + $0x90] sm:$0xff] %v302
      %335 = vst [vmem:[%s172 + $0x98] sm:$0xff] %v303
      %336 = vst [vmem:[%s172 + $0xa0] sm:$0xff] %v304
      %337 = vst [vmem:[%s172 + $0xa8] sm:$0xff] %v305
      %338 = vst [vmem:[%s172 + $0xb0] sm:$0xff] %v306
      %339 = vst [vmem:[%s172 + $0xb8] sm:$0xff] %v307
      %340 = vst [vmem:[%s172 + $0xc0] sm:$0xff] %v308
      %341 = vst [vmem:[%s172 + $0xc8] sm:$0xff] %v309
      %342 = vst [vmem:[%s172 + $0xd0] sm:$0xff] %v310
      %343 = vst [vmem:[%s172 + $0xd8] sm:$0xff] %v311
      %344 = vst [vmem:[%s172 + $0xe0] sm:$0xff] %v312
      %345 = vst [vmem:[%s172 + $0xe8] sm:$0xff] %v313
      %346 = vst [vmem:[%s172 + $0xf0] sm:$0xff] %v314
      %347 = vst [vmem:[%s172 + $0xf8] sm:$0xff] %v315
      %s348 = smul.u32 32, %s14
      %p349 = scmp.lt.s32.totalorder %s348, 63
      %s350 = scalar_select %p349, %s348, 63
      %s351 = smul.addr %s350, 8
      %s352 = scalar_lea.vmem %s3, %s351
      // Predicated region
      $region33: #{conv_block.5} parent=31 // pred_check
        %p353 = pneg %p100
      $region34: #{conv_block.5} parent=31 // pred_check_branch
        %355 = sbr.rel (%p353) target = $region36
      $region35: #{conv_block.5} parent=31 // pred_region
        %s356 = smul.u32 32, %s14
      $region36: #{conv_block.5} parent=31 // pred_fallthru
        _
    $region32: #{conv_block.5} parent=5 // pred_fallthru
      _
    %p357 = scmp.le.s32.totalorder 2, %s9
    // Predicated region
    $region37: #{conv_block.5} parent=5 // pred_check
      %p358 = pneg %p357
    $region38: #{conv_block.5} parent=5 // pred_check_branch
      %360 = sbr.rel (%p358) target = $region40
    $region39: #{conv_block.5} parent=5 // pred_region
      %s361 = ssub.s32 %s9, 2
      // Predicated region
      $region41: #{conv_block.5} parent=39 // pred_check
        %p362 = pneg %p106
      $region42: #{conv_block.5} parent=39 // pred_check_branch
        %364 = sbr.rel (%p362) target = $region44
      $region43: #{conv_block.5} parent=39 // pred_region
        %s365 = smul.u32 32, %s15
        %p366 = scmp.lt.s32.totalorder %s365, 63
        %s367 = scalar_select %p366, %s365, 63
        %s368 = smul.addr %s367, 8
        %s369 = scalar_lea.vmem %s3, %s368
      $region44: #{conv_block.5} parent=39 // pred_fallthru
        _
    $region40: #{conv_block.5} parent=5 // pred_fallthru
      _
  $region6: #{conv_block.5} parent=0 // loop_footer
    %s13 = sadd.s32 1, %s9
  $region7: #{conv_block.5} parent=0 // loop_footer_branch
    %8 = sbr.rel target = $region3
  $region8: #{conv_block.5} parent=0 // loop_exit
    _

// kernel: conv_block.4
$region0: #{conv_block.4}
  #allocation0 [shape = 'u32[]', space=smem, size = 0x4, offset = 0x4, fixed_abs, tag = 'smem constant byte address 0x4 - core index']
  #allocation1 [shape = 'u32[144,128]{1,0:T(1,128)}', space=vmem, size = 0x12000, scoped, tag = 'internal scratch']
  %s0 = inlined_call_operand.vmem [shape: bf16[2,16,18,4], index: 0, kind: input, shape index: {}]
  %s1 = inlined_call_operand.vmem [shape: bf16[2,16,18,4], index: 1, kind: input, shape index: {}]
  %s2 = inlined_call_operand.vmem [shape: bf16[2,16,18,4], index: 2, kind: input, shape index: {}]
  %s3 = inlined_call_operand.vmem [shape: bf16[3,3,4,128], index: 3, kind: input, shape index: {}]
  %s4 = inlined_call_operand.vmem [shape: f32[512,128], index: 4, kind: output, shape index: {0}]
  %s5 = inlined_call_operand.vmem [shape: f32[2,2,128], index: 5, kind: output, shape index: {1}]
  %6 = xla_tuple %s4, %s5
  %s7 = sld [smem:[#allocation0]]
  $region57: #{conv_block.4} parent=0
    _
  %s9 = ssub.s32 1, %s7
  %s10 = scalar_select 0, %s9, %s7
  loop: start=0, step=1, limit=4
  $region2: #{conv_block.4} parent=0 // loop_pre_header
    _
  $region3: #{conv_block.4} parent=0 // loop_header
    %s12 = sphi 0, %s16
    %p13 = scmp.ge.s32.totalorder %s12, 4
    %s19 = sphi 0, %s31
    %s20 = sphi 0, %s27
    %s21 = sphi 0, %s19
    %s22 = sphi 0, %s20
    %s23 = sphi 0, %s21
    %s24 = sphi 0, %s22
    %s36 = sphi 0, %s38
    %s39 = sphi 0, %s36
    %s40 = sphi 0, %s39
    %s56 = sphi 0, %s40
    %s64 = sphi 0, %s66
    %s67 = sphi 0, %s64
    %s68 = sphi 0, %s67
    %s84 = sphi 0, %s68
    %s92 = sphi 0, %s94
    %s95 = sphi 0, %s92
    %s96 = sphi 0, %s95
    %s112 = sphi 0, %s96
    %s116 = sphi 0, %s116
    %s118 = sphi 0, %s116
    %s119 = sphi 0, %s118
    %s133 = sphi 0, %s119
    %s141 = sphi 0, %s143
    %s144 = sphi 0, %s141
    %s145 = sphi 0, %s144
    %s161 = sphi 0, %s145
    %s169 = sphi 0, %s171
    %s172 = sphi 0, %s169
    %s173 = sphi 0, %s172
    %s189 = sphi 0, %s173
  $region4: #{conv_block.4} parent=0 // loop_header_branch
    %15 = sbr.rel (%p13) target = $region8
  $region5: #{conv_block.4} parent=0 // loop_body
    %s17 = ssub.s32 %s12, 1
    %s18 = ssub.s32 %s12, 2
    %s25 = sadd.s32 1, %s20
    %p26 = scmp.ge.s32.totalorder %s25, 1
    %s27 = scalar_select %p26, 0, %s25
    %s28 = sadd.s32 1, %s19
    %s29 = scalar_select %p26, %s28, %s19
    %p30 = scmp.ge.s32.totalorder %s29, 2
    %s31 = scalar_select %p30, 0, %s29
    %s32 = ssub.s32 %s19, %s31
    %s33 = ssub.s32 %s20, %s27
    %s34 = sor.u32 %s32, %s33
    %p35 = scmp.eq.s32.totalorder %s34, 0
    %s37 = sadd.s32 %s36, 1
    %s38 = scalar_select %p35, %s36, %s37
    %p41 = pneg %p35
    %p42 = scmp.eq.s32.totalorder %s12, 1
    %p43 = por %p41, %p42
    %p44 = scmp.ne.s32.totalorder %s36, %s39
    %p45 = scmp.eq.s32.totalorder %s12, 0
    %p46 = por %p44, %p45
    %p47 = scmp.ne.s32.totalorder %s36, %s39
    %p48 = scmp.eq.s32.totalorder %s17, 1
    %p49 = por %p47, %p48
    %p50 = scmp.ne.s32.totalorder %s39, %s40
    %p51 = scmp.eq.s32.totalorder %s17, 0
    %p52 = por %p50, %p51
    %p53 = scmp.ne.s32.totalorder %s39, %s40
    %p54 = scmp.eq.s32.totalorder %s18, 1
    %p55 = por %p53, %p54
    %p57 = scmp.ne.s32.totalorder %s40, %s56
    %p58 = scmp.eq.s32.totalorder %s18, 0
    %p59 = por %p57, %p58
    %s60 = ssub.s32 %s19, %s31
    %s61 = ssub.s32 %s20, %s27
    %s62 = sor.u32 %s60, %s61
    %p63 = scmp.eq.s32.totalorder %s62, 0
    %s65 = sadd.s32 %s64, 1
    %s66 = scalar_select %p63, %s64, %s65
    %p69 = pneg %p63
    %p70 = scmp.eq.s32.totalorder %s12, 1
    %p71 = por %p69, %p70
    %p72 = scmp.ne.s32.totalorder %s64, %s67
    %p73 = scmp.eq.s32.totalorder %s12, 0
    %p74 = por %p72, %p73
    %p75 = scmp.ne.s32.totalorder %s64, %s67
    %p76 = scmp.eq.s32.totalorder %s17, 1
    %p77 = por %p75, %p76
    %p78 = scmp.ne.s32.totalorder %s67, %s68
    %p79 = scmp.eq.s32.totalorder %s17, 0
    %p80 = por %p78, %p79
    %p81 = scmp.ne.s32.totalorder %s67, %s68
    %p82 = scmp.eq.s32.totalorder %s18, 1
    %p83 = por %p81, %p82
    %p85 = scmp.ne.s32.totalorder %s68, %s84
    %p86 = scmp.eq.s32.totalorder %s18, 0
    %p87 = por %p85, %p86
    %s88 = ssub.s32 %s19, %s31
    %s89 = ssub.s32 %s20, %s27
    %s90 = sor.u32 %s88, %s89
    %p91 = scmp.eq.s32.totalorder %s90, 0
    %s93 = sadd.s32 %s92, 1
    %s94 = scalar_select %p91, %s92, %s93
    %p97 = pneg %p91
    %p98 = scmp.eq.s32.totalorder %s12, 1
    %p99 = por %p97, %p98
    %p100 = scmp.ne.s32.totalorder %s92, %s95
    %p101 = scmp.eq.s32.totalorder %s12, 0
    %p102 = por %p100, %p101
    %p103 = scmp.ne.s32.totalorder %s92, %s95
    %p104 = scmp.eq.s32.totalorder %s17, 1
    %p105 = por %p103, %p104
    %p106 = scmp.ne.s32.totalorder %s95, %s96
    %p107 = scmp.eq.s32.totalorder %s17, 0
    %p108 = por %p106, %p107
    %p109 = scmp.ne.s32.totalorder %s95, %s96
    %p110 = scmp.eq.s32.totalorder %s18, 1
    %p111 = por %p109, %p110
    %p113 = scmp.ne.s32.totalorder %s96, %s112
    %p114 = scmp.eq.s32.totalorder %s18, 0
    %p115 = por %p113, %p114
    %s117 = sadd.s32 %s116, 1
    %p120 = scmp.eq.s32.totalorder %s12, 1
    %p121 = scmp.ne.s32.totalorder %s116, %s118
    %p122 = scmp.eq.s32.totalorder %s12, 0
    %p123 = por %p121, %p122
    %p124 = scmp.ne.s32.totalorder %s116, %s118
    %p125 = scmp.eq.s32.totalorder %s17, 1
    %p126 = por %p124, %p125
    %p127 = scmp.ne.s32.totalorder %s118, %s119
    %p128 = scmp.eq.s32.totalorder %s17, 0
    %p129 = por %p127, %p128
    %p130 = scmp.ne.s32.totalorder %s118, %s119
    %p131 = scmp.eq.s32.totalorder %s18, 1
    %p132 = por %p130, %p131
    %p134 = scmp.ne.s32.totalorder %s119, %s133
    %p135 = scmp.eq.s32.totalorder %s18, 0
    %p136 = por %p134, %p135
    %s137 = sadd.s32 %s19, %s20
    %s138 = sadd.s32 %s31, %s27
    %s139 = ssub.s32 %s137, %s138
    %p140 = scmp.eq.s32.totalorder %s139, 0
    %s142 = sadd.s32 %s141, 1
    %s143 = scalar_select %p140, %s141, %s142
    %p146 = pneg %p140
    %p147 = scmp.eq.s32.totalorder %s12, 1
    %p148 = por %p146, %p147
    %p149 = scmp.ne.s32.totalorder %s141, %s144
    %p150 = scmp.eq.s32.totalorder %s12, 0
    %p151 = por %p149, %p150
    %p152 = scmp.ne.s32.totalorder %s141, %s144
    %p153 = scmp.eq.s32.totalorder %s17, 1
    %p154 = por %p152, %p153
    %p155 = scmp.ne.s32.totalorder %s144, %s145
    %p156 = scmp.eq.s32.totalorder %s17, 0
    %p157 = por %p155, %p156
    %p158 = scmp.ne.s32.totalorder %s144, %s145
    %p159 = scmp.eq.s32.totalorder %s18, 1
    %p160 = por %p158, %p159
    %p162 = scmp.ne.s32.totalorder %s145, %s161
    %p163 = scmp.eq.s32.totalorder %s18, 0
    %p164 = por %p162, %p163
    %s165 = sadd.s32 %s19, %s20
    %s166 = sadd.s32 %s31, %s27
    %s167 = ssub.s32 %s165, %s166
    %p168 = scmp.eq.s32.totalorder %s167, 0
    %s170 = sadd.s32 %s169, 1
    %s171 = scalar_select %p168, %s169, %s170
    %p174 = pneg %p168
    %p175 = scmp.eq.s32.totalorder %s12, 1
    %p176 = por %p174, %p175
    %p177 = scmp.ne.s32.totalorder %s169, %s172
    %p178 = scmp.eq.s32.totalorder %s12, 0
    %p179 = por %p177, %p178
    %p180 = scmp.ne.s32.totalorder %s169, %s172
    %p181 = scmp.eq.s32.totalorder %s17, 1
    %p182 = por %p180, %p181
    %p183 = scmp.ne.s32.totalorder %s172, %s173
    %p184 = scmp.eq.s32.totalorder %s17, 0
    %p185 = por %p183, %p184
    %p186 = scmp.ne.s32.totalorder %s172, %s173
    %p187 = scmp.eq.s32.totalorder %s18, 1
    %p188 = por %p186, %p187
    %p190 = scmp.ne.s32.totalorder %s173, %s189
    %p191 = scmp.eq.s32.totalorder %s18, 0
    %p192 = por %p190, %p191
    %p193 = scmp.le.s32.totalorder 1, %s12
    %p194 = scmp.lt.s32.totalorder %s12, 3
    %p195 = pnand %p193, %p194
    %p196 = pneg %p195
    // Predicated region
    $region9: #{conv_block.4} parent=5 // pred_check
      _
    $region10: #{conv_block.4} parent=5 // pred_check_branch
      %198 = sbr.rel (%p195) target = $region12
    $region11: #{conv_block.4} parent=5 // pred_region
      %s199 = ssub.s32 %s12, 1
      // Predicated region
      $region13: #{conv_block.4} parent=11 // pred_check
        %p200 = pneg %p129
      $region14: #{conv_block.4} parent=11 // pred_check_branch
        %202 = sbr.rel (%p200) target = $region16
      $region15: #{conv_block.4} parent=11 // pred_region
        _
      $region16: #{conv_block.4} parent=11 // pred_fallthru
        _
    $region12: #{conv_block.4} parent=5 // pred_fallthru
      _
    %p203 = scmp.lt.s32.totalorder %s12, 2
    // Predicated region
    $region17: #{conv_block.4} parent=5 // pred_check
      %p204 = pneg %p203
    $region18: #{conv_block.4} parent=5 // pred_check_branch
      %206 = sbr.rel (%p204) target = $region20
    $region19: #{conv_block.4} parent=5 // pred_region
      // Predicated region
      $region21: #{conv_block.4} parent=19 // pred_check
        %p207 = pneg %p46
      $region22: #{conv_block.4} parent=19 // pred_check_branch
        %209 = sbr.rel (%p207) target = $region24
      $region23: #{conv_block.4} parent=19 // pred_region
        %s210 = smul.u32 16, %s20
        %p211 = scmp.lt.s32.totalorder %s19, 1
        %s212 = scalar_select %p211, %s19, 1
        %p213 = scmp.lt.s32.totalorder %s210, 15
        %s214 = scalar_select %p213, %s210, 15
        %s215 = smul.addr %s214, 3
        %s216 = smul.addr %s212, 48
        %s217 = sadd.s32 %s215, %s216
        %s218 = smul.addr %s217, 4
        %s219 = scalar_lea.vmem %s0, %s218
        %s220 = smul.u32 16, %s20
      $region24: #{conv_block.4} parent=19 // pred_fallthru
        _
      // Predicated region
      $region25: #{conv_block.4} parent=19 // pred_check
        %p221 = pneg %p74
      $region26: #{conv_block.4} parent=19 // pred_check_branch
        %223 = sbr.rel (%p221) target = $region28
      $region27: #{conv_block.4} parent=19 // pred_region
        %s224 = smul.u32 16, %s20
        %p225 = scmp.lt.s32.totalorder %s19, 1
        %s226 = scalar_select %p225, %s19, 1
        %p227 = scmp.lt.s32.totalorder %s224, 15
        %s228 = scalar_select %p227, %s224, 15
        %s229 = smul.addr %s228, 3
        %s230 = smul.addr %s226, 48
        %s231 = sadd.s32 %s229, %s230
        %s232 = smul.addr %s231, 4
        %s233 = scalar_lea.vmem %s1, %s232
        %s234 = smul.u32 16, %s20
      $region28: #{conv_block.4} parent=19 // pred_fallthru
        _
      // Predicated region
      $region29: #{conv_block.4} parent=19 // pred_check
        %p235 = pneg %p102
      $region30: #{conv_block.4} parent=19 // pred_check_branch
        %237 = sbr.rel (%p235) target = $region32
      $region31: #{conv_block.4} parent=19 // pred_region
        %s238 = smul.u32 16, %s20
        %p239 = scmp.lt.s32.totalorder %s19, 1
        %s240 = scalar_select %p239, %s19, 1
        %p241 = scmp.lt.s32.totalorder %s238, 15
        %s242 = scalar_select %p241, %s238, 15
        %s243 = smul.addr %s242, 3
        %s244 = smul.addr %s240, 48
        %s245 = sadd.s32 %s243, %s244
        %s246 = smul.addr %s245, 4
        %s247 = scalar_lea.vmem %s2, %s246
        %s248 = smul.u32 16, %s20
      $region32: #{conv_block.4} parent=19 // pred_fallthru
        _
    $region20: #{conv_block.4} parent=5 // pred_fallthru
      _
    %p249 = scmp.le.s32.totalorder 1, %s12
    %p250 = scmp.lt.s32.totalorder %s12, 3
    %p251 = pnand %p249, %p250
    %p252 = pneg %p251
    // Predicated region
    $region33: #{conv_block.4} parent=5 // pred_check
      _
    $region34: #{conv_block.4} parent=5 // pred_check_branch
      %254 = sbr.rel (%p251) target = $region36
    $region35: #{conv_block.4} parent=5 // pred_region
      %s255 = ssub.s32 %s12, 1
      %s256 = smul.u32 16, %s22
      %p257 = scmp.lt.s32.totalorder %s21, 1
      %s258 = scalar_select %p257, %s21, 1
      %p259 = scmp.lt.s32.totalorder %s256, 15
      %s260 = scalar_select %p259, %s256, 15
      %s261 = smul.addr %s260, 3
      %s262 = smul.addr %s258, 48
      %s263 = sadd.s32 %s261, %s262
      %s264 = smul.addr %s263, 4
      %s265 = scalar_lea.vmem %s0, %s264
      %p266 = pneg %p52
      %p267 = pneg %p49
      %s268 = smul.u32 16, %s22
      %p269 = scmp.lt.s32.totalorder %s21, 1
      %s270 = scalar_select %p269, %s21, 1
      %p271 = scmp.lt.s32.totalorder %s268, 15
      %s272 = scalar_select %p271, %s268, 15
      %s273 = smul.addr %s272, 3
      %s274 = smul.addr %s270, 48
      %s275 = sadd.s32 %s273, %s274
      %s276 = smul.addr %s275, 4
      %s277 = scalar_lea.vmem %s1, %s276
      %p278 = pneg %p80
      %p279 = pneg %p77
      %s280 = smul.u32 16, %s22
      %p281 = scmp.lt.s32.totalorder %s21, 1
      %s282 = scalar_select %p281, %s21, 1
      %p283 = scmp.lt.s32.totalorder %s280, 15
      %s284 = scalar_select %p283, %s280, 15
      %s285 = smul.addr %s284, 3
      %s286 = smul.addr %s282, 48
      %s287 = sadd.s32 %s285, %s286
      %s288 = smul.addr %s287, 4
      %s289 = scalar_lea.vmem %s2, %s288
      %p290 = pneg %p108
      %p291 = pneg %p105
      %p292 = pneg %p129
      %p293 = pneg %p126
      %p294 = pneg %p157
      %p295 = pneg %p154
      %s296 = sadd.s32 %s21, %s22
      %s297 = smul.u32 32, %s296
      %p298 = scmp.lt.s32.totalorder %s297, 63
      %s299 = scalar_select %p298, %s297, 63
      %s300 = smul.addr %s299, 8
      %s301 = scalar_lea.vmem %s4, %s300
      %p302 = pneg %p185
      %p303 = pneg %p182
      %s304 = sadd.s32 %s21, %s22
      %p305 = scmp.lt.s32.totalorder %s304, 1
      %s306 = scalar_select %p305, %s304, 1
      %s307 = smul.addr %s306, 2
      %s308 = scalar_lea.vmem %s5, %s307
      %s309 = smul.u32 16, %s22
      %p310 = scmp.lt.s32.totalorder %s21, 1
      %s311 = scalar_select %p310, %s21, 1
      %p312 = scmp.lt.s32.totalorder %s309, 15
      %s313 = scalar_select %p312, %s309, 15
      %s314 = smul.addr %s313, 3
      %s315 = smul.addr %s311, 48
      %s316 = sadd.s32 %s314, %s315
      %s317 = smul.addr %s316, 4
      %s318 = scalar_lea.vmem %s0, %s317
      %s319 = smul.u32 16, %s22
      %s320 = smul.u32 16, %s22
      %p321 = scmp.lt.s32.totalorder %s21, 1
      %s322 = scalar_select %p321, %s21, 1
      %p323 = scmp.lt.s32.totalorder %s320, 15
      %s324 = scalar_select %p323, %s320, 15
      %s325 = smul.addr %s324, 3
      %s326 = smul.addr %s322, 48
      %s327 = sadd.s32 %s325, %s326
      %s328 = smul.addr %s327, 4
      %s329 = scalar_lea.vmem %s1, %s328
      %s330 = smul.u32 16, %s22
      %s331 = smul.u32 16, %s22
      %p332 = scmp.lt.s32.totalorder %s21, 1
      %s333 = scalar_select %p332, %s21, 1
      %p334 = scmp.lt.s32.totalorder %s331, 15
      %s335 = scalar_select %p334, %s331, 15
      %s336 = smul.addr %s335, 3
      %s337 = smul.addr %s333, 48
      %s338 = sadd.s32 %s336, %s337
      %s339 = smul.addr %s338, 4
      %s340 = scalar_lea.vmem %s2, %s339
      %s341 = smul.u32 16, %s22
      %s342 = sadd.s32 %s21, %s22
      %s343 = smul.u32 32, %s342
      %p344 = scmp.lt.s32.totalorder %s343, 63
      %s345 = scalar_select %p344, %s343, 63
      %s346 = smul.addr %s345, 8
      %s347 = scalar_lea.vmem %s4, %s346
      %s348 = sadd.s32 %s21, %s22
      %s349 = smul.u32 32, %s348
      %s350 = sadd.s32 %s21, %s22
      %p351 = scmp.lt.s32.totalorder %s350, 1
      %s352 = scalar_select %p351, %s350, 1
      %s353 = smul.addr %s352, 2
      %s354 = scalar_lea.vmem %s5, %s353
      %s355 = sadd.s32 %s21, %s22
      %v357 = vld [vmem:[%s318] sm:$0xf]
      %v358 = vld [vmem:[%s318 + $0x4] sm:$0xf]
      %v359 = vld [vmem:[%s318 + $0x8] sm:$0x1]
      %v360 = vld [vmem:[%s318 + $0xc] sm:$0xf]
      %v361 = vld [vmem:[%s318 + $0x10] sm:$0xf]
      %v362 = vld [vmem:[%s318 + $0x14] sm:$0x1]
      %v363 = vld [vmem:[%s318 + $0x18] sm:$0xf]
      %v364 = vld [vmem:[%s318 + $0x1c] sm:$0xf]
      %v365 = vld [vmem:[%s318 + $0x20] sm:$0x1]
      %v366 = vld [vmem:[%s318 + $0x24] sm:$0xf]
      %v367 = vld [vmem:[%s318 + $0x28] sm:$0xf]
      %v368 = vld [vmem:[%s318 + $0x2c] sm:$0x1]
      %v369 = vld [vmem:[%s318 + $0x30] sm:$0xf]
      %v370 = vld [vmem:[%s318 + $0x34] sm:$0xf]
      %v371 = vld [vmem:[%s318 + $0x38] sm:$0x1]
      %v372 = vld [vmem:[%s318 + $0x3c] sm:$0xf]
      %v373 = vld [vmem:[%s318 + $0x40] sm:$0xf]
      %v374 = vld [vmem:[%s318 + $0x44] sm:$0x1]
      %v375 = vld [vmem:[%s318 + $0x48] sm:$0xf]
      %v376 = vld [vmem:[%s318 + $0x4c] sm:$0xf]
      %v377 = vld [vmem:[%s318 + $0x50] sm:$0x1]
      %v378 = vld [vmem:[%s318 + $0x54] sm:$0xf]
      %v379 = vld [vmem:[%s318 + $0x58] sm:$0xf]
      %v380 = vld [vmem:[%s318 + $0x5c] sm:$0x1]
      %v381 = vld [vmem:[%s318 + $0x60] sm:$0xf]
      %v382 = vld [vmem:[%s318 + $0x64] sm:$0xf]
      %v383 = vld [vmem:[%s318 + $0x68] sm:$0x1]
      %v384 = vld [vmem:[%s318 + $0x6c] sm:$0xf]
      %v385 = vld [vmem:[%s318 + $0x70] sm:$0xf]
      %v386 = vld [vmem:[%s318 + $0x74] sm:$0x1]
      %v387 = vld [vmem:[%s318 + $0x78] sm:$0xf]
      %v388 = vld [vmem:[%s318 + $0x7c] sm:$0xf]
      %v389 = vld [vmem:[%s318 + $0x80] sm:$0x1]
      %v390 = vld [vmem:[%s318 + $0x84] sm:$0xf]
      %v391 = vld [vmem:[%s318 + $0x88] sm:$0xf]
      %v392 = vld [vmem:[%s318 + $0x8c] sm:$0x1]
      %v393 = vld [vmem:[%s318 + $0x90] sm:$0xf]
      %v394 = vld [vmem:[%s318 + $0x94] sm:$0xf]
      %v395 = vld [vmem:[%s318 + $0x98] sm:$0x1]
      %v396 = vld [vmem:[%s318 + $0x9c] sm:$0xf]
      %v397 = vld [vmem:[%s318 + $0xa0] sm:$0xf]
      %v398 = vld [vmem:[%s318 + $0xa4] sm:$0x1]
      %v399 = vld [vmem:[%s318 + $0xa8] sm:$0xf]
      %v400 = vld [vmem:[%s318 + $0xac] sm:$0xf]
      %v401 = vld [vmem:[%s318 + $0xb0] sm:$0x1]
      %v402 = vld [vmem:[%s318 + $0xb4] sm:$0xf]
      %v403 = vld [vmem:[%s318 + $0xb8] sm:$0xf]
      %v404 = vld [vmem:[%s318 + $0xbc] sm:$0x1]
      %v405 = vld [vmem:[%s3] sm:$0x3]
      %vm406 = vsmask.f32 3328
      %vm407 = vsmask.f32 7440
      %vm408 = vmor %vm406, %vm407
      %v410 = vshrl.u32 %v357, 16
      %v412 = vrot.slane %v410, 4
      %v413 = vshll.u32 %v357, 16
      %v415 = vrot.slane %v413, 5
      %v416 = vor.u32 %v412, %v415
      %v417 = vrot.slane %v416, 4
      %v419 = vshll.u32 %v358, 16
      %v421 = vrot.slane %v419, 5
      %v422 = vsel %vm408, %v417, %v421
      %v423 = vshrl.u32 %v358, 16
      %v425 = vrot.slane %v423, 4
      %v426 = vor.u32 %v425, %v421
      %v427 = vrot.slane %v426, 4
      %v429 = vshll.u32 %v359, 16
      %v431 = vrot.slane %v429, 5
      %v432 = vsel %vm408, %v427, %v431
      %v434 = vshrl.u32 %v360, 16
      %v436 = vrot.slane %v434, 4
      %v437 = vshll.u32 %v360, 16
      %v439 = vrot.slane %v437, 5
      %v440 = vor.u32 %v436, %v439
      %v441 = vrot.slane %v440, 4
      %v443 = vshll.u32 %v361, 16
      %v445 = vrot.slane %v443, 5
      %v446 = vsel %vm408, %v441, %v445
      %v447 = vshrl.u32 %v361, 16
      %v449 = vrot.slane %v447, 4
      %v450 = vor.u32 %v449, %v445
      %v451 = vrot.slane %v450, 4
      %v453 = vshll.u32 %v362, 16
      %v455 = vrot.slane %v453, 5
      %v456 = vsel %vm408, %v451, %v455
      %v458 = vshrl.u32 %v363, 16
      %v460 = vrot.slane %v458, 4
      %v461 = vshll.u32 %v363, 16
      %v463 = vrot.slane %v461, 5
      %v464 = vor.u32 %v460, %v463
      %v465 = vrot.slane %v464, 4
      %v467 = vshll.u32 %v364, 16
      %v469 = vrot.slane %v467, 5
      %v470 = vsel %vm408, %v465, %v469
      %v471 = vshrl.u32 %v364, 16
      %v473 = vrot.slane %v471, 4
      %v474 = vor.u32 %v473, %v469
      %v475 = vrot.slane %v474, 4
      %v477 = vshll.u32 %v365, 16
      %v479 = vrot.slane %v477, 5
      %v480 = vsel %vm408, %v475, %v479
      %v482 = vshrl.u32 %v366, 16
      %v484 = vrot.slane %v482, 4
      %v485 = vshll.u32 %v366, 16
      %v487 = vrot.slane %v485, 5
      %v488 = vor.u32 %v484, %v487
      %v489 = vrot.slane %v488, 4
      %v491 = vshll.u32 %v367, 16
      %v493 = vrot.slane %v491, 5
      %v494 = vsel %vm408, %v489, %v493
      %v495 = vshrl.u32 %v367, 16
      %v497 = vrot.slane %v495, 4
      %v498 = vor.u32 %v497, %v493
      %v499 = vrot.slane %v498, 4
      %v501 = vshll.u32 %v368, 16
      %v503 = vrot.slane %v501, 5
      %v504 = vsel %vm408, %v499, %v503
      %v506 = vshrl.u32 %v369, 16
      %v508 = vrot.slane %v506, 4
      %v509 = vshll.u32 %v369, 16
      %v511 = vrot.slane %v509, 5
      %v512 = vor.u32 %v508, %v511
      %v513 = vrot.slane %v512, 4
      %v515 = vshll.u32 %v370, 16
      %v517 = vrot.slane %v515, 5
      %v518 = vsel %vm408, %v513, %v517
      %v519 = vshrl.u32 %v370, 16
      %v521 = vrot.slane %v519, 4
      %v522 = vor.u32 %v521, %v517
      %v523 = vrot.slane %v522, 4
      %v525 = vshll.u32 %v371, 16
      %v527 = vrot.slane %v525, 5
      %v528 = vsel %vm408, %v523, %v527
      %v530 = vshrl.u32 %v372, 16
      %v532 = vrot.slane %v530, 4
      %v533 = vshll.u32 %v372, 16
      %v535 = vrot.slane %v533, 5
      %v536 = vor.u32 %v532, %v535
      %v537 = vrot.slane %v536, 4
      %v539 = vshll.u32 %v373, 16
      %v541 = vrot.slane %v539, 5
      %v542 = vsel %vm408, %v537, %v541
      %v543 = vshrl.u32 %v373, 16
      %v545 = vrot.slane %v543, 4
      %v546 = vor.u32 %v545, %v541
      %v547 = vrot.slane %v546, 4
      %v549 = vshll.u32 %v374, 16
      %v551 = vrot.slane %v549, 5
      %v552 = vsel %vm408, %v547, %v551
      %v554 = vshrl.u32 %v375, 16
      %v556 = vrot.slane %v554, 4
      %v557 = vshll.u32 %v375, 16
      %v559 = vrot.slane %v557, 5
      %v560 = vor.u32 %v556, %v559
      %v561 = vrot.slane %v560, 4
      %v563 = vshll.u32 %v376, 16
      %v565 = vrot.slane %v563, 5
      %v566 = vsel %vm408, %v561, %v565
      %v567 = vshrl.u32 %v376, 16
      %v569 = vrot.slane %v567, 4
      %v570 = vor.u32 %v569, %v565
      %v571 = vrot.slane %v570, 4
      %v573 = vshll.u32 %v377, 16
      %v575 = vrot.slane %v573, 5
      %v576 = vsel %vm408, %v571, %v575
      %v578 = vshrl.u32 %v378, 16
      %v580 = vrot.slane %v578, 4
      %v581 = vshll.u32 %v378, 16
      %v583 = vrot.slane %v581, 5
      %v584 = vor.u32 %v580, %v583
      %v585 = vrot.slane %v584, 4
      %v587 = vshll.u32 %v379, 16
      %v589 = vrot.slane %v587, 5
      %v590 = vsel %vm408, %v585, %v589
      %v591 = vshrl.u32 %v379, 16
      %v593 = vrot.slane %v591, 4
      %v594 = vor.u32 %v593, %v589
      %v595 = vrot.slane %v594, 4
      %v597 = vshll.u32 %v380, 16
      %v599 = vrot.slane %v597, 5
      %v600 = vsel %vm408, %v595, %v599
      %v602 = vshrl.u32 %v381, 16
      %v604 = vrot.slane %v602, 4
      %v605 = vshll.u32 %v381, 16
      %v607 = vrot.slane %v605, 5
      %v608 = vor.u32 %v604, %v607
      %v609 = vrot.slane %v608, 4
      %v611 = vshll.u32 %v382, 16
      %v613 = vrot.slane %v611, 5
      %v614 = vsel %vm408, %v609, %v613
      %v615 = vshrl.u32 %v382, 16
      %v617 = vrot.slane %v615, 4
      %v618 = vor.u32 %v617, %v613
      %v619 = vrot.slane %v618, 4
      %v621 = vshll.u32 %v383, 16
      %v623 = vrot.slane %v621, 5
      %v624 = vsel %vm408, %v619, %v623
      %v626 = vshrl.u32 %v384, 16
      %v628 = vrot.slane %v626, 4
      %v629 = vshll.u32 %v384, 16
      %v631 = vrot.slane %v629, 5
      %v632 = vor.u32 %v628, %v631
      %v633 = vrot.slane %v632, 4
      %v635 = vshll.u32 %v385, 16
      %v637 = vrot.slane %v635, 5
      %v638 = vsel %vm408, %v633, %v637
      %v639 = vshrl.u32 %v385, 16
      %v641 = vrot.slane %v639, 4
      %v642 = vor.u32 %v641, %v637
      %v643 = vrot.slane %v642, 4
      %v645 = vshll.u32 %v386, 16
      %v647 = vrot.slane %v645, 5
      %v648 = vsel %vm408, %v643, %v647
      %v650 = vshrl.u32 %v387, 16
      %v652 = vrot.slane %v650, 4
      %v653 = vshll.u32 %v387, 16
      %v655 = vrot.slane %v653, 5
      %v656 = vor.u32 %v652, %v655
      %v657 = vrot.slane %v656, 4
      %v659 = vshll.u32 %v388, 16
      %v661 = vrot.slane %v659, 5
      %v662 = vsel %vm408, %v657, %v661
      %v663 = vshrl.u32 %v388, 16
      %v665 = vrot.slane %v663, 4
      %v666 = vor.u32 %v665, %v661
      %v667 = vrot.slane %v666, 4
      %v669 = vshll.u32 %v389, 16
      %v671 = vrot.slane %v669, 5
      %v672 = vsel %vm408, %v667, %v671
      %v674 = vshrl.u32 %v390, 16
      %v676 = vrot.slane %v674, 4
      %v677 = vshll.u32 %v390, 16
      %v679 = vrot.slane %v677, 5
      %v680 = vor.u32 %v676, %v679
      %v681 = vrot.slane %v680, 4
      %v683 = vshll.u32 %v391, 16
      %v685 = vrot.slane %v683, 5
      %v686 = vsel %vm408, %v681, %v685
      %v687 = vshrl.u32 %v391, 16
      %v689 = vrot.slane %v687, 4
      %v690 = vor.u32 %v689, %v685
      %v691 = vrot.slane %v690, 4
      %v693 = vshll.u32 %v392, 16
      %v695 = vrot.slane %v693, 5
      %v696 = vsel %vm408, %v691, %v695
      %v698 = vshrl.u32 %v393, 16
      %v700 = vrot.slane %v698, 4
      %v701 = vshll.u32 %v393, 16
      %v703 = vrot.slane %v701, 5
      %v704 = vor.u32 %v700, %v703
      %v705 = vrot.slane %v704, 4
      %v707 = vshll.u32 %v394, 16
      %v709 = vrot.slane %v707, 5
      %v710 = vsel %vm408, %v705, %v709
      %v711 = vshrl.u32 %v394, 16
      %v713 = vrot.slane %v711, 4
      %v714 = vor.u32 %v713, %v709
      %v715 = vrot.slane %v714, 4
      %v717 = vshll.u32 %v395, 16
      %v719 = vrot.slane %v717, 5
      %v720 = vsel %vm408, %v715, %v719
      %v722 = vshrl.u32 %v396, 16
      %v724 = vrot.slane %v722, 4
      %v725 = vshll.u32 %v396, 16
      %v727 = vrot.slane %v725, 5
      %v728 = vor.u32 %v724, %v727
      %v729 = vrot.slane %v728, 4
      %v731 = vshll.u32 %v397, 16
      %v733 = vrot.slane %v731, 5
      %v734 = vsel %vm408, %v729, %v733
      %v735 = vshrl.u32 %v397, 16
      %v737 = vrot.slane %v735, 4
      %v738 = vor.u32 %v737, %v733
      %v739 = vrot.slane %v738, 4
      %v741 = vshll.u32 %v398, 16
      %v743 = vrot.slane %v741, 5
      %v744 = vsel %vm408, %v739, %v743
      %v746 = vshrl.u32 %v399, 16
      %v748 = vrot.slane %v746, 4
      %v749 = vshll.u32 %v399, 16
      %v751 = vrot.slane %v749, 5
      %v752 = vor.u32 %v748, %v751
      %v753 = vrot.slane %v752, 4
      %v755 = vshll.u32 %v400, 16
      %v757 = vrot.slane %v755, 5
      %v758 = vsel %vm408, %v753, %v757
      %v759 = vshrl.u32 %v400, 16
      %v761 = vrot.slane %v759, 4
      %v762 = vor.u32 %v761, %v757
      %v763 = vrot.slane %v762, 4
      %v765 = vshll.u32 %v401, 16
      %v767 = vrot.slane %v765, 5
      %v768 = vsel %vm408, %v763, %v767
      %v770 = vshrl.u32 %v402, 16
      %v772 = vrot.slane %v770, 4
      %v773 = vshll.u32 %v402, 16
      %v775 = vrot.slane %v773, 5
      %v776 = vor.u32 %v772, %v775
      %v777 = vrot.slane %v776, 4
      %v779 = vshll.u32 %v403, 16
      %v781 = vrot.slane %v779, 5
      %v782 = vsel %vm408, %v777, %v781
      %v783 = vshrl.u32 %v403, 16
      %v785 = vrot.slane %v783, 4
      %v786 = vor.u32 %v785, %v781
      %v787 = vrot.slane %v786, 4
      %v789 = vshll.u32 %v404, 16
      %v791 = vrot.slane %v789, 5
      %v792 = vsel %vm408, %v787, %v791
      %s793 = scalar_lea.vmem %s3, 2
      %v794 = vld [vmem:[%s793] sm:$0x3]
      %v795 = vunpack.c.l.b16 %v422
      %v796 = vunpack.c.l.b16 %v432
      %v797 = vunpack.c.l.b16 %v446
      %v798 = vunpack.c.l.b16 %v456
      %v799 = vunpack.c.l.b16 %v470
      %v800 = vunpack.c.l.b16 %v480
      %v801 = vunpack.c.l.b16 %v494
      %v802 = vunpack.c.l.b16 %v504
      %v803 = vunpack.c.l.b16 %v518
      %v804 = vunpack.c.l.b16 %v528
      %v805 = vunpack.c.l.b16 %v542
      %v806 = vunpack.c.l.b16 %v552
      %v807 = vunpack.c.l.b16 %v566
      %v808 = vunpack.c.l.b16 %v576
      %v809 = vunpack.c.l.b16 %v590
      %v810 = vunpack.c.l.b16 %v600
      %v811 = vunpack.c.l.b16 %v614
      %v812 = vunpack.c.l.b16 %v624
      %v813 = vunpack.c.l.b16 %v638
      %v814 = vunpack.c.l.b16 %v648
      %v815 = vunpack.c.l.b16 %v662
      %v816 = vunpack.c.l.b16 %v672
      %v817 = vunpack.c.l.b16 %v686
      %v818 = vunpack.c.l.b16 %v696
      %v819 = vunpack.c.l.b16 %v710
      %v820 = vunpack.c.l.b16 %v720
      %v821 = vunpack.c.l.b16 %v734
      %v822 = vunpack.c.l.b16 %v744
      %v823 = vunpack.c.l.b16 %v758
      %v824 = vunpack.c.l.b16 %v768
      %v825 = vunpack.c.l.b16 %v782
      %v826 = vunpack.c.l.b16 %v792
      %v827 = vpack.c.b16 %v796, %v795
      %v828 = vpack.c.b16 %v798, %v797
      %v829 = vpack.c.b16 %v800, %v799
      %v830 = vpack.c.b16 %v802, %v801
      %v831 = vpack.c.b16 %v804, %v803
      %v832 = vpack.c.b16 %v806, %v805
      %v833 = vpack.c.b16 %v808, %v807
      %v834 = vpack.c.b16 %v810, %v809
      %v835 = vpack.c.b16 %v812, %v811
      %v836 = vpack.c.b16 %v814, %v813
      %v837 = vpack.c.b16 %v816, %v815
      %v838 = vpack.c.b16 %v818, %v817
      %v839 = vpack.c.b16 %v820, %v819
      %v840 = vpack.c.b16 %v822, %v821
      %v841 = vpack.c.b16 %v824, %v823
      %v842 = vpack.c.b16 %v826, %v825
      %vm843 = vcmask 31744
      %v845 = vsel %vm843, %v827, 0
      %v848 = vsel %vm843, %v828, 0
      %v851 = vsel %vm843, %v829, 0
      %v854 = vsel %vm843, %v830, 0
      %v857 = vsel %vm843, %v831, 0
      %v860 = vsel %vm843, %v832, 0
      %v863 = vsel %vm843, %v833, 0
      %v866 = vsel %vm843, %v834, 0
      %v869 = vsel %vm843, %v835, 0
      %v872 = vsel %vm843, %v836, 0
      %v875 = vsel %vm843, %v837, 0
      %v878 = vsel %vm843, %v838, 0
      %v881 = vsel %vm843, %v839, 0
      %v884 = vsel %vm843, %v840, 0
      %v887 = vsel %vm843, %v841, 0
      %v890 = vsel %vm843, %v842, 0
      %vm892 = vcmask 1041408
      %v894 = vsel %vm892, %v794, 0
      %896 = vmatprep.subr.bf16.mxu0 0
      %897 = vmatpush1.bf16.msra.mxu0 %v894
      %898 = vmatprep.subr.bf16.mxu0 0
      %899 = vmatpush1.bf16.msra.mxu0 0
      %900 = vmatprep.subr.bf16.mxu0 0
      %901 = vmatpush1.bf16.msra.mxu0 0
      %902 = vmatprep.subr.bf16.mxu0 0
      %903 = vmatpush1.bf16.msra.mxu0 0
      %904 = vmatprep.subr.bf16.mxu0 0
      %905 = vmatpush1.bf16.msra.mxu0 0
      %906 = vmatprep.subr.bf16.mxu0 0
      %907 = vmatpush1.bf16.msra.mxu0 0
      %908 = vmatprep.subr.bf16.mxu0 0
      %909 = vmatpush1.bf16.msra.mxu0 0
      %910 = vmatprep.subr.bf16.mxu0 0
      %911 = vmatpush1.bf16.msra.mxu0 0
      %912 = vmatprep.subr.bf16.mxu0 0
      %913 = vmatpush1.bf16.msra.mxu0 0
      %914 = vmatprep.subr.bf16.mxu0 0
      %915 = vmatpush1.bf16.msra.mxu0 0
      %916 = vmatprep.subr.bf16.mxu0 0
      %917 = vmatpush1.bf16.msra.mxu0 0
      %918 = vmatprep.subr.bf16.mxu0 0
      %919 = vmatpush1.bf16.msra.mxu0 0
      %920 = vmatprep.subr.bf16.mxu0 0
      %921 = vmatpush1.bf16.msra.mxu0 0
      %922 = vmatprep.subr.bf16.mxu0 0
      %923 = vmatpush1.bf16.msra.mxu0 0
      %924 = vmatprep.subr.bf16.mxu0 0
      %925 = vmatpush1.bf16.msra.mxu0 0
      %926 = vmatprep.subr.bf16.mxu0 0
      %927 = vmatpush1.bf16.msra.mxu0 0
      %928 = vmatprep.mubr.bf16.mxu0 0
      %929 = vmatmul.mubr.bf16.gmra.mrb[0].mxu0 %v845
      %v930 = vpop.f32.mrb[0].mxu0
      %v931 = vadd.f32 0.0, %v930
      %v932 = vpop.f32.mrb[0].mxu0
      %v933 = vpop.f32.mrb[0].mxu0
      %v934 = vadd.f32 0.0, %v933
      %v935 = vpop.f32.mrb[0].mxu0
      %936 = vmatprep.mubr.bf16.mxu0 0
      %937 = vmatmul.mubr.bf16.gmra.mrb[0].mxu0 %v848
      %v938 = vpop.f32.mrb[0].mxu0
      %v939 = vadd.f32 0.0, %v938
      %v940 = vpop.f32.mrb[0].mxu0
      %v941 = vpop.f32.mrb[0].mxu0
      %v942 = vadd.f32 0.0, %v941
      %v943 = vpop.f32.mrb[0].mxu0
      %944 = vmatprep.mubr.bf16.mxu0 0
      %945 = vmatmul.mubr.bf16.gmra.mrb[0].mxu0 %v851
      %v946 = vpop.f32.mrb[0].mxu0
      %v947 = vadd.f32 0.0, %v946
      %v948 = vpop.f32.mrb[0].mxu0
      %v949 = vpop.f32.mrb[0].mxu0
      %v950 = vadd.f32 0.0, %v949
      %v951 = vpop.f32.mrb[0].mxu0
      %952 = vmatprep.mubr.bf16.mxu0 0
      %953 = vmatmul.mubr.bf16.gmra.mrb[0].mxu0 %v854
      %v954 = vpop.f32.mrb[0].mxu0
      %v955 = vadd.f32 0.0, %v954
      %v956 = vpop.f32.mrb[0].mxu0
      %v957 = vpop.f32.mrb[0].mxu0
      %v958 = vadd.f32 0.0, %v957
      %v959 = vpop.f32.mrb[0].mxu0
      %960 = vmatprep.mubr.bf16.mxu0 0
      %961 = vmatmul.mubr.bf16.gmra.mrb[0].mxu0 %v857
      %v962 = vpop.f32.mrb[0].mxu0
      %v963 = vadd.f32 0.0, %v962
      %v964 = vpop.f32.mrb[0].mxu0
      %v965 = vpop.f32.mrb[0].mxu0
      %v966 = vadd.f32 0.0, %v965
      %v967 = vpop.f32.mrb[0].mxu0
      %968 = vmatprep.mubr.bf16.mxu0 0
      %969 = vmatmul.mubr.bf16.gmra.mrb[0].mxu0 %v860
      %v970 = vpop.f32.mrb[0].mxu0
      %v971 = vadd.f32 0.0, %v970
      %v972 = vpop.f32.mrb[0].mxu0
      %v973 = vpop.f32.mrb[0].mxu0
      %v974 = vadd.f32 0.0, %v973
      %v975 = vpop.f32.mrb[0].mxu0
      %976 = vmatprep.mubr.bf16.mxu0 0
      %977 = vmatmul.mubr.bf16.gmra.mrb[0].mxu0 %v863
      %v978 = vpop.f32.mrb[0].mxu0
      %v979 = vadd.f32 0.0, %v978
      %v980 = vpop.f32.mrb[0].mxu0
      %v981 = vpop.f32.mrb[0].mxu0
      %v982 = vadd.f32 0.0, %v981
      %v983 = vpop.f32.mrb[0].mxu0
      %984 = vmatprep.mubr.bf16.mxu0 0
      %985 = vmatmul.mubr.bf16.gmra.mrb[0].mxu0 %v866
      %v986 = vpop.f32.mrb[0].mxu0
      %v987 = vadd.f32 0.0, %v986
      %v988 = vpop.f32.mrb[0].mxu0
      %v989 = vpop.f32.mrb[0].mxu0
      %v990 = vadd.f32 0.0, %v989
      %v991 = vpop.f32.mrb[0].mxu0
      %992 = vmatprep.mubr.bf16.mxu0 0
      %993 = vmatmul.mubr.bf16.gmra.mrb[0].mxu0 %v869
      %v994 = vpop.f32.mrb[0].mxu0
      %v995 = vadd.f32 0.0, %v994
      %v996 = vpop.f32.mrb[0].mxu0
      %v997 = vpop.f32.mrb[0].mxu0
      %v998 = vadd.f32 0.0, %v997
      %v999 = vpop.f32.mrb[0].mxu0
      %1000 = vmatprep.mubr.bf16.mxu0 0
      %1001 = vmatmul.mubr.bf16.gmra.mrb[0].mxu0 %v872
      %v1002 = vpop.f32.mrb[0].mxu0
      %v1003 = vadd.f32 0.0, %v1002
      %v1004 = vpop.f32.mrb[0].mxu0
      %v1005 = vpop.f32.mrb[0].mxu0
      %v1006 = vadd.f32 0.0, %v1005
      %v1007 = vpop.f32.mrb[0].mxu0
      %1008 = vmatprep.mubr.bf16.mxu0 0
      %1009 = vmatmul.mubr.bf16.gmra.mrb[0].mxu0 %v875
      %v1010 = vpop.f32.mrb[0].mxu0
      %v1011 = vadd.f32 0.0, %v1010
      %v1012 = vpop.f32.mrb[0].mxu0
      %v1013 = vpop.f32.mrb[0].mxu0
      %v1014 = vadd.f32 0.0, %v1013
      %v1015 = vpop.f32.mrb[0].mxu0
      %1016 = vmatprep.mubr.bf16.mxu0 0
      %1017 = vmatmul.mubr.bf16.gmra.mrb[0].mxu0 %v878
      %v1018 = vpop.f32.mrb[0].mxu0
      %v1019 = vadd.f32 0.0, %v1018
      %v1020 = vpop.f32.mrb[0].mxu0
      %v1021 = vpop.f32.mrb[0].mxu0
      %v1022 = vadd.f32 0.0, %v1021
      %v1023 = vpop.f32.mrb[0].mxu0
      %1024 = vmatprep.mubr.bf16.mxu0 0
      %1025 = vmatmul.mubr.bf16.gmra.mrb[0].mxu0 %v881
      %v1026 = vpop.f32.mrb[0].mxu0
      %v1027 = vadd.f32 0.0, %v1026
      %v1028 = vpop.f32.mrb[0].mxu0
      %v1029 = vpop.f32.mrb[0].mxu0
      %v1030 = vadd.f32 0.0, %v1029
      %v1031 = vpop.f32.mrb[0].mxu0
      %1032 = vmatprep.mubr.bf16.mxu0 0
      %1033 = vmatmul.mubr.bf16.gmra.mrb[0].mxu0 %v884
      %v1034 = vpop.f32.mrb[0].mxu0
      %v1035 = vadd.f32 0.0, %v1034
      %v1036 = vpop.f32.mrb[0].mxu0
      %v1037 = vpop.f32.mrb[0].mxu0
      %v1038 = vadd.f32 0.0, %v1037
      %v1039 = vpop.f32.mrb[0].mxu0
      %1040 = vmatprep.mubr.bf16.mxu0 0
      %1041 = vmatmul.mubr.bf16.gmra.mrb[0].mxu0 %v887
      %v1042 = vpop.f32.mrb[0].mxu0
      %v1043 = vadd.f32 0.0, %v1042
      %v1044 = vpop.f32.mrb[0].mxu0
      %v1045 = vpop.f32.mrb[0].mxu0
      %v1046 = vadd.f32 0.0, %v1045
      %v1047 = vpop.f32.mrb[0].mxu0
      %1048 = vmatprep.mubr.bf16.mxu0 0
      %1049 = vmatmul.mubr.bf16.gmra.mrb[0].mxu0 %v890
      %v1050 = vpop.f32.mrb[0].mxu0
      %v1051 = vadd.f32 0.0, %v1050
      %v1052 = vpop.f32.mrb[0].mxu0
      %v1053 = vpop.f32.mrb[0].mxu0
      %v1054 = vadd.f32 0.0, %v1053
      %v1055 = vpop.f32.mrb[0].mxu0
      %1056 = vdwg.mxu0
      %v1089 = vunpack.c.l.b16 %v357
      %v1090 = vunpack.c.l.b16 %v358
      %v1091 = vunpack.c.l.b16 %v360
      %v1092 = vunpack.c.l.b16 %v361
      %v1093 = vunpack.c.l.b16 %v363
      %v1094 = vunpack.c.l.b16 %v364
      %v1095 = vunpack.c.l.b16 %v366
      %v1096 = vunpack.c.l.b16 %v367
      %v1097 = vunpack.c.l.b16 %v369
      %v1098 = vunpack.c.l.b16 %v370
      %v1099 = vunpack.c.l.b16 %v372
      %v1100 = vunpack.c.l.b16 %v373
      %v1101 = vunpack.c.l.b16 %v375
      %v1102 = vunpack.c.l.b16 %v376
      %v1103 = vunpack.c.l.b16 %v378
      %v1104 = vunpack.c.l.b16 %v379
      %v1105 = vunpack.c.l.b16 %v381
      %v1106 = vunpack.c.l.b16 %v382
      %v1107 = vunpack.c.l.b16 %v384
      %v1108 = vunpack.c.l.b16 %v385
      %v1109 = vunpack.c.l.b16 %v387
      %v1110 = vunpack.c.l.b16 %v388
      %v1111 = vunpack.c.l.b16 %v390
      %v1112 = vunpack.c.l.b16 %v391
      %v1113 = vunpack.c.l.b16 %v393
      %v1114 = vunpack.c.l.b16 %v394
      %v1115 = vunpack.c.l.b16 %v396
      %v1116 = vunpack.c.l.b16 %v397
      %v1117 = vunpack.c.l.b16 %v399
      %v1118 = vunpack.c.l.b16 %v400
      %v1119 = vunpack.c.l.b16 %v402
      %v1120 = vunpack.c.l.b16 %v403
      %v1121 = vpack.c.b16 %v1090, %v1089
      %v1122 = vpack.c.b16 %v1092, %v1091
      %v1123 = vpack.c.b16 %v1094, %v1093
      %v1124 = vpack.c.b16 %v1096, %v1095
      %v1125 = vpack.c.b16 %v1098, %v1097
      %v1126 = vpack.c.b16 %v1100, %v1099
      %v1127 = vpack.c.b16 %v1102, %v1101
      %v1128 = vpack.c.b16 %v1104, %v1103
      %v1129 = vpack.c.b16 %v1106, %v1105
      %v1130 = vpack.c.b16 %v1108, %v1107
      %v1131 = vpack.c.b16 %v1110, %v1109
      %v1132 = vpack.c.b16 %v1112, %v1111
      %v1133 = vpack.c.b16 %v1114, %v1113
      %v1134 = vpack.c.b16 %v1116, %v1115
      %v1135 = vpack.c.b16 %v1118, %v1117
      %v1136 = vpack.c.b16 %v1120, %v1119
      %v1138 = vsel %vm843, %v1121, 0
      %v1141 = vsel %vm843, %v1122, 0
      %v1144 = vsel %vm843, %v1123, 0
      %v1147 = vsel %vm843, %v1124, 0
      %v1150 = vsel %vm843, %v1125, 0
      %v1153 = vsel %vm843, %v1126, 0
      %v1156 = vsel %vm843, %v1127, 0
      %v1159 = vsel %vm843, %v1128, 0
      %v1162 = vsel %vm843, %v1129, 0
      %v1165 = vsel %vm843, %v1130, 0
      %v1168 = vsel %vm843, %v1131, 0
      %v1171 = vsel %vm843, %v1132, 0
      %v1174 = vsel %vm843, %v1133, 0
      %v1177 = vsel %vm843, %v1134, 0
      %v1180 = vsel %vm843, %v1135, 0
      %v1183 = vsel %vm843, %v1136, 0
      %v1186 = vsel %vm892, %v405, 0
      %1188 = vmatprep.subr.bf16.mxu0 0
      %1189 = vmatpush1.bf16.msra.mxu0 %v1186
      %1190 = vmatprep.subr.bf16.mxu0 0
      %1191 = vmatpush1.bf16.msra.mxu0 0
      %1192 = vmatprep.subr.bf16.mxu0 0
      %1193 = vmatpush1.bf16.msra.mxu0 0
      %1194 = vmatprep.subr.bf16.mxu0 0
      %1195 = vmatpush1.bf16.msra.mxu0 0
      %1196 = vmatprep.subr.bf16.mxu0 0
      %1197 = vmatpush1.bf16.msra.mxu0 0
      %1198 = vmatprep.subr.bf16.mxu0 0
      %1199 = vmatpush1.bf16.msra.mxu0 0
      %1200 = vmatprep.subr.bf16.mxu0 0
      %1201 = vmatpush1.bf16.msra.mxu0 0
      %1202 = vmatprep.subr.bf16.mxu0 0
      %1203 = vmatpush1.bf16.msra.mxu0 0
      %1204 = vmatprep.subr.bf16.mxu0 0
      %1205 = vmatpush1.bf16.msra.mxu0 0
      %1206 = vmatprep.subr.bf16.mxu0 0
      %1207 = vmatpush1.bf16.msra.mxu0 0
      %1208 = vmatprep.subr.bf16.mxu0 0
      %1209 = vmatpush1.bf16.msra.mxu0 0
      %1210 = vmatprep.subr.bf16.mxu0 0
      %1211 = vmatpush1.bf16.msra.mxu0 0
      %1212 = vmatprep.subr.bf16.mxu0 0
      %1213 = vmatpush1.bf16.msra.mxu0 0
      %1214 = vmatprep.subr.bf16.mxu0 0
      %1215 = vmatpush1.bf16.msra.mxu0 0
      %1216 = vmatprep.subr.bf16.mxu0 0
      %1217 = vmatpush1.bf16.msra.mxu0 0
      %1218 = vmatprep.subr.bf16.mxu0 0
      %1219 = vmatpush1.bf16.msra.mxu0 0
      %1220 = vmatprep.mubr.bf16.mxu0 0
      %1221 = vmatmul.mubr.bf16.gmra.mrb[0].mxu0 %v1138
      %v1222 = vpop.f32.mrb[0].mxu0
      %v1223 = vadd.f32 %v931, %v1222
      %v1224 = vpop.f32.mrb[0].mxu0
      %v1225 = vpop.f32.mrb[0].mxu0
      %v1226 = vadd.f32 %v934, %v1225
      %v1227 = vpop.f32.mrb[0].mxu0
      %1228 = vmatprep.mubr.bf16.mxu0 0
      %1229 = vmatmul.mubr.bf16.gmra.mrb[0].mxu0 %v1141
      %v1230 = vpop.f32.mrb[0].mxu0
      %v1231 = vadd.f32 %v939, %v1230
      %v1232 = vpop.f32.mrb[0].mxu0
      %v1233 = vpop.f32.mrb[0].mxu0
      %v1234 = vadd.f32 %v942, %v1233
      %v1235 = vpop.f32.mrb[0].mxu0
      %1236 = vmatprep.mubr.bf16.mxu0 0
      %1237 = vmatmul.mubr.bf16.gmra.mrb[0].mxu0 %v1144
      %v1238 = vpop.f32.mrb[0].mxu0
      %v1239 = vadd.f32 %v947, %v1238
      %v1240 = vpop.f32.mrb[0].mxu0
      %v1241 = vpop.f32.mrb[0].mxu0
      %v1242 = vadd.f32 %v950, %v1241
      %v1243 = vpop.f32.mrb[0].mxu0
      %1244 = vmatprep.mubr.bf16.mxu0 0
      %1245 = vmatmul.mubr.bf16.gmra.mrb[0].mxu0 %v1147
      %v1246 = vpop.f32.mrb[0].mxu0
      %v1247 = vadd.f32 %v955, %v1246
      %v1248 = vpop.f32.mrb[0].mxu0
      %v1249 = vpop.f32.mrb[0].mxu0
      %v1250 = vadd.f32 %v958, %v1249
      %v1251 = vpop.f32.mrb[0].mxu0
      %1252 = vmatprep.mubr.bf16.mxu0 0
      %1253 = vmatmul.mubr.bf16.gmra.mrb[0].mxu0 %v1150
      %v1254 = vpop.f32.mrb[0].mxu0
      %v1255 = vadd.f32 %v963, %v1254
      %v1256 = vpop.f32.mrb[0].mxu0
      %v1257 = vpop.f32.mrb[0].mxu0
      %v1258 = vadd.f32 %v966, %v1257
      %v1259 = vpop.f32.mrb[0].mxu0
      %1260 = vmatprep.mubr.bf16.mxu0 0
      %1261 = vmatmul.mubr.bf16.gmra.mrb[0].mxu0 %v1153
      %v1262 = vpop.f32.mrb[0].mxu0
      %v1263 = vadd.f32 %v971, %v1262
      %v1264 = vpop.f32.mrb[0].mxu0
      %v1265 = vpop.f32.mrb[0].mxu0
      %v1266 = vadd.f32 %v974, %v1265
      %v1267 = vpop.f32.mrb[0].mxu0
      %1268 = vmatprep.mubr.bf16.mxu0 0
      %1269 = vmatmul.mubr.bf16.gmra.mrb[0].mxu0 %v1156
      %v1270 = vpop.f32.mrb[0].mxu0
      %v1271 = vadd.f32 %v979, %v1270
      %v1272 = vpop.f32.mrb[0].mxu0
      %v1273 = vpop.f32.mrb[0].mxu0
      %v1274 = vadd.f32 %v982, %v1273
      %v1275 = vpop.f32.mrb[0].mxu0
      %1276 = vmatprep.mubr.bf16.mxu0 0
      %1277 = vmatmul.mubr.bf16.gmra.mrb[0].mxu0 %v1159
      %v1278 = vpop.f32.mrb[0].mxu0
      %v1279 = vadd.f32 %v987, %v1278
      %v1280 = vpop.f32.mrb[0].mxu0
      %v1281 = vpop.f32.mrb[0].mxu0
      %v1282 = vadd.f32 %v990, %v1281
      %v1283 = vpop.f32.mrb[0].mxu0
      %1284 = vmatprep.mubr.bf16.mxu0 0
      %1285 = vmatmul.mubr.bf16.gmra.mrb[0].mxu0 %v1162
      %v1286 = vpop.f32.mrb[0].mxu0
      %v1287 = vadd.f32 %v995, %v1286
      %v1288 = vpop.f32.mrb[0].mxu0
      %v1289 = vpop.f32.mrb[0].mxu0
      %v1290 = vadd.f32 %v998, %v1289
      %v1291 = vpop.f32.mrb[0].mxu0
      %1292 = vmatprep.mubr.bf16.mxu0 0
      %1293 = vmatmul.mubr.bf16.gmra.mrb[0].mxu0 %v1165
      %v1294 = vpop.f32.mrb[0].mxu0
      %v1295 = vadd.f32 %v1003, %v1294
      %v1296 = vpop.f32.mrb[0].mxu0
      %v1297 = vpop.f32.mrb[0].mxu0
      %v1298 = vadd.f32 %v1006, %v1297
      %v1299 = vpop.f32.mrb[0].mxu0
      %1300 = vmatprep.mubr.bf16.mxu0 0
      %1301 = vmatmul.mubr.bf16.gmra.mrb[0].mxu0 %v1168
      %v1302 = vpop.f32.mrb[0].mxu0
      %v1303 = vadd.f32 %v1011, %v1302
      %v1304 = vpop.f32.mrb[0].mxu0
      %v1305 = vpop.f32.mrb[0].mxu0
      %v1306 = vadd.f32 %v1014, %v1305
      %v1307 = vpop.f32.mrb[0].mxu0
      %1308 = vmatprep.mubr.bf16.mxu0 0
      %1309 = vmatmul.mubr.bf16.gmra.mrb[0].mxu0 %v1171
      %v1310 = vpop.f32.mrb[0].mxu0
      %v1311 = vadd.f32 %v1019, %v1310
      %v1312 = vpop.f32.mrb[0].mxu0
      %v1313 = vpop.f32.mrb[0].mxu0
      %v1314 = vadd.f32 %v1022, %v1313
      %v1315 = vpop.f32.mrb[0].mxu0
      %1316 = vmatprep.mubr.bf16.mxu0 0
      %1317 = vmatmul.mubr.bf16.gmra.mrb[0].mxu0 %v1174
      %v1318 = vpop.f32.mrb[0].mxu0
      %v1319 = vadd.f32 %v1027, %v1318
      %v1320 = vpop.f32.mrb[0].mxu0
      %v1321 = vpop.f32.mrb[0].mxu0
      %v1322 = vadd.f32 %v1030, %v1321
      %v1323 = vpop.f32.mrb[0].mxu0
      %1324 = vmatprep.mubr.bf16.mxu0 0
      %1325 = vmatmul.mubr.bf16.gmra.mrb[0].mxu0 %v1177
      %v1326 = vpop.f32.mrb[0].mxu0
      %v1327 = vadd.f32 %v1035, %v1326
      %v1328 = vpop.f32.mrb[0].mxu0
      %v1329 = vpop.f32.mrb[0].mxu0
      %v1330 = vadd.f32 %v1038, %v1329
      %v1331 = vpop.f32.mrb[0].mxu0
      %1332 = vmatprep.mubr.bf16.mxu0 0
      %1333 = vmatmul.mubr.bf16.gmra.mrb[0].mxu0 %v1180
      %v1334 = vpop.f32.mrb[0].mxu0
      %v1335 = vadd.f32 %v1043, %v1334
      %v1336 = vpop.f32.mrb[0].mxu0
      %v1337 = vpop.f32.mrb[0].mxu0
      %v1338 = vadd.f32 %v1046, %v1337
      %v1339 = vpop.f32.mrb[0].mxu0
      %1340 = vmatprep.mubr.bf16.mxu0 0
      %1341 = vmatmul.mubr.bf16.gmra.mrb[0].mxu0 %v1183
      %v1342 = vpop.f32.mrb[0].mxu0
      %v1343 = vadd.f32 %v1051, %v1342
      %v1344 = vpop.f32.mrb[0].mxu0
      %v1345 = vpop.f32.mrb[0].mxu0
      %v1346 = vadd.f32 %v1054, %v1345
      %v1347 = vpop.f32.mrb[0].mxu0
      %1348 = vdwg.mxu0
      %vm1365 = vcmask 1042432
      %vm1366 = vcmask 1046532
      %vm1367 = vmor %vm1365, %vm1366
      %v1368 = vrot.slane %v357, 5
      %v1369 = vrot.slane %v1368, 4
      %v1370 = vrot.slane %v358, 5
      %v1371 = vsel %vm1367, %v1369, %v1370
      %v1372 = vrot.slane %v1370, 4
      %v1373 = vrot.slane %v359, 5
      %v1374 = vsel %vm1367, %v1372, %v1373
      %v1375 = vrot.slane %v360, 5
      %v1376 = vrot.slane %v1375, 4
      %v1377 = vrot.slane %v361, 5
      %v1378 = vsel %vm1367, %v1376, %v1377
      %v1379 = vrot.slane %v1377, 4
      %v1380 = vrot.slane %v362, 5
      %v1381 = vsel %vm1367, %v1379, %v1380
      %v1382 = vrot.slane %v363, 5
      %v1383 = vrot.slane %v1382, 4
      %v1384 = vrot.slane %v364, 5
      %v1385 = vsel %vm1367, %v1383, %v1384
      %v1386 = vrot.slane %v1384, 4
      %v1387 = vrot.slane %v365, 5
      %v1388 = vsel %vm1367, %v1386, %v1387
      %v1389 = vrot.slane %v366, 5
      %v1390 = vrot.slane %v1389, 4
      %v1391 = vrot.slane %v367, 5
      %v1392 = vsel %vm1367, %v1390, %v1391
      %v1393 = vrot.slane %v1391, 4
      %v1394 = vrot.slane %v368, 5
      %v1395 = vsel %vm1367, %v1393, %v1394
      %v1396 = vrot.slane %v369, 5
      %v1397 = vrot.slane %v1396, 4
      %v1398 = vrot.slane %v370, 5
      %v1399 = vsel %vm1367, %v1397, %v1398
      %v1400 = vrot.slane %v1398, 4
      %v1401 = vrot.slane %v371, 5
      %v1402 = vsel %vm1367, %v1400, %v1401
      %v1403 = vrot.slane %v372, 5
      %v1404 = vrot.slane %v1403, 4
      %v1405 = vrot.slane %v373, 5
      %v1406 = vsel %vm1367, %v1404, %v1405
      %v1407 = vrot.slane %v1405, 4
      %v1408 = vrot.slane %v374, 5
      %v1409 = vsel %vm1367, %v1407, %v1408
      %v1410 = vrot.slane %v375, 5
      %v1411 = vrot.slane %v1410, 4
      %v1412 = vrot.slane %v376, 5
      %v1413 = vsel %vm1367, %v1411, %v1412
      %v1414 = vrot.slane %v1412, 4
      %v1415 = vrot.slane %v377, 5
      %v1416 = vsel %vm1367, %v1414, %v1415
      %v1417 = vrot.slane %v378, 5
      %v1418 = vrot.slane %v1417, 4
      %v1419 = vrot.slane %v379, 5
      %v1420 = vsel %vm1367, %v1418, %v1419
      %v1421 = vrot.slane %v1419, 4
      %v1422 = vrot.slane %v380, 5
      %v1423 = vsel %vm1367, %v1421, %v1422
      %v1424 = vrot.slane %v381, 5
      %v1425 = vrot.slane %v1424, 4
      %v1426 = vrot.slane %v382, 5
      %v1427 = vsel %vm1367, %v1425, %v1426
      %v1428 = vrot.slane %v1426, 4
      %v1429 = vrot.slane %v383, 5
      %v1430 = vsel %vm1367, %v1428, %v1429
      %v1431 = vrot.slane %v384, 5
      %v1432 = vrot.slane %v1431, 4
      %v1433 = vrot.slane %v385, 5
      %v1434 = vsel %vm1367, %v1432, %v1433
      %v1435 = vrot.slane %v1433, 4
      %v1436 = vrot.slane %v386, 5
      %v1437 = vsel %vm1367, %v1435, %v1436
      %v1438 = vrot.slane %v387, 5
      %v1439 = vrot.slane %v1438, 4
      %v1440 = vrot.slane %v388, 5
      %v1441 = vsel %vm1367, %v1439, %v1440
      %v1442 = vrot.slane %v1440, 4
      %v1443 = vrot.slane %v389, 5
      %v1444 = vsel %vm1367, %v1442, %v1443
      %v1445 = vrot.slane %v390, 5
      %v1446 = vrot.slane %v1445, 4
      %v1447 = vrot.slane %v391, 5
      %v1448 = vsel %vm1367, %v1446, %v1447
      %v1449 = vrot.slane %v1447, 4
      %v1450 = vrot.slane %v392, 5
      %v1451 = vsel %vm1367, %v1449, %v1450
      %v1452 = vrot.slane %v393, 5
      %v1453 = vrot.slane %v1452, 4
      %v1454 = vrot.slane %v394, 5
      %v1455 = vsel %vm1367, %v1453, %v1454
      %v1456 = vrot.slane %v1454, 4
      %v1457 = vrot.slane %v395, 5
      %v1458 = vsel %vm1367, %v1456, %v1457
      %v1459 = vrot.slane %v396, 5
      %v1460 = vrot.slane %v1459, 4
      %v1461 = vrot.slane %v397, 5
      %v1462 = vsel %vm1367, %v1460, %v1461
      %v1463 = vrot.slane %v1461, 4
      %v1464 = vrot.slane %v398, 5
      %v1465 = vsel %vm1367, %v1463, %v1464
      %v1466 = vrot.slane %v399, 5
      %v1467 = vrot.slane %v1466, 4
      %v1468 = vrot.slane %v400, 5
      %v1469 = vsel %vm1367, %v1467, %v1468
      %v1470 = vrot.slane %v1468, 4
      %v1471 = vrot.slane %v401, 5
      %v1472 = vsel %vm1367, %v1470, %v1471
      %v1473 = vrot.slane %v402, 5
      %v1474 = vrot.slane %v1473, 4
      %v1475 = vrot.slane %v403, 5
      %v1476 = vsel %vm1367, %v1474, %v1475
      %v1477 = vrot.slane %v1475, 4
      %v1478 = vrot.slane %v404, 5
      %v1479 = vsel %vm1367, %v1477, %v1478
      %s1480 = scalar_lea.vmem %s3, 4
      %v1481 = vld [vmem:[%s1480] sm:$0x3]
      %v1482 = vunpack.c.l.b16 %v1371
      %v1483 = vunpack.c.l.b16 %v1374
      %v1484 = vunpack.c.l.b16 %v1378
      %v1485 = vunpack.c.l.b16 %v1381
      %v1486 = vunpack.c.l.b16 %v1385
      %v1487 = vunpack.c.l.b16 %v1388
      %v1488 = vunpack.c.l.b16 %v1392
      %v1489 = vunpack.c.l.b16 %v1395
      %v1490 = vunpack.c.l.b16 %v1399
      %v1491 = vunpack.c.l.b16 %v1402
      %v1492 = vunpack.c.l.b16 %v1406
      %v1493 = vunpack.c.l.b16 %v1409
      %v1494 = vunpack.c.l.b16 %v1413
      %v1495 = vunpack.c.l.b16 %v1416
      %v1496 = vunpack.c.l.b16 %v1420
      %v1497 = vunpack.c.l.b16 %v1423
      %v1498 = vunpack.c.l.b16 %v1427
      %v1499 = vunpack.c.l.b16 %v1430
      %v1500 = vunpack.c.l.b16 %v1434
      %v1501 = vunpack.c.l.b16 %v1437
      %v1502 = vunpack.c.l.b16 %v1441
      %v1503 = vunpack.c.l.b16 %v1444
      %v1504 = vunpack.c.l.b16 %v1448
      %v1505 = vunpack.c.l.b16 %v1451
      %v1506 = vunpack.c.l.b16 %v1455
      %v1507 = vunpack.c.l.b16 %v1458
      %v1508 = vunpack.c.l.b16 %v1462
      %v1509 = vunpack.c.l.b16 %v1465
      %v1510 = vunpack.c.l.b16 %v1469
      %v1511 = vunpack.c.l.b16 %v1472
      %v1512 = vunpack.c.l.b16 %v1476
      %v1513 = vunpack.c.l.b16 %v1479
      %v1514 = vpack.c.b16 %v1483, %v1482
      %v1515 = vpack.c.b16 %v1485, %v1484
      %v1516 = vpack.c.b16 %v1487, %v1486
      %v1517 = vpack.c.b16 %v1489, %v1488
      %v1518 = vpack.c.b16 %v1491, %v1490
      %v1519 = vpack.c.b16 %v1493, %v1492
      %v1520 = vpack.c.b16 %v1495, %v1494
      %v1521 = vpack.c.b16 %v1497, %v1496
      %v1522 = vpack.c.b16 %v1499, %v1498
      %v1523 = vpack.c.b16 %v1501, %v1500
      %v1524 = vpack.c.b16 %v1503, %v1502
      %v1525 = vpack.c.b16 %v1505, %v1504
      %v1526 = vpack.c.b16 %v1507, %v1506
      %v1527 = vpack.c.b16 %v1509, %v1508
      %v1528 = vpack.c.b16 %v1511, %v1510
      %v1529 = vpack.c.b16 %v1513, %v1512
      %v1531 = vsel %vm843, %v1514, 0
      %v1534 = vsel %vm843, %v1515, 0
      %v1537 = vsel %vm843, %v1516, 0
      %v1540 = vsel %vm843, %v1517, 0
      %v1543 = vsel %vm843, %v1518, 0
      %v1546 = vsel %vm843, %v1519, 0
      %v1549 = vsel %vm843, %v1520, 0
      %v1552 = vsel %vm843, %v1521, 0
      %v1555 = vsel %vm843, %v1522, 0
      %v1558 = vsel %vm843, %v1523, 0
      %v1561 = vsel %vm843, %v1524, 0
      %v1564 = vsel %vm843, %v1525, 0
      %v1567 = vsel %vm843, %v1526, 0
      %v1570 = vsel %vm843, %v1527, 0
      %v1573 = vsel %vm843, %v1528, 0
      %v1576 = vsel %vm843, %v1529, 0
      %v1579 = vsel %vm892, %v1481, 0
      %1581 = vmatprep.subr.bf16.mxu0 0
      %1582 = vmatpush1.bf16.msra.mxu0 %v1579
      %1583 = vmatprep.subr.bf16.mxu0 0
      %1584 = vmatpush1.bf16.msra.mxu0 0
      %1585 = vmatprep.subr.bf16.mxu0 0
      %1586 = vmatpush1.bf16.msra.mxu0 0
      %1587 = vmatprep.subr.bf16.mxu0 0
      %1588 = vmatpush1.bf16.msra.mxu0 0
      %1589 = vmatprep.subr.bf16.mxu0 0
      %1590 = vmatpush1.bf16.msra.mxu0 0
      %1591 = vmatprep.subr.bf16.mxu0 0
      %1592 = vmatpush1.bf16.msra.mxu0 0
      %1593 = vmatprep.subr.bf16.mxu0 0
      %1594 = vmatpush1.bf16.msra.mxu0 0
      %1595 = vmatprep.subr.bf16.mxu0 0
      %1596 = vmatpush1.bf16.msra.mxu0 0
      %1597 = vmatprep.subr.bf16.mxu0 0
      %1598 = vmatpush1.bf16.msra.mxu0 0
      %1599 = vmatprep.subr.bf16.mxu0 0
      %1600 = vmatpush1.bf16.msra.mxu0 0
      %1601 = vmatprep.subr.bf16.mxu0 0
      %1602 = vmatpush1.bf16.msra.mxu0 0
      %1603 = vmatprep.subr.bf16.mxu0 0
      %1604 = vmatpush1.bf16.msra.mxu0 0
      %1605 = vmatprep.subr.bf16.mxu0 0
      %1606 = vmatpush1.bf16.msra.mxu0 0
      %1607 = vmatprep.subr.bf16.mxu0 0
      %1608 = vmatpush1.bf16.msra.mxu0 0
      %1609 = vmatprep.subr.bf16.mxu0 0
      %1610 = vmatpush1.bf16.msra.mxu0 0
      %1611 = vmatprep.subr.bf16.mxu0 0
      %1612 = vmatpush1.bf16.msra.mxu0 0
      %1613 = vmatprep.mubr.bf16.mxu0 0
      %1614 = vmatmul.mubr.bf16.gmra.mrb[0].mxu0 %v1531
      %v1615 = vpop.f32.mrb[0].mxu0
      %v1616 = vadd.f32 0.0, %v1615
      %v1617 = vpop.f32.mrb[0].mxu0
      %v1618 = vpop.f32.mrb[0].mxu0
      %v1619 = vadd.f32 0.0, %v1618
      %v1620 = vpop.f32.mrb[0].mxu0
      %1621 = vmatprep.mubr.bf16.mxu0 0
      %1622 = vmatmul.mubr.bf16.gmra.mrb[0].mxu0 %v1534
      %v1623 = vpop.f32.mrb[0].mxu0
      %v1624 = vadd.f32 0.0, %v1623
      %v1625 = vpop.f32.mrb[0].mxu0
      %v1626 = vpop.f32.mrb[0].mxu0
      %v1627 = vadd.f32 0.0, %v1626
      %v1628 = vpop.f32.mrb[0].mxu0
      %1629 = vmatprep.mubr.bf16.mxu0 0
      %1630 = vmatmul.mubr.bf16.gmra.mrb[0].mxu0 %v1537
      %v1631 = vpop.f32.mrb[0].mxu0
      %v1632 = vadd.f32 0.0, %v1631
      %v1633 = vpop.f32.mrb[0].mxu0
      %v1634 = vpop.f32.mrb[0].mxu0
      %v1635 = vadd.f32 0.0, %v1634
      %v1636 = vpop.f32.mrb[0].mxu0
      %1637 = vmatprep.mubr.bf16.mxu0 0
      %1638 = vmatmul.mubr.bf16.gmra.mrb[0].mxu0 %v1540
      %v1639 = vpop.f32.mrb[0].mxu0
      %v1640 = vadd.f32 0.0, %v1639
      %v1641 = vpop.f32.mrb[0].mxu0
      %v1642 = vpop.f32.mrb[0].mxu0
      %v1643 = vadd.f32 0.0, %v1642
      %v1644 = vpop.f32.mrb[0].mxu0
      %1645 = vmatprep.mubr.bf16.mxu0 0
      %1646 = vmatmul.mubr.bf16.gmra.mrb[0].mxu0 %v1543
      %v1647 = vpop.f32.mrb[0].mxu0
      %v1648 = vadd.f32 0.0, %v1647
      %v1649 = vpop.f32.mrb[0].mxu0
      %v1650 = vpop.f32.mrb[0].mxu0
      %v1651 = vadd.f32 0.0, %v1650
      %v1652 = vpop.f32.mrb[0].mxu0
      %1653 = vmatprep.mubr.bf16.mxu0 0
      %1654 = vmatmul.mubr.bf16.gmra.mrb[0].mxu0 %v1546
      %v1655 = vpop.f32.mrb[0].mxu0
      %v1656 = vadd.f32 0.0, %v1655
      %v1657 = vpop.f32.mrb[0].mxu0
      %v1658 = vpop.f32.mrb[0].mxu0
      %v1659 = vadd.f32 0.0, %v1658
      %v1660 = vpop.f32.mrb[0].mxu0
      %1661 = vmatprep.mubr.bf16.mxu0 0
      %1662 = vmatmul.mubr.bf16.gmra.mrb[0].mxu0 %v1549
      %v1663 = vpop.f32.mrb[0].mxu0
      %v1664 = vadd.f32 0.0, %v1663
      %v1665 = vpop.f32.mrb[0].mxu0
      %v1666 = vpop.f32.mrb[0].mxu0
      %v1667 = vadd.f32 0.0, %v1666
      %v1668 = vpop.f32.mrb[0].mxu0
      %1669 = vmatprep.mubr.bf16.mxu0 0
      %1670 = vmatmul.mubr.bf16.gmra.mrb[0].mxu0 %v1552
      %v1671 = vpop.f32.mrb[0].mxu0
      %v1672 = vadd.f32 0.0, %v1671
      %v1673 = vpop.f32.mrb[0].mxu0
      %v1674 = vpop.f32.mrb[0].mxu0
      %v1675 = vadd.f32 0.0, %v1674
      %v1676 = vpop.f32.mrb[0].mxu0
      %1677 = vmatprep.mubr.bf16.mxu0 0
      %1678 = vmatmul.mubr.bf16.gmra.mrb[0].mxu0 %v1555
      %v1679 = vpop.f32.mrb[0].mxu0
      %v1680 = vadd.f32 0.0, %v1679
      %v1681 = vpop.f32.mrb[0].mxu0
      %v1682 = vpop.f32.mrb[0].mxu0
      %v1683 = vadd.f32 0.0, %v1682
      %v1684 = vpop.f32.mrb[0].mxu0
      %1685 = vmatprep.mubr.bf16.mxu0 0
      %1686 = vmatmul.mubr.bf16.gmra.mrb[0].mxu0 %v1558
      %v1687 = vpop.f32.mrb[0].mxu0
      %v1688 = vadd.f32 0.0, %v1687
      %v1689 = vpop.f32.mrb[0].mxu0
      %v1690 = vpop.f32.mrb[0].mxu0
      %v1691 = vadd.f32 0.0, %v1690
      %v1692 = vpop.f32.mrb[0].mxu0
      %1693 = vmatprep.mubr.bf16.mxu0 0
      %1694 = vmatmul.mubr.bf16.gmra.mrb[0].mxu0 %v1561
      %v1695 = vpop.f32.mrb[0].mxu0
      %v1696 = vadd.f32 0.0, %v1695
      %v1697 = vpop.f32.mrb[0].mxu0
      %v1698 = vpop.f32.mrb[0].mxu0
      %v1699 = vadd.f32 0.0, %v1698
      %v1700 = vpop.f32.mrb[0].mxu0
      %1701 = vmatprep.mubr.bf16.mxu0 0
      %1702 = vmatmul.mubr.bf16.gmra.mrb[0].mxu0 %v1564
      %v1703 = vpop.f32.mrb[0].mxu0
      %v1704 = vadd.f32 0.0, %v1703
      %v1705 = vpop.f32.mrb[0].mxu0
      %v1706 = vpop.f32.mrb[0].mxu0
      %v1707 = vadd.f32 0.0, %v1706
      %v1708 = vpop.f32.mrb[0].mxu0
      %1709 = vmatprep.mubr.bf16.mxu0 0
      %1710 = vmatmul.mubr.bf16.gmra.mrb[0].mxu0 %v1567
      %v1711 = vpop.f32.mrb[0].mxu0
      %v1712 = vadd.f32 0.0, %v1711
      %v1713 = vpop.f32.mrb[0].mxu0
      %v1714 = vpop.f32.mrb[0].mxu0
      %v1715 = vadd.f32 0.0, %v1714
      %v1716 = vpop.f32.mrb[0].mxu0
      %1717 = vmatprep.mubr.bf16.mxu0 0
      %1718 = vmatmul.mubr.bf16.gmra.mrb[0].mxu0 %v1570
      %v1719 = vpop.f32.mrb[0].mxu0
      %v1720 = vadd.f32 0.0, %v1719
      %v1721 = vpop.f32.mrb[0].mxu0
      %v1722 = vpop.f32.mrb[0].mxu0
      %v1723 = vadd.f32 0.0, %v1722
      %v1724 = vpop.f32.mrb[0].mxu0
      %1725 = vmatprep.mubr.bf16.mxu0 0
      %1726 = vmatmul.mubr.bf16.gmra.mrb[0].mxu0 %v1573
      %v1727 = vpop.f32.mrb[0].mxu0
      %v1728 = vadd.f32 0.0, %v1727
      %v1729 = vpop.f32.mrb[0].mxu0
      %v1730 = vpop.f32.mrb[0].mxu0
      %v1731 = vadd.f32 0.0, %v1730
      %v1732 = vpop.f32.mrb[0].mxu0
      %1733 = vmatprep.mubr.bf16.mxu0 0
      %1734 = vmatmul.mubr.bf16.gmra.mrb[0].mxu0 %v1576
      %v1735 = vpop.f32.mrb[0].mxu0
      %v1736 = vadd.f32 0.0, %v1735
      %v1737 = vpop.f32.mrb[0].mxu0
      %v1738 = vpop.f32.mrb[0].mxu0
      %v1739 = vadd.f32 0.0, %v1738
      %v1740 = vpop.f32.mrb[0].mxu0
      %1741 = vdwg.mxu0
      %v1742 = vadd.f32 %v1223, %v1616
      %v1743 = vadd.f32 %v1226, %v1619
      %v1744 = vadd.f32 %v1231, %v1624
      %v1745 = vadd.f32 %v1234, %v1627
      %v1746 = vadd.f32 %v1239, %v1632
      %v1747 = vadd.f32 %v1242, %v1635
      %v1748 = vadd.f32 %v1247, %v1640
      %v1749 = vadd.f32 %v1250, %v1643
      %v1750 = vadd.f32 %v1255, %v1648
      %v1751 = vadd.f32 %v1258, %v1651
      %v1752 = vadd.f32 %v1263, %v1656
      %v1753 = vadd.f32 %v1266, %v1659
      %v1754 = vadd.f32 %v1271, %v1664
      %v1755 = vadd.f32 %v1274, %v1667
      %v1756 = vadd.f32 %v1279, %v1672
      %v1757 = vadd.f32 %v1282, %v1675
      %v1758 = vadd.f32 %v1287, %v1680
      %v1759 = vadd.f32 %v1290, %v1683
      %v1760 = vadd.f32 %v1295, %v1688
      %v1761 = vadd.f32 %v1298, %v1691
      %v1762 = vadd.f32 %v1303, %v1696
      %v1763 = vadd.f32 %v1306, %v1699
      %v1764 = vadd.f32 %v1311, %v1704
      %v1765 = vadd.f32 %v1314, %v1707
      %v1766 = vadd.f32 %v1319, %v1712
      %v1767 = vadd.f32 %v1322, %v1715
      %v1768 = vadd.f32 %v1327, %v1720
      %v1769 = vadd.f32 %v1330, %v1723
      %v1770 = vadd.f32 %v1335, %v1728
      %v1771 = vadd.f32 %v1338, %v1731
      %v1772 = vadd.f32 %v1343, %v1736
      %v1773 = vadd.f32 %v1346, %v1739
      %v1774 = vld [vmem:[%s329] sm:$0xf]
      %v1775 = vld [vmem:[%s329 + $0x4] sm:$0xf]
      %v1776 = vld [vmem:[%s329 + $0x8] sm:$0x1]
      %v1777 = vld [vmem:[%s329 + $0xc] sm:$0xf]
      %v1778 = vld [vmem:[%s329 + $0x10] sm:$0xf]
      %v1779 = vld [vmem:[%s329 + $0x14] sm:$0x1]
      %v1780 = vld [vmem:[%s329 + $0x18] sm:$0xf]
      %v1781 = vld [vmem:[%s329 + $0x1c] sm:$0xf]
      %v1782 = vld [vmem:[%s329 + $0x20] sm:$0x1]
      %v1783 = vld [vmem:[%s329 + $0x24] sm:$0xf]
      %v1784 = vld [vmem:[%s329 + $0x28] sm:$0xf]
      %v1785 = vld [vmem:[%s329 + $0x2c] sm:$0x1]
      %v1786 = vld [vmem:[%s329 + $0x30] sm:$0xf]
      %v1787 = vld [vmem:[%s329 + $0x34] sm:$0xf]
      %v1788 = vld [vmem:[%s329 + $0x38] sm:$0x1]
      %v1789 = vld [vmem:[%s329 + $0x3c] sm:$0xf]
      %v1790 = vld [vmem:[%s329 + $0x40] sm:$0xf]
      %v1791 = vld [vmem:[%s329 + $0x44] sm:$0x1]
      %v1792 = vld [vmem:[%s329 + $0x48] sm:$0xf]
      %v1793 = vld [vmem:[%s329 + $0x4c] sm:$0xf]
      %v1794 = vld [vmem:[%s329 + $0x50] sm:$0x1]
      %v1795 = vld [vmem:[%s329 + $0x54] sm:$0xf]
      %v1796 = vld [vmem:[%s329 + $0x58] sm:$0xf]
      %v1797 = vld [vmem:[%s329 + $0x5c] sm:$0x1]
      %v1798 = vld [vmem:[%s329 + $0x60] sm:$0xf]
      %v1799 = vld [vmem:[%s329 + $0x64] sm:$0xf]
      %v1800 = vld [vmem:[%s329 + $0x68] sm:$0x1]
      %v1801 = vld [vmem:[%s329 + $0x6c] sm:$0xf]
      %v1802 = vld [vmem:[%s329 + $0x70] sm:$0xf]
      %v1803 = vld [vmem:[%s329 + $0x74] sm:$0x1]
      %v1804 = vld [vmem:[%s329 + $0x78] sm:$0xf]
      %v1805 = vld [vmem:[%s329 + $0x7c] sm:$0xf]
      %v1806 = vld [vmem:[%s329 + $0x80] sm:$0x1]
      %v1807 = vld [vmem:[%s329 + $0x84] sm:$0xf]
      %v1808 = vld [vmem:[%s329 + $0x88] sm:$0xf]
      %v1809 = vld [vmem:[%s329 + $0x8c] sm:$0x1]
      %v1810 = vld [vmem:[%s329 + $0x90] sm:$0xf]
      %v1811 = vld [vmem:[%s329 + $0x94] sm:$0xf]
      %v1812 = vld [vmem:[%s329 + $0x98] sm:$0x1]
      %v1813 = vld [vmem:[%s329 + $0x9c] sm:$0xf]
      %v1814 = vld [vmem:[%s329 + $0xa0] sm:$0xf]
      %v1815 = vld [vmem:[%s329 + $0xa4] sm:$0x1]
      %v1816 = vld [vmem:[%s329 + $0xa8] sm:$0xf]
      %v1817 = vld [vmem:[%s329 + $0xac] sm:$0xf]
      %v1818 = vld [vmem:[%s329 + $0xb0] sm:$0x1]
      %v1819 = vld [vmem:[%s329 + $0xb4] sm:$0xf]
      %v1820 = vld [vmem:[%s329 + $0xb8] sm:$0xf]
      %v1821 = vld [vmem:[%s329 + $0xbc] sm:$0x1]
      %s1822 = scalar_lea.vmem %s3, 6
      %v1823 = vld [vmem:[%s1822] sm:$0x3]
      %v1856 = vunpack.c.l.b16 %v1774
      %v1857 = vunpack.c.l.b16 %v1775
      %v1858 = vunpack.c.l.b16 %v1777
      %v1859 = vunpack.c.l.b16 %v1778
      %v1860 = vunpack.c.l.b16 %v1780
      %v1861 = vunpack.c.l.b16 %v1781
      %v1862 = vunpack.c.l.b16 %v1783
      %v1863 = vunpack.c.l.b16 %v1784
      %v1864 = vunpack.c.l.b16 %v1786
      %v1865 = vunpack.c.l.b16 %v1787
      %v1866 = vunpack.c.l.b16 %v1789
      %v1867 = vunpack.c.l.b16 %v1790
      %v1868 = vunpack.c.l.b16 %v1792
      %v1869 = vunpack.c.l.b16 %v1793
      %v1870 = vunpack.c.l.b16 %v1795
      %v1871 = vunpack.c.l.b16 %v1796
      %v1872 = vunpack.c.l.b16 %v1798
      %v1873 = vunpack.c.l.b16 %v1799
      %v1874 = vunpack.c.l.b16 %v1801
      %v1875 = vunpack.c.l.b16 %v1802
      %v1876 = vunpack.c.l.b16 %v1804
      %v1877 = vunpack.c.l.b16 %v1805
      %v1878 = vunpack.c.l.b16 %v1807
      %v1879 = vunpack.c.l.b16 %v1808
      %v1880 = vunpack.c.l.b16 %v1810
      %v1881 = vunpack.c.l.b16 %v1811
      %v1882 = vunpack.c.l.b16 %v1813
      %v1883 = vunpack.c.l.b16 %v1814
      %v1884 = vunpack.c.l.b16 %v1816
      %v1885 = vunpack.c.l.b16 %v1817
      %v1886 = vunpack.c.l.b16 %v1819
      %v1887 = vunpack.c.l.b16 %v1820
      %v1888 = vpack.c.b16 %v1857, %v1856
      %v1889 = vpack.c.b16 %v1859, %v1858
      %v1890 = vpack.c.b16 %v1861, %v1860
      %v1891 = vpack.c.b16 %v1863, %v1862
      %v1892 = vpack.c.b16 %v1865, %v1864
      %v1893 = vpack.c.b16 %v1867, %v1866
      %v1894 = vpack.c.b16 %v1869, %v1868
      %v1895 = vpack.c.b16 %v1871, %v1870
      %v1896 = vpack.c.b16 %v1873, %v1872
      %v1897 = vpack.c.b16 %v1875, %v1874
      %v1898 = vpack.c.b16 %v1877, %v1876
      %v1899 = vpack.c.b16 %v1879, %v1878
      %v1900 = vpack.c.b16 %v1881, %v1880
      %v1901 = vpack.c.b16 %v1883, %v1882
      %v1902 = vpack.c.b16 %v1885, %v1884
      %v1903 = vpack.c.b16 %v1887, %v1886
      %v1905 = vsel %vm843, %v1888, 0
      %v1908 = vsel %vm843, %v1889, 0
      %v1911 = vsel %vm843, %v1890, 0
      %v1914 = vsel %vm843, %v1891, 0
      %v1917 = vsel %vm843, %v1892, 0
      %v1920 = vsel %vm843, %v1893, 0
      %v1923 = vsel %vm843, %v1894, 0
      %v1926 = vsel %vm843, %v1895, 0
      %v1929 = vsel %vm843, %v1896, 0
      %v1932 = vsel %vm843, %v1897, 0
      %v1935 = vsel %vm843, %v1898, 0
      %v1938 = vsel %vm843, %v1899, 0
      %v1941 = vsel %vm843, %v1900, 0
      %v1944 = vsel %vm843, %v1901, 0
      %v1947 = vsel %vm843, %v1902, 0
      %v1950 = vsel %vm843, %v1903, 0
      %v1953 = vsel %vm892, %v1823, 0
      %1955 = vmatprep.subr.bf16.mxu0 0
      %1956 = vmatpush1.bf16.msra.mxu0 %v1953
      %1957 = vmatprep.subr.bf16.mxu0 0
      %1958 = vmatpush1.bf16.msra.mxu0 0
      %1959 = vmatprep.subr.bf16.mxu0 0
      %1960 = vmatpush1.bf16.msra.mxu0 0
      %1961 = vmatprep.subr.bf16.mxu0 0
      %1962 = vmatpush1.bf16.msra.mxu0 0
      %1963 = vmatprep.subr.bf16.mxu0 0
      %1964 = vmatpush1.bf16.msra.mxu0 0
      %1965 = vmatprep.subr.bf16.mxu0 0
      %1966 = vmatpush1.bf16.msra.mxu0 0
      %1967 = vmatprep.subr.bf16.mxu0 0
      %1968 = vmatpush1.bf16.msra.mxu0 0
      %1969 = vmatprep.subr.bf16.mxu0 0
      %1970 = vmatpush1.bf16.msra.mxu0 0
      %1971 = vmatprep.subr.bf16.mxu0 0
      %1972 = vmatpush1.bf16.msra.mxu0 0
      %1973 = vmatprep.subr.bf16.mxu0 0
      %1974 = vmatpush1.bf16.msra.mxu0 0
      %1975 = vmatprep.subr.bf16.mxu0 0
      %1976 = vmatpush1.bf16.msra.mxu0 0
      %1977 = vmatprep.subr.bf16.mxu0 0
      %1978 = vmatpush1.bf16.msra.mxu0 0
      %1979 = vmatprep.subr.bf16.mxu0 0
      %1980 = vmatpush1.bf16.msra.mxu0 0
      %1981 = vmatprep.subr.bf16.mxu0 0
      %1982 = vmatpush1.bf16.msra.mxu0 0
      %1983 = vmatprep.subr.bf16.mxu0 0
      %1984 = vmatpush1.bf16.msra.mxu0 0
      %1985 = vmatprep.subr.bf16.mxu0 0
      %1986 = vmatpush1.bf16.msra.mxu0 0
      %1987 = vmatprep.mubr.bf16.mxu0 0
      %1988 = vmatmul.mubr.bf16.gmra.mrb[0].mxu0 %v1905
      %v1989 = vpop.f32.mrb[0].mxu0
      %v1990 = vadd.f32 0.0, %v1989
      %v1991 = vpop.f32.mrb[0].mxu0
      %v1992 = vpop.f32.mrb[0].mxu0
      %v1993 = vadd.f32 0.0, %v1992
      %v1994 = vpop.f32.mrb[0].mxu0
      %1995 = vmatprep.mubr.bf16.mxu0 0
      %1996 = vmatmul.mubr.bf16.gmra.mrb[0].mxu0 %v1908
      %v1997 = vpop.f32.mrb[0].mxu0
      %v1998 = vadd.f32 0.0, %v1997
      %v1999 = vpop.f32.mrb[0].mxu0
      %v2000 = vpop.f32.mrb[0].mxu0
      %v2001 = vadd.f32 0.0, %v2000
      %v2002 = vpop.f32.mrb[0].mxu0
      %2003 = vmatprep.mubr.bf16.mxu0 0
      %2004 = vmatmul.mubr.bf16.gmra.mrb[0].mxu0 %v1911
      %v2005 = vpop.f32.mrb[0].mxu0
      %v2006 = vadd.f32 0.0, %v2005
      %v2007 = vpop.f32.mrb[0].mxu0
      %v2008 = vpop.f32.mrb[0].mxu0
      %v2009 = vadd.f32 0.0, %v2008
      %v2010 = vpop.f32.mrb[0].mxu0
      %2011 = vmatprep.mubr.bf16.mxu0 0
      %2012 = vmatmul.mubr.bf16.gmra.mrb[0].mxu0 %v1914
      %v2013 = vpop.f32.mrb[0].mxu0
      %v2014 = vadd.f32 0.0, %v2013
      %v2015 = vpop.f32.mrb[0].mxu0
      %v2016 = vpop.f32.mrb[0].mxu0
      %v2017 = vadd.f32 0.0, %v2016
      %v2018 = vpop.f32.mrb[0].mxu0
      %2019 = vmatprep.mubr.bf16.mxu0 0
      %2020 = vmatmul.mubr.bf16.gmra.mrb[0].mxu0 %v1917
      %v2021 = vpop.f32.mrb[0].mxu0
      %v2022 = vadd.f32 0.0, %v2021
      %v2023 = vpop.f32.mrb[0].mxu0
      %v2024 = vpop.f32.mrb[0].mxu0
      %v2025 = vadd.f32 0.0, %v2024
      %v2026 = vpop.f32.mrb[0].mxu0
      %2027 = vmatprep.mubr.bf16.mxu0 0
      %2028 = vmatmul.mubr.bf16.gmra.mrb[0].mxu0 %v1920
      %v2029 = vpop.f32.mrb[0].mxu0
      %v2030 = vadd.f32 0.0, %v2029
      %v2031 = vpop.f32.mrb[0].mxu0
      %v2032 = vpop.f32.mrb[0].mxu0
      %v2033 = vadd.f32 0.0, %v2032
      %v2034 = vpop.f32.mrb[0].mxu0
      %2035 = vmatprep.mubr.bf16.mxu0 0
      %2036 = vmatmul.mubr.bf16.gmra.mrb[0].mxu0 %v1923
      %v2037 = vpop.f32.mrb[0].mxu0
      %v2038 = vadd.f32 0.0, %v2037
      %v2039 = vpop.f32.mrb[0].mxu0
      %v2040 = vpop.f32.mrb[0].mxu0
      %v2041 = vadd.f32 0.0, %v2040
      %v2042 = vpop.f32.mrb[0].mxu0
      %2043 = vmatprep.mubr.bf16.mxu0 0
      %2044 = vmatmul.mubr.bf16.gmra.mrb[0].mxu0 %v1926
      %v2045 = vpop.f32.mrb[0].mxu0
      %v2046 = vadd.f32 0.0, %v2045
      %v2047 = vpop.f32.mrb[0].mxu0
      %v2048 = vpop.f32.mrb[0].mxu0
      %v2049 = vadd.f32 0.0, %v2048
      %v2050 = vpop.f32.mrb[0].mxu0
      %2051 = vmatprep.mubr.bf16.mxu0 0
      %2052 = vmatmul.mubr.bf16.gmra.mrb[0].mxu0 %v1929
      %v2053 = vpop.f32.mrb[0].mxu0
      %v2054 = vadd.f32 0.0, %v2053
      %v2055 = vpop.f32.mrb[0].mxu0
      %v2056 = vpop.f32.mrb[0].mxu0
      %v2057 = vadd.f32 0.0, %v2056
      %v2058 = vpop.f32.mrb[0].mxu0
      %2059 = vmatprep.mubr.bf16.mxu0 0
      %2060 = vmatmul.mubr.bf16.gmra.mrb[0].mxu0 %v1932
      %v2061 = vpop.f32.mrb[0].mxu0
      %v2062 = vadd.f32 0.0, %v2061
      %v2063 = vpop.f32.mrb[0].mxu0
      %v2064 = vpop.f32.mrb[0].mxu0
      %v2065 = vadd.f32 0.0, %v2064
      %v2066 = vpop.f32.mrb[0].mxu0
      %2067 = vmatprep.mubr.bf16.mxu0 0
      %2068 = vmatmul.mubr.bf16.gmra.mrb[0].mxu0 %v1935
      %v2069 = vpop.f32.mrb[0].mxu0
      %v2070 = vadd.f32 0.0, %v2069
      %v2071 = vpop.f32.mrb[0].mxu0
      %v2072 = vpop.f32.mrb[0].mxu0
      %v2073 = vadd.f32 0.0, %v2072
      %v2074 = vpop.f32.mrb[0].mxu0
      %2075 = vmatprep.mubr.bf16.mxu0 0
      %2076 = vmatmul.mubr.bf16.gmra.mrb[0].mxu0 %v1938
      %v2077 = vpop.f32.mrb[0].mxu0
      %v2078 = vadd.f32 0.0, %v2077
      %v2079 = vpop.f32.mrb[0].mxu0
      %v2080 = vpop.f32.mrb[0].mxu0
      %v2081 = vadd.f32 0.0, %v2080
      %v2082 = vpop.f32.mrb[0].mxu0
      %2083 = vmatprep.mubr.bf16.mxu0 0
      %2084 = vmatmul.mubr.bf16.gmra.mrb[0].mxu0 %v1941
      %v2085 = vpop.f32.mrb[0].mxu0
      %v2086 = vadd.f32 0.0, %v2085
      %v2087 = vpop.f32.mrb[0].mxu0
      %v2088 = vpop.f32.mrb[0].mxu0
      %v2089 = vadd.f32 0.0, %v2088
      %v2090 = vpop.f32.mrb[0].mxu0
      %2091 = vmatprep.mubr.bf16.mxu0 0
      %2092 = vmatmul.mubr.bf16.gmra.mrb[0].mxu0 %v1944
      %v2093 = vpop.f32.mrb[0].mxu0
      %v2094 = vadd.f32 0.0, %v2093
      %v2095 = vpop.f32.mrb[0].mxu0
      %v2096 = vpop.f32.mrb[0].mxu0
      %v2097 = vadd.f32 0.0, %v2096
      %v2098 = vpop.f32.mrb[0].mxu0
      %2099 = vmatprep.mubr.bf16.mxu0 0
      %2100 = vmatmul.mubr.bf16.gmra.mrb[0].mxu0 %v1947
      %v2101 = vpop.f32.mrb[0].mxu0
      %v2102 = vadd.f32 0.0, %v2101
      %v2103 = vpop.f32.mrb[0].mxu0
      %v2104 = vpop.f32.mrb[0].mxu0
      %v2105 = vadd.f32 0.0, %v2104
      %v2106 = vpop.f32.mrb[0].mxu0
      %2107 = vmatprep.mubr.bf16.mxu0 0
      %2108 = vmatmul.mubr.bf16.gmra.mrb[0].mxu0 %v1950
      %v2109 = vpop.f32.mrb[0].mxu0
      %v2110 = vadd.f32 0.0, %v2109
      %v2111 = vpop.f32.mrb[0].mxu0
      %v2112 = vpop.f32.mrb[0].mxu0
      %v2113 = vadd.f32 0.0, %v2112
      %v2114 = vpop.f32.mrb[0].mxu0
      %2115 = vdwg.mxu0
      %v2116 = vadd.f32 %v1742, %v1990
      %v2117 = vadd.f32 %v1743, %v1993
      %v2118 = vadd.f32 %v1744, %v1998
      %v2119 = vadd.f32 %v1745, %v2001
      %v2120 = vadd.f32 %v1746, %v2006
      %v2121 = vadd.f32 %v1747, %v2009
      %v2122 = vadd.f32 %v1748, %v2014
      %v2123 = vadd.f32 %v1749, %v2017
      %v2124 = vadd.f32 %v1750, %v2022
      %v2125 = vadd.f32 %v1751, %v2025
      %v2126 = vadd.f32 %v1752, %v2030
      %v2127 = vadd.f32 %v1753, %v2033
      %v2128 = vadd.f32 %v1754, %v2038
      %v2129 = vadd.f32 %v1755, %v2041
      %v2130 = vadd.f32 %v1756, %v2046
      %v2131 = vadd.f32 %v1757, %v2049
      %v2132 = vadd.f32 %v1758, %v2054
      %v2133 = vadd.f32 %v1759, %v2057
      %v2134 = vadd.f32 %v1760, %v2062
      %v2135 = vadd.f32 %v1761, %v2065
      %v2136 = vadd.f32 %v1762, %v2070
      %v2137 = vadd.f32 %v1763, %v2073
      %v2138 = vadd.f32 %v1764, %v2078
      %v2139 = vadd.f32 %v1765, %v2081
      %v2140 = vadd.f32 %v1766, %v2086
      %v2141 = vadd.f32 %v1767, %v2089
      %v2142 = vadd.f32 %v1768, %v2094
      %v2143 = vadd.f32 %v1769, %v2097
      %v2144 = vadd.f32 %v1770, %v2102
      %v2145 = vadd.f32 %v1771, %v2105
      %v2146 = vadd.f32 %v1772, %v2110
      %v2147 = vadd.f32 %v1773, %v2113
      %v2149 = vshrl.u32 %v1774, 16
      %v2151 = vrot.slane %v2149, 4
      %v2152 = vshll.u32 %v1774, 16
      %v2154 = vrot.slane %v2152, 5
      %v2155 = vor.u32 %v2151, %v2154
      %v2156 = vrot.slane %v2155, 4
      %v2158 = vshll.u32 %v1775, 16
      %v2160 = vrot.slane %v2158, 5
      %v2161 = vsel %vm408, %v2156, %v2160
      %v2162 = vshrl.u32 %v1775, 16
      %v2164 = vrot.slane %v2162, 4
      %v2165 = vor.u32 %v2164, %v2160
      %v2166 = vrot.slane %v2165, 4
      %v2168 = vshll.u32 %v1776, 16
      %v2170 = vrot.slane %v2168, 5
      %v2171 = vsel %vm408, %v2166, %v2170
      %v2173 = vshrl.u32 %v1777, 16
      %v2175 = vrot.slane %v2173, 4
      %v2176 = vshll.u32 %v1777, 16
      %v2178 = vrot.slane %v2176, 5
      %v2179 = vor.u32 %v2175, %v2178
      %v2180 = vrot.slane %v2179, 4
      %v2182 = vshll.u32 %v1778, 16
      %v2184 = vrot.slane %v2182, 5
      %v2185 = vsel %vm408, %v2180, %v2184
      %v2186 = vshrl.u32 %v1778, 16
      %v2188 = vrot.slane %v2186, 4
      %v2189 = vor.u32 %v2188, %v2184
      %v2190 = vrot.slane %v2189, 4
      %v2192 = vshll.u32 %v1779, 16
      %v2194 = vrot.slane %v2192, 5
      %v2195 = vsel %vm408, %v2190, %v2194
      %v2197 = vshrl.u32 %v1780, 16
      %v2199 = vrot.slane %v2197, 4
      %v2200 = vshll.u32 %v1780, 16
      %v2202 = vrot.slane %v2200, 5
      %v2203 = vor.u32 %v2199, %v2202
      %v2204 = vrot.slane %v2203, 4
      %v2206 = vshll.u32 %v1781, 16
      %v2208 = vrot.slane %v2206, 5
      %v2209 = vsel %vm408, %v2204, %v2208
      %v2210 = vshrl.u32 %v1781, 16
      %v2212 = vrot.slane %v2210, 4
      %v2213 = vor.u32 %v2212, %v2208
      %v2214 = vrot.slane %v2213, 4
      %v2216 = vshll.u32 %v1782, 16
      %v2218 = vrot.slane %v2216, 5
      %v2219 = vsel %vm408, %v2214, %v2218
      %v2221 = vshrl.u32 %v1783, 16
      %v2223 = vrot.slane %v2221, 4
      %v2224 = vshll.u32 %v1783, 16
      %v2226 = vrot.slane %v2224, 5
      %v2227 = vor.u32 %v2223, %v2226
      %v2228 = vrot.slane %v2227, 4
      %v2230 = vshll.u32 %v1784, 16
      %v2232 = vrot.slane %v2230, 5
      %v2233 = vsel %vm408, %v2228, %v2232
      %v2234 = vshrl.u32 %v1784, 16
      %v2236 = vrot.slane %v2234, 4
      %v2237 = vor.u32 %v2236, %v2232
      %v2238 = vrot.slane %v2237, 4
      %v2240 = vshll.u32 %v1785, 16
      %v2242 = vrot.slane %v2240, 5
      %v2243 = vsel %vm408, %v2238, %v2242
      %v2245 = vshrl.u32 %v1786, 16
      %v2247 = vrot.slane %v2245, 4
      %v2248 = vshll.u32 %v1786, 16
      %v2250 = vrot.slane %v2248, 5
      %v2251 = vor.u32 %v2247, %v2250
      %v2252 = vrot.slane %v2251, 4
      %v2254 = vshll.u32 %v1787, 16
      %v2256 = vrot.slane %v2254, 5
      %v2257 = vsel %vm408, %v2252, %v2256
      %v2258 = vshrl.u32 %v1787, 16
      %v2260 = vrot.slane %v2258, 4
      %v2261 = vor.u32 %v2260, %v2256
      %v2262 = vrot.slane %v2261, 4
      %v2264 = vshll.u32 %v1788, 16
      %v2266 = vrot.slane %v2264, 5
      %v2267 = vsel %vm408, %v2262, %v2266
      %v2269 = vshrl.u32 %v1789, 16
      %v2271 = vrot.slane %v2269, 4
      %v2272 = vshll.u32 %v1789, 16
      %v2274 = vrot.slane %v2272, 5
      %v2275 = vor.u32 %v2271, %v2274
      %v2276 = vrot.slane %v2275, 4
      %v2278 = vshll.u32 %v1790, 16
      %v2280 = vrot.slane %v2278, 5
      %v2281 = vsel %vm408, %v2276, %v2280
      %v2282 = vshrl.u32 %v1790, 16
      %v2284 = vrot.slane %v2282, 4
      %v2285 = vor.u32 %v2284, %v2280
      %v2286 = vrot.slane %v2285, 4
      %v2288 = vshll.u32 %v1791, 16
      %v2290 = vrot.slane %v2288, 5
      %v2291 = vsel %vm408, %v2286, %v2290
      %v2293 = vshrl.u32 %v1792, 16
      %v2295 = vrot.slane %v2293, 4
      %v2296 = vshll.u32 %v1792, 16
      %v2298 = vrot.slane %v2296, 5
      %v2299 = vor.u32 %v2295, %v2298
      %v2300 = vrot.slane %v2299, 4
      %v2302 = vshll.u32 %v1793, 16
      %v2304 = vrot.slane %v2302, 5
      %v2305 = vsel %vm408, %v2300, %v2304
      %v2306 = vshrl.u32 %v1793, 16
      %v2308 = vrot.slane %v2306, 4
      %v2309 = vor.u32 %v2308, %v2304
      %v2310 = vrot.slane %v2309, 4
      %v2312 = vshll.u32 %v1794, 16
      %v2314 = vrot.slane %v2312, 5
      %v2315 = vsel %vm408, %v2310, %v2314
      %v2317 = vshrl.u32 %v1795, 16
      %v2319 = vrot.slane %v2317, 4
      %v2320 = vshll.u32 %v1795, 16
      %v2322 = vrot.slane %v2320, 5
      %v2323 = vor.u32 %v2319, %v2322
      %v2324 = vrot.slane %v2323, 4
      %v2326 = vshll.u32 %v1796, 16
      %v2328 = vrot.slane %v2326, 5
      %v2329 = vsel %vm408, %v2324, %v2328
      %v2330 = vshrl.u32 %v1796, 16
      %v2332 = vrot.slane %v2330, 4
      %v2333 = vor.u32 %v2332, %v2328
      %v2334 = vrot.slane %v2333, 4
      %v2336 = vshll.u32 %v1797, 16
      %v2338 = vrot.slane %v2336, 5
      %v2339 = vsel %vm408, %v2334, %v2338
      %v2341 = vshrl.u32 %v1798, 16
      %v2343 = vrot.slane %v2341, 4
      %v2344 = vshll.u32 %v1798, 16
      %v2346 = vrot.slane %v2344, 5
      %v2347 = vor.u32 %v2343, %v2346
      %v2348 = vrot.slane %v2347, 4
      %v2350 = vshll.u32 %v1799, 16
      %v2352 = vrot.slane %v2350, 5
      %v2353 = vsel %vm408, %v2348, %v2352
      %v2354 = vshrl.u32 %v1799, 16
      %v2356 = vrot.slane %v2354, 4
      %v2357 = vor.u32 %v2356, %v2352
      %v2358 = vrot.slane %v2357, 4
      %v2360 = vshll.u32 %v1800, 16
      %v2362 = vrot.slane %v2360, 5
      %v2363 = vsel %vm408, %v2358, %v2362
      %v2365 = vshrl.u32 %v1801, 16
      %v2367 = vrot.slane %v2365, 4
      %v2368 = vshll.u32 %v1801, 16
      %v2370 = vrot.slane %v2368, 5
      %v2371 = vor.u32 %v2367, %v2370
      %v2372 = vrot.slane %v2371, 4
      %v2374 = vshll.u32 %v1802, 16
      %v2376 = vrot.slane %v2374, 5
      %v2377 = vsel %vm408, %v2372, %v2376
      %v2378 = vshrl.u32 %v1802, 16
      %v2380 = vrot.slane %v2378, 4
      %v2381 = vor.u32 %v2380, %v2376
      %v2382 = vrot.slane %v2381, 4
      %v2384 = vshll.u32 %v1803, 16
      %v2386 = vrot.slane %v2384, 5
      %v2387 = vsel %vm408, %v2382, %v2386
      %v2389 = vshrl.u32 %v1804, 16
      %v2391 = vrot.slane %v2389, 4
      %v2392 = vshll.u32 %v1804, 16
      %v2394 = vrot.slane %v2392, 5
      %v2395 = vor.u32 %v2391, %v2394
      %v2396 = vrot.slane %v2395, 4
      %v2398 = vshll.u32 %v1805, 16
      %v2400 = vrot.slane %v2398, 5
      %v2401 = vsel %vm408, %v2396, %v2400
      %v2402 = vshrl.u32 %v1805, 16
      %v2404 = vrot.slane %v2402, 4
      %v2405 = vor.u32 %v2404, %v2400
      %v2406 = vrot.slane %v2405, 4
      %v2408 = vshll.u32 %v1806, 16
      %v2410 = vrot.slane %v2408, 5
      %v2411 = vsel %vm408, %v2406, %v2410
      %v2413 = vshrl.u32 %v1807, 16
      %v2415 = vrot.slane %v2413, 4
      %v2416 = vshll.u32 %v1807, 16
      %v2418 = vrot.slane %v2416, 5
      %v2419 = vor.u32 %v2415, %v2418
      %v2420 = vrot.slane %v2419, 4
      %v2422 = vshll.u32 %v1808, 16
      %v2424 = vrot.slane %v2422, 5
      %v2425 = vsel %vm408, %v2420, %v2424
      %v2426 = vshrl.u32 %v1808, 16
      %v2428 = vrot.slane %v2426, 4
      %v2429 = vor.u32 %v2428, %v2424
      %v2430 = vrot.slane %v2429, 4
      %v2432 = vshll.u32 %v1809, 16
      %v2434 = vrot.slane %v2432, 5
      %v2435 = vsel %vm408, %v2430, %v2434
      %v2437 = vshrl.u32 %v1810, 16
      %v2439 = vrot.slane %v2437, 4
      %v2440 = vshll.u32 %v1810, 16
      %v2442 = vrot.slane %v2440, 5
      %v2443 = vor.u32 %v2439, %v2442
      %v2444 = vrot.slane %v2443, 4
      %v2446 = vshll.u32 %v1811, 16
      %v2448 = vrot.slane %v2446, 5
      %v2449 = vsel %vm408, %v2444, %v2448
      %v2450 = vshrl.u32 %v1811, 16
      %v2452 = vrot.slane %v2450, 4
      %v2453 = vor.u32 %v2452, %v2448
      %v2454 = vrot.slane %v2453, 4
      %v2456 = vshll.u32 %v1812, 16
      %v2458 = vrot.slane %v2456, 5
      %v2459 = vsel %vm408, %v2454, %v2458
      %v2461 = vshrl.u32 %v1813, 16
      %v2463 = vrot.slane %v2461, 4
      %v2464 = vshll.u32 %v1813, 16
      %v2466 = vrot.slane %v2464, 5
      %v2467 = vor.u32 %v2463, %v2466
      %v2468 = vrot.slane %v2467, 4
      %v2470 = vshll.u32 %v1814, 16
      %v2472 = vrot.slane %v2470, 5
      %v2473 = vsel %vm408, %v2468, %v2472
      %v2474 = vshrl.u32 %v1814, 16
      %v2476 = vrot.slane %v2474, 4
      %v2477 = vor.u32 %v2476, %v2472
      %v2478 = vrot.slane %v2477, 4
      %v2480 = vshll.u32 %v1815, 16
      %v2482 = vrot.slane %v2480, 5
      %v2483 = vsel %vm408, %v2478, %v2482
      %v2485 = vshrl.u32 %v1816, 16
      %v2487 = vrot.slane %v2485, 4
      %v2488 = vshll.u32 %v1816, 16
      %v2490 = vrot.slane %v2488, 5
      %v2491 = vor.u32 %v2487, %v2490
      %v2492 = vrot.slane %v2491, 4
      %v2494 = vshll.u32 %v1817, 16
      %v2496 = vrot.slane %v2494, 5
      %v2497 = vsel %vm408, %v2492, %v2496
      %v2498 = vshrl.u32 %v1817, 16
      %v2500 = vrot.slane %v2498, 4
      %v2501 = vor.u32 %v2500, %v2496
      %v2502 = vrot.slane %v2501, 4
      %v2504 = vshll.u32 %v1818, 16
      %v2506 = vrot.slane %v2504, 5
      %v2507 = vsel %vm408, %v2502, %v2506
      %v2509 = vshrl.u32 %v1819, 16
      %v2511 = vrot.slane %v2509, 4
      %v2512 = vshll.u32 %v1819, 16
      %v2514 = vrot.slane %v2512, 5
      %v2515 = vor.u32 %v2511, %v2514
      %v2516 = vrot.slane %v2515, 4
      %v2518 = vshll.u32 %v1820, 16
      %v2520 = vrot.slane %v2518, 5
      %v2521 = vsel %vm408, %v2516, %v2520
      %v2522 = vshrl.u32 %v1820, 16
      %v2524 = vrot.slane %v2522, 4
      %v2525 = vor.u32 %v2524, %v2520
      %v2526 = vrot.slane %v2525, 4
      %v2528 = vshll.u32 %v1821, 16
      %v2530 = vrot.slane %v2528, 5
      %v2531 = vsel %vm408, %v2526, %v2530
      %s2532 = scalar_lea.vmem %s3, 8
      %v2533 = vld [vmem:[%s2532] sm:$0x3]
      %v2534 = vunpack.c.l.b16 %v2161
      %v2535 = vunpack.c.l.b16 %v2171
      %v2536 = vunpack.c.l.b16 %v2185
      %v2537 = vunpack.c.l.b16 %v2195
      %v2538 = vunpack.c.l.b16 %v2209
      %v2539 = vunpack.c.l.b16 %v2219
      %v2540 = vunpack.c.l.b16 %v2233
      %v2541 = vunpack.c.l.b16 %v2243
      %v2542 = vunpack.c.l.b16 %v2257
      %v2543 = vunpack.c.l.b16 %v2267
      %v2544 = vunpack.c.l.b16 %v2281
      %v2545 = vunpack.c.l.b16 %v2291
      %v2546 = vunpack.c.l.b16 %v2305
      %v2547 = vunpack.c.l.b16 %v2315
      %v2548 = vunpack.c.l.b16 %v2329
      %v2549 = vunpack.c.l.b16 %v2339
      %v2550 = vunpack.c.l.b16 %v2353
      %v2551 = vunpack.c.l.b16 %v2363
      %v2552 = vunpack.c.l.b16 %v2377
      %v2553 = vunpack.c.l.b16 %v2387
      %v2554 = vunpack.c.l.b16 %v2401
      %v2555 = vunpack.c.l.b16 %v2411
      %v2556 = vunpack.c.l.b16 %v2425
      %v2557 = vunpack.c.l.b16 %v2435
      %v2558 = vunpack.c.l.b16 %v2449
      %v2559 = vunpack.c.l.b16 %v2459
      %v2560 = vunpack.c.l.b16 %v2473
      %v2561 = vunpack.c.l.b16 %v2483
      %v2562 = vunpack.c.l.b16 %v2497
      %v2563 = vunpack.c.l.b16 %v2507
      %v2564 = vunpack.c.l.b16 %v2521
      %v2565 = vunpack.c.l.b16 %v2531
      %v2566 = vpack.c.b16 %v2535, %v2534
      %v2567 = vpack.c.b16 %v2537, %v2536
      %v2568 = vpack.c.b16 %v2539, %v2538
      %v2569 = vpack.c.b16 %v2541, %v2540
      %v2570 = vpack.c.b16 %v2543, %v2542
      %v2571 = vpack.c.b16 %v2545, %v2544
      %v2572 = vpack.c.b16 %v2547, %v2546
      %v2573 = vpack.c.b16 %v2549, %v2548
      %v2574 = vpack.c.b16 %v2551, %v2550
      %v2575 = vpack.c.b16 %v2553, %v2552
      %v2576 = vpack.c.b16 %v2555, %v2554
      %v2577 = vpack.c.b16 %v2557, %v2556
      %v2578 = vpack.c.b16 %v2559, %v2558
      %v2579 = vpack.c.b16 %v2561, %v2560
      %v2580 = vpack.c.b16 %v2563, %v2562
      %v2581 = vpack.c.b16 %v2565, %v2564
      %v2583 = vsel %vm843, %v2566, 0
      %v2586 = vsel %vm843, %v2567, 0
      %v2589 = vsel %vm843, %v2568, 0
      %v2592 = vsel %vm843, %v2569, 0
      %v2595 = vsel %vm843, %v2570, 0
      %v2598 = vsel %vm843, %v2571, 0
      %v2601 = vsel %vm843, %v2572, 0
      %v2604 = vsel %vm843, %v2573, 0
      %v2607 = vsel %vm843, %v2574, 0
      %v2610 = vsel %vm843, %v2575, 0
      %v2613 = vsel %vm843, %v2576, 0
      %v2616 = vsel %vm843, %v2577, 0
      %v2619 = vsel %vm843, %v2578, 0
      %v2622 = vsel %vm843, %v2579, 0
      %v2625 = vsel %vm843, %v2580, 0
      %v2628 = vsel %vm843, %v2581, 0
      %v2631 = vsel %vm892, %v2533, 0
      %2633 = vmatprep.subr.bf16.mxu0 0
      %2634 = vmatpush1.bf16.msra.mxu0 %v2631
      %2635 = vmatprep.subr.bf16.mxu0 0
      %2636 = vmatpush1.bf16.msra.mxu0 0
      %2637 = vmatprep.subr.bf16.mxu0 0
      %2638 = vmatpush1.bf16.msra.mxu0 0
      %2639 = vmatprep.subr.bf16.mxu0 0
      %2640 = vmatpush1.bf16.msra.mxu0 0
      %2641 = vmatprep.subr.bf16.mxu0 0
      %2642 = vmatpush1.bf16.msra.mxu0 0
      %2643 = vmatprep.subr.bf16.mxu0 0
      %2644 = vmatpush1.bf16.msra.mxu0 0
      %2645 = vmatprep.subr.bf16.mxu0 0
      %2646 = vmatpush1.bf16.msra.mxu0 0
      %2647 = vmatprep.subr.bf16.mxu0 0
      %2648 = vmatpush1.bf16.msra.mxu0 0
      %2649 = vmatprep.subr.bf16.mxu0 0
      %2650 = vmatpush1.bf16.msra.mxu0 0
      %2651 = vmatprep.subr.bf16.mxu0 0
      %2652 = vmatpush1.bf16.msra.mxu0 0
      %2653 = vmatprep.subr.bf16.mxu0 0
      %2654 = vmatpush1.bf16.msra.mxu0 0
      %2655 = vmatprep.subr.bf16.mxu0 0
      %2656 = vmatpush1.bf16.msra.mxu0 0
      %2657 = vmatprep.subr.bf16.mxu0 0
      %2658 = vmatpush1.bf16.msra.mxu0 0
      %2659 = vmatprep.subr.bf16.mxu0 0
      %2660 = vmatpush1.bf16.msra.mxu0 0
      %2661 = vmatprep.subr.bf16.mxu0 0
      %2662 = vmatpush1.bf16.msra.mxu0 0
      %2663 = vmatprep.subr.bf16.mxu0 0
      %2664 = vmatpush1.bf16.msra.mxu0 0
      %2665 = vmatprep.mubr.bf16.mxu0 0
      %2666 = vmatmul.mubr.bf16.gmra.mrb[0].mxu0 %v2583
      %v2667 = vpop.f32.mrb[0].mxu0
      %v2668 = vadd.f32 0.0, %v2667
      %v2669 = vpop.f32.mrb[0].mxu0
      %v2670 = vpop.f32.mrb[0].mxu0
      %v2671 = vadd.f32 0.0, %v2670
      %v2672 = vpop.f32.mrb[0].mxu0
      %2673 = vmatprep.mubr.bf16.mxu0 0
      %2674 = vmatmul.mubr.bf16.gmra.mrb[0].mxu0 %v2586
      %v2675 = vpop.f32.mrb[0].mxu0
      %v2676 = vadd.f32 0.0, %v2675
      %v2677 = vpop.f32.mrb[0].mxu0
      %v2678 = vpop.f32.mrb[0].mxu0
      %v2679 = vadd.f32 0.0, %v2678
      %v2680 = vpop.f32.mrb[0].mxu0
      %2681 = vmatprep.mubr.bf16.mxu0 0
      %2682 = vmatmul.mubr.bf16.gmra.mrb[0].mxu0 %v2589
      %v2683 = vpop.f32.mrb[0].mxu0
      %v2684 = vadd.f32 0.0, %v2683
      %v2685 = vpop.f32.mrb[0].mxu0
      %v2686 = vpop.f32.mrb[0].mxu0
      %v2687 = vadd.f32 0.0, %v2686
      %v2688 = vpop.f32.mrb[0].mxu0
      %2689 = vmatprep.mubr.bf16.mxu0 0
      %2690 = vmatmul.mubr.bf16.gmra.mrb[0].mxu0 %v2592
      %v2691 = vpop.f32.mrb[0].mxu0
      %v2692 = vadd.f32 0.0, %v2691
      %v2693 = vpop.f32.mrb[0].mxu0
      %v2694 = vpop.f32.mrb[0].mxu0
      %v2695 = vadd.f32 0.0, %v2694
      %v2696 = vpop.f32.mrb[0].mxu0
      %2697 = vmatprep.mubr.bf16.mxu0 0
      %2698 = vmatmul.mubr.bf16.gmra.mrb[0].mxu0 %v2595
      %v2699 = vpop.f32.mrb[0].mxu0
      %v2700 = vadd.f32 0.0, %v2699
      %v2701 = vpop.f32.mrb[0].mxu0
      %v2702 = vpop.f32.mrb[0].mxu0
      %v2703 = vadd.f32 0.0, %v2702
      %v2704 = vpop.f32.mrb[0].mxu0
      %2705 = vmatprep.mubr.bf16.mxu0 0
      %2706 = vmatmul.mubr.bf16.gmra.mrb[0].mxu0 %v2598
      %v2707 = vpop.f32.mrb[0].mxu0
      %v2708 = vadd.f32 0.0, %v2707
      %v2709 = vpop.f32.mrb[0].mxu0
      %v2710 = vpop.f32.mrb[0].mxu0
      %v2711 = vadd.f32 0.0, %v2710
      %v2712 = vpop.f32.mrb[0].mxu0
      %2713 = vmatprep.mubr.bf16.mxu0 0
      %2714 = vmatmul.mubr.bf16.gmra.mrb[0].mxu0 %v2601
      %v2715 = vpop.f32.mrb[0].mxu0
      %v2716 = vadd.f32 0.0, %v2715
      %v2717 = vpop.f32.mrb[0].mxu0
      %v2718 = vpop.f32.mrb[0].mxu0
      %v2719 = vadd.f32 0.0, %v2718
      %v2720 = vpop.f32.mrb[0].mxu0
      %2721 = vmatprep.mubr.bf16.mxu0 0
      %2722 = vmatmul.mubr.bf16.gmra.mrb[0].mxu0 %v2604
      %v2723 = vpop.f32.mrb[0].mxu0
      %v2724 = vadd.f32 0.0, %v2723
      %v2725 = vpop.f32.mrb[0].mxu0
      %v2726 = vpop.f32.mrb[0].mxu0
      %v2727 = vadd.f32 0.0, %v2726
      %v2728 = vpop.f32.mrb[0].mxu0
      %2729 = vmatprep.mubr.bf16.mxu0 0
      %2730 = vmatmul.mubr.bf16.gmra.mrb[0].mxu0 %v2607
      %v2731 = vpop.f32.mrb[0].mxu0
      %v2732 = vadd.f32 0.0, %v2731
      %v2733 = vpop.f32.mrb[0].mxu0
      %v2734 = vpop.f32.mrb[0].mxu0
      %v2735 = vadd.f32 0.0, %v2734
      %v2736 = vpop.f32.mrb[0].mxu0
      %2737 = vmatprep.mubr.bf16.mxu0 0
      %2738 = vmatmul.mubr.bf16.gmra.mrb[0].mxu0 %v2610
      %v2739 = vpop.f32.mrb[0].mxu0
      %v2740 = vadd.f32 0.0, %v2739
      %v2741 = vpop.f32.mrb[0].mxu0
      %v2742 = vpop.f32.mrb[0].mxu0
      %v2743 = vadd.f32 0.0, %v2742
      %v2744 = vpop.f32.mrb[0].mxu0
      %2745 = vmatprep.mubr.bf16.mxu0 0
      %2746 = vmatmul.mubr.bf16.gmra.mrb[0].mxu0 %v2613
      %v2747 = vpop.f32.mrb[0].mxu0
      %v2748 = vadd.f32 0.0, %v2747
      %v2749 = vpop.f32.mrb[0].mxu0
      %v2750 = vpop.f32.mrb[0].mxu0
      %v2751 = vadd.f32 0.0, %v2750
      %v2752 = vpop.f32.mrb[0].mxu0
      %2753 = vmatprep.mubr.bf16.mxu0 0
      %2754 = vmatmul.mubr.bf16.gmra.mrb[0].mxu0 %v2616
      %v2755 = vpop.f32.mrb[0].mxu0
      %v2756 = vadd.f32 0.0, %v2755
      %v2757 = vpop.f32.mrb[0].mxu0
      %v2758 = vpop.f32.mrb[0].mxu0
      %v2759 = vadd.f32 0.0, %v2758
      %v2760 = vpop.f32.mrb[0].mxu0
      %2761 = vmatprep.mubr.bf16.mxu0 0
      %2762 = vmatmul.mubr.bf16.gmra.mrb[0].mxu0 %v2619
      %v2763 = vpop.f32.mrb[0].mxu0
      %v2764 = vadd.f32 0.0, %v2763
      %v2765 = vpop.f32.mrb[0].mxu0
      %v2766 = vpop.f32.mrb[0].mxu0
      %v2767 = vadd.f32 0.0, %v2766
      %v2768 = vpop.f32.mrb[0].mxu0
      %2769 = vmatprep.mubr.bf16.mxu0 0
      %2770 = vmatmul.mubr.bf16.gmra.mrb[0].mxu0 %v2622
      %v2771 = vpop.f32.mrb[0].mxu0
      %v2772 = vadd.f32 0.0, %v2771
      %v2773 = vpop.f32.mrb[0].mxu0
      %v2774 = vpop.f32.mrb[0].mxu0
      %v2775 = vadd.f32 0.0, %v2774
      %v2776 = vpop.f32.mrb[0].mxu0
      %2777 = vmatprep.mubr.bf16.mxu0 0
      %2778 = vmatmul.mubr.bf16.gmra.mrb[0].mxu0 %v2625
      %v2779 = vpop.f32.mrb[0].mxu0
      %v2780 = vadd.f32 0.0, %v2779
      %v2781 = vpop.f32.mrb[0].mxu0
      %v2782 = vpop.f32.mrb[0].mxu0
      %v2783 = vadd.f32 0.0, %v2782
      %v2784 = vpop.f32.mrb[0].mxu0
      %2785 = vmatprep.mubr.bf16.mxu0 0
      %2786 = vmatmul.mubr.bf16.gmra.mrb[0].mxu0 %v2628
      %v2787 = vpop.f32.mrb[0].mxu0
      %v2788 = vadd.f32 0.0, %v2787
      %v2789 = vpop.f32.mrb[0].mxu0
      %v2790 = vpop.f32.mrb[0].mxu0
      %v2791 = vadd.f32 0.0, %v2790
      %v2792 = vpop.f32.mrb[0].mxu0
      %2793 = vdwg.mxu0
      %v2794 = vadd.f32 %v2116, %v2668
      %v2795 = vadd.f32 %v2117, %v2671
      %v2796 = vadd.f32 %v2118, %v2676
      %v2797 = vadd.f32 %v2119, %v2679
      %v2798 = vadd.f32 %v2120, %v2684
      %v2799 = vadd.f32 %v2121, %v2687
      %v2800 = vadd.f32 %v2122, %v2692
      %v2801 = vadd.f32 %v2123, %v2695
      %v2802 = vadd.f32 %v2124, %v2700
      %v2803 = vadd.f32 %v2125, %v2703
      %v2804 = vadd.f32 %v2126, %v2708
      %v2805 = vadd.f32 %v2127, %v2711
      %v2806 = vadd.f32 %v2128, %v2716
      %v2807 = vadd.f32 %v2129, %v2719
      %v2808 = vadd.f32 %v2130, %v2724
      %v2809 = vadd.f32 %v2131, %v2727
      %v2810 = vadd.f32 %v2132, %v2732
      %v2811 = vadd.f32 %v2133, %v2735
      %v2812 = vadd.f32 %v2134, %v2740
      %v2813 = vadd.f32 %v2135, %v2743
      %v2814 = vadd.f32 %v2136, %v2748
      %v2815 = vadd.f32 %v2137, %v2751
      %v2816 = vadd.f32 %v2138, %v2756
      %v2817 = vadd.f32 %v2139, %v2759
      %v2818 = vadd.f32 %v2140, %v2764
      %v2819 = vadd.f32 %v2141, %v2767
      %v2820 = vadd.f32 %v2142, %v2772
      %v2821 = vadd.f32 %v2143, %v2775
      %v2822 = vadd.f32 %v2144, %v2780
      %v2823 = vadd.f32 %v2145, %v2783
      %v2824 = vadd.f32 %v2146, %v2788
      %v2825 = vadd.f32 %v2147, %v2791
      %v2842 = vrot.slane %v1774, 5
      %v2843 = vrot.slane %v2842, 4
      %v2844 = vrot.slane %v1775, 5
      %v2845 = vsel %vm1367, %v2843, %v2844
      %v2846 = vrot.slane %v2844, 4
      %v2847 = vrot.slane %v1776, 5
      %v2848 = vsel %vm1367, %v2846, %v2847
      %v2849 = vrot.slane %v1777, 5
      %v2850 = vrot.slane %v2849, 4
      %v2851 = vrot.slane %v1778, 5
      %v2852 = vsel %vm1367, %v2850, %v2851
      %v2853 = vrot.slane %v2851, 4
      %v2854 = vrot.slane %v1779, 5
      %v2855 = vsel %vm1367, %v2853, %v2854
      %v2856 = vrot.slane %v1780, 5
      %v2857 = vrot.slane %v2856, 4
      %v2858 = vrot.slane %v1781, 5
      %v2859 = vsel %vm1367, %v2857, %v2858
      %v2860 = vrot.slane %v2858, 4
      %v2861 = vrot.slane %v1782, 5
      %v2862 = vsel %vm1367, %v2860, %v2861
      %v2863 = vrot.slane %v1783, 5
      %v2864 = vrot.slane %v2863, 4
      %v2865 = vrot.slane %v1784, 5
      %v2866 = vsel %vm1367, %v2864, %v2865
      %v2867 = vrot.slane %v2865, 4
      %v2868 = vrot.slane %v1785, 5
      %v2869 = vsel %vm1367, %v2867, %v2868
      %v2870 = vrot.slane %v1786, 5
      %v2871 = vrot.slane %v2870, 4
      %v2872 = vrot.slane %v1787, 5
      %v2873 = vsel %vm1367, %v2871, %v2872
      %v2874 = vrot.slane %v2872, 4
      %v2875 = vrot.slane %v1788, 5
      %v2876 = vsel %vm1367, %v2874, %v2875
      %v2877 = vrot.slane %v1789, 5
      %v2878 = vrot.slane %v2877, 4
      %v2879 = vrot.slane %v1790, 5
      %v2880 = vsel %vm1367, %v2878, %v2879
      %v2881 = vrot.slane %v2879, 4
      %v2882 = vrot.slane %v1791, 5
      %v2883 = vsel %vm1367, %v2881, %v2882
      %v2884 = vrot.slane %v1792, 5
      %v2885 = vrot.slane %v2884, 4
      %v2886 = vrot.slane %v1793, 5
      %v2887 = vsel %vm1367, %v2885, %v2886
      %v2888 = vrot.slane %v2886, 4
      %v2889 = vrot.slane %v1794, 5
      %v2890 = vsel %vm1367, %v2888, %v2889
      %v2891 = vrot.slane %v1795, 5
      %v2892 = vrot.slane %v2891, 4
      %v2893 = vrot.slane %v1796, 5
      %v2894 = vsel %vm1367, %v2892, %v2893
      %v2895 = vrot.slane %v2893, 4
      %v2896 = vrot.slane %v1797, 5
      %v2897 = vsel %vm1367, %v2895, %v2896
      %v2898 = vrot.slane %v1798, 5
      %v2899 = vrot.slane %v2898, 4
      %v2900 = vrot.slane %v1799, 5
      %v2901 = vsel %vm1367, %v2899, %v2900
      %v2902 = vrot.slane %v2900, 4
      %v2903 = vrot.slane %v1800, 5
      %v2904 = vsel %vm1367, %v2902, %v2903
      %v2905 = vrot.slane %v1801, 5
      %v2906 = vrot.slane %v2905, 4
      %v2907 = vrot.slane %v1802, 5
      %v2908 = vsel %vm1367, %v2906, %v2907
      %v2909 = vrot.slane %v2907, 4
      %v2910 = vrot.slane %v1803, 5
      %v2911 = vsel %vm1367, %v2909, %v2910
      %v2912 = vrot.slane %v1804, 5
      %v2913 = vrot.slane %v2912, 4
      %v2914 = vrot.slane %v1805, 5
      %v2915 = vsel %vm1367, %v2913, %v2914
      %v2916 = vrot.slane %v2914, 4
      %v2917 = vrot.slane %v1806, 5
      %v2918 = vsel %vm1367, %v2916, %v2917
      %v2919 = vrot.slane %v1807, 5
      %v2920 = vrot.slane %v2919, 4
      %v2921 = vrot.slane %v1808, 5
      %v2922 = vsel %vm1367, %v2920, %v2921
      %v2923 = vrot.slane %v2921, 4
      %v2924 = vrot.slane %v1809, 5
      %v2925 = vsel %vm1367, %v2923, %v2924
      %v2926 = vrot.slane %v1810, 5
      %v2927 = vrot.slane %v2926, 4
      %v2928 = vrot.slane %v1811, 5
      %v2929 = vsel %vm1367, %v2927, %v2928
      %v2930 = vrot.slane %v2928, 4
      %v2931 = vrot.slane %v1812, 5
      %v2932 = vsel %vm1367, %v2930, %v2931
      %v2933 = vrot.slane %v1813, 5
      %v2934 = vrot.slane %v2933, 4
      %v2935 = vrot.slane %v1814, 5
      %v2936 = vsel %vm1367, %v2934, %v2935
      %v2937 = vrot.slane %v2935, 4
      %v2938 = vrot.slane %v1815, 5
      %v2939 = vsel %vm1367, %v2937, %v2938
      %v2940 = vrot.slane %v1816, 5
      %v2941 = vrot.slane %v2940, 4
      %v2942 = vrot.slane %v1817, 5
      %v2943 = vsel %vm1367, %v2941, %v2942
      %v2944 = vrot.slane %v2942, 4
      %v2945 = vrot.slane %v1818, 5
      %v2946 = vsel %vm1367, %v2944, %v2945
      %v2947 = vrot.slane %v1819, 5
      %v2948 = vrot.slane %v2947, 4
      %v2949 = vrot.slane %v1820, 5
      %v2950 = vsel %vm1367, %v2948, %v2949
      %v2951 = vrot.slane %v2949, 4
      %v2952 = vrot.slane %v1821, 5
      %v2953 = vsel %vm1367, %v2951, %v2952
      %s2954 = scalar_lea.vmem %s3, 10
      %v2955 = vld [vmem:[%s2954] sm:$0x3]
      %v2956 = vunpack.c.l.b16 %v2845
      %v2957 = vunpack.c.l.b16 %v2848
      %v2958 = vunpack.c.l.b16 %v2852
      %v2959 = vunpack.c.l.b16 %v2855
      %v2960 = vunpack.c.l.b16 %v2859
      %v2961 = vunpack.c.l.b16 %v2862
      %v2962 = vunpack.c.l.b16 %v2866
      %v2963 = vunpack.c.l.b16 %v2869
      %v2964 = vunpack.c.l.b16 %v2873
      %v2965 = vunpack.c.l.b16 %v2876
      %v2966 = vunpack.c.l.b16 %v2880
      %v2967 = vunpack.c.l.b16 %v2883
      %v2968 = vunpack.c.l.b16 %v2887
      %v2969 = vunpack.c.l.b16 %v2890
      %v2970 = vunpack.c.l.b16 %v2894
      %v2971 = vunpack.c.l.b16 %v2897
      %v2972 = vunpack.c.l.b16 %v2901
      %v2973 = vunpack.c.l.b16 %v2904
      %v2974 = vunpack.c.l.b16 %v2908
      %v2975 = vunpack.c.l.b16 %v2911
      %v2976 = vunpack.c.l.b16 %v2915
      %v2977 = vunpack.c.l.b16 %v2918
      %v2978 = vunpack.c.l.b16 %v2922
      %v2979 = vunpack.c.l.b16 %v2925
      %v2980 = vunpack.c.l.b16 %v2929
      %v2981 = vunpack.c.l.b16 %v2932
      %v2982 = vunpack.c.l.b16 %v2936
      %v2983 = vunpack.c.l.b16 %v2939
      %v2984 = vunpack.c.l.b16 %v2943
      %v2985 = vunpack.c.l.b16 %v2946
      %v2986 = vunpack.c.l.b16 %v2950
      %v2987 = vunpack.c.l.b16 %v2953
      %v2988 = vpack.c.b16 %v2957, %v2956
      %v2989 = vpack.c.b16 %v2959, %v2958
      %v2990 = vpack.c.b16 %v2961, %v2960
      %v2991 = vpack.c.b16 %v2963, %v2962
      %v2992 = vpack.c.b16 %v2965, %v2964
      %v2993 = vpack.c.b16 %v2967, %v2966
      %v2994 = vpack.c.b16 %v2969, %v2968
      %v2995 = vpack.c.b16 %v2971, %v2970
      %v2996 = vpack.c.b16 %v2973, %v2972
      %v2997 = vpack.c.b16 %v2975, %v2974
      %v2998 = vpack.c.b16 %v2977, %v2976
      %v2999 = vpack.c.b16 %v2979, %v2978
      %v3000 = vpack.c.b16 %v2981, %v2980
      %v3001 = vpack.c.b16 %v2983, %v2982
      %v3002 = vpack.c.b16 %v2985, %v2984
      %v3003 = vpack.c.b16 %v2987, %v2986
      %v3005 = vsel %vm843, %v2988, 0
      %v3008 = vsel %vm843, %v2989, 0
      %v3011 = vsel %vm843, %v2990, 0
      %v3014 = vsel %vm843, %v2991, 0
      %v3017 = vsel %vm843, %v2992, 0
      %v3020 = vsel %vm843, %v2993, 0
      %v3023 = vsel %vm843, %v2994, 0
      %v3026 = vsel %vm843, %v2995, 0
      %v3029 = vsel %vm843, %v2996, 0
      %v3032 = vsel %vm843, %v2997, 0
      %v3035 = vsel %vm843, %v2998, 0
      %v3038 = vsel %vm843, %v2999, 0
      %v3041 = vsel %vm843, %v3000, 0
      %v3044 = vsel %vm843, %v3001, 0
      %v3047 = vsel %vm843, %v3002, 0
      %v3050 = vsel %vm843, %v3003, 0
      %v3053 = vsel %vm892, %v2955, 0
      %3055 = vmatprep.subr.bf16.mxu0 0
      %3056 = vmatpush1.bf16.msra.mxu0 %v3053
      %3057 = vmatprep.subr.bf16.mxu0 0
      %3058 = vmatpush1.bf16.msra.mxu0 0
      %3059 = vmatprep.subr.bf16.mxu0 0
      %3060 = vmatpush1.bf16.msra.mxu0 0
      %3061 = vmatprep.subr.bf16.mxu0 0
      %3062 = vmatpush1.bf16.msra.mxu0 0
      %3063 = vmatprep.subr.bf16.mxu0 0
      %3064 = vmatpush1.bf16.msra.mxu0 0
      %3065 = vmatprep.subr.bf16.mxu0 0
      %3066 = vmatpush1.bf16.msra.mxu0 0
      %3067 = vmatprep.subr.bf16.mxu0 0
      %3068 = vmatpush1.bf16.msra.mxu0 0
      %3069 = vmatprep.subr.bf16.mxu0 0
      %3070 = vmatpush1.bf16.msra.mxu0 0
      %3071 = vmatprep.subr.bf16.mxu0 0
      %3072 = vmatpush1.bf16.msra.mxu0 0
      %3073 = vmatprep.subr.bf16.mxu0 0
      %3074 = vmatpush1.bf16.msra.mxu0 0
      %3075 = vmatprep.subr.bf16.mxu0 0
      %3076 = vmatpush1.bf16.msra.mxu0 0
      %3077 = vmatprep.subr.bf16.mxu0 0
      %3078 = vmatpush1.bf16.msra.mxu0 0
      %3079 = vmatprep.subr.bf16.mxu0 0
      %3080 = vmatpush1.bf16.msra.mxu0 0
      %3081 = vmatprep.subr.bf16.mxu0 0
      %3082 = vmatpush1.bf16.msra.mxu0 0
      %3083 = vmatprep.subr.bf16.mxu0 0
      %3084 = vmatpush1.bf16.msra.mxu0 0
      %3085 = vmatprep.subr.bf16.mxu0 0
      %3086 = vmatpush1.bf16.msra.mxu0 0
      %3087 = vmatprep.mubr.bf16.mxu0 0
      %3088 = vmatmul.mubr.bf16.gmra.mrb[0].mxu0 %v3005
      %v3089 = vpop.f32.mrb[0].mxu0
      %v3090 = vadd.f32 0.0, %v3089
      %v3091 = vpop.f32.mrb[0].mxu0
      %v3092 = vpop.f32.mrb[0].mxu0
      %v3093 = vadd.f32 0.0, %v3092
      %v3094 = vpop.f32.mrb[0].mxu0
      %3095 = vmatprep.mubr.bf16.mxu0 0
      %3096 = vmatmul.mubr.bf16.gmra.mrb[0].mxu0 %v3008
      %v3097 = vpop.f32.mrb[0].mxu0
      %v3098 = vadd.f32 0.0, %v3097
      %v3099 = vpop.f32.mrb[0].mxu0
      %v3100 = vpop.f32.mrb[0].mxu0
      %v3101 = vadd.f32 0.0, %v3100
      %v3102 = vpop.f32.mrb[0].mxu0
      %3103 = vmatprep.mubr.bf16.mxu0 0
      %3104 = vmatmul.mubr.bf16.gmra.mrb[0].mxu0 %v3011
      %v3105 = vpop.f32.mrb[0].mxu0
      %v3106 = vadd.f32 0.0, %v3105
      %v3107 = vpop.f32.mrb[0].mxu0
      %v3108 = vpop.f32.mrb[0].mxu0
      %v3109 = vadd.f32 0.0, %v3108
      %v3110 = vpop.f32.mrb[0].mxu0
      %3111 = vmatprep.mubr.bf16.mxu0 0
      %3112 = vmatmul.mubr.bf16.gmra.mrb[0].mxu0 %v3014
      %v3113 = vpop.f32.mrb[0].mxu0
      %v3114 = vadd.f32 0.0, %v3113
      %v3115 = vpop.f32.mrb[0].mxu0
      %v3116 = vpop.f32.mrb[0].mxu0
      %v3117 = vadd.f32 0.0, %v3116
      %v3118 = vpop.f32.mrb[0].mxu0
      %3119 = vmatprep.mubr.bf16.mxu0 0
      %3120 = vmatmul.mubr.bf16.gmra.mrb[0].mxu0 %v3017
      %v3121 = vpop.f32.mrb[0].mxu0
      %v3122 = vadd.f32 0.0, %v3121
      %v3123 = vpop.f32.mrb[0].mxu0
      %v3124 = vpop.f32.mrb[0].mxu0
      %v3125 = vadd.f32 0.0, %v3124
      %v3126 = vpop.f32.mrb[0].mxu0
      %3127 = vmatprep.mubr.bf16.mxu0 0
      %3128 = vmatmul.mubr.bf16.gmra.mrb[0].mxu0 %v3020
      %v3129 = vpop.f32.mrb[0].mxu0
      %v3130 = vadd.f32 0.0, %v3129
      %v3131 = vpop.f32.mrb[0].mxu0
      %v3132 = vpop.f32.mrb[0].mxu0
      %v3133 = vadd.f32 0.0, %v3132
      %v3134 = vpop.f32.mrb[0].mxu0
      %3135 = vmatprep.mubr.bf16.mxu0 0
      %3136 = vmatmul.mubr.bf16.gmra.mrb[0].mxu0 %v3023
      %v3137 = vpop.f32.mrb[0].mxu0
      %v3138 = vadd.f32 0.0, %v3137
      %v3139 = vpop.f32.mrb[0].mxu0
      %v3140 = vpop.f32.mrb[0].mxu0
      %v3141 = vadd.f32 0.0, %v3140
      %v3142 = vpop.f32.mrb[0].mxu0
      %3143 = vmatprep.mubr.bf16.mxu0 0
      %3144 = vmatmul.mubr.bf16.gmra.mrb[0].mxu0 %v3026
      %v3145 = vpop.f32.mrb[0].mxu0
      %v3146 = vadd.f32 0.0, %v3145
      %v3147 = vpop.f32.mrb[0].mxu0
      %v3148 = vpop.f32.mrb[0].mxu0
      %v3149 = vadd.f32 0.0, %v3148
      %v3150 = vpop.f32.mrb[0].mxu0
      %3151 = vmatprep.mubr.bf16.mxu0 0
      %3152 = vmatmul.mubr.bf16.gmra.mrb[0].mxu0 %v3029
      %v3153 = vpop.f32.mrb[0].mxu0
      %v3154 = vadd.f32 0.0, %v3153
      %v3155 = vpop.f32.mrb[0].mxu0
      %v3156 = vpop.f32.mrb[0].mxu0
      %v3157 = vadd.f32 0.0, %v3156
      %v3158 = vpop.f32.mrb[0].mxu0
      %3159 = vmatprep.mubr.bf16.mxu0 0
      %3160 = vmatmul.mubr.bf16.gmra.mrb[0].mxu0 %v3032
      %v3161 = vpop.f32.mrb[0].mxu0
      %v3162 = vadd.f32 0.0, %v3161
      %v3163 = vpop.f32.mrb[0].mxu0
      %v3164 = vpop.f32.mrb[0].mxu0
      %v3165 = vadd.f32 0.0, %v3164
      %v3166 = vpop.f32.mrb[0].mxu0
      %3167 = vmatprep.mubr.bf16.mxu0 0
      %3168 = vmatmul.mubr.bf16.gmra.mrb[0].mxu0 %v3035
      %v3169 = vpop.f32.mrb[0].mxu0
      %v3170 = vadd.f32 0.0, %v3169
      %v3171 = vpop.f32.mrb[0].mxu0
      %v3172 = vpop.f32.mrb[0].mxu0
      %v3173 = vadd.f32 0.0, %v3172
      %v3174 = vpop.f32.mrb[0].mxu0
      %3175 = vmatprep.mubr.bf16.mxu0 0
      %3176 = vmatmul.mubr.bf16.gmra.mrb[0].mxu0 %v3038
      %v3177 = vpop.f32.mrb[0].mxu0
      %v3178 = vadd.f32 0.0, %v3177
      %v3179 = vpop.f32.mrb[0].mxu0
      %v3180 = vpop.f32.mrb[0].mxu0
      %v3181 = vadd.f32 0.0, %v3180
      %v3182 = vpop.f32.mrb[0].mxu0
      %3183 = vmatprep.mubr.bf16.mxu0 0
      %3184 = vmatmul.mubr.bf16.gmra.mrb[0].mxu0 %v3041
      %v3185 = vpop.f32.mrb[0].mxu0
      %v3186 = vadd.f32 0.0, %v3185
      %v3187 = vpop.f32.mrb[0].mxu0
      %v3188 = vpop.f32.mrb[0].mxu0
      %v3189 = vadd.f32 0.0, %v3188
      %v3190 = vpop.f32.mrb[0].mxu0
      %3191 = vmatprep.mubr.bf16.mxu0 0
      %3192 = vmatmul.mubr.bf16.gmra.mrb[0].mxu0 %v3044
      %v3193 = vpop.f32.mrb[0].mxu0
      %v3194 = vadd.f32 0.0, %v3193
      %v3195 = vpop.f32.mrb[0].mxu0
      %v3196 = vpop.f32.mrb[0].mxu0
      %v3197 = vadd.f32 0.0, %v3196
      %v3198 = vpop.f32.mrb[0].mxu0
      %3199 = vmatprep.mubr.bf16.mxu0 0
      %3200 = vmatmul.mubr.bf16.gmra.mrb[0].mxu0 %v3047
      %v3201 = vpop.f32.mrb[0].mxu0
      %v3202 = vadd.f32 0.0, %v3201
      %v3203 = vpop.f32.mrb[0].mxu0
      %v3204 = vpop.f32.mrb[0].mxu0
      %v3205 = vadd.f32 0.0, %v3204
      %v3206 = vpop.f32.mrb[0].mxu0
      %3207 = vmatprep.mubr.bf16.mxu0 0
      %3208 = vmatmul.mubr.bf16.gmra.mrb[0].mxu0 %v3050
      %v3209 = vpop.f32.mrb[0].mxu0
      %v3210 = vadd.f32 0.0, %v3209
      %v3211 = vpop.f32.mrb[0].mxu0
      %v3212 = vpop.f32.mrb[0].mxu0
      %v3213 = vadd.f32 0.0, %v3212
      %v3214 = vpop.f32.mrb[0].mxu0
      %3215 = vdwg.mxu0
      %v3216 = vadd.f32 %v2794, %v3090
      %v3217 = vadd.f32 %v2795, %v3093
      %v3218 = vadd.f32 %v2796, %v3098
      %v3219 = vadd.f32 %v2797, %v3101
      %v3220 = vadd.f32 %v2798, %v3106
      %v3221 = vadd.f32 %v2799, %v3109
      %v3222 = vadd.f32 %v2800, %v3114
      %v3223 = vadd.f32 %v2801, %v3117
      %v3224 = vadd.f32 %v2802, %v3122
      %v3225 = vadd.f32 %v2803, %v3125
      %v3226 = vadd.f32 %v2804, %v3130
      %v3227 = vadd.f32 %v2805, %v3133
      %v3228 = vadd.f32 %v2806, %v3138
      %v3229 = vadd.f32 %v2807, %v3141
      %v3230 = vadd.f32 %v2808, %v3146
      %v3231 = vadd.f32 %v2809, %v3149
      %v3232 = vadd.f32 %v2810, %v3154
      %v3233 = vadd.f32 %v2811, %v3157
      %v3234 = vadd.f32 %v2812, %v3162
      %v3235 = vadd.f32 %v2813, %v3165
      %v3236 = vadd.f32 %v2814, %v3170
      %v3237 = vadd.f32 %v2815, %v3173
      %v3238 = vadd.f32 %v2816, %v3178
      %v3239 = vadd.f32 %v2817, %v3181
      %v3240 = vadd.f32 %v2818, %v3186
      %v3241 = vadd.f32 %v2819, %v3189
      %v3242 = vadd.f32 %v2820, %v3194
      %v3243 = vadd.f32 %v2821, %v3197
      %v3244 = vadd.f32 %v2822, %v3202
      %v3245 = vadd.f32 %v2823, %v3205
      %v3246 = vadd.f32 %v2824, %v3210
      %v3247 = vadd.f32 %v2825, %v3213
      %v3248 = vld [vmem:[%s340] sm:$0xf]
      %v3249 = vld [vmem:[%s340 + $0x4] sm:$0xf]
      %v3250 = vld [vmem:[%s340 + $0x8] sm:$0x1]
      %v3251 = vld [vmem:[%s340 + $0xc] sm:$0xf]
      %v3252 = vld [vmem:[%s340 + $0x10] sm:$0xf]
      %v3253 = vld [vmem:[%s340 + $0x14] sm:$0x1]
      %v3254 = vld [vmem:[%s340 + $0x18] sm:$0xf]
      %v3255 = vld [vmem:[%s340 + $0x1c] sm:$0xf]
      %v3256 = vld [vmem:[%s340 + $0x20] sm:$0x1]
      %v3257 = vld [vmem:[%s340 + $0x24] sm:$0xf]
      %v3258 = vld [vmem:[%s340 + $0x28] sm:$0xf]
      %v3259 = vld [vmem:[%s340 + $0x2c] sm:$0x1]
      %v3260 = vld [vmem:[%s340 + $0x30] sm:$0xf]
      %v3261 = vld [vmem:[%s340 + $0x34] sm:$0xf]
      %v3262 = vld [vmem:[%s340 + $0x38] sm:$0x1]
      %v3263 = vld [vmem:[%s340 + $0x3c] sm:$0xf]
      %v3264 = vld [vmem:[%s340 + $0x40] sm:$0xf]
      %v3265 = vld [vmem:[%s340 + $0x44] sm:$0x1]
      %v3266 = vld [vmem:[%s340 + $0x48] sm:$0xf]
      %v3267 = vld [vmem:[%s340 + $0x4c] sm:$0xf]
      %v3268 = vld [vmem:[%s340 + $0x50] sm:$0x1]
      %v3269 = vld [vmem:[%s340 + $0x54] sm:$0xf]
      %v3270 = vld [vmem:[%s340 + $0x58] sm:$0xf]
      %v3271 = vld [vmem:[%s340 + $0x5c] sm:$0x1]
      %v3272 = vld [vmem:[%s340 + $0x60] sm:$0xf]
      %v3273 = vld [vmem:[%s340 + $0x64] sm:$0xf]
      %v3274 = vld [vmem:[%s340 + $0x68] sm:$0x1]
      %v3275 = vld [vmem:[%s340 + $0x6c] sm:$0xf]
      %v3276 = vld [vmem:[%s340 + $0x70] sm:$0xf]
      %v3277 = vld [vmem:[%s340 + $0x74] sm:$0x1]
      %v3278 = vld [vmem:[%s340 + $0x78] sm:$0xf]
      %v3279 = vld [vmem:[%s340 + $0x7c] sm:$0xf]
      %v3280 = vld [vmem:[%s340 + $0x80] sm:$0x1]
      %v3281 = vld [vmem:[%s340 + $0x84] sm:$0xf]
      %v3282 = vld [vmem:[%s340 + $0x88] sm:$0xf]
      %v3283 = vld [vmem:[%s340 + $0x8c] sm:$0x1]
      %v3284 = vld [vmem:[%s340 + $0x90] sm:$0xf]
      %v3285 = vld [vmem:[%s340 + $0x94] sm:$0xf]
      %v3286 = vld [vmem:[%s340 + $0x98] sm:$0x1]
      %v3287 = vld [vmem:[%s340 + $0x9c] sm:$0xf]
      %v3288 = vld [vmem:[%s340 + $0xa0] sm:$0xf]
      %v3289 = vld [vmem:[%s340 + $0xa4] sm:$0x1]
      %v3290 = vld [vmem:[%s340 + $0xa8] sm:$0xf]
      %v3291 = vld [vmem:[%s340 + $0xac] sm:$0xf]
      %v3292 = vld [vmem:[%s340 + $0xb0] sm:$0x1]
      %v3293 = vld [vmem:[%s340 + $0xb4] sm:$0xf]
      %v3294 = vld [vmem:[%s340 + $0xb8] sm:$0xf]
      %v3295 = vld [vmem:[%s340 + $0xbc] sm:$0x1]
      %s3296 = scalar_lea.vmem %s3, 12
      %v3297 = vld [vmem:[%s3296] sm:$0x3]
      %v3330 = vunpack.c.l.b16 %v3248
      %v3331 = vunpack.c.l.b16 %v3249
      %v3332 = vunpack.c.l.b16 %v3251
      %v3333 = vunpack.c.l.b16 %v3252
      %v3334 = vunpack.c.l.b16 %v3254
      %v3335 = vunpack.c.l.b16 %v3255
      %v3336 = vunpack.c.l.b16 %v3257
      %v3337 = vunpack.c.l.b16 %v3258
      %v3338 = vunpack.c.l.b16 %v3260
      %v3339 = vunpack.c.l.b16 %v3261
      %v3340 = vunpack.c.l.b16 %v3263
      %v3341 = vunpack.c.l.b16 %v3264
      %v3342 = vunpack.c.l.b16 %v3266
      %v3343 = vunpack.c.l.b16 %v3267
      %v3344 = vunpack.c.l.b16 %v3269
      %v3345 = vunpack.c.l.b16 %v3270
      %v3346 = vunpack.c.l.b16 %v3272
      %v3347 = vunpack.c.l.b16 %v3273
      %v3348 = vunpack.c.l.b16 %v3275
      %v3349 = vunpack.c.l.b16 %v3276
      %v3350 = vunpack.c.l.b16 %v3278
      %v3351 = vunpack.c.l.b16 %v3279
      %v3352 = vunpack.c.l.b16 %v3281
      %v3353 = vunpack.c.l.b16 %v3282
      %v3354 = vunpack.c.l.b16 %v3284
      %v3355 = vunpack.c.l.b16 %v3285
      %v3356 = vunpack.c.l.b16 %v3287
      %v3357 = vunpack.c.l.b16 %v3288
      %v3358 = vunpack.c.l.b16 %v3290
      %v3359 = vunpack.c.l.b16 %v3291
      %v3360 = vunpack.c.l.b16 %v3293
      %v3361 = vunpack.c.l.b16 %v3294
      %v3362 = vpack.c.b16 %v3331, %v3330
      %v3363 = vpack.c.b16 %v3333, %v3332
      %v3364 = vpack.c.b16 %v3335, %v3334
      %v3365 = vpack.c.b16 %v3337, %v3336
      %v3366 = vpack.c.b16 %v3339, %v3338
      %v3367 = vpack.c.b16 %v3341, %v3340
      %v3368 = vpack.c.b16 %v3343, %v3342
      %v3369 = vpack.c.b16 %v3345, %v3344
      %v3370 = vpack.c.b16 %v3347, %v3346
      %v3371 = vpack.c.b16 %v3349, %v3348
      %v3372 = vpack.c.b16 %v3351, %v3350
      %v3373 = vpack.c.b16 %v3353, %v3352
      %v3374 = vpack.c.b16 %v3355, %v3354
      %v3375 = vpack.c.b16 %v3357, %v3356
      %v3376 = vpack.c.b16 %v3359, %v3358
      %v3377 = vpack.c.b16 %v3361, %v3360
      %v3379 = vsel %vm843, %v3362, 0
      %v3382 = vsel %vm843, %v3363, 0
      %v3385 = vsel %vm843, %v3364, 0
      %v3388 = vsel %vm843, %v3365, 0
      %v3391 = vsel %vm843, %v3366, 0
      %v3394 = vsel %vm843, %v3367, 0
      %v3397 = vsel %vm843, %v3368, 0
      %v3400 = vsel %vm843, %v3369, 0
      %v3403 = vsel %vm843, %v3370, 0
      %v3406 = vsel %vm843, %v3371, 0
      %v3409 = vsel %vm843, %v3372, 0
      %v3412 = vsel %vm843, %v3373, 0
      %v3415 = vsel %vm843, %v3374, 0
      %v3418 = vsel %vm843, %v3375, 0
      %v3421 = vsel %vm843, %v3376, 0
      %v3424 = vsel %vm843, %v3377, 0
      %v3427 = vsel %vm892, %v3297, 0
      %3429 = vmatprep.subr.bf16.mxu0 0
      %3430 = vmatpush1.bf16.msra.mxu0 %v3427
      %3431 = vmatprep.subr.bf16.mxu0 0
      %3432 = vmatpush1.bf16.msra.mxu0 0
      %3433 = vmatprep.subr.bf16.mxu0 0
      %3434 = vmatpush1.bf16.msra.mxu0 0
      %3435 = vmatprep.subr.bf16.mxu0 0
      %3436 = vmatpush1.bf16.msra.mxu0 0
      %3437 = vmatprep.subr.bf16.mxu0 0
      %3438 = vmatpush1.bf16.msra.mxu0 0
      %3439 = vmatprep.subr.bf16.mxu0 0
      %3440 = vmatpush1.bf16.msra.mxu0 0
      %3441 = vmatprep.subr.bf16.mxu0 0
      %3442 = vmatpush1.bf16.msra.mxu0 0
      %3443 = vmatprep.subr.bf16.mxu0 0
      %3444 = vmatpush1.bf16.msra.mxu0 0
      %3445 = vmatprep.subr.bf16.mxu0 0
      %3446 = vmatpush1.bf16.msra.mxu0 0
      %3447 = vmatprep.subr.bf16.mxu0 0
      %3448 = vmatpush1.bf16.msra.mxu0 0
      %3449 = vmatprep.subr.bf16.mxu0 0
      %3450 = vmatpush1.bf16.msra.mxu0 0
      %3451 = vmatprep.subr.bf16.mxu0 0
      %3452 = vmatpush1.bf16.msra.mxu0 0
      %3453 = vmatprep.subr.bf16.mxu0 0
      %3454 = vmatpush1.bf16.msra.mxu0 0
      %3455 = vmatprep.subr.bf16.mxu0 0
      %3456 = vmatpush1.bf16.msra.mxu0 0
      %3457 = vmatprep.subr.bf16.mxu0 0
      %3458 = vmatpush1.bf16.msra.mxu0 0
      %3459 = vmatprep.subr.bf16.mxu0 0
      %3460 = vmatpush1.bf16.msra.mxu0 0
      %3461 = vmatprep.mubr.bf16.mxu0 0
      %3462 = vmatmul.mubr.bf16.gmra.mrb[0].mxu0 %v3379
      %v3463 = vpop.f32.mrb[0].mxu0
      %v3464 = vadd.f32 0.0, %v3463
      %v3465 = vpop.f32.mrb[0].mxu0
      %v3466 = vpop.f32.mrb[0].mxu0
      %v3467 = vadd.f32 0.0, %v3466
      %v3468 = vpop.f32.mrb[0].mxu0
      %3469 = vmatprep.mubr.bf16.mxu0 0
      %3470 = vmatmul.mubr.bf16.gmra.mrb[0].mxu0 %v3382
      %v3471 = vpop.f32.mrb[0].mxu0
      %v3472 = vadd.f32 0.0, %v3471
      %v3473 = vpop.f32.mrb[0].mxu0
      %v3474 = vpop.f32.mrb[0].mxu0
      %v3475 = vadd.f32 0.0, %v3474
      %v3476 = vpop.f32.mrb[0].mxu0
      %3477 = vmatprep.mubr.bf16.mxu0 0
      %3478 = vmatmul.mubr.bf16.gmra.mrb[0].mxu0 %v3385
      %v3479 = vpop.f32.mrb[0].mxu0
      %v3480 = vadd.f32 0.0, %v3479
      %v3481 = vpop.f32.mrb[0].mxu0
      %v3482 = vpop.f32.mrb[0].mxu0
      %v3483 = vadd.f32 0.0, %v3482
      %v3484 = vpop.f32.mrb[0].mxu0
      %3485 = vmatprep.mubr.bf16.mxu0 0
      %3486 = vmatmul.mubr.bf16.gmra.mrb[0].mxu0 %v3388
      %v3487 = vpop.f32.mrb[0].mxu0
      %v3488 = vadd.f32 0.0, %v3487
      %v3489 = vpop.f32.mrb[0].mxu0
      %v3490 = vpop.f32.mrb[0].mxu0
      %v3491 = vadd.f32 0.0, %v3490
      %v3492 = vpop.f32.mrb[0].mxu0
      %3493 = vmatprep.mubr.bf16.mxu0 0
      %3494 = vmatmul.mubr.bf16.gmra.mrb[0].mxu0 %v3391
      %v3495 = vpop.f32.mrb[0].mxu0
      %v3496 = vadd.f32 0.0, %v3495
      %v3497 = vpop.f32.mrb[0].mxu0
      %v3498 = vpop.f32.mrb[0].mxu0
      %v3499 = vadd.f32 0.0, %v3498
      %v3500 = vpop.f32.mrb[0].mxu0
      %3501 = vmatprep.mubr.bf16.mxu0 0
      %3502 = vmatmul.mubr.bf16.gmra.mrb[0].mxu0 %v3394
      %v3503 = vpop.f32.mrb[0].mxu0
      %v3504 = vadd.f32 0.0, %v3503
      %v3505 = vpop.f32.mrb[0].mxu0
      %v3506 = vpop.f32.mrb[0].mxu0
      %v3507 = vadd.f32 0.0, %v3506
      %v3508 = vpop.f32.mrb[0].mxu0
      %3509 = vmatprep.mubr.bf16.mxu0 0
      %3510 = vmatmul.mubr.bf16.gmra.mrb[0].mxu0 %v3397
      %v3511 = vpop.f32.mrb[0].mxu0
      %v3512 = vadd.f32 0.0, %v3511
      %v3513 = vpop.f32.mrb[0].mxu0
      %v3514 = vpop.f32.mrb[0].mxu0
      %v3515 = vadd.f32 0.0, %v3514
      %v3516 = vpop.f32.mrb[0].mxu0
      %3517 = vmatprep.mubr.bf16.mxu0 0
      %3518 = vmatmul.mubr.bf16.gmra.mrb[0].mxu0 %v3400
      %v3519 = vpop.f32.mrb[0].mxu0
      %v3520 = vadd.f32 0.0, %v3519
      %v3521 = vpop.f32.mrb[0].mxu0
      %v3522 = vpop.f32.mrb[0].mxu0
      %v3523 = vadd.f32 0.0, %v3522
      %v3524 = vpop.f32.mrb[0].mxu0
      %3525 = vmatprep.mubr.bf16.mxu0 0
      %3526 = vmatmul.mubr.bf16.gmra.mrb[0].mxu0 %v3403
      %v3527 = vpop.f32.mrb[0].mxu0
      %v3528 = vadd.f32 0.0, %v3527
      %v3529 = vpop.f32.mrb[0].mxu0
      %v3530 = vpop.f32.mrb[0].mxu0
      %v3531 = vadd.f32 0.0, %v3530
      %v3532 = vpop.f32.mrb[0].mxu0
      %3533 = vmatprep.mubr.bf16.mxu0 0
      %3534 = vmatmul.mubr.bf16.gmra.mrb[0].mxu0 %v3406
      %v3535 = vpop.f32.mrb[0].mxu0
      %v3536 = vadd.f32 0.0, %v3535
      %v3537 = vpop.f32.mrb[0].mxu0
      %v3538 = vpop.f32.mrb[0].mxu0
      %v3539 = vadd.f32 0.0, %v3538
      %v3540 = vpop.f32.mrb[0].mxu0
      %3541 = vmatprep.mubr.bf16.mxu0 0
      %3542 = vmatmul.mubr.bf16.gmra.mrb[0].mxu0 %v3409
      %v3543 = vpop.f32.mrb[0].mxu0
      %v3544 = vadd.f32 0.0, %v3543
      %v3545 = vpop.f32.mrb[0].mxu0
      %v3546 = vpop.f32.mrb[0].mxu0
      %v3547 = vadd.f32 0.0, %v3546
      %v3548 = vpop.f32.mrb[0].mxu0
      %3549 = vmatprep.mubr.bf16.mxu0 0
      %3550 = vmatmul.mubr.bf16.gmra.mrb[0].mxu0 %v3412
      %v3551 = vpop.f32.mrb[0].mxu0
      %v3552 = vadd.f32 0.0, %v3551
      %v3553 = vpop.f32.mrb[0].mxu0
      %v3554 = vpop.f32.mrb[0].mxu0
      %v3555 = vadd.f32 0.0, %v3554
      %v3556 = vpop.f32.mrb[0].mxu0
      %3557 = vmatprep.mubr.bf16.mxu0 0
      %3558 = vmatmul.mubr.bf16.gmra.mrb[0].mxu0 %v3415
      %v3559 = vpop.f32.mrb[0].mxu0
      %v3560 = vadd.f32 0.0, %v3559
      %v3561 = vpop.f32.mrb[0].mxu0
      %v3562 = vpop.f32.mrb[0].mxu0
      %v3563 = vadd.f32 0.0, %v3562
      %v3564 = vpop.f32.mrb[0].mxu0
      %3565 = vmatprep.mubr.bf16.mxu0 0
      %3566 = vmatmul.mubr.bf16.gmra.mrb[0].mxu0 %v3418
      %v3567 = vpop.f32.mrb[0].mxu0
      %v3568 = vadd.f32 0.0, %v3567
      %v3569 = vpop.f32.mrb[0].mxu0
      %v3570 = vpop.f32.mrb[0].mxu0
      %v3571 = vadd.f32 0.0, %v3570
      %v3572 = vpop.f32.mrb[0].mxu0
      %3573 = vmatprep.mubr.bf16.mxu0 0
      %3574 = vmatmul.mubr.bf16.gmra.mrb[0].mxu0 %v3421
      %v3575 = vpop.f32.mrb[0].mxu0
      %v3576 = vadd.f32 0.0, %v3575
      %v3577 = vpop.f32.mrb[0].mxu0
      %v3578 = vpop.f32.mrb[0].mxu0
      %v3579 = vadd.f32 0.0, %v3578
      %v3580 = vpop.f32.mrb[0].mxu0
      %3581 = vmatprep.mubr.bf16.mxu0 0
      %3582 = vmatmul.mubr.bf16.gmra.mrb[0].mxu0 %v3424
      %v3583 = vpop.f32.mrb[0].mxu0
      %v3584 = vadd.f32 0.0, %v3583
      %v3585 = vpop.f32.mrb[0].mxu0
      %v3586 = vpop.f32.mrb[0].mxu0
      %v3587 = vadd.f32 0.0, %v3586
      %v3588 = vpop.f32.mrb[0].mxu0
      %3589 = vdwg.mxu0
      %v3590 = vadd.f32 %v3216, %v3464
      %v3591 = vadd.f32 %v3217, %v3467
      %v3592 = vadd.f32 %v3218, %v3472
      %v3593 = vadd.f32 %v3219, %v3475
      %v3594 = vadd.f32 %v3220, %v3480
      %v3595 = vadd.f32 %v3221, %v3483
      %v3596 = vadd.f32 %v3222, %v3488
      %v3597 = vadd.f32 %v3223, %v3491
      %v3598 = vadd.f32 %v3224, %v3496
      %v3599 = vadd.f32 %v3225, %v3499
      %v3600 = vadd.f32 %v3226, %v3504
      %v3601 = vadd.f32 %v3227, %v3507
      %v3602 = vadd.f32 %v3228, %v3512
      %v3603 = vadd.f32 %v3229, %v3515
      %v3604 = vadd.f32 %v3230, %v3520
      %v3605 = vadd.f32 %v3231, %v3523
      %v3606 = vadd.f32 %v3232, %v3528
      %v3607 = vadd.f32 %v3233, %v3531
      %v3608 = vadd.f32 %v3234, %v3536
      %v3609 = vadd.f32 %v3235, %v3539
      %v3610 = vadd.f32 %v3236, %v3544
      %v3611 = vadd.f32 %v3237, %v3547
      %v3612 = vadd.f32 %v3238, %v3552
      %v3613 = vadd.f32 %v3239, %v3555
      %v3614 = vadd.f32 %v3240, %v3560
      %v3615 = vadd.f32 %v3241, %v3563
      %v3616 = vadd.f32 %v3242, %v3568
      %v3617 = vadd.f32 %v3243, %v3571
      %v3618 = vadd.f32 %v3244, %v3576
      %v3619 = vadd.f32 %v3245, %v3579
      %v3620 = vadd.f32 %v3246, %v3584
      %v3621 = vadd.f32 %v3247, %v3587
      %v3623 = vshrl.u32 %v3248, 16
      %v3625 = vrot.slane %v3623, 4
      %v3626 = vshll.u32 %v3248, 16
      %v3628 = vrot.slane %v3626, 5
      %v3629 = vor.u32 %v3625, %v3628
      %v3630 = vrot.slane %v3629, 4
      %v3632 = vshll.u32 %v3249, 16
      %v3634 = vrot.slane %v3632, 5
      %v3635 = vsel %vm408, %v3630, %v3634
      %v3636 = vshrl.u32 %v3249, 16
      %v3638 = vrot.slane %v3636, 4
      %v3639 = vor.u32 %v3638, %v3634
      %v3640 = vrot.slane %v3639, 4
      %v3642 = vshll.u32 %v3250, 16
      %v3644 = vrot.slane %v3642, 5
      %v3645 = vsel %vm408, %v3640, %v3644
      %v3647 = vshrl.u32 %v3251, 16
      %v3649 = vrot.slane %v3647, 4
      %v3650 = vshll.u32 %v3251, 16
      %v3652 = vrot.slane %v3650, 5
      %v3653 = vor.u32 %v3649, %v3652
      %v3654 = vrot.slane %v3653, 4
      %v3656 = vshll.u32 %v3252, 16
      %v3658 = vrot.slane %v3656, 5
      %v3659 = vsel %vm408, %v3654, %v3658
      %v3660 = vshrl.u32 %v3252, 16
      %v3662 = vrot.slane %v3660, 4
      %v3663 = vor.u32 %v3662, %v3658
      %v3664 = vrot.slane %v3663, 4
      %v3666 = vshll.u32 %v3253, 16
      %v3668 = vrot.slane %v3666, 5
      %v3669 = vsel %vm408, %v3664, %v3668
      %v3671 = vshrl.u32 %v3254, 16
      %v3673 = vrot.slane %v3671, 4
      %v3674 = vshll.u32 %v3254, 16
      %v3676 = vrot.slane %v3674, 5
      %v3677 = vor.u32 %v3673, %v3676
      %v3678 = vrot.slane %v3677, 4
      %v3680 = vshll.u32 %v3255, 16
      %v3682 = vrot.slane %v3680, 5
      %v3683 = vsel %vm408, %v3678, %v3682
      %v3684 = vshrl.u32 %v3255, 16
      %v3686 = vrot.slane %v3684, 4
      %v3687 = vor.u32 %v3686, %v3682
      %v3688 = vrot.slane %v3687, 4
      %v3690 = vshll.u32 %v3256, 16
      %v3692 = vrot.slane %v3690, 5
      %v3693 = vsel %vm408, %v3688, %v3692
      %v3695 = vshrl.u32 %v3257, 16
      %v3697 = vrot.slane %v3695, 4
      %v3698 = vshll.u32 %v3257, 16
      %v3700 = vrot.slane %v3698, 5
      %v3701 = vor.u32 %v3697, %v3700
      %v3702 = vrot.slane %v3701, 4
      %v3704 = vshll.u32 %v3258, 16
      %v3706 = vrot.slane %v3704, 5
      %v3707 = vsel %vm408, %v3702, %v3706
      %v3708 = vshrl.u32 %v3258, 16
      %v3710 = vrot.slane %v3708, 4
      %v3711 = vor.u32 %v3710, %v3706
      %v3712 = vrot.slane %v3711, 4
      %v3714 = vshll.u32 %v3259, 16
      %v3716 = vrot.slane %v3714, 5
      %v3717 = vsel %vm408, %v3712, %v3716
      %v3719 = vshrl.u32 %v3260, 16
      %v3721 = vrot.slane %v3719, 4
      %v3722 = vshll.u32 %v3260, 16
      %v3724 = vrot.slane %v3722, 5
      %v3725 = vor.u32 %v3721, %v3724
      %v3726 = vrot.slane %v3725, 4
      %v3728 = vshll.u32 %v3261, 16
      %v3730 = vrot.slane %v3728, 5
      %v3731 = vsel %vm408, %v3726, %v3730
      %v3732 = vshrl.u32 %v3261, 16
      %v3734 = vrot.slane %v3732, 4
      %v3735 = vor.u32 %v3734, %v3730
      %v3736 = vrot.slane %v3735, 4
      %v3738 = vshll.u32 %v3262, 16
      %v3740 = vrot.slane %v3738, 5
      %v3741 = vsel %vm408, %v3736, %v3740
      %v3743 = vshrl.u32 %v3263, 16
      %v3745 = vrot.slane %v3743, 4
      %v3746 = vshll.u32 %v3263, 16
      %v3748 = vrot.slane %v3746, 5
      %v3749 = vor.u32 %v3745, %v3748
      %v3750 = vrot.slane %v3749, 4
      %v3752 = vshll.u32 %v3264, 16
      %v3754 = vrot.slane %v3752, 5
      %v3755 = vsel %vm408, %v3750, %v3754
      %v3756 = vshrl.u32 %v3264, 16
      %v3758 = vrot.slane %v3756, 4
      %v3759 = vor.u32 %v3758, %v3754
      %v3760 = vrot.slane %v3759, 4
      %v3762 = vshll.u32 %v3265, 16
      %v3764 = vrot.slane %v3762, 5
      %v3765 = vsel %vm408, %v3760, %v3764
      %v3767 = vshrl.u32 %v3266, 16
      %v3769 = vrot.slane %v3767, 4
      %v3770 = vshll.u32 %v3266, 16
      %v3772 = vrot.slane %v3770, 5
      %v3773 = vor.u32 %v3769, %v3772
      %v3774 = vrot.slane %v3773, 4
      %v3776 = vshll.u32 %v3267, 16
      %v3778 = vrot.slane %v3776, 5
      %v3779 = vsel %vm408, %v3774, %v3778
      %v3780 = vshrl.u32 %v3267, 16
      %v3782 = vrot.slane %v3780, 4
      %v3783 = vor.u32 %v3782, %v3778
      %v3784 = vrot.slane %v3783, 4
      %v3786 = vshll.u32 %v3268, 16
      %v3788 = vrot.slane %v3786, 5
      %v3789 = vsel %vm408, %v3784, %v3788
      %v3791 = vshrl.u32 %v3269, 16
      %v3793 = vrot.slane %v3791, 4
      %v3794 = vshll.u32 %v3269, 16
      %v3796 = vrot.slane %v3794, 5
      %v3797 = vor.u32 %v3793, %v3796
      %v3798 = vrot.slane %v3797, 4
      %v3800 = vshll.u32 %v3270, 16
      %v3802 = vrot.slane %v3800, 5
      %v3803 = vsel %vm408, %v3798, %v3802
      %v3804 = vshrl.u32 %v3270, 16
      %v3806 = vrot.slane %v3804, 4
      %v3807 = vor.u32 %v3806, %v3802
      %v3808 = vrot.slane %v3807, 4
      %v3810 = vshll.u32 %v3271, 16
      %v3812 = vrot.slane %v3810, 5
      %v3813 = vsel %vm408, %v3808, %v3812
      %v3815 = vshrl.u32 %v3272, 16
      %v3817 = vrot.slane %v3815, 4
      %v3818 = vshll.u32 %v3272, 16
      %v3820 = vrot.slane %v3818, 5
      %v3821 = vor.u32 %v3817, %v3820
      %v3822 = vrot.slane %v3821, 4
      %v3824 = vshll.u32 %v3273, 16
      %v3826 = vrot.slane %v3824, 5
      %v3827 = vsel %vm408, %v3822, %v3826
      %v3828 = vshrl.u32 %v3273, 16
      %v3830 = vrot.slane %v3828, 4
      %v3831 = vor.u32 %v3830, %v3826
      %v3832 = vrot.slane %v3831, 4
      %v3834 = vshll.u32 %v3274, 16
      %v3836 = vrot.slane %v3834, 5
      %v3837 = vsel %vm408, %v3832, %v3836
      %v3839 = vshrl.u32 %v3275, 16
      %v3841 = vrot.slane %v3839, 4
      %v3842 = vshll.u32 %v3275, 16
      %v3844 = vrot.slane %v3842, 5
      %v3845 = vor.u32 %v3841, %v3844
      %v3846 = vrot.slane %v3845, 4
      %v3848 = vshll.u32 %v3276, 16
      %v3850 = vrot.slane %v3848, 5
      %v3851 = vsel %vm408, %v3846, %v3850
      %v3852 = vshrl.u32 %v3276, 16
      %v3854 = vrot.slane %v3852, 4
      %v3855 = vor.u32 %v3854, %v3850
      %v3856 = vrot.slane %v3855, 4
      %v3858 = vshll.u32 %v3277, 16
      %v3860 = vrot.slane %v3858, 5
      %v3861 = vsel %vm408, %v3856, %v3860
      %v3863 = vshrl.u32 %v3278, 16
      %v3865 = vrot.slane %v3863, 4
      %v3866 = vshll.u32 %v3278, 16
      %v3868 = vrot.slane %v3866, 5
      %v3869 = vor.u32 %v3865, %v3868
      %v3870 = vrot.slane %v3869, 4
      %v3872 = vshll.u32 %v3279, 16
      %v3874 = vrot.slane %v3872, 5
      %v3875 = vsel %vm408, %v3870, %v3874
      %v3876 = vshrl.u32 %v3279, 16
      %v3878 = vrot.slane %v3876, 4
      %v3879 = vor.u32 %v3878, %v3874
      %v3880 = vrot.slane %v3879, 4
      %v3882 = vshll.u32 %v3280, 16
      %v3884 = vrot.slane %v3882, 5
      %v3885 = vsel %vm408, %v3880, %v3884
      %v3887 = vshrl.u32 %v3281, 16
      %v3889 = vrot.slane %v3887, 4
      %v3890 = vshll.u32 %v3281, 16
      %v3892 = vrot.slane %v3890, 5
      %v3893 = vor.u32 %v3889, %v3892
      %v3894 = vrot.slane %v3893, 4
      %v3896 = vshll.u32 %v3282, 16
      %v3898 = vrot.slane %v3896, 5
      %v3899 = vsel %vm408, %v3894, %v3898
      %v3900 = vshrl.u32 %v3282, 16
      %v3902 = vrot.slane %v3900, 4
      %v3903 = vor.u32 %v3902, %v3898
      %v3904 = vrot.slane %v3903, 4
      %v3906 = vshll.u32 %v3283, 16
      %v3908 = vrot.slane %v3906, 5
      %v3909 = vsel %vm408, %v3904, %v3908
      %v3911 = vshrl.u32 %v3284, 16
      %v3913 = vrot.slane %v3911, 4
      %v3914 = vshll.u32 %v3284, 16
      %v3916 = vrot.slane %v3914, 5
      %v3917 = vor.u32 %v3913, %v3916
      %v3918 = vrot.slane %v3917, 4
      %v3920 = vshll.u32 %v3285, 16
      %v3922 = vrot.slane %v3920, 5
      %v3923 = vsel %vm408, %v3918, %v3922
      %v3924 = vshrl.u32 %v3285, 16
      %v3926 = vrot.slane %v3924, 4
      %v3927 = vor.u32 %v3926, %v3922
      %v3928 = vrot.slane %v3927, 4
      %v3930 = vshll.u32 %v3286, 16
      %v3932 = vrot.slane %v3930, 5
      %v3933 = vsel %vm408, %v3928, %v3932
      %v3935 = vshrl.u32 %v3287, 16
      %v3937 = vrot.slane %v3935, 4
      %v3938 = vshll.u32 %v3287, 16
      %v3940 = vrot.slane %v3938, 5
      %v3941 = vor.u32 %v3937, %v3940
      %v3942 = vrot.slane %v3941, 4
      %v3944 = vshll.u32 %v3288, 16
      %v3946 = vrot.slane %v3944, 5
      %v3947 = vsel %vm408, %v3942, %v3946
      %v3948 = vshrl.u32 %v3288, 16
      %v3950 = vrot.slane %v3948, 4
      %v3951 = vor.u32 %v3950, %v3946
      %v3952 = vrot.slane %v3951, 4
      %v3954 = vshll.u32 %v3289, 16
      %v3956 = vrot.slane %v3954, 5
      %v3957 = vsel %vm408, %v3952, %v3956
      %v3959 = vshrl.u32 %v3290, 16
      %v3961 = vrot.slane %v3959, 4
      %v3962 = vshll.u32 %v3290, 16
      %v3964 = vrot.slane %v3962, 5
      %v3965 = vor.u32 %v3961, %v3964
      %v3966 = vrot.slane %v3965, 4
      %v3968 = vshll.u32 %v3291, 16
      %v3970 = vrot.slane %v3968, 5
      %v3971 = vsel %vm408, %v3966, %v3970
      %v3972 = vshrl.u32 %v3291, 16
      %v3974 = vrot.slane %v3972, 4
      %v3975 = vor.u32 %v3974, %v3970
      %v3976 = vrot.slane %v3975, 4
      %v3978 = vshll.u32 %v3292, 16
      %v3980 = vrot.slane %v3978, 5
      %v3981 = vsel %vm408, %v3976, %v3980
      %v3983 = vshrl.u32 %v3293, 16
      %v3985 = vrot.slane %v3983, 4
      %v3986 = vshll.u32 %v3293, 16
      %v3988 = vrot.slane %v3986, 5
      %v3989 = vor.u32 %v3985, %v3988
      %v3990 = vrot.slane %v3989, 4
      %v3992 = vshll.u32 %v3294, 16
      %v3994 = vrot.slane %v3992, 5
      %v3995 = vsel %vm408, %v3990, %v3994
      %v3996 = vshrl.u32 %v3294, 16
      %v3998 = vrot.slane %v3996, 4
      %v3999 = vor.u32 %v3998, %v3994
      %v4000 = vrot.slane %v3999, 4
      %v4002 = vshll.u32 %v3295, 16
      %v4004 = vrot.slane %v4002, 5
      %v4005 = vsel %vm408, %v4000, %v4004
      %s4006 = scalar_lea.vmem %s3, 14
      %v4007 = vld [vmem:[%s4006] sm:$0x3]
      %v4008 = vunpack.c.l.b16 %v3635
      %v4009 = vunpack.c.l.b16 %v3645
      %v4010 = vunpack.c.l.b16 %v3659
      %v4011 = vunpack.c.l.b16 %v3669
      %v4012 = vunpack.c.l.b16 %v3683
      %v4013 = vunpack.c.l.b16 %v3693
      %v4014 = vunpack.c.l.b16 %v3707
      %v4015 = vunpack.c.l.b16 %v3717
      %v4016 = vunpack.c.l.b16 %v3731
      %v4017 = vunpack.c.l.b16 %v3741
      %v4018 = vunpack.c.l.b16 %v3755
      %v4019 = vunpack.c.l.b16 %v3765
      %v4020 = vunpack.c.l.b16 %v3779
      %v4021 = vunpack.c.l.b16 %v3789
      %v4022 = vunpack.c.l.b16 %v3803
      %v4023 = vunpack.c.l.b16 %v3813
      %v4024 = vunpack.c.l.b16 %v3827
      %v4025 = vunpack.c.l.b16 %v3837
      %v4026 = vunpack.c.l.b16 %v3851
      %v4027 = vunpack.c.l.b16 %v3861
      %v4028 = vunpack.c.l.b16 %v3875
      %v4029 = vunpack.c.l.b16 %v3885
      %v4030 = vunpack.c.l.b16 %v3899
      %v4031 = vunpack.c.l.b16 %v3909
      %v4032 = vunpack.c.l.b16 %v3923
      %v4033 = vunpack.c.l.b16 %v3933
      %v4034 = vunpack.c.l.b16 %v3947
      %v4035 = vunpack.c.l.b16 %v3957
      %v4036 = vunpack.c.l.b16 %v3971
      %v4037 = vunpack.c.l.b16 %v3981
      %v4038 = vunpack.c.l.b16 %v3995
      %v4039 = vunpack.c.l.b16 %v4005
      %v4040 = vpack.c.b16 %v4009, %v4008
      %v4041 = vpack.c.b16 %v4011, %v4010
      %v4042 = vpack.c.b16 %v4013, %v4012
      %v4043 = vpack.c.b16 %v4015, %v4014
      %v4044 = vpack.c.b16 %v4017, %v4016
      %v4045 = vpack.c.b16 %v4019, %v4018
      %v4046 = vpack.c.b16 %v4021, %v4020
      %v4047 = vpack.c.b16 %v4023, %v4022
      %v4048 = vpack.c.b16 %v4025, %v4024
      %v4049 = vpack.c.b16 %v4027, %v4026
      %v4050 = vpack.c.b16 %v4029, %v4028
      %v4051 = vpack.c.b16 %v4031, %v4030
      %v4052 = vpack.c.b16 %v4033, %v4032
      %v4053 = vpack.c.b16 %v4035, %v4034
      %v4054 = vpack.c.b16 %v4037, %v4036
      %v4055 = vpack.c.b16 %v4039, %v4038
      %v4057 = vsel %vm843, %v4040, 0
      %v4060 = vsel %vm843, %v4041, 0
      %v4063 = vsel %vm843, %v4042, 0
      %v4066 = vsel %vm843, %v4043, 0
      %v4069 = vsel %vm843, %v4044, 0
      %v4072 = vsel %vm843, %v4045, 0
      %v4075 = vsel %vm843, %v4046, 0
      %v4078 = vsel %vm843, %v4047, 0
      %v4081 = vsel %vm843, %v4048, 0
      %v4084 = vsel %vm843, %v4049, 0
      %v4087 = vsel %vm843, %v4050, 0
      %v4090 = vsel %vm843, %v4051, 0
      %v4093 = vsel %vm843, %v4052, 0
      %v4096 = vsel %vm843, %v4053, 0
      %v4099 = vsel %vm843, %v4054, 0
      %v4102 = vsel %vm843, %v4055, 0
      %v4105 = vsel %vm892, %v4007, 0
      %4107 = vmatprep.subr.bf16.mxu0 0
      %4108 = vmatpush1.bf16.msra.mxu0 %v4105
      %4109 = vmatprep.subr.bf16.mxu0 0
      %4110 = vmatpush1.bf16.msra.mxu0 0
      %4111 = vmatprep.subr.bf16.mxu0 0
      %4112 = vmatpush1.bf16.msra.mxu0 0
      %4113 = vmatprep.subr.bf16.mxu0 0
      %4114 = vmatpush1.bf16.msra.mxu0 0
      %4115 = vmatprep.subr.bf16.mxu0 0
      %4116 = vmatpush1.bf16.msra.mxu0 0
      %4117 = vmatprep.subr.bf16.mxu0 0
      %4118 = vmatpush1.bf16.msra.mxu0 0
      %4119 = vmatprep.subr.bf16.mxu0 0
      %4120 = vmatpush1.bf16.msra.mxu0 0
      %4121 = vmatprep.subr.bf16.mxu0 0
      %4122 = vmatpush1.bf16.msra.mxu0 0
      %4123 = vmatprep.subr.bf16.mxu0 0
      %4124 = vmatpush1.bf16.msra.mxu0 0
      %4125 = vmatprep.subr.bf16.mxu0 0
      %4126 = vmatpush1.bf16.msra.mxu0 0
      %4127 = vmatprep.subr.bf16.mxu0 0
      %4128 = vmatpush1.bf16.msra.mxu0 0
      %4129 = vmatprep.subr.bf16.mxu0 0
      %4130 = vmatpush1.bf16.msra.mxu0 0
      %4131 = vmatprep.subr.bf16.mxu0 0
      %4132 = vmatpush1.bf16.msra.mxu0 0
      %4133 = vmatprep.subr.bf16.mxu0 0
      %4134 = vmatpush1.bf16.msra.mxu0 0
      %4135 = vmatprep.subr.bf16.mxu0 0
      %4136 = vmatpush1.bf16.msra.mxu0 0
      %4137 = vmatprep.subr.bf16.mxu0 0
      %4138 = vmatpush1.bf16.msra.mxu0 0
      %4139 = vmatprep.mubr.bf16.mxu0 0
      %4140 = vmatmul.mubr.bf16.gmra.mrb[0].mxu0 %v4057
      %v4141 = vpop.f32.mrb[0].mxu0
      %v4142 = vadd.f32 0.0, %v4141
      %v4143 = vpop.f32.mrb[0].mxu0
      %v4144 = vpop.f32.mrb[0].mxu0
      %v4145 = vadd.f32 0.0, %v4144
      %v4146 = vpop.f32.mrb[0].mxu0
      %4147 = vmatprep.mubr.bf16.mxu0 0
      %4148 = vmatmul.mubr.bf16.gmra.mrb[0].mxu0 %v4060
      %v4149 = vpop.f32.mrb[0].mxu0
      %v4150 = vadd.f32 0.0, %v4149
      %v4151 = vpop.f32.mrb[0].mxu0
      %v4152 = vpop.f32.mrb[0].mxu0
      %v4153 = vadd.f32 0.0, %v4152
      %v4154 = vpop.f32.mrb[0].mxu0
      %4155 = vmatprep.mubr.bf16.mxu0 0
      %4156 = vmatmul.mubr.bf16.gmra.mrb[0].mxu0 %v4063
      %v4157 = vpop.f32.mrb[0].mxu0
      %v4158 = vadd.f32 0.0, %v4157
      %v4159 = vpop.f32.mrb[0].mxu0
      %v4160 = vpop.f32.mrb[0].mxu0
      %v4161 = vadd.f32 0.0, %v4160
      %v4162 = vpop.f32.mrb[0].mxu0
      %4163 = vmatprep.mubr.bf16.mxu0 0
      %4164 = vmatmul.mubr.bf16.gmra.mrb[0].mxu0 %v4066
      %v4165 = vpop.f32.mrb[0].mxu0
      %v4166 = vadd.f32 0.0, %v4165
      %v4167 = vpop.f32.mrb[0].mxu0
      %v4168 = vpop.f32.mrb[0].mxu0
      %v4169 = vadd.f32 0.0, %v4168
      %v4170 = vpop.f32.mrb[0].mxu0
      %4171 = vmatprep.mubr.bf16.mxu0 0
      %4172 = vmatmul.mubr.bf16.gmra.mrb[0].mxu0 %v4069
      %v4173 = vpop.f32.mrb[0].mxu0
      %v4174 = vadd.f32 0.0, %v4173
      %v4175 = vpop.f32.mrb[0].mxu0
      %v4176 = vpop.f32.mrb[0].mxu0
      %v4177 = vadd.f32 0.0, %v4176
      %v4178 = vpop.f32.mrb[0].mxu0
      %4179 = vmatprep.mubr.bf16.mxu0 0
      %4180 = vmatmul.mubr.bf16.gmra.mrb[0].mxu0 %v4072
      %v4181 = vpop.f32.mrb[0].mxu0
      %v4182 = vadd.f32 0.0, %v4181
      %v4183 = vpop.f32.mrb[0].mxu0
      %v4184 = vpop.f32.mrb[0].mxu0
      %v4185 = vadd.f32 0.0, %v4184
      %v4186 = vpop.f32.mrb[0].mxu0
      %4187 = vmatprep.mubr.bf16.mxu0 0
      %4188 = vmatmul.mubr.bf16.gmra.mrb[0].mxu0 %v4075
      %v4189 = vpop.f32.mrb[0].mxu0
      %v4190 = vadd.f32 0.0, %v4189
      %v4191 = vpop.f32.mrb[0].mxu0
      %v4192 = vpop.f32.mrb[0].mxu0
      %v4193 = vadd.f32 0.0, %v4192
      %v4194 = vpop.f32.mrb[0].mxu0
      %4195 = vmatprep.mubr.bf16.mxu0 0
      %4196 = vmatmul.mubr.bf16.gmra.mrb[0].mxu0 %v4078
      %v4197 = vpop.f32.mrb[0].mxu0
      %v4198 = vadd.f32 0.0, %v4197
      %v4199 = vpop.f32.mrb[0].mxu0
      %v4200 = vpop.f32.mrb[0].mxu0
      %v4201 = vadd.f32 0.0, %v4200
      %v4202 = vpop.f32.mrb[0].mxu0
      %4203 = vmatprep.mubr.bf16.mxu0 0
      %4204 = vmatmul.mubr.bf16.gmra.mrb[0].mxu0 %v4081
      %v4205 = vpop.f32.mrb[0].mxu0
      %v4206 = vadd.f32 0.0, %v4205
      %v4207 = vpop.f32.mrb[0].mxu0
      %v4208 = vpop.f32.mrb[0].mxu0
      %v4209 = vadd.f32 0.0, %v4208
      %v4210 = vpop.f32.mrb[0].mxu0
      %4211 = vmatprep.mubr.bf16.mxu0 0
      %4212 = vmatmul.mubr.bf16.gmra.mrb[0].mxu0 %v4084
      %v4213 = vpop.f32.mrb[0].mxu0
      %v4214 = vadd.f32 0.0, %v4213
      %v4215 = vpop.f32.mrb[0].mxu0
      %v4216 = vpop.f32.mrb[0].mxu0
      %v4217 = vadd.f32 0.0, %v4216
      %v4218 = vpop.f32.mrb[0].mxu0
      %4219 = vmatprep.mubr.bf16.mxu0 0
      %4220 = vmatmul.mubr.bf16.gmra.mrb[0].mxu0 %v4087
      %v4221 = vpop.f32.mrb[0].mxu0
      %v4222 = vadd.f32 0.0, %v4221
      %v4223 = vpop.f32.mrb[0].mxu0
      %v4224 = vpop.f32.mrb[0].mxu0
      %v4225 = vadd.f32 0.0, %v4224
      %v4226 = vpop.f32.mrb[0].mxu0
      %4227 = vmatprep.mubr.bf16.mxu0 0
      %4228 = vmatmul.mubr.bf16.gmra.mrb[0].mxu0 %v4090
      %v4229 = vpop.f32.mrb[0].mxu0
      %v4230 = vadd.f32 0.0, %v4229
      %v4231 = vpop.f32.mrb[0].mxu0
      %v4232 = vpop.f32.mrb[0].mxu0
      %v4233 = vadd.f32 0.0, %v4232
      %v4234 = vpop.f32.mrb[0].mxu0
      %4235 = vmatprep.mubr.bf16.mxu0 0
      %4236 = vmatmul.mubr.bf16.gmra.mrb[0].mxu0 %v4093
      %v4237 = vpop.f32.mrb[0].mxu0
      %v4238 = vadd.f32 0.0, %v4237
      %v4239 = vpop.f32.mrb[0].mxu0
      %v4240 = vpop.f32.mrb[0].mxu0
      %v4241 = vadd.f32 0.0, %v4240
      %v4242 = vpop.f32.mrb[0].mxu0
      %4243 = vmatprep.mubr.bf16.mxu0 0
      %4244 = vmatmul.mubr.bf16.gmra.mrb[0].mxu0 %v4096
      %v4245 = vpop.f32.mrb[0].mxu0
      %v4246 = vadd.f32 0.0, %v4245
      %v4247 = vpop.f32.mrb[0].mxu0
      %v4248 = vpop.f32.mrb[0].mxu0
      %v4249 = vadd.f32 0.0, %v4248
      %v4250 = vpop.f32.mrb[0].mxu0
      %4251 = vmatprep.mubr.bf16.mxu0 0
      %4252 = vmatmul.mubr.bf16.gmra.mrb[0].mxu0 %v4099
      %v4253 = vpop.f32.mrb[0].mxu0
      %v4254 = vadd.f32 0.0, %v4253
      %v4255 = vpop.f32.mrb[0].mxu0
      %v4256 = vpop.f32.mrb[0].mxu0
      %v4257 = vadd.f32 0.0, %v4256
      %v4258 = vpop.f32.mrb[0].mxu0
      %4259 = vmatprep.mubr.bf16.mxu0 0
      %4260 = vmatmul.mubr.bf16.gmra.mrb[0].mxu0 %v4102
      %v4261 = vpop.f32.mrb[0].mxu0
      %v4262 = vadd.f32 0.0, %v4261
      %v4263 = vpop.f32.mrb[0].mxu0
      %v4264 = vpop.f32.mrb[0].mxu0
      %v4265 = vadd.f32 0.0, %v4264
      %v4266 = vpop.f32.mrb[0].mxu0
      %4267 = vdwg.mxu0
      %v4268 = vadd.f32 %v3590, %v4142
      %v4269 = vadd.f32 %v3591, %v4145
      %v4270 = vadd.f32 %v3592, %v4150
      %v4271 = vadd.f32 %v3593, %v4153
      %v4272 = vadd.f32 %v3594, %v4158
      %v4273 = vadd.f32 %v3595, %v4161
      %v4274 = vadd.f32 %v3596, %v4166
      %v4275 = vadd.f32 %v3597, %v4169
      %v4276 = vadd.f32 %v3598, %v4174
      %v4277 = vadd.f32 %v3599, %v4177
      %v4278 = vadd.f32 %v3600, %v4182
      %v4279 = vadd.f32 %v3601, %v4185
      %v4280 = vadd.f32 %v3602, %v4190
      %v4281 = vadd.f32 %v3603, %v4193
      %v4282 = vadd.f32 %v3604, %v4198
      %v4283 = vadd.f32 %v3605, %v4201
      %v4284 = vadd.f32 %v3606, %v4206
      %v4285 = vadd.f32 %v3607, %v4209
      %v4286 = vadd.f32 %v3608, %v4214
      %v4287 = vadd.f32 %v3609, %v4217
      %v4288 = vadd.f32 %v3610, %v4222
      %v4289 = vadd.f32 %v3611, %v4225
      %v4290 = vadd.f32 %v3612, %v4230
      %v4291 = vadd.f32 %v3613, %v4233
      %v4292 = vadd.f32 %v3614, %v4238
      %v4293 = vadd.f32 %v3615, %v4241
      %v4294 = vadd.f32 %v3616, %v4246
      %v4295 = vadd.f32 %v3617, %v4249
      %v4296 = vadd.f32 %v3618, %v4254
      %v4297 = vadd.f32 %v3619, %v4257
      %v4298 = vadd.f32 %v3620, %v4262
      %v4299 = vadd.f32 %v3621, %v4265
      %v4316 = vrot.slane %v3248, 5
      %v4317 = vrot.slane %v4316, 4
      %v4318 = vrot.slane %v3249, 5
      %v4319 = vsel %vm1367, %v4317, %v4318
      %v4320 = vrot.slane %v4318, 4
      %v4321 = vrot.slane %v3250, 5
      %v4322 = vsel %vm1367, %v4320, %v4321
      %v4323 = vrot.slane %v3251, 5
      %v4324 = vrot.slane %v4323, 4
      %v4325 = vrot.slane %v3252, 5
      %v4326 = vsel %vm1367, %v4324, %v4325
      %v4327 = vrot.slane %v4325, 4
      %v4328 = vrot.slane %v3253, 5
      %v4329 = vsel %vm1367, %v4327, %v4328
      %v4330 = vrot.slane %v3254, 5
      %v4331 = vrot.slane %v4330, 4
      %v4332 = vrot.slane %v3255, 5
      %v4333 = vsel %vm1367, %v4331, %v4332
      %v4334 = vrot.slane %v4332, 4
      %v4335 = vrot.slane %v3256, 5
      %v4336 = vsel %vm1367, %v4334, %v4335
      %v4337 = vrot.slane %v3257, 5
      %v4338 = vrot.slane %v4337, 4
      %v4339 = vrot.slane %v3258, 5
      %v4340 = vsel %vm1367, %v4338, %v4339
      %v4341 = vrot.slane %v4339, 4
      %v4342 = vrot.slane %v3259, 5
      %v4343 = vsel %vm1367, %v4341, %v4342
      %v4344 = vrot.slane %v3260, 5
      %v4345 = vrot.slane %v4344, 4
      %v4346 = vrot.slane %v3261, 5
      %v4347 = vsel %vm1367, %v4345, %v4346
      %v4348 = vrot.slane %v4346, 4
      %v4349 = vrot.slane %v3262, 5
      %v4350 = vsel %vm1367, %v4348, %v4349
      %v4351 = vrot.slane %v3263, 5
      %v4352 = vrot.slane %v4351, 4
      %v4353 = vrot.slane %v3264, 5
      %v4354 = vsel %vm1367, %v4352, %v4353
      %v4355 = vrot.slane %v4353, 4
      %v4356 = vrot.slane %v3265, 5
      %v4357 = vsel %vm1367, %v4355, %v4356
      %v4358 = vrot.slane %v3266, 5
      %v4359 = vrot.slane %v4358, 4
      %v4360 = vrot.slane %v3267, 5
      %v4361 = vsel %vm1367, %v4359, %v4360
      %v4362 = vrot.slane %v4360, 4
      %v4363 = vrot.slane %v3268, 5
      %v4364 = vsel %vm1367, %v4362, %v4363
      %v4365 = vrot.slane %v3269, 5
      %v4366 = vrot.slane %v4365, 4
      %v4367 = vrot.slane %v3270, 5
      %v4368 = vsel %vm1367, %v4366, %v4367
      %v4369 = vrot.slane %v4367, 4
      %v4370 = vrot.slane %v3271, 5
      %v4371 = vsel %vm1367, %v4369, %v4370
      %v4372 = vrot.slane %v3272, 5
      %v4373 = vrot.slane %v4372, 4
      %v4374 = vrot.slane %v3273, 5
      %v4375 = vsel %vm1367, %v4373, %v4374
      %v4376 = vrot.slane %v4374, 4
      %v4377 = vrot.slane %v3274, 5
      %v4378 = vsel %vm1367, %v4376, %v4377
      %v4379 = vrot.slane %v3275, 5
      %v4380 = vrot.slane %v4379, 4
      %v4381 = vrot.slane %v3276, 5
      %v4382 = vsel %vm1367, %v4380, %v4381
      %v4383 = vrot.slane %v4381, 4
      %v4384 = vrot.slane %v3277, 5
      %v4385 = vsel %vm1367, %v4383, %v4384
      %v4386 = vrot.slane %v3278, 5
      %v4387 = vrot.slane %v4386, 4
      %v4388 = vrot.slane %v3279, 5
      %v4389 = vsel %vm1367, %v4387, %v4388
      %v4390 = vrot.slane %v4388, 4
      %v4391 = vrot.slane %v3280, 5
      %v4392 = vsel %vm1367, %v4390, %v4391
      %v4393 = vrot.slane %v3281, 5
      %v4394 = vrot.slane %v4393, 4
      %v4395 = vrot.slane %v3282, 5
      %v4396 = vsel %vm1367, %v4394, %v4395
      %v4397 = vrot.slane %v4395, 4
      %v4398 = vrot.slane %v3283, 5
      %v4399 = vsel %vm1367, %v4397, %v4398
      %v4400 = vrot.slane %v3284, 5
      %v4401 = vrot.slane %v4400, 4
      %v4402 = vrot.slane %v3285, 5
      %v4403 = vsel %vm1367, %v4401, %v4402
      %v4404 = vrot.slane %v4402, 4
      %v4405 = vrot.slane %v3286, 5
      %v4406 = vsel %vm1367, %v4404, %v4405
      %v4407 = vrot.slane %v3287, 5
      %v4408 = vrot.slane %v4407, 4
      %v4409 = vrot.slane %v3288, 5
      %v4410 = vsel %vm1367, %v4408, %v4409
      %v4411 = vrot.slane %v4409, 4
      %v4412 = vrot.slane %v3289, 5
      %v4413 = vsel %vm1367, %v4411, %v4412
      %v4414 = vrot.slane %v3290, 5
      %v4415 = vrot.slane %v4414, 4
      %v4416 = vrot.slane %v3291, 5
      %v4417 = vsel %vm1367, %v4415, %v4416
      %v4418 = vrot.slane %v4416, 4
      %v4419 = vrot.slane %v3292, 5
      %v4420 = vsel %vm1367, %v4418, %v4419
      %v4421 = vrot.slane %v3293, 5
      %v4422 = vrot.slane %v4421, 4
      %v4423 = vrot.slane %v3294, 5
      %v4424 = vsel %vm1367, %v4422, %v4423
      %v4425 = vrot.slane %v4423, 4
      %v4426 = vrot.slane %v3295, 5
      %v4427 = vsel %vm1367, %v4425, %v4426
      %s4428 = scalar_lea.vmem %s3, 16
      %v4429 = vld [vmem:[%s4428] sm:$0x3]
      %v4430 = vunpack.c.l.b16 %v4319
      %v4431 = vunpack.c.l.b16 %v4322
      %v4432 = vunpack.c.l.b16 %v4326
      %v4433 = vunpack.c.l.b16 %v4329
      %v4434 = vunpack.c.l.b16 %v4333
      %v4435 = vunpack.c.l.b16 %v4336
      %v4436 = vunpack.c.l.b16 %v4340
      %v4437 = vunpack.c.l.b16 %v4343
      %v4438 = vunpack.c.l.b16 %v4347
      %v4439 = vunpack.c.l.b16 %v4350
      %v4440 = vunpack.c.l.b16 %v4354
      %v4441 = vunpack.c.l.b16 %v4357
      %v4442 = vunpack.c.l.b16 %v4361
      %v4443 = vunpack.c.l.b16 %v4364
      %v4444 = vunpack.c.l.b16 %v4368
      %v4445 = vunpack.c.l.b16 %v4371
      %v4446 = vunpack.c.l.b16 %v4375
      %v4447 = vunpack.c.l.b16 %v4378
      %v4448 = vunpack.c.l.b16 %v4382
      %v4449 = vunpack.c.l.b16 %v4385
      %v4450 = vunpack.c.l.b16 %v4389
      %v4451 = vunpack.c.l.b16 %v4392
      %v4452 = vunpack.c.l.b16 %v4396
      %v4453 = vunpack.c.l.b16 %v4399
      %v4454 = vunpack.c.l.b16 %v4403
      %v4455 = vunpack.c.l.b16 %v4406
      %v4456 = vunpack.c.l.b16 %v4410
      %v4457 = vunpack.c.l.b16 %v4413
      %v4458 = vunpack.c.l.b16 %v4417
      %v4459 = vunpack.c.l.b16 %v4420
      %v4460 = vunpack.c.l.b16 %v4424
      %v4461 = vunpack.c.l.b16 %v4427
      %v4462 = vpack.c.b16 %v4431, %v4430
      %v4463 = vpack.c.b16 %v4433, %v4432
      %v4464 = vpack.c.b16 %v4435, %v4434
      %v4465 = vpack.c.b16 %v4437, %v4436
      %v4466 = vpack.c.b16 %v4439, %v4438
      %v4467 = vpack.c.b16 %v4441, %v4440
      %v4468 = vpack.c.b16 %v4443, %v4442
      %v4469 = vpack.c.b16 %v4445, %v4444
      %v4470 = vpack.c.b16 %v4447, %v4446
      %v4471 = vpack.c.b16 %v4449, %v4448
      %v4472 = vpack.c.b16 %v4451, %v4450
      %v4473 = vpack.c.b16 %v4453, %v4452
      %v4474 = vpack.c.b16 %v4455, %v4454
      %v4475 = vpack.c.b16 %v4457, %v4456
      %v4476 = vpack.c.b16 %v4459, %v4458
      %v4477 = vpack.c.b16 %v4461, %v4460
      %v4479 = vsel %vm843, %v4462, 0
      %v4482 = vsel %vm843, %v4463, 0
      %v4485 = vsel %vm843, %v4464, 0
      %v4488 = vsel %vm843, %v4465, 0
      %v4491 = vsel %vm843, %v4466, 0
      %v4494 = vsel %vm843, %v4467, 0
      %v4497 = vsel %vm843, %v4468, 0
      %v4500 = vsel %vm843, %v4469, 0
      %v4503 = vsel %vm843, %v4470, 0
      %v4506 = vsel %vm843, %v4471, 0
      %v4509 = vsel %vm843, %v4472, 0
      %v4512 = vsel %vm843, %v4473, 0
      %v4515 = vsel %vm843, %v4474, 0
      %v4518 = vsel %vm843, %v4475, 0
      %v4521 = vsel %vm843, %v4476, 0
      %v4524 = vsel %vm843, %v4477, 0
      %v4527 = vsel %vm892, %v4429, 0
      %4529 = vmatprep.subr.bf16.mxu0 0
      %4530 = vmatpush1.bf16.msra.mxu0 %v4527
      %4531 = vmatprep.subr.bf16.mxu0 0
      %4532 = vmatpush1.bf16.msra.mxu0 0
      %4533 = vmatprep.subr.bf16.mxu0 0
      %4534 = vmatpush1.bf16.msra.mxu0 0
      %4535 = vmatprep.subr.bf16.mxu0 0
      %4536 = vmatpush1.bf16.msra.mxu0 0
      %4537 = vmatprep.subr.bf16.mxu0 0
      %4538 = vmatpush1.bf16.msra.mxu0 0
      %4539 = vmatprep.subr.bf16.mxu0 0
      %4540 = vmatpush1.bf16.msra.mxu0 0
      %4541 = vmatprep.subr.bf16.mxu0 0
      %4542 = vmatpush1.bf16.msra.mxu0 0
      %4543 = vmatprep.subr.bf16.mxu0 0
      %4544 = vmatpush1.bf16.msra.mxu0 0
      %4545 = vmatprep.subr.bf16.mxu0 0
      %4546 = vmatpush1.bf16.msra.mxu0 0
      %4547 = vmatprep.subr.bf16.mxu0 0
      %4548 = vmatpush1.bf16.msra.mxu0 0
      %4549 = vmatprep.subr.bf16.mxu0 0
      %4550 = vmatpush1.bf16.msra.mxu0 0
      %4551 = vmatprep.subr.bf16.mxu0 0
      %4552 = vmatpush1.bf16.msra.mxu0 0
      %4553 = vmatprep.subr.bf16.mxu0 0
      %4554 = vmatpush1.bf16.msra.mxu0 0
      %4555 = vmatprep.subr.bf16.mxu0 0
      %4556 = vmatpush1.bf16.msra.mxu0 0
      %4557 = vmatprep.subr.bf16.mxu0 0
      %4558 = vmatpush1.bf16.msra.mxu0 0
      %4559 = vmatprep.subr.bf16.mxu0 0
      %4560 = vmatpush1.bf16.msra.mxu0 0
      %4561 = vmatprep.mubr.bf16.mxu0 0
      %4562 = vmatmul.mubr.bf16.gmra.mrb[0].mxu0 %v4479
      %v4563 = vpop.f32.mrb[0].mxu0
      %v4564 = vadd.f32 0.0, %v4563
      %v4565 = vpop.f32.mrb[0].mxu0
      %v4566 = vpop.f32.mrb[0].mxu0
      %v4567 = vadd.f32 0.0, %v4566
      %v4568 = vpop.f32.mrb[0].mxu0
      %4569 = vmatprep.mubr.bf16.mxu0 0
      %4570 = vmatmul.mubr.bf16.gmra.mrb[0].mxu0 %v4482
      %v4571 = vpop.f32.mrb[0].mxu0
      %v4572 = vadd.f32 0.0, %v4571
      %v4573 = vpop.f32.mrb[0].mxu0
      %v4574 = vpop.f32.mrb[0].mxu0
      %v4575 = vadd.f32 0.0, %v4574
      %v4576 = vpop.f32.mrb[0].mxu0
      %4577 = vmatprep.mubr.bf16.mxu0 0
      %4578 = vmatmul.mubr.bf16.gmra.mrb[0].mxu0 %v4485
      %v4579 = vpop.f32.mrb[0].mxu0
      %v4580 = vadd.f32 0.0, %v4579
      %v4581 = vpop.f32.mrb[0].mxu0
      %v4582 = vpop.f32.mrb[0].mxu0
      %v4583 = vadd.f32 0.0, %v4582
      %v4584 = vpop.f32.mrb[0].mxu0
      %4585 = vmatprep.mubr.bf16.mxu0 0
      %4586 = vmatmul.mubr.bf16.gmra.mrb[0].mxu0 %v4488
      %v4587 = vpop.f32.mrb[0].mxu0
      %v4588 = vadd.f32 0.0, %v4587
      %v4589 = vpop.f32.mrb[0].mxu0
      %v4590 = vpop.f32.mrb[0].mxu0
      %v4591 = vadd.f32 0.0, %v4590
      %v4592 = vpop.f32.mrb[0].mxu0
      %4593 = vmatprep.mubr.bf16.mxu0 0
      %4594 = vmatmul.mubr.bf16.gmra.mrb[0].mxu0 %v4491
      %v4595 = vpop.f32.mrb[0].mxu0
      %v4596 = vadd.f32 0.0, %v4595
      %v4597 = vpop.f32.mrb[0].mxu0
      %v4598 = vpop.f32.mrb[0].mxu0
      %v4599 = vadd.f32 0.0, %v4598
      %v4600 = vpop.f32.mrb[0].mxu0
      %4601 = vmatprep.mubr.bf16.mxu0 0
      %4602 = vmatmul.mubr.bf16.gmra.mrb[0].mxu0 %v4494
      %v4603 = vpop.f32.mrb[0].mxu0
      %v4604 = vadd.f32 0.0, %v4603
      %v4605 = vpop.f32.mrb[0].mxu0
      %v4606 = vpop.f32.mrb[0].mxu0
      %v4607 = vadd.f32 0.0, %v4606
      %v4608 = vpop.f32.mrb[0].mxu0
      %4609 = vmatprep.mubr.bf16.mxu0 0
      %4610 = vmatmul.mubr.bf16.gmra.mrb[0].mxu0 %v4497
      %v4611 = vpop.f32.mrb[0].mxu0
      %v4612 = vadd.f32 0.0, %v4611
      %v4613 = vpop.f32.mrb[0].mxu0
      %v4614 = vpop.f32.mrb[0].mxu0
      %v4615 = vadd.f32 0.0, %v4614
      %v4616 = vpop.f32.mrb[0].mxu0
      %4617 = vmatprep.mubr.bf16.mxu0 0
      %4618 = vmatmul.mubr.bf16.gmra.mrb[0].mxu0 %v4500
      %v4619 = vpop.f32.mrb[0].mxu0
      %v4620 = vadd.f32 0.0, %v4619
      %v4621 = vpop.f32.mrb[0].mxu0
      %v4622 = vpop.f32.mrb[0].mxu0
      %v4623 = vadd.f32 0.0, %v4622
      %v4624 = vpop.f32.mrb[0].mxu0
      %4625 = vmatprep.mubr.bf16.mxu0 0
      %4626 = vmatmul.mubr.bf16.gmra.mrb[0].mxu0 %v4503
      %v4627 = vpop.f32.mrb[0].mxu0
      %v4628 = vadd.f32 0.0, %v4627
      %v4629 = vpop.f32.mrb[0].mxu0
      %v4630 = vpop.f32.mrb[0].mxu0
      %v4631 = vadd.f32 0.0, %v4630
      %v4632 = vpop.f32.mrb[0].mxu0
      %4633 = vmatprep.mubr.bf16.mxu0 0
      %4634 = vmatmul.mubr.bf16.gmra.mrb[0].mxu0 %v4506
      %v4635 = vpop.f32.mrb[0].mxu0
      %v4636 = vadd.f32 0.0, %v4635
      %v4637 = vpop.f32.mrb[0].mxu0
      %v4638 = vpop.f32.mrb[0].mxu0
      %v4639 = vadd.f32 0.0, %v4638
      %v4640 = vpop.f32.mrb[0].mxu0
      %4641 = vmatprep.mubr.bf16.mxu0 0
      %4642 = vmatmul.mubr.bf16.gmra.mrb[0].mxu0 %v4509
      %v4643 = vpop.f32.mrb[0].mxu0
      %v4644 = vadd.f32 0.0, %v4643
      %v4645 = vpop.f32.mrb[0].mxu0
      %v4646 = vpop.f32.mrb[0].mxu0
      %v4647 = vadd.f32 0.0, %v4646
      %v4648 = vpop.f32.mrb[0].mxu0
      %4649 = vmatprep.mubr.bf16.mxu0 0
      %4650 = vmatmul.mubr.bf16.gmra.mrb[0].mxu0 %v4512
      %v4651 = vpop.f32.mrb[0].mxu0
      %v4652 = vadd.f32 0.0, %v4651
      %v4653 = vpop.f32.mrb[0].mxu0
      %v4654 = vpop.f32.mrb[0].mxu0
      %v4655 = vadd.f32 0.0, %v4654
      %v4656 = vpop.f32.mrb[0].mxu0
      %4657 = vmatprep.mubr.bf16.mxu0 0
      %4658 = vmatmul.mubr.bf16.gmra.mrb[0].mxu0 %v4515
      %v4659 = vpop.f32.mrb[0].mxu0
      %v4660 = vadd.f32 0.0, %v4659
      %v4661 = vpop.f32.mrb[0].mxu0
      %v4662 = vpop.f32.mrb[0].mxu0
      %v4663 = vadd.f32 0.0, %v4662
      %v4664 = vpop.f32.mrb[0].mxu0
      %4665 = vmatprep.mubr.bf16.mxu0 0
      %4666 = vmatmul.mubr.bf16.gmra.mrb[0].mxu0 %v4518
      %v4667 = vpop.f32.mrb[0].mxu0
      %v4668 = vadd.f32 0.0, %v4667
      %v4669 = vpop.f32.mrb[0].mxu0
      %v4670 = vpop.f32.mrb[0].mxu0
      %v4671 = vadd.f32 0.0, %v4670
      %v4672 = vpop.f32.mrb[0].mxu0
      %4673 = vmatprep.mubr.bf16.mxu0 0
      %4674 = vmatmul.mubr.bf16.gmra.mrb[0].mxu0 %v4521
      %v4675 = vpop.f32.mrb[0].mxu0
      %v4676 = vadd.f32 0.0, %v4675
      %v4677 = vpop.f32.mrb[0].mxu0
      %v4678 = vpop.f32.mrb[0].mxu0
      %v4679 = vadd.f32 0.0, %v4678
      %v4680 = vpop.f32.mrb[0].mxu0
      %4681 = vmatprep.mubr.bf16.mxu0 0
      %4682 = vmatmul.mubr.bf16.gmra.mrb[0].mxu0 %v4524
      %v4683 = vpop.f32.mrb[0].mxu0
      %v4684 = vadd.f32 0.0, %v4683
      %v4685 = vpop.f32.mrb[0].mxu0
      %v4686 = vpop.f32.mrb[0].mxu0
      %v4687 = vadd.f32 0.0, %v4686
      %v4688 = vpop.f32.mrb[0].mxu0
      %4689 = vdwg.mxu0
      %v4690 = vadd.f32 %v4268, %v4564
      %v4691 = vadd.f32 %v4269, %v4567
      %v4692 = vadd.f32 %v4270, %v4572
      %v4693 = vadd.f32 %v4271, %v4575
      %v4694 = vadd.f32 %v4272, %v4580
      %v4695 = vadd.f32 %v4273, %v4583
      %v4696 = vadd.f32 %v4274, %v4588
      %v4697 = vadd.f32 %v4275, %v4591
      %v4698 = vadd.f32 %v4276, %v4596
      %v4699 = vadd.f32 %v4277, %v4599
      %v4700 = vadd.f32 %v4278, %v4604
      %v4701 = vadd.f32 %v4279, %v4607
      %v4702 = vadd.f32 %v4280, %v4612
      %v4703 = vadd.f32 %v4281, %v4615
      %v4704 = vadd.f32 %v4282, %v4620
      %v4705 = vadd.f32 %v4283, %v4623
      %v4706 = vadd.f32 %v4284, %v4628
      %v4707 = vadd.f32 %v4285, %v4631
      %v4708 = vadd.f32 %v4286, %v4636
      %v4709 = vadd.f32 %v4287, %v4639
      %v4710 = vadd.f32 %v4288, %v4644
      %v4711 = vadd.f32 %v4289, %v4647
      %v4712 = vadd.f32 %v4290, %v4652
      %v4713 = vadd.f32 %v4291, %v4655
      %v4714 = vadd.f32 %v4292, %v4660
      %v4715 = vadd.f32 %v4293, %v4663
      %v4716 = vadd.f32 %v4294, %v4668
      %v4717 = vadd.f32 %v4295, %v4671
      %v4718 = vadd.f32 %v4296, %v4676
      %v4719 = vadd.f32 %v4297, %v4679
      %v4720 = vadd.f32 %v4298, %v4684
      %v4721 = vadd.f32 %v4299, %v4687
      %4722 = vst [vmem:[%s347] sm:$0xff] %v4690
      %4723 = vst [vmem:[%s347 + $0x8] sm:$0xff] %v4691
      %4724 = vst [vmem:[%s347 + $0x10] sm:$0xff] %v4692
      %4725 = vst [vmem:[%s347 + $0x18] sm:$0xff] %v4693
      %4726 = vst [vmem:[%s347 + $0x20] sm:$0xff] %v4694
      %4727 = vst [vmem:[%s347 + $0x28] sm:$0xff] %v4695
      %4728 = vst [vmem:[%s347 + $0x30] sm:$0xff] %v4696
      %4729 = vst [vmem:[%s347 + $0x38] sm:$0xff] %v4697
      %4730 = vst [vmem:[%s347 + $0x40] sm:$0xff] %v4698
      %4731 = vst [vmem:[%s347 + $0x48] sm:$0xff] %v4699
      %4732 = vst [vmem:[%s347 + $0x50] sm:$0xff] %v4700
      %4733 = vst [vmem:[%s347 + $0x58] sm:$0xff] %v4701
      %4734 = vst [vmem:[%s347 + $0x60] sm:$0xff] %v4702
      %4735 = vst [vmem:[%s347 + $0x68] sm:$0xff] %v4703
      %4736 = vst [vmem:[%s347 + $0x70] sm:$0xff] %v4704
      %4737 = vst [vmem:[%s347 + $0x78] sm:$0xff] %v4705
      %4738 = vst [vmem:[%s347 + $0x80] sm:$0xff] %v4706
      %4739 = vst [vmem:[%s347 + $0x88] sm:$0xff] %v4707
      %4740 = vst [vmem:[%s347 + $0x90] sm:$0xff] %v4708
      %4741 = vst [vmem:[%s347 + $0x98] sm:$0xff] %v4709
      %4742 = vst [vmem:[%s347 + $0xa0] sm:$0xff] %v4710
      %4743 = vst [vmem:[%s347 + $0xa8] sm:$0xff] %v4711
      %4744 = vst [vmem:[%s347 + $0xb0] sm:$0xff] %v4712
      %4745 = vst [vmem:[%s347 + $0xb8] sm:$0xff] %v4713
      %4746 = vst [vmem:[%s347 + $0xc0] sm:$0xff] %v4714
      %4747 = vst [vmem:[%s347 + $0xc8] sm:$0xff] %v4715
      %4748 = vst [vmem:[%s347 + $0xd0] sm:$0xff] %v4716
      %4749 = vst [vmem:[%s347 + $0xd8] sm:$0xff] %v4717
      %4750 = vst [vmem:[%s347 + $0xe0] sm:$0xff] %v4718
      %4751 = vst [vmem:[%s347 + $0xe8] sm:$0xff] %v4719
      %4752 = vst [vmem:[%s347 + $0xf0] sm:$0xff] %v4720
      %4753 = vst [vmem:[%s347 + $0xf8] sm:$0xff] %v4721
      %v4754 = vadd.f32 %v4690, %v4691
      %v4755 = vadd.f32 %v4754, %v4692
      %v4756 = vadd.f32 %v4755, %v4693
      %v4757 = vadd.f32 %v4756, %v4694
      %v4758 = vadd.f32 %v4757, %v4695
      %v4759 = vadd.f32 %v4758, %v4696
      %v4760 = vadd.f32 %v4759, %v4697
      %v4761 = vadd.f32 %v4760, %v4698
      %v4762 = vadd.f32 %v4761, %v4699
      %v4763 = vadd.f32 %v4762, %v4700
      %v4764 = vadd.f32 %v4763, %v4701
      %v4765 = vadd.f32 %v4764, %v4702
      %v4766 = vadd.f32 %v4765, %v4703
      %v4767 = vadd.f32 %v4766, %v4704
      %v4768 = vadd.f32 %v4767, %v4705
      %v4769 = vadd.f32 %v4768, %v4706
      %v4770 = vadd.f32 %v4769, %v4707
      %v4771 = vadd.f32 %v4770, %v4708
      %v4772 = vadd.f32 %v4771, %v4709
      %v4773 = vadd.f32 %v4772, %v4710
      %v4774 = vadd.f32 %v4773, %v4711
      %v4775 = vadd.f32 %v4774, %v4712
      %v4776 = vadd.f32 %v4775, %v4713
      %v4777 = vadd.f32 %v4776, %v4714
      %v4778 = vadd.f32 %v4777, %v4715
      %v4779 = vadd.f32 %v4778, %v4716
      %v4780 = vadd.f32 %v4779, %v4717
      %v4781 = vadd.f32 %v4780, %v4718
      %v4782 = vadd.f32 %v4781, %v4719
      %v4783 = vadd.f32 %v4782, %v4720
      %v4784 = vadd.f32 %v4783, %v4721
      %v4785 = vrot.slane %v4784, 4
      %v4786 = vadd.f32 %v4784, %v4785
      %v4787 = vrot.slane %v4786, 2
      %v4788 = vadd.f32 %v4786, %v4787
      %v4789 = vrot.slane %v4788, 1
      %v4790 = vadd.f32 %v4788, %v4789
      %v4791 = vmul.f32 %v4690, %v4690
      %v4792 = vmul.f32 %v4691, %v4691
      %v4793 = vmul.f32 %v4692, %v4692
      %v4794 = vmul.f32 %v4693, %v4693
      %v4795 = vmul.f32 %v4694, %v4694
      %v4796 = vmul.f32 %v4695, %v4695
      %v4797 = vmul.f32 %v4696, %v4696
      %v4798 = vmul.f32 %v4697, %v4697
      %v4799 = vmul.f32 %v4698, %v4698
      %v4800 = vmul.f32 %v4699, %v4699
      %v4801 = vmul.f32 %v4700, %v4700
      %v4802 = vmul.f32 %v4701, %v4701
      %v4803 = vmul.f32 %v4702, %v4702
      %v4804 = vmul.f32 %v4703, %v4703
      %v4805 = vmul.f32 %v4704, %v4704
      %v4806 = vmul.f32 %v4705, %v4705
      %v4807 = vmul.f32 %v4706, %v4706
      %v4808 = vmul.f32 %v4707, %v4707
      %v4809 = vmul.f32 %v4708, %v4708
      %v4810 = vmul.f32 %v4709, %v4709
      %v4811 = vmul.f32 %v4710, %v4710
      %v4812 = vmul.f32 %v4711, %v4711
      %v4813 = vmul.f32 %v4712, %v4712
      %v4814 = vmul.f32 %v4713, %v4713
      %v4815 = vmul.f32 %v4714, %v4714
      %v4816 = vmul.f32 %v4715, %v4715
      %v4817 = vmul.f32 %v4716, %v4716
      %v4818 = vmul.f32 %v4717, %v4717
      %v4819 = vmul.f32 %v4718, %v4718
      %v4820 = vmul.f32 %v4719, %v4719
      %v4821 = vmul.f32 %v4720, %v4720
      %v4822 = vmul.f32 %v4721, %v4721
      %v4823 = vadd.f32 %v4791, %v4792
      %v4824 = vadd.f32 %v4823, %v4793
      %v4825 = vadd.f32 %v4824, %v4794
      %v4826 = vadd.f32 %v4825, %v4795
      %v4827 = vadd.f32 %v4826, %v4796
      %v4828 = vadd.f32 %v4827, %v4797
      %v4829 = vadd.f32 %v4828, %v4798
      %v4830 = vadd.f32 %v4829, %v4799
      %v4831 = vadd.f32 %v4830, %v4800
      %v4832 = vadd.f32 %v4831, %v4801
      %v4833 = vadd.f32 %v4832, %v4802
      %v4834 = vadd.f32 %v4833, %v4803
      %v4835 = vadd.f32 %v4834, %v4804
      %v4836 = vadd.f32 %v4835, %v4805
      %v4837 = vadd.f32 %v4836, %v4806
      %v4838 = vadd.f32 %v4837, %v4807
      %v4839 = vadd.f32 %v4838, %v4808
      %v4840 = vadd.f32 %v4839, %v4809
      %v4841 = vadd.f32 %v4840, %v4810
      %v4842 = vadd.f32 %v4841, %v4811
      %v4843 = vadd.f32 %v4842, %v4812
      %v4844 = vadd.f32 %v4843, %v4813
      %v4845 = vadd.f32 %v4844, %v4814
      %v4846 = vadd.f32 %v4845, %v4815
      %v4847 = vadd.f32 %v4846, %v4816
      %v4848 = vadd.f32 %v4847, %v4817
      %v4849 = vadd.f32 %v4848, %v4818
      %v4850 = vadd.f32 %v4849, %v4819
      %v4851 = vadd.f32 %v4850, %v4820
      %v4852 = vadd.f32 %v4851, %v4821
      %v4853 = vadd.f32 %v4852, %v4822
      %v4854 = vrot.slane %v4853, 4
      %v4855 = vadd.f32 %v4853, %v4854
      %v4856 = vrot.slane %v4855, 2
      %v4857 = vadd.f32 %v4855, %v4856
      %v4858 = vrot.slane %v4857, 1
      %v4859 = vadd.f32 %v4857, %v4858
      %vm4860 = vcmask 1040384
      %v4861 = vsel %vm4860, %v4790, %v4859
      %4862 = vst [vmem:[%s354] sm:$0x3] %v4861
      %s4863 = sadd.s32 %s21, %s22
      %s4864 = smul.u32 32, %s4863
      %p4865 = scmp.lt.s32.totalorder %s4864, 63
      %s4866 = scalar_select %p4865, %s4864, 63
      %s4867 = smul.addr %s4866, 8
      %s4868 = scalar_lea.vmem %s4, %s4867
      %s4869 = sadd.s32 %s21, %s22
      %p4870 = scmp.lt.s32.totalorder %s4869, 1
      %s4871 = scalar_select %p4870, %s4869, 1
      %s4872 = smul.addr %s4871, 2
      %s4873 = scalar_lea.vmem %s5, %s4872
      // Predicated region
      $region37: #{conv_block.4} parent=35 // pred_check
        %p4874 = pneg %p154
      $region38: #{conv_block.4} parent=35 // pred_check_branch
        %4876 = sbr.rel (%p4874) target = $region40
      $region39: #{conv_block.4} parent=35 // pred_region
        %s4877 = sadd.s32 %s21, %s22
        %s4878 = smul.u32 32, %s4877
      $region40: #{conv_block.4} parent=35 // pred_fallthru
        _
      // Predicated region
      $region41: #{conv_block.4} parent=35 // pred_check
        %p4879 = pneg %p182
      $region42: #{conv_block.4} parent=35 // pred_check_branch
        %4881 = sbr.rel (%p4879) target = $region44
      $region43: #{conv_block.4} parent=35 // pred_region
        %s4882 = sadd.s32 %s21, %s22
      $region44: #{conv_block.4} parent=35 // pred_fallthru
        _
    $region36: #{conv_block.4} parent=5 // pred_fallthru
      _
    %p4883 = scmp.le.s32.totalorder 2, %s12
    // Predicated region
    $region45: #{conv_block.4} parent=5 // pred_check
      %p4884 = pneg %p4883
    $region46: #{conv_block.4} parent=5 // pred_check_branch
      %4886 = sbr.rel (%p4884) target = $region48
    $region47: #{conv_block.4} parent=5 // pred_region
      %s4887 = ssub.s32 %s12, 2
      // Predicated region
      $region49: #{conv_block.4} parent=47 // pred_check
        %p4888 = pneg %p160
      $region50: #{conv_block.4} parent=47 // pred_check_branch
        %4890 = sbr.rel (%p4888) target = $region52
      $region51: #{conv_block.4} parent=47 // pred_region
        %s4891 = sadd.s32 %s23, %s24
        %s4892 = smul.u32 32, %s4891
        %p4893 = scmp.lt.s32.totalorder %s4892, 63
        %s4894 = scalar_select %p4893, %s4892, 63
        %s4895 = smul.addr %s4894, 8
        %s4896 = scalar_lea.vmem %s4, %s4895
      $region52: #{conv_block.4} parent=47 // pred_fallthru
        _
      // Predicated region
      $region53: #{conv_block.4} parent=47 // pred_check
        %p4897 = pneg %p188
      $region54: #{conv_block.4} parent=47 // pred_check_branch
        %4899 = sbr.rel (%p4897) target = $region56
      $region55: #{conv_block.4} parent=47 // pred_region
        %s4900 = sadd.s32 %s23, %s24
        %p4901 = scmp.lt.s32.totalorder %s4900, 1
        %s4902 = scalar_select %p4901, %s4900, 1
        %s4903 = smul.addr %s4902, 2
        %s4904 = scalar_lea.vmem %s5, %s4903
      $region56: #{conv_block.4} parent=47 // pred_fallthru
        _
    $region48: #{conv_block.4} parent=5 // pred_fallthru
      _
  $region6: #{conv_block.4} parent=0 // loop_footer
    %s16 = sadd.s32 1, %s12
  $region7: #{conv_block.4} parent=0 // loop_footer_branch
    %11 = sbr.rel target = $region3
  $region8: #{conv_block.4} parent=0 // loop_exit
    _

// kernel: conv_block.6
$region0: #{conv_block.6}
  #allocation0 [shape = 'u32[]', space=smem, size = 0x4, offset = 0x4, fixed_abs, tag = 'smem constant byte address 0x4 - core index']
  #allocation1 [shape = 'u32[144,128]{1,0:T(1,128)}', space=vmem, size = 0x12000, scoped, tag = 'internal scratch']
  %s0 = inlined_call_operand.vmem [shape: bf16[2,16,18,8], index: 0, kind: input, shape index: {}]
  %s1 = inlined_call_operand.vmem [shape: bf16[2,16,18,8], index: 1, kind: input, shape index: {}]
  %s2 = inlined_call_operand.vmem [shape: bf16[2,16,18,8], index: 2, kind: input, shape index: {}]
  %s3 = inlined_call_operand.vmem [shape: bf16[3,3,8,128], index: 3, kind: input, shape index: {}]
  %s4 = inlined_call_operand.vmem [shape: f32[512,128], index: 4, kind: output, shape index: {0}]
  %s5 = inlined_call_operand.vmem [shape: f32[2,2,128], index: 5, kind: output, shape index: {1}]
  %6 = xla_tuple %s4, %s5
  %s7 = sld [smem:[#allocation0]]
  $region57: #{conv_block.6} parent=0
    _
  %s9 = ssub.s32 1, %s7
  %s10 = scalar_select 0, %s9, %s7
  loop: start=0, step=1, limit=4
  $region2: #{conv_block.6} parent=0 // loop_pre_header
    _
  $region3: #{conv_block.6} parent=0 // loop_header
    %s12 = sphi 0, %s16
    %p13 = scmp.ge.s32.totalorder %s12, 4
    %s19 = sphi 0, %s31
    %s20 = sphi 0, %s27
    %s21 = sphi 0, %s19
    %s22 = sphi 0, %s20
    %s23 = sphi 0, %s21
    %s24 = sphi 0, %s22
    %s36 = sphi 0, %s38
    %s39 = sphi 0, %s36
    %s40 = sphi 0, %s39
    %s56 = sphi 0, %s40
    %s64 = sphi 0, %s66
    %s67 = sphi 0, %s64
    %s68 = sphi 0, %s67
    %s84 = sphi 0, %s68
    %s92 = sphi 0, %s94
    %s95 = sphi 0, %s92
    %s96 = sphi 0, %s95
    %s112 = sphi 0, %s96
    %s116 = sphi 0, %s116
    %s118 = sphi 0, %s116
    %s119 = sphi 0, %s118
    %s133 = sphi 0, %s119
    %s141 = sphi 0, %s143
    %s144 = sphi 0, %s141
    %s145 = sphi 0, %s144
    %s161 = sphi 0, %s145
    %s169 = sphi 0, %s171
    %s172 = sphi 0, %s169
    %s173 = sphi 0, %s172
    %s189 = sphi 0, %s173
  $region4: #{conv_block.6} parent=0 // loop_header_branch
    %15 = sbr.rel (%p13) target = $region8
  $region5: #{conv_block.6} parent=0 // loop_body
    %s17 = ssub.s32 %s12, 1
    %s18 = ssub.s32 %s12, 2
    %s25 = sadd.s32 1, %s20
    %p26 = scmp.ge.s32.totalorder %s25, 1
    %s27 = scalar_select %p26, 0, %s25
    %s28 = sadd.s32 1, %s19
    %s29 = scalar_select %p26, %s28, %s19
    %p30 = scmp.ge.s32.totalorder %s29, 2
    %s31 = scalar_select %p30, 0, %s29
    %s32 = ssub.s32 %s19, %s31
    %s33 = ssub.s32 %s20, %s27
    %s34 = sor.u32 %s32, %s33
    %p35 = scmp.eq.s32.totalorder %s34, 0
    %s37 = sadd.s32 %s36, 1
    %s38 = scalar_select %p35, %s36, %s37
    %p41 = pneg %p35
    %p42 = scmp.eq.s32.totalorder %s12, 1
    %p43 = por %p41, %p42
    %p44 = scmp.ne.s32.totalorder %s36, %s39
    %p45 = scmp.eq.s32.totalorder %s12, 0
    %p46 = por %p44, %p45
    %p47 = scmp.ne.s32.totalorder %s36, %s39
    %p48 = scmp.eq.s32.totalorder %s17, 1
    %p49 = por %p47, %p48
    %p50 = scmp.ne.s32.totalorder %s39, %s40
    %p51 = scmp.eq.s32.totalorder %s17, 0
    %p52 = por %p50, %p51
    %p53 = scmp.ne.s32.totalorder %s39, %s40
    %p54 = scmp.eq.s32.totalorder %s18, 1
    %p55 = por %p53, %p54
    %p57 = scmp.ne.s32.totalorder %s40, %s56
    %p58 = scmp.eq.s32.totalorder %s18, 0
    %p59 = por %p57, %p58
    %s60 = ssub.s32 %s19, %s31
    %s61 = ssub.s32 %s20, %s27
    %s62 = sor.u32 %s60, %s61
    %p63 = scmp.eq.s32.totalorder %s62, 0
    %s65 = sadd.s32 %s64, 1
    %s66 = scalar_select %p63, %s64, %s65
    %p69 = pneg %p63
    %p70 = scmp.eq.s32.totalorder %s12, 1
    %p71 = por %p69, %p70
    %p72 = scmp.ne.s32.totalorder %s64, %s67
    %p73 = scmp.eq.s32.totalorder %s12, 0
    %p74 = por %p72, %p73
    %p75 = scmp.ne.s32.totalorder %s64, %s67
    %p76 = scmp.eq.s32.totalorder %s17, 1
    %p77 = por %p75, %p76
    %p78 = scmp.ne.s32.totalorder %s67, %s68
    %p79 = scmp.eq.s32.totalorder %s17, 0
    %p80 = por %p78, %p79
    %p81 = scmp.ne.s32.totalorder %s67, %s68
    %p82 = scmp.eq.s32.totalorder %s18, 1
    %p83 = por %p81, %p82
    %p85 = scmp.ne.s32.totalorder %s68, %s84
    %p86 = scmp.eq.s32.totalorder %s18, 0
    %p87 = por %p85, %p86
    %s88 = ssub.s32 %s19, %s31
    %s89 = ssub.s32 %s20, %s27
    %s90 = sor.u32 %s88, %s89
    %p91 = scmp.eq.s32.totalorder %s90, 0
    %s93 = sadd.s32 %s92, 1
    %s94 = scalar_select %p91, %s92, %s93
    %p97 = pneg %p91
    %p98 = scmp.eq.s32.totalorder %s12, 1
    %p99 = por %p97, %p98
    %p100 = scmp.ne.s32.totalorder %s92, %s95
    %p101 = scmp.eq.s32.totalorder %s12, 0
    %p102 = por %p100, %p101
    %p103 = scmp.ne.s32.totalorder %s92, %s95
    %p104 = scmp.eq.s32.totalorder %s17, 1
    %p105 = por %p103, %p104
    %p106 = scmp.ne.s32.totalorder %s95, %s96
    %p107 = scmp.eq.s32.totalorder %s17, 0
    %p108 = por %p106, %p107
    %p109 = scmp.ne.s32.totalorder %s95, %s96
    %p110 = scmp.eq.s32.totalorder %s18, 1
    %p111 = por %p109, %p110
    %p113 = scmp.ne.s32.totalorder %s96, %s112
    %p114 = scmp.eq.s32.totalorder %s18, 0
    %p115 = por %p113, %p114
    %s117 = sadd.s32 %s116, 1
    %p120 = scmp.eq.s32.totalorder %s12, 1
    %p121 = scmp.ne.s32.totalorder %s116, %s118
    %p122 = scmp.eq.s32.totalorder %s12, 0
    %p123 = por %p121, %p122
    %p124 = scmp.ne.s32.totalorder %s116, %s118
    %p125 = scmp.eq.s32.totalorder %s17, 1
    %p126 = por %p124, %p125
    %p127 = scmp.ne.s32.totalorder %s118, %s119
    %p128 = scmp.eq.s32.totalorder %s17, 0
    %p129 = por %p127, %p128
    %p130 = scmp.ne.s32.totalorder %s118, %s119
    %p131 = scmp.eq.s32.totalorder %s18, 1
    %p132 = por %p130, %p131
    %p134 = scmp.ne.s32.totalorder %s119, %s133
    %p135 = scmp.eq.s32.totalorder %s18, 0
    %p136 = por %p134, %p135
    %s137 = sadd.s32 %s19, %s20
    %s138 = sadd.s32 %s31, %s27
    %s139 = ssub.s32 %s137, %s138
    %p140 = scmp.eq.s32.totalorder %s139, 0
    %s142 = sadd.s32 %s141, 1
    %s143 = scalar_select %p140, %s141, %s142
    %p146 = pneg %p140
    %p147 = scmp.eq.s32.totalorder %s12, 1
    %p148 = por %p146, %p147
    %p149 = scmp.ne.s32.totalorder %s141, %s144
    %p150 = scmp.eq.s32.totalorder %s12, 0
    %p151 = por %p149, %p150
    %p152 = scmp.ne.s32.totalorder %s141, %s144
    %p153 = scmp.eq.s32.totalorder %s17, 1
    %p154 = por %p152, %p153
    %p155 = scmp.ne.s32.totalorder %s144, %s145
    %p156 = scmp.eq.s32.totalorder %s17, 0
    %p157 = por %p155, %p156
    %p158 = scmp.ne.s32.totalorder %s144, %s145
    %p159 = scmp.eq.s32.totalorder %s18, 1
    %p160 = por %p158, %p159
    %p162 = scmp.ne.s32.totalorder %s145, %s161
    %p163 = scmp.eq.s32.totalorder %s18, 0
    %p164 = por %p162, %p163
    %s165 = sadd.s32 %s19, %s20
    %s166 = sadd.s32 %s31, %s27
    %s167 = ssub.s32 %s165, %s166
    %p168 = scmp.eq.s32.totalorder %s167, 0
    %s170 = sadd.s32 %s169, 1
    %s171 = scalar_select %p168, %s169, %s170
    %p174 = pneg %p168
    %p175 = scmp.eq.s32.totalorder %s12, 1
    %p176 = por %p174, %p175
    %p177 = scmp.ne.s32.totalorder %s169, %s172
    %p178 = scmp.eq.s32.totalorder %s12, 0
    %p179 = por %p177, %p178
    %p180 = scmp.ne.s32.totalorder %s169, %s172
    %p181 = scmp.eq.s32.totalorder %s17, 1
    %p182 = por %p180, %p181
    %p183 = scmp.ne.s32.totalorder %s172, %s173
    %p184 = scmp.eq.s32.totalorder %s17, 0
    %p185 = por %p183, %p184
    %p186 = scmp.ne.s32.totalorder %s172, %s173
    %p187 = scmp.eq.s32.totalorder %s18, 1
    %p188 = por %p186, %p187
    %p190 = scmp.ne.s32.totalorder %s173, %s189
    %p191 = scmp.eq.s32.totalorder %s18, 0
    %p192 = por %p190, %p191
    %p193 = scmp.le.s32.totalorder 1, %s12
    %p194 = scmp.lt.s32.totalorder %s12, 3
    %p195 = pnand %p193, %p194
    %p196 = pneg %p195
    // Predicated region
    $region9: #{conv_block.6} parent=5 // pred_check
      _
    $region10: #{conv_block.6} parent=5 // pred_check_branch
      %198 = sbr.rel (%p195) target = $region12
    $region11: #{conv_block.6} parent=5 // pred_region
      %s199 = ssub.s32 %s12, 1
      // Predicated region
      $region13: #{conv_block.6} parent=11 // pred_check
        %p200 = pneg %p129
      $region14: #{conv_block.6} parent=11 // pred_check_branch
        %202 = sbr.rel (%p200) target = $region16
      $region15: #{conv_block.6} parent=11 // pred_region
        _
      $region16: #{conv_block.6} parent=11 // pred_fallthru
        _
    $region12: #{conv_block.6} parent=5 // pred_fallthru
      _
    %p203 = scmp.lt.s32.totalorder %s12, 2
    // Predicated region
    $region17: #{conv_block.6} parent=5 // pred_check
      %p204 = pneg %p203
    $region18: #{conv_block.6} parent=5 // pred_check_branch
      %206 = sbr.rel (%p204) target = $region20
    $region19: #{conv_block.6} parent=5 // pred_region
      // Predicated region
      $region21: #{conv_block.6} parent=19 // pred_check
        %p207 = pneg %p46
      $region22: #{conv_block.6} parent=19 // pred_check_branch
        %209 = sbr.rel (%p207) target = $region24
      $region23: #{conv_block.6} parent=19 // pred_region
        %s210 = smul.u32 16, %s20
        %p211 = scmp.lt.s32.totalorder %s19, 1
        %s212 = scalar_select %p211, %s19, 1
        %p213 = scmp.lt.s32.totalorder %s210, 15
        %s214 = scalar_select %p213, %s210, 15
        %s215 = smul.addr %s214, 3
        %s216 = smul.addr %s212, 48
        %s217 = sadd.s32 %s215, %s216
        %s218 = smul.addr %s217, 4
        %s219 = scalar_lea.vmem %s0, %s218
        %s220 = smul.u32 16, %s20
      $region24: #{conv_block.6} parent=19 // pred_fallthru
        _
      // Predicated region
      $region25: #{conv_block.6} parent=19 // pred_check
        %p221 = pneg %p74
      $region26: #{conv_block.6} parent=19 // pred_check_branch
        %223 = sbr.rel (%p221) target = $region28
      $region27: #{conv_block.6} parent=19 // pred_region
        %s224 = smul.u32 16, %s20
        %p225 = scmp.lt.s32.totalorder %s19, 1
        %s226 = scalar_select %p225, %s19, 1
        %p227 = scmp.lt.s32.totalorder %s224, 15
        %s228 = scalar_select %p227, %s224, 15
        %s229 = smul.addr %s228, 3
        %s230 = smul.addr %s226, 48
        %s231 = sadd.s32 %s229, %s230
        %s232 = smul.addr %s231, 4
        %s233 = scalar_lea.vmem %s1, %s232
        %s234 = smul.u32 16, %s20
      $region28: #{conv_block.6} parent=19 // pred_fallthru
        _
      // Predicated region
      $region29: #{conv_block.6} parent=19 // pred_check
        %p235 = pneg %p102
      $region30: #{conv_block.6} parent=19 // pred_check_branch
        %237 = sbr.rel (%p235) target = $region32
      $region31: #{conv_block.6} parent=19 // pred_region
        %s238 = smul.u32 16, %s20
        %p239 = scmp.lt.s32.totalorder %s19, 1
        %s240 = scalar_select %p239, %s19, 1
        %p241 = scmp.lt.s32.totalorder %s238, 15
        %s242 = scalar_select %p241, %s238, 15
        %s243 = smul.addr %s242, 3
        %s244 = smul.addr %s240, 48
        %s245 = sadd.s32 %s243, %s244
        %s246 = smul.addr %s245, 4
        %s247 = scalar_lea.vmem %s2, %s246
        %s248 = smul.u32 16, %s20
      $region32: #{conv_block.6} parent=19 // pred_fallthru
        _
    $region20: #{conv_block.6} parent=5 // pred_fallthru
      _
    %p249 = scmp.le.s32.totalorder 1, %s12
    %p250 = scmp.lt.s32.totalorder %s12, 3
    %p251 = pnand %p249, %p250
    %p252 = pneg %p251
    // Predicated region
    $region33: #{conv_block.6} parent=5 // pred_check
      _
    $region34: #{conv_block.6} parent=5 // pred_check_branch
      %254 = sbr.rel (%p251) target = $region36
    $region35: #{conv_block.6} parent=5 // pred_region
      %s255 = ssub.s32 %s12, 1
      %s256 = smul.u32 16, %s22
      %p257 = scmp.lt.s32.totalorder %s21, 1
      %s258 = scalar_select %p257, %s21, 1
      %p259 = scmp.lt.s32.totalorder %s256, 15
      %s260 = scalar_select %p259, %s256, 15
      %s261 = smul.addr %s260, 3
      %s262 = smul.addr %s258, 48
      %s263 = sadd.s32 %s261, %s262
      %s264 = smul.addr %s263, 4
      %s265 = scalar_lea.vmem %s0, %s264
      %p266 = pneg %p52
      %p267 = pneg %p49
      %s268 = smul.u32 16, %s22
      %p269 = scmp.lt.s32.totalorder %s21, 1
      %s270 = scalar_select %p269, %s21, 1
      %p271 = scmp.lt.s32.totalorder %s268, 15
      %s272 = scalar_select %p271, %s268, 15
      %s273 = smul.addr %s272, 3
      %s274 = smul.addr %s270, 48
      %s275 = sadd.s32 %s273, %s274
      %s276 = smul.addr %s275, 4
      %s277 = scalar_lea.vmem %s1, %s276
      %p278 = pneg %p80
      %p279 = pneg %p77
      %s280 = smul.u32 16, %s22
      %p281 = scmp.lt.s32.totalorder %s21, 1
      %s282 = scalar_select %p281, %s21, 1
      %p283 = scmp.lt.s32.totalorder %s280, 15
      %s284 = scalar_select %p283, %s280, 15
      %s285 = smul.addr %s284, 3
      %s286 = smul.addr %s282, 48
      %s287 = sadd.s32 %s285, %s286
      %s288 = smul.addr %s287, 4
      %s289 = scalar_lea.vmem %s2, %s288
      %p290 = pneg %p108
      %p291 = pneg %p105
      %p292 = pneg %p129
      %p293 = pneg %p126
      %p294 = pneg %p157
      %p295 = pneg %p154
      %s296 = sadd.s32 %s21, %s22
      %s297 = smul.u32 32, %s296
      %p298 = scmp.lt.s32.totalorder %s297, 63
      %s299 = scalar_select %p298, %s297, 63
      %s300 = smul.addr %s299, 8
      %s301 = scalar_lea.vmem %s4, %s300
      %p302 = pneg %p185
      %p303 = pneg %p182
      %s304 = sadd.s32 %s21, %s22
      %p305 = scmp.lt.s32.totalorder %s304, 1
      %s306 = scalar_select %p305, %s304, 1
      %s307 = smul.addr %s306, 2
      %s308 = scalar_lea.vmem %s5, %s307
      %s309 = smul.u32 16, %s22
      %p310 = scmp.lt.s32.totalorder %s21, 1
      %s311 = scalar_select %p310, %s21, 1
      %p312 = scmp.lt.s32.totalorder %s309, 15
      %s313 = scalar_select %p312, %s309, 15
      %s314 = smul.addr %s313, 3
      %s315 = smul.addr %s311, 48
      %s316 = sadd.s32 %s314, %s315
      %s317 = smul.addr %s316, 4
      %s318 = scalar_lea.vmem %s0, %s317
      %s319 = smul.u32 16, %s22
      %s320 = smul.u32 16, %s22
      %p321 = scmp.lt.s32.totalorder %s21, 1
      %s322 = scalar_select %p321, %s21, 1
      %p323 = scmp.lt.s32.totalorder %s320, 15
      %s324 = scalar_select %p323, %s320, 15
      %s325 = smul.addr %s324, 3
      %s326 = smul.addr %s322, 48
      %s327 = sadd.s32 %s325, %s326
      %s328 = smul.addr %s327, 4
      %s329 = scalar_lea.vmem %s1, %s328
      %s330 = smul.u32 16, %s22
      %s331 = smul.u32 16, %s22
      %p332 = scmp.lt.s32.totalorder %s21, 1
      %s333 = scalar_select %p332, %s21, 1
      %p334 = scmp.lt.s32.totalorder %s331, 15
      %s335 = scalar_select %p334, %s331, 15
      %s336 = smul.addr %s335, 3
      %s337 = smul.addr %s333, 48
      %s338 = sadd.s32 %s336, %s337
      %s339 = smul.addr %s338, 4
      %s340 = scalar_lea.vmem %s2, %s339
      %s341 = smul.u32 16, %s22
      %s342 = sadd.s32 %s21, %s22
      %s343 = smul.u32 32, %s342
      %p344 = scmp.lt.s32.totalorder %s343, 63
      %s345 = scalar_select %p344, %s343, 63
      %s346 = smul.addr %s345, 8
      %s347 = scalar_lea.vmem %s4, %s346
      %s348 = sadd.s32 %s21, %s22
      %s349 = smul.u32 32, %s348
      %s350 = sadd.s32 %s21, %s22
      %p351 = scmp.lt.s32.totalorder %s350, 1
      %s352 = scalar_select %p351, %s350, 1
      %s353 = smul.addr %s352, 2
      %s354 = scalar_lea.vmem %s5, %s353
      %s355 = sadd.s32 %s21, %s22
      %v357 = vld [vmem:[%s318] sm:$0xf]
      %v358 = vld [vmem:[%s318 + $0x4] sm:$0xf]
      %v359 = vld [vmem:[%s318 + $0x8] sm:$0x1]
      %v360 = vld [vmem:[%s318 + $0xc] sm:$0xf]
      %v361 = vld [vmem:[%s318 + $0x10] sm:$0xf]
      %v362 = vld [vmem:[%s318 + $0x14] sm:$0x1]
      %v363 = vld [vmem:[%s318 + $0x18] sm:$0xf]
      %v364 = vld [vmem:[%s318 + $0x1c] sm:$0xf]
      %v365 = vld [vmem:[%s318 + $0x20] sm:$0x1]
      %v366 = vld [vmem:[%s318 + $0x24] sm:$0xf]
      %v367 = vld [vmem:[%s318 + $0x28] sm:$0xf]
      %v368 = vld [vmem:[%s318 + $0x2c] sm:$0x1]
      %v369 = vld [vmem:[%s318 + $0x30] sm:$0xf]
      %v370 = vld [vmem:[%s318 + $0x34] sm:$0xf]
      %v371 = vld [vmem:[%s318 + $0x38] sm:$0x1]
      %v372 = vld [vmem:[%s318 + $0x3c] sm:$0xf]
      %v373 = vld [vmem:[%s318 + $0x40] sm:$0xf]
      %v374 = vld [vmem:[%s318 + $0x44] sm:$0x1]
      %v375 = vld [vmem:[%s318 + $0x48] sm:$0xf]
      %v376 = vld [vmem:[%s318 + $0x4c] sm:$0xf]
      %v377 = vld [vmem:[%s318 + $0x50] sm:$0x1]
      %v378 = vld [vmem:[%s318 + $0x54] sm:$0xf]
      %v379 = vld [vmem:[%s318 + $0x58] sm:$0xf]
      %v380 = vld [vmem:[%s318 + $0x5c] sm:$0x1]
      %v381 = vld [vmem:[%s318 + $0x60] sm:$0xf]
      %v382 = vld [vmem:[%s318 + $0x64] sm:$0xf]
      %v383 = vld [vmem:[%s318 + $0x68] sm:$0x1]
      %v384 = vld [vmem:[%s318 + $0x6c] sm:$0xf]
      %v385 = vld [vmem:[%s318 + $0x70] sm:$0xf]
      %v386 = vld [vmem:[%s318 + $0x74] sm:$0x1]
      %v387 = vld [vmem:[%s318 + $0x78] sm:$0xf]
      %v388 = vld [vmem:[%s318 + $0x7c] sm:$0xf]
      %v389 = vld [vmem:[%s318 + $0x80] sm:$0x1]
      %v390 = vld [vmem:[%s318 + $0x84] sm:$0xf]
      %v391 = vld [vmem:[%s318 + $0x88] sm:$0xf]
      %v392 = vld [vmem:[%s318 + $0x8c] sm:$0x1]
      %v393 = vld [vmem:[%s318 + $0x90] sm:$0xf]
      %v394 = vld [vmem:[%s318 + $0x94] sm:$0xf]
      %v395 = vld [vmem:[%s318 + $0x98] sm:$0x1]
      %v396 = vld [vmem:[%s318 + $0x9c] sm:$0xf]
      %v397 = vld [vmem:[%s318 + $0xa0] sm:$0xf]
      %v398 = vld [vmem:[%s318 + $0xa4] sm:$0x1]
      %v399 = vld [vmem:[%s318 + $0xa8] sm:$0xf]
      %v400 = vld [vmem:[%s318 + $0xac] sm:$0xf]
      %v401 = vld [vmem:[%s318 + $0xb0] sm:$0x1]
      %v402 = vld [vmem:[%s318 + $0xb4] sm:$0xf]
      %v403 = vld [vmem:[%s318 + $0xb8] sm:$0xf]
      %v404 = vld [vmem:[%s318 + $0xbc] sm:$0x1]
      %v405 = vld [vmem:[%s3] sm:$0xf]
      %vm406 = vsmask.f32 3328
      %vm407 = vsmask.f32 7440
      %vm408 = vmor %vm406, %vm407
      %v410 = vshrl.u32 %v357, 16
      %v412 = vrot.slane %v410, 4
      %v413 = vshll.u32 %v357, 16
      %v415 = vrot.slane %v413, 5
      %v416 = vor.u32 %v412, %v415
      %v417 = vrot.slane %v416, 4
      %v419 = vshll.u32 %v358, 16
      %v421 = vrot.slane %v419, 5
      %v422 = vsel %vm408, %v417, %v421
      %v423 = vshrl.u32 %v358, 16
      %v425 = vrot.slane %v423, 4
      %v426 = vor.u32 %v425, %v421
      %v427 = vrot.slane %v426, 4
      %v429 = vshll.u32 %v359, 16
      %v431 = vrot.slane %v429, 5
      %v432 = vsel %vm408, %v427, %v431
      %v434 = vshrl.u32 %v360, 16
      %v436 = vrot.slane %v434, 4
      %v437 = vshll.u32 %v360, 16
      %v439 = vrot.slane %v437, 5
      %v440 = vor.u32 %v436, %v439
      %v441 = vrot.slane %v440, 4
      %v443 = vshll.u32 %v361, 16
      %v445 = vrot.slane %v443, 5
      %v446 = vsel %vm408, %v441, %v445
      %v447 = vshrl.u32 %v361, 16
      %v449 = vrot.slane %v447, 4
      %v450 = vor.u32 %v449, %v445
      %v451 = vrot.slane %v450, 4
      %v453 = vshll.u32 %v362, 16
      %v455 = vrot.slane %v453, 5
      %v456 = vsel %vm408, %v451, %v455
      %v458 = vshrl.u32 %v363, 16
      %v460 = vrot.slane %v458, 4
      %v461 = vshll.u32 %v363, 16
      %v463 = vrot.slane %v461, 5
      %v464 = vor.u32 %v460, %v463
      %v465 = vrot.slane %v464, 4
      %v467 = vshll.u32 %v364, 16
      %v469 = vrot.slane %v467, 5
      %v470 = vsel %vm408, %v465, %v469
      %v471 = vshrl.u32 %v364, 16
      %v473 = vrot.slane %v471, 4
      %v474 = vor.u32 %v473, %v469
      %v475 = vrot.slane %v474, 4
      %v477 = vshll.u32 %v365, 16
      %v479 = vrot.slane %v477, 5
      %v480 = vsel %vm408, %v475, %v479
      %v482 = vshrl.u32 %v366, 16
      %v484 = vrot.slane %v482, 4
      %v485 = vshll.u32 %v366, 16
      %v487 = vrot.slane %v485, 5
      %v488 = vor.u32 %v484, %v487
      %v489 = vrot.slane %v488, 4
      %v491 = vshll.u32 %v367, 16
      %v493 = vrot.slane %v491, 5
      %v494 = vsel %vm408, %v489, %v493
      %v495 = vshrl.u32 %v367, 16
      %v497 = vrot.slane %v495, 4
      %v498 = vor.u32 %v497, %v493
      %v499 = vrot.slane %v498, 4
      %v501 = vshll.u32 %v368, 16
      %v503 = vrot.slane %v501, 5
      %v504 = vsel %vm408, %v499, %v503
      %v506 = vshrl.u32 %v369, 16
      %v508 = vrot.slane %v506, 4
      %v509 = vshll.u32 %v369, 16
      %v511 = vrot.slane %v509, 5
      %v512 = vor.u32 %v508, %v511
      %v513 = vrot.slane %v512, 4
      %v515 = vshll.u32 %v370, 16
      %v517 = vrot.slane %v515, 5
      %v518 = vsel %vm408, %v513, %v517
      %v519 = vshrl.u32 %v370, 16
      %v521 = vrot.slane %v519, 4
      %v522 = vor.u32 %v521, %v517
      %v523 = vrot.slane %v522, 4
      %v525 = vshll.u32 %v371, 16
      %v527 = vrot.slane %v525, 5
      %v528 = vsel %vm408, %v523, %v527
      %v530 = vshrl.u32 %v372, 16
      %v532 = vrot.slane %v530, 4
      %v533 = vshll.u32 %v372, 16
      %v535 = vrot.slane %v533, 5
      %v536 = vor.u32 %v532, %v535
      %v537 = vrot.slane %v536, 4
      %v539 = vshll.u32 %v373, 16
      %v541 = vrot.slane %v539, 5
      %v542 = vsel %vm408, %v537, %v541
      %v543 = vshrl.u32 %v373, 16
      %v545 = vrot.slane %v543, 4
      %v546 = vor.u32 %v545, %v541
      %v547 = vrot.slane %v546, 4
      %v549 = vshll.u32 %v374, 16
      %v551 = vrot.slane %v549, 5
      %v552 = vsel %vm408, %v547, %v551
      %v554 = vshrl.u32 %v375, 16
      %v556 = vrot.slane %v554, 4
      %v557 = vshll.u32 %v375, 16
      %v559 = vrot.slane %v557, 5
      %v560 = vor.u32 %v556, %v559
      %v561 = vrot.slane %v560, 4
      %v563 = vshll.u32 %v376, 16
      %v565 = vrot.slane %v563, 5
      %v566 = vsel %vm408, %v561, %v565
      %v567 = vshrl.u32 %v376, 16
      %v569 = vrot.slane %v567, 4
      %v570 = vor.u32 %v569, %v565
      %v571 = vrot.slane %v570, 4
      %v573 = vshll.u32 %v377, 16
      %v575 = vrot.slane %v573, 5
      %v576 = vsel %vm408, %v571, %v575
      %v578 = vshrl.u32 %v378, 16
      %v580 = vrot.slane %v578, 4
      %v581 = vshll.u32 %v378, 16
      %v583 = vrot.slane %v581, 5
      %v584 = vor.u32 %v580, %v583
      %v585 = vrot.slane %v584, 4
      %v587 = vshll.u32 %v379, 16
      %v589 = vrot.slane %v587, 5
      %v590 = vsel %vm408, %v585, %v589
      %v591 = vshrl.u32 %v379, 16
      %v593 = vrot.slane %v591, 4
      %v594 = vor.u32 %v593, %v589
      %v595 = vrot.slane %v594, 4
      %v597 = vshll.u32 %v380, 16
      %v599 = vrot.slane %v597, 5
      %v600 = vsel %vm408, %v595, %v599
      %v602 = vshrl.u32 %v381, 16
      %v604 = vrot.slane %v602, 4
      %v605 = vshll.u32 %v381, 16
      %v607 = vrot.slane %v605, 5
      %v608 = vor.u32 %v604, %v607
      %v609 = vrot.slane %v608, 4
      %v611 = vshll.u32 %v382, 16
      %v613 = vrot.slane %v611, 5
      %v614 = vsel %vm408, %v609, %v613
      %v615 = vshrl.u32 %v382, 16
      %v617 = vrot.slane %v615, 4
      %v618 = vor.u32 %v617, %v613
      %v619 = vrot.slane %v618, 4
      %v621 = vshll.u32 %v383, 16
      %v623 = vrot.slane %v621, 5
      %v624 = vsel %vm408, %v619, %v623
      %v626 = vshrl.u32 %v384, 16
      %v628 = vrot.slane %v626, 4
      %v629 = vshll.u32 %v384, 16
      %v631 = vrot.slane %v629, 5
      %v632 = vor.u32 %v628, %v631
      %v633 = vrot.slane %v632, 4
      %v635 = vshll.u32 %v385, 16
      %v637 = vrot.slane %v635, 5
      %v638 = vsel %vm408, %v633, %v637
      %v639 = vshrl.u32 %v385, 16
      %v641 = vrot.slane %v639, 4
      %v642 = vor.u32 %v641, %v637
      %v643 = vrot.slane %v642, 4
      %v645 = vshll.u32 %v386, 16
      %v647 = vrot.slane %v645, 5
      %v648 = vsel %vm408, %v643, %v647
      %v650 = vshrl.u32 %v387, 16
      %v652 = vrot.slane %v650, 4
      %v653 = vshll.u32 %v387, 16
      %v655 = vrot.slane %v653, 5
      %v656 = vor.u32 %v652, %v655
      %v657 = vrot.slane %v656, 4
      %v659 = vshll.u32 %v388, 16
      %v661 = vrot.slane %v659, 5
      %v662 = vsel %vm408, %v657, %v661
      %v663 = vshrl.u32 %v388, 16
      %v665 = vrot.slane %v663, 4
      %v666 = vor.u32 %v665, %v661
      %v667 = vrot.slane %v666, 4
      %v669 = vshll.u32 %v389, 16
      %v671 = vrot.slane %v669, 5
      %v672 = vsel %vm408, %v667, %v671
      %v674 = vshrl.u32 %v390, 16
      %v676 = vrot.slane %v674, 4
      %v677 = vshll.u32 %v390, 16
      %v679 = vrot.slane %v677, 5
      %v680 = vor.u32 %v676, %v679
      %v681 = vrot.slane %v680, 4
      %v683 = vshll.u32 %v391, 16
      %v685 = vrot.slane %v683, 5
      %v686 = vsel %vm408, %v681, %v685
      %v687 = vshrl.u32 %v391, 16
      %v689 = vrot.slane %v687, 4
      %v690 = vor.u32 %v689, %v685
      %v691 = vrot.slane %v690, 4
      %v693 = vshll.u32 %v392, 16
      %v695 = vrot.slane %v693, 5
      %v696 = vsel %vm408, %v691, %v695
      %v698 = vshrl.u32 %v393, 16
      %v700 = vrot.slane %v698, 4
      %v701 = vshll.u32 %v393, 16
      %v703 = vrot.slane %v701, 5
      %v704 = vor.u32 %v700, %v703
      %v705 = vrot.slane %v704, 4
      %v707 = vshll.u32 %v394, 16
      %v709 = vrot.slane %v707, 5
      %v710 = vsel %vm408, %v705, %v709
      %v711 = vshrl.u32 %v394, 16
      %v713 = vrot.slane %v711, 4
      %v714 = vor.u32 %v713, %v709
      %v715 = vrot.slane %v714, 4
      %v717 = vshll.u32 %v395, 16
      %v719 = vrot.slane %v717, 5
      %v720 = vsel %vm408, %v715, %v719
      %v722 = vshrl.u32 %v396, 16
      %v724 = vrot.slane %v722, 4
      %v725 = vshll.u32 %v396, 16
      %v727 = vrot.slane %v725, 5
      %v728 = vor.u32 %v724, %v727
      %v729 = vrot.slane %v728, 4
      %v731 = vshll.u32 %v397, 16
      %v733 = vrot.slane %v731, 5
      %v734 = vsel %vm408, %v729, %v733
      %v735 = vshrl.u32 %v397, 16
      %v737 = vrot.slane %v735, 4
      %v738 = vor.u32 %v737, %v733
      %v739 = vrot.slane %v738, 4
      %v741 = vshll.u32 %v398, 16
      %v743 = vrot.slane %v741, 5
      %v744 = vsel %vm408, %v739, %v743
      %v746 = vshrl.u32 %v399, 16
      %v748 = vrot.slane %v746, 4
      %v749 = vshll.u32 %v399, 16
      %v751 = vrot.slane %v749, 5
      %v752 = vor.u32 %v748, %v751
      %v753 = vrot.slane %v752, 4
      %v755 = vshll.u32 %v400, 16
      %v757 = vrot.slane %v755, 5
      %v758 = vsel %vm408, %v753, %v757
      %v759 = vshrl.u32 %v400, 16
      %v761 = vrot.slane %v759, 4
      %v762 = vor.u32 %v761, %v757
      %v763 = vrot.slane %v762, 4
      %v765 = vshll.u32 %v401, 16
      %v767 = vrot.slane %v765, 5
      %v768 = vsel %vm408, %v763, %v767
      %v770 = vshrl.u32 %v402, 16
      %v772 = vrot.slane %v770, 4
      %v773 = vshll.u32 %v402, 16
      %v775 = vrot.slane %v773, 5
      %v776 = vor.u32 %v772, %v775
      %v777 = vrot.slane %v776, 4
      %v779 = vshll.u32 %v403, 16
      %v781 = vrot.slane %v779, 5
      %v782 = vsel %vm408, %v777, %v781
      %v783 = vshrl.u32 %v403, 16
      %v785 = vrot.slane %v783, 4
      %v786 = vor.u32 %v785, %v781
      %v787 = vrot.slane %v786, 4
      %v789 = vshll.u32 %v404, 16
      %v791 = vrot.slane %v789, 5
      %v792 = vsel %vm408, %v787, %v791
      %s793 = scalar_lea.vmem %s3, 4
      %v794 = vld [vmem:[%s793] sm:$0xf]
      %v795 = vunpack.c.l.b16 %v422
      %v796 = vunpack.c.l.b16 %v432
      %v797 = vunpack.c.l.b16 %v446
      %v798 = vunpack.c.l.b16 %v456
      %v799 = vunpack.c.l.b16 %v470
      %v800 = vunpack.c.l.b16 %v480
      %v801 = vunpack.c.l.b16 %v494
      %v802 = vunpack.c.l.b16 %v504
      %v803 = vunpack.c.l.b16 %v518
      %v804 = vunpack.c.l.b16 %v528
      %v805 = vunpack.c.l.b16 %v542
      %v806 = vunpack.c.l.b16 %v552
      %v807 = vunpack.c.l.b16 %v566
      %v808 = vunpack.c.l.b16 %v576
      %v809 = vunpack.c.l.b16 %v590
      %v810 = vunpack.c.l.b16 %v600
      %v811 = vunpack.c.l.b16 %v614
      %v812 = vunpack.c.l.b16 %v624
      %v813 = vunpack.c.l.b16 %v638
      %v814 = vunpack.c.l.b16 %v648
      %v815 = vunpack.c.l.b16 %v662
      %v816 = vunpack.c.l.b16 %v672
      %v817 = vunpack.c.l.b16 %v686
      %v818 = vunpack.c.l.b16 %v696
      %v819 = vunpack.c.l.b16 %v710
      %v820 = vunpack.c.l.b16 %v720
      %v821 = vunpack.c.l.b16 %v734
      %v822 = vunpack.c.l.b16 %v744
      %v823 = vunpack.c.l.b16 %v758
      %v824 = vunpack.c.l.b16 %v768
      %v825 = vunpack.c.l.b16 %v782
      %v826 = vunpack.c.l.b16 %v792
      %v827 = vpack.c.b16 %v796, %v795
      %v828 = vpack.c.b16 %v798, %v797
      %v829 = vpack.c.b16 %v800, %v799
      %v830 = vpack.c.b16 %v802, %v801
      %v831 = vpack.c.b16 %v804, %v803
      %v832 = vpack.c.b16 %v806, %v805
      %v833 = vpack.c.b16 %v808, %v807
      %v834 = vpack.c.b16 %v810, %v809
      %v835 = vpack.c.b16 %v812, %v811
      %v836 = vpack.c.b16 %v814, %v813
      %v837 = vpack.c.b16 %v816, %v815
      %v838 = vpack.c.b16 %v818, %v817
      %v839 = vpack.c.b16 %v820, %v819
      %v840 = vpack.c.b16 %v822, %v821
      %v841 = vpack.c.b16 %v824, %v823
      %v842 = vpack.c.b16 %v826, %v825
      %vm843 = vcmask 64512
      %v845 = vsel %vm843, %v827, 0
      %v848 = vsel %vm843, %v828, 0
      %v851 = vsel %vm843, %v829, 0
      %v854 = vsel %vm843, %v830, 0
      %v857 = vsel %vm843, %v831, 0
      %v860 = vsel %vm843, %v832, 0
      %v863 = vsel %vm843, %v833, 0
      %v866 = vsel %vm843, %v834, 0
      %v869 = vsel %vm843, %v835, 0
      %v872 = vsel %vm843, %v836, 0
      %v875 = vsel %vm843, %v837, 0
      %v878 = vsel %vm843, %v838, 0
      %v881 = vsel %vm843, %v839, 0
      %v884 = vsel %vm843, %v840, 0
      %v887 = vsel %vm843, %v841, 0
      %v890 = vsel %vm843, %v842, 0
      %vm892 = vcmask 1043456
      %v894 = vsel %vm892, %v794, 0
      %896 = vmatprep.subr.bf16.mxu0 0
      %897 = vmatpush1.bf16.msra.mxu0 %v894
      %898 = vmatprep.subr.bf16.mxu0 0
      %899 = vmatpush1.bf16.msra.mxu0 0
      %900 = vmatprep.subr.bf16.mxu0 0
      %901 = vmatpush1.bf16.msra.mxu0 0
      %902 = vmatprep.subr.bf16.mxu0 0
      %903 = vmatpush1.bf16.msra.mxu0 0
      %904 = vmatprep.subr.bf16.mxu0 0
      %905 = vmatpush1.bf16.msra.mxu0 0
      %906 = vmatprep.subr.bf16.mxu0 0
      %907 = vmatpush1.bf16.msra.mxu0 0
      %908 = vmatprep.subr.bf16.mxu0 0
      %909 = vmatpush1.bf16.msra.mxu0 0
      %910 = vmatprep.subr.bf16.mxu0 0
      %911 = vmatpush1.bf16.msra.mxu0 0
      %912 = vmatprep.subr.bf16.mxu0 0
      %913 = vmatpush1.bf16.msra.mxu0 0
      %914 = vmatprep.subr.bf16.mxu0 0
      %915 = vmatpush1.bf16.msra.mxu0 0
      %916 = vmatprep.subr.bf16.mxu0 0
      %917 = vmatpush1.bf16.msra.mxu0 0
      %918 = vmatprep.subr.bf16.mxu0 0
      %919 = vmatpush1.bf16.msra.mxu0 0
      %920 = vmatprep.subr.bf16.mxu0 0
      %921 = vmatpush1.bf16.msra.mxu0 0
      %922 = vmatprep.subr.bf16.mxu0 0
      %923 = vmatpush1.bf16.msra.mxu0 0
      %924 = vmatprep.subr.bf16.mxu0 0
      %925 = vmatpush1.bf16.msra.mxu0 0
      %926 = vmatprep.subr.bf16.mxu0 0
      %927 = vmatpush1.bf16.msra.mxu0 0
      %928 = vmatprep.mubr.bf16.mxu0 0
      %929 = vmatmul.mubr.bf16.gmra.mrb[0].mxu0 %v845
      %v930 = vpop.f32.mrb[0].mxu0
      %v931 = vadd.f32 0.0, %v930
      %v932 = vpop.f32.mrb[0].mxu0
      %v933 = vpop.f32.mrb[0].mxu0
      %v934 = vadd.f32 0.0, %v933
      %v935 = vpop.f32.mrb[0].mxu0
      %936 = vmatprep.mubr.bf16.mxu0 0
      %937 = vmatmul.mubr.bf16.gmra.mrb[0].mxu0 %v848
      %v938 = vpop.f32.mrb[0].mxu0
      %v939 = vadd.f32 0.0, %v938
      %v940 = vpop.f32.mrb[0].mxu0
      %v941 = vpop.f32.mrb[0].mxu0
      %v942 = vadd.f32 0.0, %v941
      %v943 = vpop.f32.mrb[0].mxu0
      %944 = vmatprep.mubr.bf16.mxu0 0
      %945 = vmatmul.mubr.bf16.gmra.mrb[0].mxu0 %v851
      %v946 = vpop.f32.mrb[0].mxu0
      %v947 = vadd.f32 0.0, %v946
      %v948 = vpop.f32.mrb[0].mxu0
      %v949 = vpop.f32.mrb[0].mxu0
      %v950 = vadd.f32 0.0, %v949
      %v951 = vpop.f32.mrb[0].mxu0
      %952 = vmatprep.mubr.bf16.mxu0 0
      %953 = vmatmul.mubr.bf16.gmra.mrb[0].mxu0 %v854
      %v954 = vpop.f32.mrb[0].mxu0
      %v955 = vadd.f32 0.0, %v954
      %v956 = vpop.f32.mrb[0].mxu0
      %v957 = vpop.f32.mrb[0].mxu0
      %v958 = vadd.f32 0.0, %v957
      %v959 = vpop.f32.mrb[0].mxu0
      %960 = vmatprep.mubr.bf16.mxu0 0
      %961 = vmatmul.mubr.bf16.gmra.mrb[0].mxu0 %v857
      %v962 = vpop.f32.mrb[0].mxu0
      %v963 = vadd.f32 0.0, %v962
      %v964 = vpop.f32.mrb[0].mxu0
      %v965 = vpop.f32.mrb[0].mxu0
      %v966 = vadd.f32 0.0, %v965
      %v967 = vpop.f32.mrb[0].mxu0
      %968 = vmatprep.mubr.bf16.mxu0 0
      %969 = vmatmul.mubr.bf16.gmra.mrb[0].mxu0 %v860
      %v970 = vpop.f32.mrb[0].mxu0
      %v971 = vadd.f32 0.0, %v970
      %v972 = vpop.f32.mrb[0].mxu0
      %v973 = vpop.f32.mrb[0].mxu0
      %v974 = vadd.f32 0.0, %v973
      %v975 = vpop.f32.mrb[0].mxu0
      %976 = vmatprep.mubr.bf16.mxu0 0
      %977 = vmatmul.mubr.bf16.gmra.mrb[0].mxu0 %v863
      %v978 = vpop.f32.mrb[0].mxu0
      %v979 = vadd.f32 0.0, %v978
      %v980 = vpop.f32.mrb[0].mxu0
      %v981 = vpop.f32.mrb[0].mxu0
      %v982 = vadd.f32 0.0, %v981
      %v983 = vpop.f32.mrb[0].mxu0
      %984 = vmatprep.mubr.bf16.mxu0 0
      %985 = vmatmul.mubr.bf16.gmra.mrb[0].mxu0 %v866
      %v986 = vpop.f32.mrb[0].mxu0
      %v987 = vadd.f32 0.0, %v986
      %v988 = vpop.f32.mrb[0].mxu0
      %v989 = vpop.f32.mrb[0].mxu0
      %v990 = vadd.f32 0.0, %v989
      %v991 = vpop.f32.mrb[0].mxu0
      %992 = vmatprep.mubr.bf16.mxu0 0
      %993 = vmatmul.mubr.bf16.gmra.mrb[0].mxu0 %v869
      %v994 = vpop.f32.mrb[0].mxu0
      %v995 = vadd.f32 0.0, %v994
      %v996 = vpop.f32.mrb[0].mxu0
      %v997 = vpop.f32.mrb[0].mxu0
      %v998 = vadd.f32 0.0, %v997
      %v999 = vpop.f32.mrb[0].mxu0
      %1000 = vmatprep.mubr.bf16.mxu0 0
      %1001 = vmatmul.mubr.bf16.gmra.mrb[0].mxu0 %v872
      %v1002 = vpop.f32.mrb[0].mxu0
      %v1003 = vadd.f32 0.0, %v1002
      %v1004 = vpop.f32.mrb[0].mxu0
      %v1005 = vpop.f32.mrb[0].mxu0
      %v1006 = vadd.f32 0.0, %v1005
      %v1007 = vpop.f32.mrb[0].mxu0
      %1008 = vmatprep.mubr.bf16.mxu0 0
      %1009 = vmatmul.mubr.bf16.gmra.mrb[0].mxu0 %v875
      %v1010 = vpop.f32.mrb[0].mxu0
      %v1011 = vadd.f32 0.0, %v1010
      %v1012 = vpop.f32.mrb[0].mxu0
      %v1013 = vpop.f32.mrb[0].mxu0
      %v1014 = vadd.f32 0.0, %v1013
      %v1015 = vpop.f32.mrb[0].mxu0
      %1016 = vmatprep.mubr.bf16.mxu0 0
      %1017 = vmatmul.mubr.bf16.gmra.mrb[0].mxu0 %v878
      %v1018 = vpop.f32.mrb[0].mxu0
      %v1019 = vadd.f32 0.0, %v1018
      %v1020 = vpop.f32.mrb[0].mxu0
      %v1021 = vpop.f32.mrb[0].mxu0
      %v1022 = vadd.f32 0.0, %v1021
      %v1023 = vpop.f32.mrb[0].mxu0
      %1024 = vmatprep.mubr.bf16.mxu0 0
      %1025 = vmatmul.mubr.bf16.gmra.mrb[0].mxu0 %v881
      %v1026 = vpop.f32.mrb[0].mxu0
      %v1027 = vadd.f32 0.0, %v1026
      %v1028 = vpop.f32.mrb[0].mxu0
      %v1029 = vpop.f32.mrb[0].mxu0
      %v1030 = vadd.f32 0.0, %v1029
      %v1031 = vpop.f32.mrb[0].mxu0
      %1032 = vmatprep.mubr.bf16.mxu0 0
      %1033 = vmatmul.mubr.bf16.gmra.mrb[0].mxu0 %v884
      %v1034 = vpop.f32.mrb[0].mxu0
      %v1035 = vadd.f32 0.0, %v1034
      %v1036 = vpop.f32.mrb[0].mxu0
      %v1037 = vpop.f32.mrb[0].mxu0
      %v1038 = vadd.f32 0.0, %v1037
      %v1039 = vpop.f32.mrb[0].mxu0
      %1040 = vmatprep.mubr.bf16.mxu0 0
      %1041 = vmatmul.mubr.bf16.gmra.mrb[0].mxu0 %v887
      %v1042 = vpop.f32.mrb[0].mxu0
      %v1043 = vadd.f32 0.0, %v1042
      %v1044 = vpop.f32.mrb[0].mxu0
      %v1045 = vpop.f32.mrb[0].mxu0
      %v1046 = vadd.f32 0.0, %v1045
      %v1047 = vpop.f32.mrb[0].mxu0
      %1048 = vmatprep.mubr.bf16.mxu0 0
      %1049 = vmatmul.mubr.bf16.gmra.mrb[0].mxu0 %v890
      %v1050 = vpop.f32.mrb[0].mxu0
      %v1051 = vadd.f32 0.0, %v1050
      %v1052 = vpop.f32.mrb[0].mxu0
      %v1053 = vpop.f32.mrb[0].mxu0
      %v1054 = vadd.f32 0.0, %v1053
      %v1055 = vpop.f32.mrb[0].mxu0
      %1056 = vdwg.mxu0
      %v1089 = vunpack.c.l.b16 %v357
      %v1090 = vunpack.c.l.b16 %v358
      %v1091 = vunpack.c.l.b16 %v360
      %v1092 = vunpack.c.l.b16 %v361
      %v1093 = vunpack.c.l.b16 %v363
      %v1094 = vunpack.c.l.b16 %v364
      %v1095 = vunpack.c.l.b16 %v366
      %v1096 = vunpack.c.l.b16 %v367
      %v1097 = vunpack.c.l.b16 %v369
      %v1098 = vunpack.c.l.b16 %v370
      %v1099 = vunpack.c.l.b16 %v372
      %v1100 = vunpack.c.l.b16 %v373
      %v1101 = vunpack.c.l.b16 %v375
      %v1102 = vunpack.c.l.b16 %v376
      %v1103 = vunpack.c.l.b16 %v378
      %v1104 = vunpack.c.l.b16 %v379
      %v1105 = vunpack.c.l.b16 %v381
      %v1106 = vunpack.c.l.b16 %v382
      %v1107 = vunpack.c.l.b16 %v384
      %v1108 = vunpack.c.l.b16 %v385
      %v1109 = vunpack.c.l.b16 %v387
      %v1110 = vunpack.c.l.b16 %v388
      %v1111 = vunpack.c.l.b16 %v390
      %v1112 = vunpack.c.l.b16 %v391
      %v1113 = vunpack.c.l.b16 %v393
      %v1114 = vunpack.c.l.b16 %v394
      %v1115 = vunpack.c.l.b16 %v396
      %v1116 = vunpack.c.l.b16 %v397
      %v1117 = vunpack.c.l.b16 %v399
      %v1118 = vunpack.c.l.b16 %v400
      %v1119 = vunpack.c.l.b16 %v402
      %v1120 = vunpack.c.l.b16 %v403
      %v1121 = vpack.c.b16 %v1090, %v1089
      %v1122 = vpack.c.b16 %v1092, %v1091
      %v1123 = vpack.c.b16 %v1094, %v1093
      %v1124 = vpack.c.b16 %v1096, %v1095
      %v1125 = vpack.c.b16 %v1098, %v1097
      %v1126 = vpack.c.b16 %v1100, %v1099
      %v1127 = vpack.c.b16 %v1102, %v1101
      %v1128 = vpack.c.b16 %v1104, %v1103
      %v1129 = vpack.c.b16 %v1106, %v1105
      %v1130 = vpack.c.b16 %v1108, %v1107
      %v1131 = vpack.c.b16 %v1110, %v1109
      %v1132 = vpack.c.b16 %v1112, %v1111
      %v1133 = vpack.c.b16 %v1114, %v1113
      %v1134 = vpack.c.b16 %v1116, %v1115
      %v1135 = vpack.c.b16 %v1118, %v1117
      %v1136 = vpack.c.b16 %v1120, %v1119
      %v1138 = vsel %vm843, %v1121, 0
      %v1141 = vsel %vm843, %v1122, 0
      %v1144 = vsel %vm843, %v1123, 0
      %v1147 = vsel %vm843, %v1124, 0
      %v1150 = vsel %vm843, %v1125, 0
      %v1153 = vsel %vm843, %v1126, 0
      %v1156 = vsel %vm843, %v1127, 0
      %v1159 = vsel %vm843, %v1128, 0
      %v1162 = vsel %vm843, %v1129, 0
      %v1165 = vsel %vm843, %v1130, 0
      %v1168 = vsel %vm843, %v1131, 0
      %v1171 = vsel %vm843, %v1132, 0
      %v1174 = vsel %vm843, %v1133, 0
      %v1177 = vsel %vm843, %v1134, 0
      %v1180 = vsel %vm843, %v1135, 0
      %v1183 = vsel %vm843, %v1136, 0
      %v1186 = vsel %vm892, %v405, 0
      %1188 = vmatprep.subr.bf16.mxu0 0
      %1189 = vmatpush1.bf16.msra.mxu0 %v1186
      %1190 = vmatprep.subr.bf16.mxu0 0
      %1191 = vmatpush1.bf16.msra.mxu0 0
      %1192 = vmatprep.subr.bf16.mxu0 0
      %1193 = vmatpush1.bf16.msra.mxu0 0
      %1194 = vmatprep.subr.bf16.mxu0 0
      %1195 = vmatpush1.bf16.msra.mxu0 0
      %1196 = vmatprep.subr.bf16.mxu0 0
      %1197 = vmatpush1.bf16.msra.mxu0 0
      %1198 = vmatprep.subr.bf16.mxu0 0
      %1199 = vmatpush1.bf16.msra.mxu0 0
      %1200 = vmatprep.subr.bf16.mxu0 0
      %1201 = vmatpush1.bf16.msra.mxu0 0
      %1202 = vmatprep.subr.bf16.mxu0 0
      %1203 = vmatpush1.bf16.msra.mxu0 0
      %1204 = vmatprep.subr.bf16.mxu0 0
      %1205 = vmatpush1.bf16.msra.mxu0 0
      %1206 = vmatprep.subr.bf16.mxu0 0
      %1207 = vmatpush1.bf16.msra.mxu0 0
      %1208 = vmatprep.subr.bf16.mxu0 0
      %1209 = vmatpush1.bf16.msra.mxu0 0
      %1210 = vmatprep.subr.bf16.mxu0 0
      %1211 = vmatpush1.bf16.msra.mxu0 0
      %1212 = vmatprep.subr.bf16.mxu0 0
      %1213 = vmatpush1.bf16.msra.mxu0 0
      %1214 = vmatprep.subr.bf16.mxu0 0
      %1215 = vmatpush1.bf16.msra.mxu0 0
      %1216 = vmatprep.subr.bf16.mxu0 0
      %1217 = vmatpush1.bf16.msra.mxu0 0
      %1218 = vmatprep.subr.bf16.mxu0 0
      %1219 = vmatpush1.bf16.msra.mxu0 0
      %1220 = vmatprep.mubr.bf16.mxu0 0
      %1221 = vmatmul.mubr.bf16.gmra.mrb[0].mxu0 %v1138
      %v1222 = vpop.f32.mrb[0].mxu0
      %v1223 = vadd.f32 %v931, %v1222
      %v1224 = vpop.f32.mrb[0].mxu0
      %v1225 = vpop.f32.mrb[0].mxu0
      %v1226 = vadd.f32 %v934, %v1225
      %v1227 = vpop.f32.mrb[0].mxu0
      %1228 = vmatprep.mubr.bf16.mxu0 0
      %1229 = vmatmul.mubr.bf16.gmra.mrb[0].mxu0 %v1141
      %v1230 = vpop.f32.mrb[0].mxu0
      %v1231 = vadd.f32 %v939, %v1230
      %v1232 = vpop.f32.mrb[0].mxu0
      %v1233 = vpop.f32.mrb[0].mxu0
      %v1234 = vadd.f32 %v942, %v1233
      %v1235 = vpop.f32.mrb[0].mxu0
      %1236 = vmatprep.mubr.bf16.mxu0 0
      %1237 = vmatmul.mubr.bf16.gmra.mrb[0].mxu0 %v1144
      %v1238 = vpop.f32.mrb[0].mxu0
      %v1239 = vadd.f32 %v947, %v1238
      %v1240 = vpop.f32.mrb[0].mxu0
      %v1241 = vpop.f32.mrb[0].mxu0
      %v1242 = vadd.f32 %v950, %v1241
      %v1243 = vpop.f32.mrb[0].mxu0
      %1244 = vmatprep.mubr.bf16.mxu0 0
      %1245 = vmatmul.mubr.bf16.gmra.mrb[0].mxu0 %v1147
      %v1246 = vpop.f32.mrb[0].mxu0
      %v1247 = vadd.f32 %v955, %v1246
      %v1248 = vpop.f32.mrb[0].mxu0
      %v1249 = vpop.f32.mrb[0].mxu0
      %v1250 = vadd.f32 %v958, %v1249
      %v1251 = vpop.f32.mrb[0].mxu0
      %1252 = vmatprep.mubr.bf16.mxu0 0
      %1253 = vmatmul.mubr.bf16.gmra.mrb[0].mxu0 %v1150
      %v1254 = vpop.f32.mrb[0].mxu0
      %v1255 = vadd.f32 %v963, %v1254
      %v1256 = vpop.f32.mrb[0].mxu0
      %v1257 = vpop.f32.mrb[0].mxu0
      %v1258 = vadd.f32 %v966, %v1257
      %v1259 = vpop.f32.mrb[0].mxu0
      %1260 = vmatprep.mubr.bf16.mxu0 0
      %1261 = vmatmul.mubr.bf16.gmra.mrb[0].mxu0 %v1153
      %v1262 = vpop.f32.mrb[0].mxu0
      %v1263 = vadd.f32 %v971, %v1262
      %v1264 = vpop.f32.mrb[0].mxu0
      %v1265 = vpop.f32.mrb[0].mxu0
      %v1266 = vadd.f32 %v974, %v1265
      %v1267 = vpop.f32.mrb[0].mxu0
      %1268 = vmatprep.mubr.bf16.mxu0 0
      %1269 = vmatmul.mubr.bf16.gmra.mrb[0].mxu0 %v1156
      %v1270 = vpop.f32.mrb[0].mxu0
      %v1271 = vadd.f32 %v979, %v1270
      %v1272 = vpop.f32.mrb[0].mxu0
      %v1273 = vpop.f32.mrb[0].mxu0
      %v1274 = vadd.f32 %v982, %v1273
      %v1275 = vpop.f32.mrb[0].mxu0
      %1276 = vmatprep.mubr.bf16.mxu0 0
      %1277 = vmatmul.mubr.bf16.gmra.mrb[0].mxu0 %v1159
      %v1278 = vpop.f32.mrb[0].mxu0
      %v1279 = vadd.f32 %v987, %v1278
      %v1280 = vpop.f32.mrb[0].mxu0
      %v1281 = vpop.f32.mrb[0].mxu0
      %v1282 = vadd.f32 %v990, %v1281
      %v1283 = vpop.f32.mrb[0].mxu0
      %1284 = vmatprep.mubr.bf16.mxu0 0
      %1285 = vmatmul.mubr.bf16.gmra.mrb[0].mxu0 %v1162
      %v1286 = vpop.f32.mrb[0].mxu0
      %v1287 = vadd.f32 %v995, %v1286
      %v1288 = vpop.f32.mrb[0].mxu0
      %v1289 = vpop.f32.mrb[0].mxu0
      %v1290 = vadd.f32 %v998, %v1289
      %v1291 = vpop.f32.mrb[0].mxu0
      %1292 = vmatprep.mubr.bf16.mxu0 0
      %1293 = vmatmul.mubr.bf16.gmra.mrb[0].mxu0 %v1165
      %v1294 = vpop.f32.mrb[0].mxu0
      %v1295 = vadd.f32 %v1003, %v1294
      %v1296 = vpop.f32.mrb[0].mxu0
      %v1297 = vpop.f32.mrb[0].mxu0
      %v1298 = vadd.f32 %v1006, %v1297
      %v1299 = vpop.f32.mrb[0].mxu0
      %1300 = vmatprep.mubr.bf16.mxu0 0
      %1301 = vmatmul.mubr.bf16.gmra.mrb[0].mxu0 %v1168
      %v1302 = vpop.f32.mrb[0].mxu0
      %v1303 = vadd.f32 %v1011, %v1302
      %v1304 = vpop.f32.mrb[0].mxu0
      %v1305 = vpop.f32.mrb[0].mxu0
      %v1306 = vadd.f32 %v1014, %v1305
      %v1307 = vpop.f32.mrb[0].mxu0
      %1308 = vmatprep.mubr.bf16.mxu0 0
      %1309 = vmatmul.mubr.bf16.gmra.mrb[0].mxu0 %v1171
      %v1310 = vpop.f32.mrb[0].mxu0
      %v1311 = vadd.f32 %v1019, %v1310
      %v1312 = vpop.f32.mrb[0].mxu0
      %v1313 = vpop.f32.mrb[0].mxu0
      %v1314 = vadd.f32 %v1022, %v1313
      %v1315 = vpop.f32.mrb[0].mxu0
      %1316 = vmatprep.mubr.bf16.mxu0 0
      %1317 = vmatmul.mubr.bf16.gmra.mrb[0].mxu0 %v1174
      %v1318 = vpop.f32.mrb[0].mxu0
      %v1319 = vadd.f32 %v1027, %v1318
      %v1320 = vpop.f32.mrb[0].mxu0
      %v1321 = vpop.f32.mrb[0].mxu0
      %v1322 = vadd.f32 %v1030, %v1321
      %v1323 = vpop.f32.mrb[0].mxu0
      %1324 = vmatprep.mubr.bf16.mxu0 0
      %1325 = vmatmul.mubr.bf16.gmra.mrb[0].mxu0 %v1177
      %v1326 = vpop.f32.mrb[0].mxu0
      %v1327 = vadd.f32 %v1035, %v1326
      %v1328 = vpop.f32.mrb[0].mxu0
      %v1329 = vpop.f32.mrb[0].mxu0
      %v1330 = vadd.f32 %v1038, %v1329
      %v1331 = vpop.f32.mrb[0].mxu0
      %1332 = vmatprep.mubr.bf16.mxu0 0
      %1333 = vmatmul.mubr.bf16.gmra.mrb[0].mxu0 %v1180
      %v1334 = vpop.f32.mrb[0].mxu0
      %v1335 = vadd.f32 %v1043, %v1334
      %v1336 = vpop.f32.mrb[0].mxu0
      %v1337 = vpop.f32.mrb[0].mxu0
      %v1338 = vadd.f32 %v1046, %v1337
      %v1339 = vpop.f32.mrb[0].mxu0
      %1340 = vmatprep.mubr.bf16.mxu0 0
      %1341 = vmatmul.mubr.bf16.gmra.mrb[0].mxu0 %v1183
      %v1342 = vpop.f32.mrb[0].mxu0
      %v1343 = vadd.f32 %v1051, %v1342
      %v1344 = vpop.f32.mrb[0].mxu0
      %v1345 = vpop.f32.mrb[0].mxu0
      %v1346 = vadd.f32 %v1054, %v1345
      %v1347 = vpop.f32.mrb[0].mxu0
      %1348 = vdwg.mxu0
      %vm1365 = vcmask 1042432
      %vm1366 = vcmask 1046532
      %vm1367 = vmor %vm1365, %vm1366
      %v1368 = vrot.slane %v357, 5
      %v1369 = vrot.slane %v1368, 4
      %v1370 = vrot.slane %v358, 5
      %v1371 = vsel %vm1367, %v1369, %v1370
      %v1372 = vrot.slane %v1370, 4
      %v1373 = vrot.slane %v359, 5
      %v1374 = vsel %vm1367, %v1372, %v1373
      %v1375 = vrot.slane %v360, 5
      %v1376 = vrot.slane %v1375, 4
      %v1377 = vrot.slane %v361, 5
      %v1378 = vsel %vm1367, %v1376, %v1377
      %v1379 = vrot.slane %v1377, 4
      %v1380 = vrot.slane %v362, 5
      %v1381 = vsel %vm1367, %v1379, %v1380
      %v1382 = vrot.slane %v363, 5
      %v1383 = vrot.slane %v1382, 4
      %v1384 = vrot.slane %v364, 5
      %v1385 = vsel %vm1367, %v1383, %v1384
      %v1386 = vrot.slane %v1384, 4
      %v1387 = vrot.slane %v365, 5
      %v1388 = vsel %vm1367, %v1386, %v1387
      %v1389 = vrot.slane %v366, 5
      %v1390 = vrot.slane %v1389, 4
      %v1391 = vrot.slane %v367, 5
      %v1392 = vsel %vm1367, %v1390, %v1391
      %v1393 = vrot.slane %v1391, 4
      %v1394 = vrot.slane %v368, 5
      %v1395 = vsel %vm1367, %v1393, %v1394
      %v1396 = vrot.slane %v369, 5
      %v1397 = vrot.slane %v1396, 4
      %v1398 = vrot.slane %v370, 5
      %v1399 = vsel %vm1367, %v1397, %v1398
      %v1400 = vrot.slane %v1398, 4
      %v1401 = vrot.slane %v371, 5
      %v1402 = vsel %vm1367, %v1400, %v1401
      %v1403 = vrot.slane %v372, 5
      %v1404 = vrot.slane %v1403, 4
      %v1405 = vrot.slane %v373, 5
      %v1406 = vsel %vm1367, %v1404, %v1405
      %v1407 = vrot.slane %v1405, 4
      %v1408 = vrot.slane %v374, 5
      %v1409 = vsel %vm1367, %v1407, %v1408
      %v1410 = vrot.slane %v375, 5
      %v1411 = vrot.slane %v1410, 4
      %v1412 = vrot.slane %v376, 5
      %v1413 = vsel %vm1367, %v1411, %v1412
      %v1414 = vrot.slane %v1412, 4
      %v1415 = vrot.slane %v377, 5
      %v1416 = vsel %vm1367, %v1414, %v1415
      %v1417 = vrot.slane %v378, 5
      %v1418 = vrot.slane %v1417, 4
      %v1419 = vrot.slane %v379, 5
      %v1420 = vsel %vm1367, %v1418, %v1419
      %v1421 = vrot.slane %v1419, 4
      %v1422 = vrot.slane %v380, 5
      %v1423 = vsel %vm1367, %v1421, %v1422
      %v1424 = vrot.slane %v381, 5
      %v1425 = vrot.slane %v1424, 4
      %v1426 = vrot.slane %v382, 5
      %v1427 = vsel %vm1367, %v1425, %v1426
      %v1428 = vrot.slane %v1426, 4
      %v1429 = vrot.slane %v383, 5
      %v1430 = vsel %vm1367, %v1428, %v1429
      %v1431 = vrot.slane %v384, 5
      %v1432 = vrot.slane %v1431, 4
      %v1433 = vrot.slane %v385, 5
      %v1434 = vsel %vm1367, %v1432, %v1433
      %v1435 = vrot.slane %v1433, 4
      %v1436 = vrot.slane %v386, 5
      %v1437 = vsel %vm1367, %v1435, %v1436
      %v1438 = vrot.slane %v387, 5
      %v1439 = vrot.slane %v1438, 4
      %v1440 = vrot.slane %v388, 5
      %v1441 = vsel %vm1367, %v1439, %v1440
      %v1442 = vrot.slane %v1440, 4
      %v1443 = vrot.slane %v389, 5
      %v1444 = vsel %vm1367, %v1442, %v1443
      %v1445 = vrot.slane %v390, 5
      %v1446 = vrot.slane %v1445, 4
      %v1447 = vrot.slane %v391, 5
      %v1448 = vsel %vm1367, %v1446, %v1447
      %v1449 = vrot.slane %v1447, 4
      %v1450 = vrot.slane %v392, 5
      %v1451 = vsel %vm1367, %v1449, %v1450
      %v1452 = vrot.slane %v393, 5
      %v1453 = vrot.slane %v1452, 4
      %v1454 = vrot.slane %v394, 5
      %v1455 = vsel %vm1367, %v1453, %v1454
      %v1456 = vrot.slane %v1454, 4
      %v1457 = vrot.slane %v395, 5
      %v1458 = vsel %vm1367, %v1456, %v1457
      %v1459 = vrot.slane %v396, 5
      %v1460 = vrot.slane %v1459, 4
      %v1461 = vrot.slane %v397, 5
      %v1462 = vsel %vm1367, %v1460, %v1461
      %v1463 = vrot.slane %v1461, 4
      %v1464 = vrot.slane %v398, 5
      %v1465 = vsel %vm1367, %v1463, %v1464
      %v1466 = vrot.slane %v399, 5
      %v1467 = vrot.slane %v1466, 4
      %v1468 = vrot.slane %v400, 5
      %v1469 = vsel %vm1367, %v1467, %v1468
      %v1470 = vrot.slane %v1468, 4
      %v1471 = vrot.slane %v401, 5
      %v1472 = vsel %vm1367, %v1470, %v1471
      %v1473 = vrot.slane %v402, 5
      %v1474 = vrot.slane %v1473, 4
      %v1475 = vrot.slane %v403, 5
      %v1476 = vsel %vm1367, %v1474, %v1475
      %v1477 = vrot.slane %v1475, 4
      %v1478 = vrot.slane %v404, 5
      %v1479 = vsel %vm1367, %v1477, %v1478
      %s1480 = scalar_lea.vmem %s3, 8
      %v1481 = vld [vmem:[%s1480] sm:$0xf]
      %v1482 = vunpack.c.l.b16 %v1371
      %v1483 = vunpack.c.l.b16 %v1374
      %v1484 = vunpack.c.l.b16 %v1378
      %v1485 = vunpack.c.l.b16 %v1381
      %v1486 = vunpack.c.l.b16 %v1385
      %v1487 = vunpack.c.l.b16 %v1388
      %v1488 = vunpack.c.l.b16 %v1392
      %v1489 = vunpack.c.l.b16 %v1395
      %v1490 = vunpack.c.l.b16 %v1399
      %v1491 = vunpack.c.l.b16 %v1402
      %v1492 = vunpack.c.l.b16 %v1406
      %v1493 = vunpack.c.l.b16 %v1409
      %v1494 = vunpack.c.l.b16 %v1413
      %v1495 = vunpack.c.l.b16 %v1416
      %v1496 = vunpack.c.l.b16 %v1420
      %v1497 = vunpack.c.l.b16 %v1423
      %v1498 = vunpack.c.l.b16 %v1427
      %v1499 = vunpack.c.l.b16 %v1430
      %v1500 = vunpack.c.l.b16 %v1434
      %v1501 = vunpack.c.l.b16 %v1437
      %v1502 = vunpack.c.l.b16 %v1441
      %v1503 = vunpack.c.l.b16 %v1444
      %v1504 = vunpack.c.l.b16 %v1448
      %v1505 = vunpack.c.l.b16 %v1451
      %v1506 = vunpack.c.l.b16 %v1455
      %v1507 = vunpack.c.l.b16 %v1458
      %v1508 = vunpack.c.l.b16 %v1462
      %v1509 = vunpack.c.l.b16 %v1465
      %v1510 = vunpack.c.l.b16 %v1469
      %v1511 = vunpack.c.l.b16 %v1472
      %v1512 = vunpack.c.l.b16 %v1476
      %v1513 = vunpack.c.l.b16 %v1479
      %v1514 = vpack.c.b16 %v1483, %v1482
      %v1515 = vpack.c.b16 %v1485, %v1484
      %v1516 = vpack.c.b16 %v1487, %v1486
      %v1517 = vpack.c.b16 %v1489, %v1488
      %v1518 = vpack.c.b16 %v1491, %v1490
      %v1519 = vpack.c.b16 %v1493, %v1492
      %v1520 = vpack.c.b16 %v1495, %v1494
      %v1521 = vpack.c.b16 %v1497, %v1496
      %v1522 = vpack.c.b16 %v1499, %v1498
      %v1523 = vpack.c.b16 %v1501, %v1500
      %v1524 = vpack.c.b16 %v1503, %v1502
      %v1525 = vpack.c.b16 %v1505, %v1504
      %v1526 = vpack.c.b16 %v1507, %v1506
      %v1527 = vpack.c.b16 %v1509, %v1508
      %v1528 = vpack.c.b16 %v1511, %v1510
      %v1529 = vpack.c.b16 %v1513, %v1512
      %v1531 = vsel %vm843, %v1514, 0
      %v1534 = vsel %vm843, %v1515, 0
      %v1537 = vsel %vm843, %v1516, 0
      %v1540 = vsel %vm843, %v1517, 0
      %v1543 = vsel %vm843, %v1518, 0
      %v1546 = vsel %vm843, %v1519, 0
      %v1549 = vsel %vm843, %v1520, 0
      %v1552 = vsel %vm843, %v1521, 0
      %v1555 = vsel %vm843, %v1522, 0
      %v1558 = vsel %vm843, %v1523, 0
      %v1561 = vsel %vm843, %v1524, 0
      %v1564 = vsel %vm843, %v1525, 0
      %v1567 = vsel %vm843, %v1526, 0
      %v1570 = vsel %vm843, %v1527, 0
      %v1573 = vsel %vm843, %v1528, 0
      %v1576 = vsel %vm843, %v1529, 0
      %v1579 = vsel %vm892, %v1481, 0
      %1581 = vmatprep.subr.bf16.mxu0 0
      %1582 = vmatpush1.bf16.msra.mxu0 %v1579
      %1583 = vmatprep.subr.bf16.mxu0 0
      %1584 = vmatpush1.bf16.msra.mxu0 0
      %1585 = vmatprep.subr.bf16.mxu0 0
      %1586 = vmatpush1.bf16.msra.mxu0 0
      %1587 = vmatprep.subr.bf16.mxu0 0
      %1588 = vmatpush1.bf16.msra.mxu0 0
      %1589 = vmatprep.subr.bf16.mxu0 0
      %1590 = vmatpush1.bf16.msra.mxu0 0
      %1591 = vmatprep.subr.bf16.mxu0 0
      %1592 = vmatpush1.bf16.msra.mxu0 0
      %1593 = vmatprep.subr.bf16.mxu0 0
      %1594 = vmatpush1.bf16.msra.mxu0 0
      %1595 = vmatprep.subr.bf16.mxu0 0
      %1596 = vmatpush1.bf16.msra.mxu0 0
      %1597 = vmatprep.subr.bf16.mxu0 0
      %1598 = vmatpush1.bf16.msra.mxu0 0
      %1599 = vmatprep.subr.bf16.mxu0 0
      %1600 = vmatpush1.bf16.msra.mxu0 0
      %1601 = vmatprep.subr.bf16.mxu0 0
      %1602 = vmatpush1.bf16.msra.mxu0 0
      %1603 = vmatprep.subr.bf16.mxu0 0
      %1604 = vmatpush1.bf16.msra.mxu0 0
      %1605 = vmatprep.subr.bf16.mxu0 0
      %1606 = vmatpush1.bf16.msra.mxu0 0
      %1607 = vmatprep.subr.bf16.mxu0 0
      %1608 = vmatpush1.bf16.msra.mxu0 0
      %1609 = vmatprep.subr.bf16.mxu0 0
      %1610 = vmatpush1.bf16.msra.mxu0 0
      %1611 = vmatprep.subr.bf16.mxu0 0
      %1612 = vmatpush1.bf16.msra.mxu0 0
      %1613 = vmatprep.mubr.bf16.mxu0 0
      %1614 = vmatmul.mubr.bf16.gmra.mrb[0].mxu0 %v1531
      %v1615 = vpop.f32.mrb[0].mxu0
      %v1616 = vadd.f32 0.0, %v1615
      %v1617 = vpop.f32.mrb[0].mxu0
      %v1618 = vpop.f32.mrb[0].mxu0
      %v1619 = vadd.f32 0.0, %v1618
      %v1620 = vpop.f32.mrb[0].mxu0
      %1621 = vmatprep.mubr.bf16.mxu0 0
      %1622 = vmatmul.mubr.bf16.gmra.mrb[0].mxu0 %v1534
      %v1623 = vpop.f32.mrb[0].mxu0
      %v1624 = vadd.f32 0.0, %v1623
      %v1625 = vpop.f32.mrb[0].mxu0
      %v1626 = vpop.f32.mrb[0].mxu0
      %v1627 = vadd.f32 0.0, %v1626
      %v1628 = vpop.f32.mrb[0].mxu0
      %1629 = vmatprep.mubr.bf16.mxu0 0
      %1630 = vmatmul.mubr.bf16.gmra.mrb[0].mxu0 %v1537
      %v1631 = vpop.f32.mrb[0].mxu0
      %v1632 = vadd.f32 0.0, %v1631
      %v1633 = vpop.f32.mrb[0].mxu0
      %v1634 = vpop.f32.mrb[0].mxu0
      %v1635 = vadd.f32 0.0, %v1634
      %v1636 = vpop.f32.mrb[0].mxu0
      %1637 = vmatprep.mubr.bf16.mxu0 0
      %1638 = vmatmul.mubr.bf16.gmra.mrb[0].mxu0 %v1540
      %v1639 = vpop.f32.mrb[0].mxu0
      %v1640 = vadd.f32 0.0, %v1639
      %v1641 = vpop.f32.mrb[0].mxu0
      %v1642 = vpop.f32.mrb[0].mxu0
      %v1643 = vadd.f32 0.0, %v1642
      %v1644 = vpop.f32.mrb[0].mxu0
      %1645 = vmatprep.mubr.bf16.mxu0 0
      %1646 = vmatmul.mubr.bf16.gmra.mrb[0].mxu0 %v1543
      %v1647 = vpop.f32.mrb[0].mxu0
      %v1648 = vadd.f32 0.0, %v1647
      %v1649 = vpop.f32.mrb[0].mxu0
      %v1650 = vpop.f32.mrb[0].mxu0
      %v1651 = vadd.f32 0.0, %v1650
      %v1652 = vpop.f32.mrb[0].mxu0
      %1653 = vmatprep.mubr.bf16.mxu0 0
      %1654 = vmatmul.mubr.bf16.gmra.mrb[0].mxu0 %v1546
      %v1655 = vpop.f32.mrb[0].mxu0
      %v1656 = vadd.f32 0.0, %v1655
      %v1657 = vpop.f32.mrb[0].mxu0
      %v1658 = vpop.f32.mrb[0].mxu0
      %v1659 = vadd.f32 0.0, %v1658
      %v1660 = vpop.f32.mrb[0].mxu0
      %1661 = vmatprep.mubr.bf16.mxu0 0
      %1662 = vmatmul.mubr.bf16.gmra.mrb[0].mxu0 %v1549
      %v1663 = vpop.f32.mrb[0].mxu0
      %v1664 = vadd.f32 0.0, %v1663
      %v1665 = vpop.f32.mrb[0].mxu0
      %v1666 = vpop.f32.mrb[0].mxu0
      %v1667 = vadd.f32 0.0, %v1666
      %v1668 = vpop.f32.mrb[0].mxu0
      %1669 = vmatprep.mubr.bf16.mxu0 0
      %1670 = vmatmul.mubr.bf16.gmra.mrb[0].mxu0 %v1552
      %v1671 = vpop.f32.mrb[0].mxu0
      %v1672 = vadd.f32 0.0, %v1671
      %v1673 = vpop.f32.mrb[0].mxu0
      %v1674 = vpop.f32.mrb[0].mxu0
      %v1675 = vadd.f32 0.0, %v1674
      %v1676 = vpop.f32.mrb[0].mxu0
      %1677 = vmatprep.mubr.bf16.mxu0 0
      %1678 = vmatmul.mubr.bf16.gmra.mrb[0].mxu0 %v1555
      %v1679 = vpop.f32.mrb[0].mxu0
      %v1680 = vadd.f32 0.0, %v1679
      %v1681 = vpop.f32.mrb[0].mxu0
      %v1682 = vpop.f32.mrb[0].mxu0
      %v1683 = vadd.f32 0.0, %v1682
      %v1684 = vpop.f32.mrb[0].mxu0
      %1685 = vmatprep.mubr.bf16.mxu0 0
      %1686 = vmatmul.mubr.bf16.gmra.mrb[0].mxu0 %v1558
      %v1687 = vpop.f32.mrb[0].mxu0
      %v1688 = vadd.f32 0.0, %v1687
      %v1689 = vpop.f32.mrb[0].mxu0
      %v1690 = vpop.f32.mrb[0].mxu0
      %v1691 = vadd.f32 0.0, %v1690
      %v1692 = vpop.f32.mrb[0].mxu0
      %1693 = vmatprep.mubr.bf16.mxu0 0
      %1694 = vmatmul.mubr.bf16.gmra.mrb[0].mxu0 %v1561
      %v1695 = vpop.f32.mrb[0].mxu0
      %v1696 = vadd.f32 0.0, %v1695
      %v1697 = vpop.f32.mrb[0].mxu0
      %v1698 = vpop.f32.mrb[0].mxu0
      %v1699 = vadd.f32 0.0, %v1698
      %v1700 = vpop.f32.mrb[0].mxu0
      %1701 = vmatprep.mubr.bf16.mxu0 0
      %1702 = vmatmul.mubr.bf16.gmra.mrb[0].mxu0 %v1564
      %v1703 = vpop.f32.mrb[0].mxu0
      %v1704 = vadd.f32 0.0, %v1703
      %v1705 = vpop.f32.mrb[0].mxu0
      %v1706 = vpop.f32.mrb[0].mxu0
      %v1707 = vadd.f32 0.0, %v1706
      %v1708 = vpop.f32.mrb[0].mxu0
      %1709 = vmatprep.mubr.bf16.mxu0 0
      %1710 = vmatmul.mubr.bf16.gmra.mrb[0].mxu0 %v1567
      %v1711 = vpop.f32.mrb[0].mxu0
      %v1712 = vadd.f32 0.0, %v1711
      %v1713 = vpop.f32.mrb[0].mxu0
      %v1714 = vpop.f32.mrb[0].mxu0
      %v1715 = vadd.f32 0.0, %v1714
      %v1716 = vpop.f32.mrb[0].mxu0
      %1717 = vmatprep.mubr.bf16.mxu0 0
      %1718 = vmatmul.mubr.bf16.gmra.mrb[0].mxu0 %v1570
      %v1719 = vpop.f32.mrb[0].mxu0
      %v1720 = vadd.f32 0.0, %v1719
      %v1721 = vpop.f32.mrb[0].mxu0
      %v1722 = vpop.f32.mrb[0].mxu0
      %v1723 = vadd.f32 0.0, %v1722
      %v1724 = vpop.f32.mrb[0].mxu0
      %1725 = vmatprep.mubr.bf16.mxu0 0
      %1726 = vmatmul.mubr.bf16.gmra.mrb[0].mxu0 %v1573
      %v1727 = vpop.f32.mrb[0].mxu0
      %v1728 = vadd.f32 0.0, %v1727
      %v1729 = vpop.f32.mrb[0].mxu0
      %v1730 = vpop.f32.mrb[0].mxu0
      %v1731 = vadd.f32 0.0, %v1730
      %v1732 = vpop.f32.mrb[0].mxu0
      %1733 = vmatprep.mubr.bf16.mxu0 0
      %1734 = vmatmul.mubr.bf16.gmra.mrb[0].mxu0 %v1576
      %v1735 = vpop.f32.mrb[0].mxu0
      %v1736 = vadd.f32 0.0, %v1735
      %v1737 = vpop.f32.mrb[0].mxu0
      %v1738 = vpop.f32.mrb[0].mxu0
      %v1739 = vadd.f32 0.0, %v1738
      %v1740 = vpop.f32.mrb[0].mxu0
      %1741 = vdwg.mxu0
      %v1742 = vadd.f32 %v1223, %v1616
      %v1743 = vadd.f32 %v1226, %v1619
      %v1744 = vadd.f32 %v1231, %v1624
      %v1745 = vadd.f32 %v1234, %v1627
      %v1746 = vadd.f32 %v1239, %v1632
      %v1747 = vadd.f32 %v1242, %v1635
      %v1748 = vadd.f32 %v1247, %v1640
      %v1749 = vadd.f32 %v1250, %v1643
      %v1750 = vadd.f32 %v1255, %v1648
      %v1751 = vadd.f32 %v1258, %v1651
      %v1752 = vadd.f32 %v1263, %v1656
      %v1753 = vadd.f32 %v1266, %v1659
      %v1754 = vadd.f32 %v1271, %v1664
      %v1755 = vadd.f32 %v1274, %v1667
      %v1756 = vadd.f32 %v1279, %v1672
      %v1757 = vadd.f32 %v1282, %v1675
      %v1758 = vadd.f32 %v1287, %v1680
      %v1759 = vadd.f32 %v1290, %v1683
      %v1760 = vadd.f32 %v1295, %v1688
      %v1761 = vadd.f32 %v1298, %v1691
      %v1762 = vadd.f32 %v1303, %v1696
      %v1763 = vadd.f32 %v1306, %v1699
      %v1764 = vadd.f32 %v1311, %v1704
      %v1765 = vadd.f32 %v1314, %v1707
      %v1766 = vadd.f32 %v1319, %v1712
      %v1767 = vadd.f32 %v1322, %v1715
      %v1768 = vadd.f32 %v1327, %v1720
      %v1769 = vadd.f32 %v1330, %v1723
      %v1770 = vadd.f32 %v1335, %v1728
      %v1771 = vadd.f32 %v1338, %v1731
      %v1772 = vadd.f32 %v1343, %v1736
      %v1773 = vadd.f32 %v1346, %v1739
      %v1774 = vld [vmem:[%s329] sm:$0xf]
      %v1775 = vld [vmem:[%s329 + $0x4] sm:$0xf]
      %v1776 = vld [vmem:[%s329 + $0x8] sm:$0x1]
      %v1777 = vld [vmem:[%s329 + $0xc] sm:$0xf]
      %v1778 = vld [vmem:[%s329 + $0x10] sm:$0xf]
      %v1779 = vld [vmem:[%s329 + $0x14] sm:$0x1]
      %v1780 = vld [vmem:[%s329 + $0x18] sm:$0xf]
      %v1781 = vld [vmem:[%s329 + $0x1c] sm:$0xf]
      %v1782 = vld [vmem:[%s329 + $0x20] sm:$0x1]
      %v1783 = vld [vmem:[%s329 + $0x24] sm:$0xf]
      %v1784 = vld [vmem:[%s329 + $0x28] sm:$0xf]
      %v1785 = vld [vmem:[%s329 + $0x2c] sm:$0x1]
      %v1786 = vld [vmem:[%s329 + $0x30] sm:$0xf]
      %v1787 = vld [vmem:[%s329 + $0x34] sm:$0xf]
      %v1788 = vld [vmem:[%s329 + $0x38] sm:$0x1]
      %v1789 = vld [vmem:[%s329 + $0x3c] sm:$0xf]
      %v1790 = vld [vmem:[%s329 + $0x40] sm:$0xf]
      %v1791 = vld [vmem:[%s329 + $0x44] sm:$0x1]
      %v1792 = vld [vmem:[%s329 + $0x48] sm:$0xf]
      %v1793 = vld [vmem:[%s329 + $0x4c] sm:$0xf]
      %v1794 = vld [vmem:[%s329 + $0x50] sm:$0x1]
      %v1795 = vld [vmem:[%s329 + $0x54] sm:$0xf]
      %v1796 = vld [vmem:[%s329 + $0x58] sm:$0xf]
      %v1797 = vld [vmem:[%s329 + $0x5c] sm:$0x1]
      %v1798 = vld [vmem:[%s329 + $0x60] sm:$0xf]
      %v1799 = vld [vmem:[%s329 + $0x64] sm:$0xf]
      %v1800 = vld [vmem:[%s329 + $0x68] sm:$0x1]
      %v1801 = vld [vmem:[%s329 + $0x6c] sm:$0xf]
      %v1802 = vld [vmem:[%s329 + $0x70] sm:$0xf]
      %v1803 = vld [vmem:[%s329 + $0x74] sm:$0x1]
      %v1804 = vld [vmem:[%s329 + $0x78] sm:$0xf]
      %v1805 = vld [vmem:[%s329 + $0x7c] sm:$0xf]
      %v1806 = vld [vmem:[%s329 + $0x80] sm:$0x1]
      %v1807 = vld [vmem:[%s329 + $0x84] sm:$0xf]
      %v1808 = vld [vmem:[%s329 + $0x88] sm:$0xf]
      %v1809 = vld [vmem:[%s329 + $0x8c] sm:$0x1]
      %v1810 = vld [vmem:[%s329 + $0x90] sm:$0xf]
      %v1811 = vld [vmem:[%s329 + $0x94] sm:$0xf]
      %v1812 = vld [vmem:[%s329 + $0x98] sm:$0x1]
      %v1813 = vld [vmem:[%s329 + $0x9c] sm:$0xf]
      %v1814 = vld [vmem:[%s329 + $0xa0] sm:$0xf]
      %v1815 = vld [vmem:[%s329 + $0xa4] sm:$0x1]
      %v1816 = vld [vmem:[%s329 + $0xa8] sm:$0xf]
      %v1817 = vld [vmem:[%s329 + $0xac] sm:$0xf]
      %v1818 = vld [vmem:[%s329 + $0xb0] sm:$0x1]
      %v1819 = vld [vmem:[%s329 + $0xb4] sm:$0xf]
      %v1820 = vld [vmem:[%s329 + $0xb8] sm:$0xf]
      %v1821 = vld [vmem:[%s329 + $0xbc] sm:$0x1]
      %s1822 = scalar_lea.vmem %s3, 12
      %v1823 = vld [vmem:[%s1822] sm:$0xf]
      %v1856 = vunpack.c.l.b16 %v1774
      %v1857 = vunpack.c.l.b16 %v1775
      %v1858 = vunpack.c.l.b16 %v1777
      %v1859 = vunpack.c.l.b16 %v1778
      %v1860 = vunpack.c.l.b16 %v1780
      %v1861 = vunpack.c.l.b16 %v1781
      %v1862 = vunpack.c.l.b16 %v1783
      %v1863 = vunpack.c.l.b16 %v1784
      %v1864 = vunpack.c.l.b16 %v1786
      %v1865 = vunpack.c.l.b16 %v1787
      %v1866 = vunpack.c.l.b16 %v1789
      %v1867 = vunpack.c.l.b16 %v1790
      %v1868 = vunpack.c.l.b16 %v1792
      %v1869 = vunpack.c.l.b16 %v1793
      %v1870 = vunpack.c.l.b16 %v1795
      %v1871 = vunpack.c.l.b16 %v1796
      %v1872 = vunpack.c.l.b16 %v1798
      %v1873 = vunpack.c.l.b16 %v1799
      %v1874 = vunpack.c.l.b16 %v1801
      %v1875 = vunpack.c.l.b16 %v1802
      %v1876 = vunpack.c.l.b16 %v1804
      %v1877 = vunpack.c.l.b16 %v1805
      %v1878 = vunpack.c.l.b16 %v1807
      %v1879 = vunpack.c.l.b16 %v1808
      %v1880 = vunpack.c.l.b16 %v1810
      %v1881 = vunpack.c.l.b16 %v1811
      %v1882 = vunpack.c.l.b16 %v1813
      %v1883 = vunpack.c.l.b16 %v1814
      %v1884 = vunpack.c.l.b16 %v1816
      %v1885 = vunpack.c.l.b16 %v1817
      %v1886 = vunpack.c.l.b16 %v1819
      %v1887 = vunpack.c.l.b16 %v1820
      %v1888 = vpack.c.b16 %v1857, %v1856
      %v1889 = vpack.c.b16 %v1859, %v1858
      %v1890 = vpack.c.b16 %v1861, %v1860
      %v1891 = vpack.c.b16 %v1863, %v1862
      %v1892 = vpack.c.b16 %v1865, %v1864
      %v1893 = vpack.c.b16 %v1867, %v1866
      %v1894 = vpack.c.b16 %v1869, %v1868
      %v1895 = vpack.c.b16 %v1871, %v1870
      %v1896 = vpack.c.b16 %v1873, %v1872
      %v1897 = vpack.c.b16 %v1875, %v1874
      %v1898 = vpack.c.b16 %v1877, %v1876
      %v1899 = vpack.c.b16 %v1879, %v1878
      %v1900 = vpack.c.b16 %v1881, %v1880
      %v1901 = vpack.c.b16 %v1883, %v1882
      %v1902 = vpack.c.b16 %v1885, %v1884
      %v1903 = vpack.c.b16 %v1887, %v1886
      %v1905 = vsel %vm843, %v1888, 0
      %v1908 = vsel %vm843, %v1889, 0
      %v1911 = vsel %vm843, %v1890, 0
      %v1914 = vsel %vm843, %v1891, 0
      %v1917 = vsel %vm843, %v1892, 0
      %v1920 = vsel %vm843, %v1893, 0
      %v1923 = vsel %vm843, %v1894, 0
      %v1926 = vsel %vm843, %v1895, 0
      %v1929 = vsel %vm843, %v1896, 0
      %v1932 = vsel %vm843, %v1897, 0
      %v1935 = vsel %vm843, %v1898, 0
      %v1938 = vsel %vm843, %v1899, 0
      %v1941 = vsel %vm843, %v1900, 0
      %v1944 = vsel %vm843, %v1901, 0
      %v1947 = vsel %vm843, %v1902, 0
      %v1950 = vsel %vm843, %v1903, 0
      %v1953 = vsel %vm892, %v1823, 0
      %1955 = vmatprep.subr.bf16.mxu0 0
      %1956 = vmatpush1.bf16.msra.mxu0 %v1953
      %1957 = vmatprep.subr.bf16.mxu0 0
      %1958 = vmatpush1.bf16.msra.mxu0 0
      %1959 = vmatprep.subr.bf16.mxu0 0
      %1960 = vmatpush1.bf16.msra.mxu0 0
      %1961 = vmatprep.subr.bf16.mxu0 0
      %1962 = vmatpush1.bf16.msra.mxu0 0
      %1963 = vmatprep.subr.bf16.mxu0 0
      %1964 = vmatpush1.bf16.msra.mxu0 0
      %1965 = vmatprep.subr.bf16.mxu0 0
      %1966 = vmatpush1.bf16.msra.mxu0 0
      %1967 = vmatprep.subr.bf16.mxu0 0
      %1968 = vmatpush1.bf16.msra.mxu0 0
      %1969 = vmatprep.subr.bf16.mxu0 0
      %1970 = vmatpush1.bf16.msra.mxu0 0
      %1971 = vmatprep.subr.bf16.mxu0 0
      %1972 = vmatpush1.bf16.msra.mxu0 0
      %1973 = vmatprep.subr.bf16.mxu0 0
      %1974 = vmatpush1.bf16.msra.mxu0 0
      %1975 = vmatprep.subr.bf16.mxu0 0
      %1976 = vmatpush1.bf16.msra.mxu0 0
      %1977 = vmatprep.subr.bf16.mxu0 0
      %1978 = vmatpush1.bf16.msra.mxu0 0
      %1979 = vmatprep.subr.bf16.mxu0 0
      %1980 = vmatpush1.bf16.msra.mxu0 0
      %1981 = vmatprep.subr.bf16.mxu0 0
      %1982 = vmatpush1.bf16.msra.mxu0 0
      %1983 = vmatprep.subr.bf16.mxu0 0
      %1984 = vmatpush1.bf16.msra.mxu0 0
      %1985 = vmatprep.subr.bf16.mxu0 0
      %1986 = vmatpush1.bf16.msra.mxu0 0
      %1987 = vmatprep.mubr.bf16.mxu0 0
      %1988 = vmatmul.mubr.bf16.gmra.mrb[0].mxu0 %v1905
      %v1989 = vpop.f32.mrb[0].mxu0
      %v1990 = vadd.f32 0.0, %v1989
      %v1991 = vpop.f32.mrb[0].mxu0
      %v1992 = vpop.f32.mrb[0].mxu0
      %v1993 = vadd.f32 0.0, %v1992
      %v1994 = vpop.f32.mrb[0].mxu0
      %1995 = vmatprep.mubr.bf16.mxu0 0
      %1996 = vmatmul.mubr.bf16.gmra.mrb[0].mxu0 %v1908
      %v1997 = vpop.f32.mrb[0].mxu0
      %v1998 = vadd.f32 0.0, %v1997
      %v1999 = vpop.f32.mrb[0].mxu0
      %v2000 = vpop.f32.mrb[0].mxu0
      %v2001 = vadd.f32 0.0, %v2000
      %v2002 = vpop.f32.mrb[0].mxu0
      %2003 = vmatprep.mubr.bf16.mxu0 0
      %2004 = vmatmul.mubr.bf16.gmra.mrb[0].mxu0 %v1911
      %v2005 = vpop.f32.mrb[0].mxu0
      %v2006 = vadd.f32 0.0, %v2005
      %v2007 = vpop.f32.mrb[0].mxu0
      %v2008 = vpop.f32.mrb[0].mxu0
      %v2009 = vadd.f32 0.0, %v2008
      %v2010 = vpop.f32.mrb[0].mxu0
      %2011 = vmatprep.mubr.bf16.mxu0 0
      %2012 = vmatmul.mubr.bf16.gmra.mrb[0].mxu0 %v1914
      %v2013 = vpop.f32.mrb[0].mxu0
      %v2014 = vadd.f32 0.0, %v2013
      %v2015 = vpop.f32.mrb[0].mxu0
      %v2016 = vpop.f32.mrb[0].mxu0
      %v2017 = vadd.f32 0.0, %v2016
      %v2018 = vpop.f32.mrb[0].mxu0
      %2019 = vmatprep.mubr.bf16.mxu0 0
      %2020 = vmatmul.mubr.bf16.gmra.mrb[0].mxu0 %v1917
      %v2021 = vpop.f32.mrb[0].mxu0
      %v2022 = vadd.f32 0.0, %v2021
      %v2023 = vpop.f32.mrb[0].mxu0
      %v2024 = vpop.f32.mrb[0].mxu0
      %v2025 = vadd.f32 0.0, %v2024
      %v2026 = vpop.f32.mrb[0].mxu0
      %2027 = vmatprep.mubr.bf16.mxu0 0
      %2028 = vmatmul.mubr.bf16.gmra.mrb[0].mxu0 %v1920
      %v2029 = vpop.f32.mrb[0].mxu0
      %v2030 = vadd.f32 0.0, %v2029
      %v2031 = vpop.f32.mrb[0].mxu0
      %v2032 = vpop.f32.mrb[0].mxu0
      %v2033 = vadd.f32 0.0, %v2032
      %v2034 = vpop.f32.mrb[0].mxu0
      %2035 = vmatprep.mubr.bf16.mxu0 0
      %2036 = vmatmul.mubr.bf16.gmra.mrb[0].mxu0 %v1923
      %v2037 = vpop.f32.mrb[0].mxu0
      %v2038 = vadd.f32 0.0, %v2037
      %v2039 = vpop.f32.mrb[0].mxu0
      %v2040 = vpop.f32.mrb[0].mxu0
      %v2041 = vadd.f32 0.0, %v2040
      %v2042 = vpop.f32.mrb[0].mxu0
      %2043 = vmatprep.mubr.bf16.mxu0 0
      %2044 = vmatmul.mubr.bf16.gmra.mrb[0].mxu0 %v1926
      %v2045 = vpop.f32.mrb[0].mxu0
      %v2046 = vadd.f32 0.0, %v2045
      %v2047 = vpop.f32.mrb[0].mxu0
      %v2048 = vpop.f32.mrb[0].mxu0
      %v2049 = vadd.f32 0.0, %v2048
      %v2050 = vpop.f32.mrb[0].mxu0
      %2051 = vmatprep.mubr.bf16.mxu0 0
      %2052 = vmatmul.mubr.bf16.gmra.mrb[0].mxu0 %v1929
      %v2053 = vpop.f32.mrb[0].mxu0
      %v2054 = vadd.f32 0.0, %v2053
      %v2055 = vpop.f32.mrb[0].mxu0
      %v2056 = vpop.f32.mrb[0].mxu0
      %v2057 = vadd.f32 0.0, %v2056
      %v2058 = vpop.f32.mrb[0].mxu0
      %2059 = vmatprep.mubr.bf16.mxu0 0
      %2060 = vmatmul.mubr.bf16.gmra.mrb[0].mxu0 %v1932
      %v2061 = vpop.f32.mrb[0].mxu0
      %v2062 = vadd.f32 0.0, %v2061
      %v2063 = vpop.f32.mrb[0].mxu0
      %v2064 = vpop.f32.mrb[0].mxu0
      %v2065 = vadd.f32 0.0, %v2064
      %v2066 = vpop.f32.mrb[0].mxu0
      %2067 = vmatprep.mubr.bf16.mxu0 0
      %2068 = vmatmul.mubr.bf16.gmra.mrb[0].mxu0 %v1935
      %v2069 = vpop.f32.mrb[0].mxu0
      %v2070 = vadd.f32 0.0, %v2069
      %v2071 = vpop.f32.mrb[0].mxu0
      %v2072 = vpop.f32.mrb[0].mxu0
      %v2073 = vadd.f32 0.0, %v2072
      %v2074 = vpop.f32.mrb[0].mxu0
      %2075 = vmatprep.mubr.bf16.mxu0 0
      %2076 = vmatmul.mubr.bf16.gmra.mrb[0].mxu0 %v1938
      %v2077 = vpop.f32.mrb[0].mxu0
      %v2078 = vadd.f32 0.0, %v2077
      %v2079 = vpop.f32.mrb[0].mxu0
      %v2080 = vpop.f32.mrb[0].mxu0
      %v2081 = vadd.f32 0.0, %v2080
      %v2082 = vpop.f32.mrb[0].mxu0
      %2083 = vmatprep.mubr.bf16.mxu0 0
      %2084 = vmatmul.mubr.bf16.gmra.mrb[0].mxu0 %v1941
      %v2085 = vpop.f32.mrb[0].mxu0
      %v2086 = vadd.f32 0.0, %v2085
      %v2087 = vpop.f32.mrb[0].mxu0
      %v2088 = vpop.f32.mrb[0].mxu0
      %v2089 = vadd.f32 0.0, %v2088
      %v2090 = vpop.f32.mrb[0].mxu0
      %2091 = vmatprep.mubr.bf16.mxu0 0
      %2092 = vmatmul.mubr.bf16.gmra.mrb[0].mxu0 %v1944
      %v2093 = vpop.f32.mrb[0].mxu0
      %v2094 = vadd.f32 0.0, %v2093
      %v2095 = vpop.f32.mrb[0].mxu0
      %v2096 = vpop.f32.mrb[0].mxu0
      %v2097 = vadd.f32 0.0, %v2096
      %v2098 = vpop.f32.mrb[0].mxu0
      %2099 = vmatprep.mubr.bf16.mxu0 0
      %2100 = vmatmul.mubr.bf16.gmra.mrb[0].mxu0 %v1947
      %v2101 = vpop.f32.mrb[0].mxu0
      %v2102 = vadd.f32 0.0, %v2101
      %v2103 = vpop.f32.mrb[0].mxu0
      %v2104 = vpop.f32.mrb[0].mxu0
      %v2105 = vadd.f32 0.0, %v2104
      %v2106 = vpop.f32.mrb[0].mxu0
      %2107 = vmatprep.mubr.bf16.mxu0 0
      %2108 = vmatmul.mubr.bf16.gmra.mrb[0].mxu0 %v1950
      %v2109 = vpop.f32.mrb[0].mxu0
      %v2110 = vadd.f32 0.0, %v2109
      %v2111 = vpop.f32.mrb[0].mxu0
      %v2112 = vpop.f32.mrb[0].mxu0
      %v2113 = vadd.f32 0.0, %v2112
      %v2114 = vpop.f32.mrb[0].mxu0
      %2115 = vdwg.mxu0
      %v2116 = vadd.f32 %v1742, %v1990
      %v2117 = vadd.f32 %v1743, %v1993
      %v2118 = vadd.f32 %v1744, %v1998
      %v2119 = vadd.f32 %v1745, %v2001
      %v2120 = vadd.f32 %v1746, %v2006
      %v2121 = vadd.f32 %v1747, %v2009
      %v2122 = vadd.f32 %v1748, %v2014
      %v2123 = vadd.f32 %v1749, %v2017
      %v2124 = vadd.f32 %v1750, %v2022
      %v2125 = vadd.f32 %v1751, %v2025
      %v2126 = vadd.f32 %v1752, %v2030
      %v2127 = vadd.f32 %v1753, %v2033
      %v2128 = vadd.f32 %v1754, %v2038
      %v2129 = vadd.f32 %v1755, %v2041
      %v2130 = vadd.f32 %v1756, %v2046
      %v2131 = vadd.f32 %v1757, %v2049
      %v2132 = vadd.f32 %v1758, %v2054
      %v2133 = vadd.f32 %v1759, %v2057
      %v2134 = vadd.f32 %v1760, %v2062
      %v2135 = vadd.f32 %v1761, %v2065
      %v2136 = vadd.f32 %v1762, %v2070
      %v2137 = vadd.f32 %v1763, %v2073
      %v2138 = vadd.f32 %v1764, %v2078
      %v2139 = vadd.f32 %v1765, %v2081
      %v2140 = vadd.f32 %v1766, %v2086
      %v2141 = vadd.f32 %v1767, %v2089
      %v2142 = vadd.f32 %v1768, %v2094
      %v2143 = vadd.f32 %v1769, %v2097
      %v2144 = vadd.f32 %v1770, %v2102
      %v2145 = vadd.f32 %v1771, %v2105
      %v2146 = vadd.f32 %v1772, %v2110
      %v2147 = vadd.f32 %v1773, %v2113
      %v2149 = vshrl.u32 %v1774, 16
      %v2151 = vrot.slane %v2149, 4
      %v2152 = vshll.u32 %v1774, 16
      %v2154 = vrot.slane %v2152, 5
      %v2155 = vor.u32 %v2151, %v2154
      %v2156 = vrot.slane %v2155, 4
      %v2158 = vshll.u32 %v1775, 16
      %v2160 = vrot.slane %v2158, 5
      %v2161 = vsel %vm408, %v2156, %v2160
      %v2162 = vshrl.u32 %v1775, 16
      %v2164 = vrot.slane %v2162, 4
      %v2165 = vor.u32 %v2164, %v2160
      %v2166 = vrot.slane %v2165, 4
      %v2168 = vshll.u32 %v1776, 16
      %v2170 = vrot.slane %v2168, 5
      %v2171 = vsel %vm408, %v2166, %v2170
      %v2173 = vshrl.u32 %v1777, 16
      %v2175 = vrot.slane %v2173, 4
      %v2176 = vshll.u32 %v1777, 16
      %v2178 = vrot.slane %v2176, 5
      %v2179 = vor.u32 %v2175, %v2178
      %v2180 = vrot.slane %v2179, 4
      %v2182 = vshll.u32 %v1778, 16
      %v2184 = vrot.slane %v2182, 5
      %v2185 = vsel %vm408, %v2180, %v2184
      %v2186 = vshrl.u32 %v1778, 16
      %v2188 = vrot.slane %v2186, 4
      %v2189 = vor.u32 %v2188, %v2184
      %v2190 = vrot.slane %v2189, 4
      %v2192 = vshll.u32 %v1779, 16
      %v2194 = vrot.slane %v2192, 5
      %v2195 = vsel %vm408, %v2190, %v2194
      %v2197 = vshrl.u32 %v1780, 16
      %v2199 = vrot.slane %v2197, 4
      %v2200 = vshll.u32 %v1780, 16
      %v2202 = vrot.slane %v2200, 5
      %v2203 = vor.u32 %v2199, %v2202
      %v2204 = vrot.slane %v2203, 4
      %v2206 = vshll.u32 %v1781, 16
      %v2208 = vrot.slane %v2206, 5
      %v2209 = vsel %vm408, %v2204, %v2208
      %v2210 = vshrl.u32 %v1781, 16
      %v2212 = vrot.slane %v2210, 4
      %v2213 = vor.u32 %v2212, %v2208
      %v2214 = vrot.slane %v2213, 4
      %v2216 = vshll.u32 %v1782, 16
      %v2218 = vrot.slane %v2216, 5
      %v2219 = vsel %vm408, %v2214, %v2218
      %v2221 = vshrl.u32 %v1783, 16
      %v2223 = vrot.slane %v2221, 4
      %v2224 = vshll.u32 %v1783, 16
      %v2226 = vrot.slane %v2224, 5
      %v2227 = vor.u32 %v2223, %v2226
      %v2228 = vrot.slane %v2227, 4
      %v2230 = vshll.u32 %v1784, 16
      %v2232 = vrot.slane %v2230, 5
      %v2233 = vsel %vm408, %v2228, %v2232
      %v2234 = vshrl.u32 %v1784, 16
      %v2236 = vrot.slane %v2234, 4
      %v2237 = vor.u32 %v2236, %v2232
      %v2238 = vrot.slane %v2237, 4
      %v2240 = vshll.u32 %v1785, 16
      %v2242 = vrot.slane %v2240, 5
      %v2243 = vsel %vm408, %v2238, %v2242
      %v2245 = vshrl.u32 %v1786, 16
      %v2247 = vrot.slane %v2245, 4
      %v2248 = vshll.u32 %v1786, 16
      %v2250 = vrot.slane %v2248, 5
      %v2251 = vor.u32 %v2247, %v2250
      %v2252 = vrot.slane %v2251, 4
      %v2254 = vshll.u32 %v1787, 16
      %v2256 = vrot.slane %v2254, 5
      %v2257 = vsel %vm408, %v2252, %v2256
      %v2258 = vshrl.u32 %v1787, 16
      %v2260 = vrot.slane %v2258, 4
      %v2261 = vor.u32 %v2260, %v2256
      %v2262 = vrot.slane %v2261, 4
      %v2264 = vshll.u32 %v1788, 16
      %v2266 = vrot.slane %v2264, 5
      %v2267 = vsel %vm408, %v2262, %v2266
      %v2269 = vshrl.u32 %v1789, 16
      %v2271 = vrot.slane %v2269, 4
      %v2272 = vshll.u32 %v1789, 16
      %v2274 = vrot.slane %v2272, 5
      %v2275 = vor.u32 %v2271, %v2274
      %v2276 = vrot.slane %v2275, 4
      %v2278 = vshll.u32 %v1790, 16
      %v2280 = vrot.slane %v2278, 5
      %v2281 = vsel %vm408, %v2276, %v2280
      %v2282 = vshrl.u32 %v1790, 16
      %v2284 = vrot.slane %v2282, 4
      %v2285 = vor.u32 %v2284, %v2280
      %v2286 = vrot.slane %v2285, 4
      %v2288 = vshll.u32 %v1791, 16
      %v2290 = vrot.slane %v2288, 5
      %v2291 = vsel %vm408, %v2286, %v2290
      %v2293 = vshrl.u32 %v1792, 16
      %v2295 = vrot.slane %v2293, 4
      %v2296 = vshll.u32 %v1792, 16
      %v2298 = vrot.slane %v2296, 5
      %v2299 = vor.u32 %v2295, %v2298
      %v2300 = vrot.slane %v2299, 4
      %v2302 = vshll.u32 %v1793, 16
      %v2304 = vrot.slane %v2302, 5
      %v2305 = vsel %vm408, %v2300, %v2304
      %v2306 = vshrl.u32 %v1793, 16
      %v2308 = vrot.slane %v2306, 4
      %v2309 = vor.u32 %v2308, %v2304
      %v2310 = vrot.slane %v2309, 4
      %v2312 = vshll.u32 %v1794, 16
      %v2314 = vrot.slane %v2312, 5
      %v2315 = vsel %vm408, %v2310, %v2314
      %v2317 = vshrl.u32 %v1795, 16
      %v2319 = vrot.slane %v2317, 4
      %v2320 = vshll.u32 %v1795, 16
      %v2322 = vrot.slane %v2320, 5
      %v2323 = vor.u32 %v2319, %v2322
      %v2324 = vrot.slane %v2323, 4
      %v2326 = vshll.u32 %v1796, 16
      %v2328 = vrot.slane %v2326, 5
      %v2329 = vsel %vm408, %v2324, %v2328
      %v2330 = vshrl.u32 %v1796, 16
      %v2332 = vrot.slane %v2330, 4
      %v2333 = vor.u32 %v2332, %v2328
      %v2334 = vrot.slane %v2333, 4
      %v2336 = vshll.u32 %v1797, 16
      %v2338 = vrot.slane %v2336, 5
      %v2339 = vsel %vm408, %v2334, %v2338
      %v2341 = vshrl.u32 %v1798, 16
      %v2343 = vrot.slane %v2341, 4
      %v2344 = vshll.u32 %v1798, 16
      %v2346 = vrot.slane %v2344, 5
      %v2347 = vor.u32 %v2343, %v2346
      %v2348 = vrot.slane %v2347, 4
      %v2350 = vshll.u32 %v1799, 16
      %v2352 = vrot.slane %v2350, 5
      %v2353 = vsel %vm408, %v2348, %v2352
      %v2354 = vshrl.u32 %v1799, 16
      %v2356 = vrot.slane %v2354, 4
      %v2357 = vor.u32 %v2356, %v2352
      %v2358 = vrot.slane %v2357, 4
      %v2360 = vshll.u32 %v1800, 16
      %v2362 = vrot.slane %v2360, 5
      %v2363 = vsel %vm408, %v2358, %v2362
      %v2365 = vshrl.u32 %v1801, 16
      %v2367 = vrot.slane %v2365, 4
      %v2368 = vshll.u32 %v1801, 16
      %v2370 = vrot.slane %v2368, 5
      %v2371 = vor.u32 %v2367, %v2370
      %v2372 = vrot.slane %v2371, 4
      %v2374 = vshll.u32 %v1802, 16
      %v2376 = vrot.slane %v2374, 5
      %v2377 = vsel %vm408, %v2372, %v2376
      %v2378 = vshrl.u32 %v1802, 16
      %v2380 = vrot.slane %v2378, 4
      %v2381 = vor.u32 %v2380, %v2376
      %v2382 = vrot.slane %v2381, 4
      %v2384 = vshll.u32 %v1803, 16
      %v2386 = vrot.slane %v2384, 5
      %v2387 = vsel %vm408, %v2382, %v2386
      %v2389 = vshrl.u32 %v1804, 16
      %v2391 = vrot.slane %v2389, 4
      %v2392 = vshll.u32 %v1804, 16
      %v2394 = vrot.slane %v2392, 5
      %v2395 = vor.u32 %v2391, %v2394
      %v2396 = vrot.slane %v2395, 4
      %v2398 = vshll.u32 %v1805, 16
      %v2400 = vrot.slane %v2398, 5
      %v2401 = vsel %vm408, %v2396, %v2400
      %v2402 = vshrl.u32 %v1805, 16
      %v2404 = vrot.slane %v2402, 4
      %v2405 = vor.u32 %v2404, %v2400
      %v2406 = vrot.slane %v2405, 4
      %v2408 = vshll.u32 %v1806, 16
      %v2410 = vrot.slane %v2408, 5
      %v2411 = vsel %vm408, %v2406, %v2410
      %v2413 = vshrl.u32 %v1807, 16
      %v2415 = vrot.slane %v2413, 4
      %v2416 = vshll.u32 %v1807, 16
      %v2418 = vrot.slane %v2416, 5
      %v2419 = vor.u32 %v2415, %v2418
      %v2420 = vrot.slane %v2419, 4
      %v2422 = vshll.u32 %v1808, 16
      %v2424 = vrot.slane %v2422, 5
      %v2425 = vsel %vm408, %v2420, %v2424
      %v2426 = vshrl.u32 %v1808, 16
      %v2428 = vrot.slane %v2426, 4
      %v2429 = vor.u32 %v2428, %v2424
      %v2430 = vrot.slane %v2429, 4
      %v2432 = vshll.u32 %v1809, 16
      %v2434 = vrot.slane %v2432, 5
      %v2435 = vsel %vm408, %v2430, %v2434
      %v2437 = vshrl.u32 %v1810, 16
      %v2439 = vrot.slane %v2437, 4
      %v2440 = vshll.u32 %v1810, 16
      %v2442 = vrot.slane %v2440, 5
      %v2443 = vor.u32 %v2439, %v2442
      %v2444 = vrot.slane %v2443, 4
      %v2446 = vshll.u32 %v1811, 16
      %v2448 = vrot.slane %v2446, 5
      %v2449 = vsel %vm408, %v2444, %v2448
      %v2450 = vshrl.u32 %v1811, 16
      %v2452 = vrot.slane %v2450, 4
      %v2453 = vor.u32 %v2452, %v2448
      %v2454 = vrot.slane %v2453, 4
      %v2456 = vshll.u32 %v1812, 16
      %v2458 = vrot.slane %v2456, 5
      %v2459 = vsel %vm408, %v2454, %v2458
      %v2461 = vshrl.u32 %v1813, 16
      %v2463 = vrot.slane %v2461, 4
      %v2464 = vshll.u32 %v1813, 16
      %v2466 = vrot.slane %v2464, 5
      %v2467 = vor.u32 %v2463, %v2466
      %v2468 = vrot.slane %v2467, 4
      %v2470 = vshll.u32 %v1814, 16
      %v2472 = vrot.slane %v2470, 5
      %v2473 = vsel %vm408, %v2468, %v2472
      %v2474 = vshrl.u32 %v1814, 16
      %v2476 = vrot.slane %v2474, 4
      %v2477 = vor.u32 %v2476, %v2472
      %v2478 = vrot.slane %v2477, 4
      %v2480 = vshll.u32 %v1815, 16
      %v2482 = vrot.slane %v2480, 5
      %v2483 = vsel %vm408, %v2478, %v2482
      %v2485 = vshrl.u32 %v1816, 16
      %v2487 = vrot.slane %v2485, 4
      %v2488 = vshll.u32 %v1816, 16
      %v2490 = vrot.slane %v2488, 5
      %v2491 = vor.u32 %v2487, %v2490
      %v2492 = vrot.slane %v2491, 4
      %v2494 = vshll.u32 %v1817, 16
      %v2496 = vrot.slane %v2494, 5
      %v2497 = vsel %vm408, %v2492, %v2496
      %v2498 = vshrl.u32 %v1817, 16
      %v2500 = vrot.slane %v2498, 4
      %v2501 = vor.u32 %v2500, %v2496
      %v2502 = vrot.slane %v2501, 4
      %v2504 = vshll.u32 %v1818, 16
      %v2506 = vrot.slane %v2504, 5
      %v2507 = vsel %vm408, %v2502, %v2506
      %v2509 = vshrl.u32 %v1819, 16
      %v2511 = vrot.slane %v2509, 4
      %v2512 = vshll.u32 %v1819, 16
      %v2514 = vrot.slane %v2512, 5
      %v2515 = vor.u32 %v2511, %v2514
      %v2516 = vrot.slane %v2515, 4
      %v2518 = vshll.u32 %v1820, 16
      %v2520 = vrot.slane %v2518, 5
      %v2521 = vsel %vm408, %v2516, %v2520
      %v2522 = vshrl.u32 %v1820, 16
      %v2524 = vrot.slane %v2522, 4
      %v2525 = vor.u32 %v2524, %v2520
      %v2526 = vrot.slane %v2525, 4
      %v2528 = vshll.u32 %v1821, 16
      %v2530 = vrot.slane %v2528, 5
      %v2531 = vsel %vm408, %v2526, %v2530
      %s2532 = scalar_lea.vmem %s3, 16
      %v2533 = vld [vmem:[%s2532] sm:$0xf]
      %v2534 = vunpack.c.l.b16 %v2161
      %v2535 = vunpack.c.l.b16 %v2171
      %v2536 = vunpack.c.l.b16 %v2185
      %v2537 = vunpack.c.l.b16 %v2195
      %v2538 = vunpack.c.l.b16 %v2209
      %v2539 = vunpack.c.l.b16 %v2219
      %v2540 = vunpack.c.l.b16 %v2233
      %v2541 = vunpack.c.l.b16 %v2243
      %v2542 = vunpack.c.l.b16 %v2257
      %v2543 = vunpack.c.l.b16 %v2267
      %v2544 = vunpack.c.l.b16 %v2281
      %v2545 = vunpack.c.l.b16 %v2291
      %v2546 = vunpack.c.l.b16 %v2305
      %v2547 = vunpack.c.l.b16 %v2315
      %v2548 = vunpack.c.l.b16 %v2329
      %v2549 = vunpack.c.l.b16 %v2339
      %v2550 = vunpack.c.l.b16 %v2353
      %v2551 = vunpack.c.l.b16 %v2363
      %v2552 = vunpack.c.l.b16 %v2377
      %v2553 = vunpack.c.l.b16 %v2387
      %v2554 = vunpack.c.l.b16 %v2401
      %v2555 = vunpack.c.l.b16 %v2411
      %v2556 = vunpack.c.l.b16 %v2425
      %v2557 = vunpack.c.l.b16 %v2435
      %v2558 = vunpack.c.l.b16 %v2449
      %v2559 = vunpack.c.l.b16 %v2459
      %v2560 = vunpack.c.l.b16 %v2473
      %v2561 = vunpack.c.l.b16 %v2483
      %v2562 = vunpack.c.l.b16 %v2497
      %v2563 = vunpack.c.l.b16 %v2507
      %v2564 = vunpack.c.l.b16 %v2521
      %v2565 = vunpack.c.l.b16 %v2531
      %v2566 = vpack.c.b16 %v2535, %v2534
      %v2567 = vpack.c.b16 %v2537, %v2536
      %v2568 = vpack.c.b16 %v2539, %v2538
      %v2569 = vpack.c.b16 %v2541, %v2540
      %v2570 = vpack.c.b16 %v2543, %v2542
      %v2571 = vpack.c.b16 %v2545, %v2544
      %v2572 = vpack.c.b16 %v2547, %v2546
      %v2573 = vpack.c.b16 %v2549, %v2548
      %v2574 = vpack.c.b16 %v2551, %v2550
      %v2575 = vpack.c.b16 %v2553, %v2552
      %v2576 = vpack.c.b16 %v2555, %v2554
      %v2577 = vpack.c.b16 %v2557, %v2556
      %v2578 = vpack.c.b16 %v2559, %v2558
      %v2579 = vpack.c.b16 %v2561, %v2560
      %v2580 = vpack.c.b16 %v2563, %v2562
      %v2581 = vpack.c.b16 %v2565, %v2564
      %v2583 = vsel %vm843, %v2566, 0
      %v2586 = vsel %vm843, %v2567, 0
      %v2589 = vsel %vm843, %v2568, 0
      %v2592 = vsel %vm843, %v2569, 0
      %v2595 = vsel %vm843, %v2570, 0
      %v2598 = vsel %vm843, %v2571, 0
      %v2601 = vsel %vm843, %v2572, 0
      %v2604 = vsel %vm843, %v2573, 0
      %v2607 = vsel %vm843, %v2574, 0
      %v2610 = vsel %vm843, %v2575, 0
      %v2613 = vsel %vm843, %v2576, 0
      %v2616 = vsel %vm843, %v2577, 0
      %v2619 = vsel %vm843, %v2578, 0
      %v2622 = vsel %vm843, %v2579, 0
      %v2625 = vsel %vm843, %v2580, 0
      %v2628 = vsel %vm843, %v2581, 0
      %v2631 = vsel %vm892, %v2533, 0
      %2633 = vmatprep.subr.bf16.mxu0 0
      %2634 = vmatpush1.bf16.msra.mxu0 %v2631
      %2635 = vmatprep.subr.bf16.mxu0 0
      %2636 = vmatpush1.bf16.msra.mxu0 0
      %2637 = vmatprep.subr.bf16.mxu0 0
      %2638 = vmatpush1.bf16.msra.mxu0 0
      %2639 = vmatprep.subr.bf16.mxu0 0
      %2640 = vmatpush1.bf16.msra.mxu0 0
      %2641 = vmatprep.subr.bf16.mxu0 0
      %2642 = vmatpush1.bf16.msra.mxu0 0
      %2643 = vmatprep.subr.bf16.mxu0 0
      %2644 = vmatpush1.bf16.msra.mxu0 0
      %2645 = vmatprep.subr.bf16.mxu0 0
      %2646 = vmatpush1.bf16.msra.mxu0 0
      %2647 = vmatprep.subr.bf16.mxu0 0
      %2648 = vmatpush1.bf16.msra.mxu0 0
      %2649 = vmatprep.subr.bf16.mxu0 0
      %2650 = vmatpush1.bf16.msra.mxu0 0
      %2651 = vmatprep.subr.bf16.mxu0 0
      %2652 = vmatpush1.bf16.msra.mxu0 0
      %2653 = vmatprep.subr.bf16.mxu0 0
      %2654 = vmatpush1.bf16.msra.mxu0 0
      %2655 = vmatprep.subr.bf16.mxu0 0
      %2656 = vmatpush1.bf16.msra.mxu0 0
      %2657 = vmatprep.subr.bf16.mxu0 0
      %2658 = vmatpush1.bf16.msra.mxu0 0
      %2659 = vmatprep.subr.bf16.mxu0 0
      %2660 = vmatpush1.bf16.msra.mxu0 0
      %2661 = vmatprep.subr.bf16.mxu0 0
      %2662 = vmatpush1.bf16.msra.mxu0 0
      %2663 = vmatprep.subr.bf16.mxu0 0
      %2664 = vmatpush1.bf16.msra.mxu0 0
      %2665 = vmatprep.mubr.bf16.mxu0 0
      %2666 = vmatmul.mubr.bf16.gmra.mrb[0].mxu0 %v2583
      %v2667 = vpop.f32.mrb[0].mxu0
      %v2668 = vadd.f32 0.0, %v2667
      %v2669 = vpop.f32.mrb[0].mxu0
      %v2670 = vpop.f32.mrb[0].mxu0
      %v2671 = vadd.f32 0.0, %v2670
      %v2672 = vpop.f32.mrb[0].mxu0
      %2673 = vmatprep.mubr.bf16.mxu0 0
      %2674 = vmatmul.mubr.bf16.gmra.mrb[0].mxu0 %v2586
      %v2675 = vpop.f32.mrb[0].mxu0
      %v2676 = vadd.f32 0.0, %v2675
      %v2677 = vpop.f32.mrb[0].mxu0
      %v2678 = vpop.f32.mrb[0].mxu0
      %v2679 = vadd.f32 0.0, %v2678
      %v2680 = vpop.f32.mrb[0].mxu0
      %2681 = vmatprep.mubr.bf16.mxu0 0
      %2682 = vmatmul.mubr.bf16.gmra.mrb[0].mxu0 %v2589
      %v2683 = vpop.f32.mrb[0].mxu0
      %v2684 = vadd.f32 0.0, %v2683
      %v2685 = vpop.f32.mrb[0].mxu0
      %v2686 = vpop.f32.mrb[0].mxu0
      %v2687 = vadd.f32 0.0, %v2686
      %v2688 = vpop.f32.mrb[0].mxu0
      %2689 = vmatprep.mubr.bf16.mxu0 0
      %2690 = vmatmul.mubr.bf16.gmra.mrb[0].mxu0 %v2592
      %v2691 = vpop.f32.mrb[0].mxu0
      %v2692 = vadd.f32 0.0, %v2691
      %v2693 = vpop.f32.mrb[0].mxu0
      %v2694 = vpop.f32.mrb[0].mxu0
      %v2695 = vadd.f32 0.0, %v2694
      %v2696 = vpop.f32.mrb[0].mxu0
      %2697 = vmatprep.mubr.bf16.mxu0 0
      %2698 = vmatmul.mubr.bf16.gmra.mrb[0].mxu0 %v2595
      %v2699 = vpop.f32.mrb[0].mxu0
      %v2700 = vadd.f32 0.0, %v2699
      %v2701 = vpop.f32.mrb[0].mxu0
      %v2702 = vpop.f32.mrb[0].mxu0
      %v2703 = vadd.f32 0.0, %v2702
      %v2704 = vpop.f32.mrb[0].mxu0
      %2705 = vmatprep.mubr.bf16.mxu0 0
      %2706 = vmatmul.mubr.bf16.gmra.mrb[0].mxu0 %v2598
      %v2707 = vpop.f32.mrb[0].mxu0
      %v2708 = vadd.f32 0.0, %v2707
      %v2709 = vpop.f32.mrb[0].mxu0
      %v2710 = vpop.f32.mrb[0].mxu0
      %v2711 = vadd.f32 0.0, %v2710
      %v2712 = vpop.f32.mrb[0].mxu0
      %2713 = vmatprep.mubr.bf16.mxu0 0
      %2714 = vmatmul.mubr.bf16.gmra.mrb[0].mxu0 %v2601
      %v2715 = vpop.f32.mrb[0].mxu0
      %v2716 = vadd.f32 0.0, %v2715
      %v2717 = vpop.f32.mrb[0].mxu0
      %v2718 = vpop.f32.mrb[0].mxu0
      %v2719 = vadd.f32 0.0, %v2718
      %v2720 = vpop.f32.mrb[0].mxu0
      %2721 = vmatprep.mubr.bf16.mxu0 0
      %2722 = vmatmul.mubr.bf16.gmra.mrb[0].mxu0 %v2604
      %v2723 = vpop.f32.mrb[0].mxu0
      %v2724 = vadd.f32 0.0, %v2723
      %v2725 = vpop.f32.mrb[0].mxu0
      %v2726 = vpop.f32.mrb[0].mxu0
      %v2727 = vadd.f32 0.0, %v2726
      %v2728 = vpop.f32.mrb[0].mxu0
      %2729 = vmatprep.mubr.bf16.mxu0 0
      %2730 = vmatmul.mubr.bf16.gmra.mrb[0].mxu0 %v2607
      %v2731 = vpop.f32.mrb[0].mxu0
      %v2732 = vadd.f32 0.0, %v2731
      %v2733 = vpop.f32.mrb[0].mxu0
      %v2734 = vpop.f32.mrb[0].mxu0
      %v2735 = vadd.f32 0.0, %v2734
      %v2736 = vpop.f32.mrb[0].mxu0
      %2737 = vmatprep.mubr.bf16.mxu0 0
      %2738 = vmatmul.mubr.bf16.gmra.mrb[0].mxu0 %v2610
      %v2739 = vpop.f32.mrb[0].mxu0
      %v2740 = vadd.f32 0.0, %v2739
      %v2741 = vpop.f32.mrb[0].mxu0
      %v2742 = vpop.f32.mrb[0].mxu0
      %v2743 = vadd.f32 0.0, %v2742
      %v2744 = vpop.f32.mrb[0].mxu0
      %2745 = vmatprep.mubr.bf16.mxu0 0
      %2746 = vmatmul.mubr.bf16.gmra.mrb[0].mxu0 %v2613
      %v2747 = vpop.f32.mrb[0].mxu0
      %v2748 = vadd.f32 0.0, %v2747
      %v2749 = vpop.f32.mrb[0].mxu0
      %v2750 = vpop.f32.mrb[0].mxu0
      %v2751 = vadd.f32 0.0, %v2750
      %v2752 = vpop.f32.mrb[0].mxu0
      %2753 = vmatprep.mubr.bf16.mxu0 0
      %2754 = vmatmul.mubr.bf16.gmra.mrb[0].mxu0 %v2616
      %v2755 = vpop.f32.mrb[0].mxu0
      %v2756 = vadd.f32 0.0, %v2755
      %v2757 = vpop.f32.mrb[0].mxu0
      %v2758 = vpop.f32.mrb[0].mxu0
      %v2759 = vadd.f32 0.0, %v2758
      %v2760 = vpop.f32.mrb[0].mxu0
      %2761 = vmatprep.mubr.bf16.mxu0 0
      %2762 = vmatmul.mubr.bf16.gmra.mrb[0].mxu0 %v2619
      %v2763 = vpop.f32.mrb[0].mxu0
      %v2764 = vadd.f32 0.0, %v2763
      %v2765 = vpop.f32.mrb[0].mxu0
      %v2766 = vpop.f32.mrb[0].mxu0
      %v2767 = vadd.f32 0.0, %v2766
      %v2768 = vpop.f32.mrb[0].mxu0
      %2769 = vmatprep.mubr.bf16.mxu0 0
      %2770 = vmatmul.mubr.bf16.gmra.mrb[0].mxu0 %v2622
      %v2771 = vpop.f32.mrb[0].mxu0
      %v2772 = vadd.f32 0.0, %v2771
      %v2773 = vpop.f32.mrb[0].mxu0
      %v2774 = vpop.f32.mrb[0].mxu0
      %v2775 = vadd.f32 0.0, %v2774
      %v2776 = vpop.f32.mrb[0].mxu0
      %2777 = vmatprep.mubr.bf16.mxu0 0
      %2778 = vmatmul.mubr.bf16.gmra.mrb[0].mxu0 %v2625
      %v2779 = vpop.f32.mrb[0].mxu0
      %v2780 = vadd.f32 0.0, %v2779
      %v2781 = vpop.f32.mrb[0].mxu0
      %v2782 = vpop.f32.mrb[0].mxu0
      %v2783 = vadd.f32 0.0, %v2782
      %v2784 = vpop.f32.mrb[0].mxu0
      %2785 = vmatprep.mubr.bf16.mxu0 0
      %2786 = vmatmul.mubr.bf16.gmra.mrb[0].mxu0 %v2628
      %v2787 = vpop.f32.mrb[0].mxu0
      %v2788 = vadd.f32 0.0, %v2787
      %v2789 = vpop.f32.mrb[0].mxu0
      %v2790 = vpop.f32.mrb[0].mxu0
      %v2791 = vadd.f32 0.0, %v2790
      %v2792 = vpop.f32.mrb[0].mxu0
      %2793 = vdwg.mxu0
      %v2794 = vadd.f32 %v2116, %v2668
      %v2795 = vadd.f32 %v2117, %v2671
      %v2796 = vadd.f32 %v2118, %v2676
      %v2797 = vadd.f32 %v2119, %v2679
      %v2798 = vadd.f32 %v2120, %v2684
      %v2799 = vadd.f32 %v2121, %v2687
      %v2800 = vadd.f32 %v2122, %v2692
      %v2801 = vadd.f32 %v2123, %v2695
      %v2802 = vadd.f32 %v2124, %v2700
      %v2803 = vadd.f32 %v2125, %v2703
      %v2804 = vadd.f32 %v2126, %v2708
      %v2805 = vadd.f32 %v2127, %v2711
      %v2806 = vadd.f32 %v2128, %v2716
      %v2807 = vadd.f32 %v2129, %v2719
      %v2808 = vadd.f32 %v2130, %v2724
      %v2809 = vadd.f32 %v2131, %v2727
      %v2810 = vadd.f32 %v2132, %v2732
      %v2811 = vadd.f32 %v2133, %v2735
      %v2812 = vadd.f32 %v2134, %v2740
      %v2813 = vadd.f32 %v2135, %v2743
      %v2814 = vadd.f32 %v2136, %v2748
      %v2815 = vadd.f32 %v2137, %v2751
      %v2816 = vadd.f32 %v2138, %v2756
      %v2817 = vadd.f32 %v2139, %v2759
      %v2818 = vadd.f32 %v2140, %v2764
      %v2819 = vadd.f32 %v2141, %v2767
      %v2820 = vadd.f32 %v2142, %v2772
      %v2821 = vadd.f32 %v2143, %v2775
      %v2822 = vadd.f32 %v2144, %v2780
      %v2823 = vadd.f32 %v2145, %v2783
      %v2824 = vadd.f32 %v2146, %v2788
      %v2825 = vadd.f32 %v2147, %v2791
      %v2842 = vrot.slane %v1774, 5
      %v2843 = vrot.slane %v2842, 4
      %v2844 = vrot.slane %v1775, 5
      %v2845 = vsel %vm1367, %v2843, %v2844
      %v2846 = vrot.slane %v2844, 4
      %v2847 = vrot.slane %v1776, 5
      %v2848 = vsel %vm1367, %v2846, %v2847
      %v2849 = vrot.slane %v1777, 5
      %v2850 = vrot.slane %v2849, 4
      %v2851 = vrot.slane %v1778, 5
      %v2852 = vsel %vm1367, %v2850, %v2851
      %v2853 = vrot.slane %v2851, 4
      %v2854 = vrot.slane %v1779, 5
      %v2855 = vsel %vm1367, %v2853, %v2854
      %v2856 = vrot.slane %v1780, 5
      %v2857 = vrot.slane %v2856, 4
      %v2858 = vrot.slane %v1781, 5
      %v2859 = vsel %vm1367, %v2857, %v2858
      %v2860 = vrot.slane %v2858, 4
      %v2861 = vrot.slane %v1782, 5
      %v2862 = vsel %vm1367, %v2860, %v2861
      %v2863 = vrot.slane %v1783, 5
      %v2864 = vrot.slane %v2863, 4
      %v2865 = vrot.slane %v1784, 5
      %v2866 = vsel %vm1367, %v2864, %v2865
      %v2867 = vrot.slane %v2865, 4
      %v2868 = vrot.slane %v1785, 5
      %v2869 = vsel %vm1367, %v2867, %v2868
      %v2870 = vrot.slane %v1786, 5
      %v2871 = vrot.slane %v2870, 4
      %v2872 = vrot.slane %v1787, 5
      %v2873 = vsel %vm1367, %v2871, %v2872
      %v2874 = vrot.slane %v2872, 4
      %v2875 = vrot.slane %v1788, 5
      %v2876 = vsel %vm1367, %v2874, %v2875
      %v2877 = vrot.slane %v1789, 5
      %v2878 = vrot.slane %v2877, 4
      %v2879 = vrot.slane %v1790, 5
      %v2880 = vsel %vm1367, %v2878, %v2879
      %v2881 = vrot.slane %v2879, 4
      %v2882 = vrot.slane %v1791, 5
      %v2883 = vsel %vm1367, %v2881, %v2882
      %v2884 = vrot.slane %v1792, 5
      %v2885 = vrot.slane %v2884, 4
      %v2886 = vrot.slane %v1793, 5
      %v2887 = vsel %vm1367, %v2885, %v2886
      %v2888 = vrot.slane %v2886, 4
      %v2889 = vrot.slane %v1794, 5
      %v2890 = vsel %vm1367, %v2888, %v2889
      %v2891 = vrot.slane %v1795, 5
      %v2892 = vrot.slane %v2891, 4
      %v2893 = vrot.slane %v1796, 5
      %v2894 = vsel %vm1367, %v2892, %v2893
      %v2895 = vrot.slane %v2893, 4
      %v2896 = vrot.slane %v1797, 5
      %v2897 = vsel %vm1367, %v2895, %v2896
      %v2898 = vrot.slane %v1798, 5
      %v2899 = vrot.slane %v2898, 4
      %v2900 = vrot.slane %v1799, 5
      %v2901 = vsel %vm1367, %v2899, %v2900
      %v2902 = vrot.slane %v2900, 4
      %v2903 = vrot.slane %v1800, 5
      %v2904 = vsel %vm1367, %v2902, %v2903
      %v2905 = vrot.slane %v1801, 5
      %v2906 = vrot.slane %v2905, 4
      %v2907 = vrot.slane %v1802, 5
      %v2908 = vsel %vm1367, %v2906, %v2907
      %v2909 = vrot.slane %v2907, 4
      %v2910 = vrot.slane %v1803, 5
      %v2911 = vsel %vm1367, %v2909, %v2910
      %v2912 = vrot.slane %v1804, 5
      %v2913 = vrot.slane %v2912, 4
      %v2914 = vrot.slane %v1805, 5
      %v2915 = vsel %vm1367, %v2913, %v2914
      %v2916 = vrot.slane %v2914, 4
      %v2917 = vrot.slane %v1806, 5
      %v2918 = vsel %vm1367, %v2916, %v2917
      %v2919 = vrot.slane %v1807, 5
      %v2920 = vrot.slane %v2919, 4
      %v2921 = vrot.slane %v1808, 5
      %v2922 = vsel %vm1367, %v2920, %v2921
      %v2923 = vrot.slane %v2921, 4
      %v2924 = vrot.slane %v1809, 5
      %v2925 = vsel %vm1367, %v2923, %v2924
      %v2926 = vrot.slane %v1810, 5
      %v2927 = vrot.slane %v2926, 4
      %v2928 = vrot.slane %v1811, 5
      %v2929 = vsel %vm1367, %v2927, %v2928
      %v2930 = vrot.slane %v2928, 4
      %v2931 = vrot.slane %v1812, 5
      %v2932 = vsel %vm1367, %v2930, %v2931
      %v2933 = vrot.slane %v1813, 5
      %v2934 = vrot.slane %v2933, 4
      %v2935 = vrot.slane %v1814, 5
      %v2936 = vsel %vm1367, %v2934, %v2935
      %v2937 = vrot.slane %v2935, 4
      %v2938 = vrot.slane %v1815, 5
      %v2939 = vsel %vm1367, %v2937, %v2938
      %v2940 = vrot.slane %v1816, 5
      %v2941 = vrot.slane %v2940, 4
      %v2942 = vrot.slane %v1817, 5
      %v2943 = vsel %vm1367, %v2941, %v2942
      %v2944 = vrot.slane %v2942, 4
      %v2945 = vrot.slane %v1818, 5
      %v2946 = vsel %vm1367, %v2944, %v2945
      %v2947 = vrot.slane %v1819, 5
      %v2948 = vrot.slane %v2947, 4
      %v2949 = vrot.slane %v1820, 5
      %v2950 = vsel %vm1367, %v2948, %v2949
      %v2951 = vrot.slane %v2949, 4
      %v2952 = vrot.slane %v1821, 5
      %v2953 = vsel %vm1367, %v2951, %v2952
      %s2954 = scalar_lea.vmem %s3, 20
      %v2955 = vld [vmem:[%s2954] sm:$0xf]
      %v2956 = vunpack.c.l.b16 %v2845
      %v2957 = vunpack.c.l.b16 %v2848
      %v2958 = vunpack.c.l.b16 %v2852
      %v2959 = vunpack.c.l.b16 %v2855
      %v2960 = vunpack.c.l.b16 %v2859
      %v2961 = vunpack.c.l.b16 %v2862
      %v2962 = vunpack.c.l.b16 %v2866
      %v2963 = vunpack.c.l.b16 %v2869
      %v2964 = vunpack.c.l.b16 %v2873
      %v2965 = vunpack.c.l.b16 %v2876
      %v2966 = vunpack.c.l.b16 %v2880
      %v2967 = vunpack.c.l.b16 %v2883
      %v2968 = vunpack.c.l.b16 %v2887
      %v2969 = vunpack.c.l.b16 %v2890
      %v2970 = vunpack.c.l.b16 %v2894
      %v2971 = vunpack.c.l.b16 %v2897
      %v2972 = vunpack.c.l.b16 %v2901
      %v2973 = vunpack.c.l.b16 %v2904
      %v2974 = vunpack.c.l.b16 %v2908
      %v2975 = vunpack.c.l.b16 %v2911
      %v2976 = vunpack.c.l.b16 %v2915
      %v2977 = vunpack.c.l.b16 %v2918
      %v2978 = vunpack.c.l.b16 %v2922
      %v2979 = vunpack.c.l.b16 %v2925
      %v2980 = vunpack.c.l.b16 %v2929
      %v2981 = vunpack.c.l.b16 %v2932
      %v2982 = vunpack.c.l.b16 %v2936
      %v2983 = vunpack.c.l.b16 %v2939
      %v2984 = vunpack.c.l.b16 %v2943
      %v2985 = vunpack.c.l.b16 %v2946
      %v2986 = vunpack.c.l.b16 %v2950
      %v2987 = vunpack.c.l.b16 %v2953
      %v2988 = vpack.c.b16 %v2957, %v2956
      %v2989 = vpack.c.b16 %v2959, %v2958
      %v2990 = vpack.c.b16 %v2961, %v2960
      %v2991 = vpack.c.b16 %v2963, %v2962
      %v2992 = vpack.c.b16 %v2965, %v2964
      %v2993 = vpack.c.b16 %v2967, %v2966
      %v2994 = vpack.c.b16 %v2969, %v2968
      %v2995 = vpack.c.b16 %v2971, %v2970
      %v2996 = vpack.c.b16 %v2973, %v2972
      %v2997 = vpack.c.b16 %v2975, %v2974
      %v2998 = vpack.c.b16 %v2977, %v2976
      %v2999 = vpack.c.b16 %v2979, %v2978
      %v3000 = vpack.c.b16 %v2981, %v2980
      %v3001 = vpack.c.b16 %v2983, %v2982
      %v3002 = vpack.c.b16 %v2985, %v2984
      %v3003 = vpack.c.b16 %v2987, %v2986
      %v3005 = vsel %vm843, %v2988, 0
      %v3008 = vsel %vm843, %v2989, 0
      %v3011 = vsel %vm843, %v2990, 0
      %v3014 = vsel %vm843, %v2991, 0
      %v3017 = vsel %vm843, %v2992, 0
      %v3020 = vsel %vm843, %v2993, 0
      %v3023 = vsel %vm843, %v2994, 0
      %v3026 = vsel %vm843, %v2995, 0
      %v3029 = vsel %vm843, %v2996, 0
      %v3032 = vsel %vm843, %v2997, 0
      %v3035 = vsel %vm843, %v2998, 0
      %v3038 = vsel %vm843, %v2999, 0
      %v3041 = vsel %vm843, %v3000, 0
      %v3044 = vsel %vm843, %v3001, 0
      %v3047 = vsel %vm843, %v3002, 0
      %v3050 = vsel %vm843, %v3003, 0
      %v3053 = vsel %vm892, %v2955, 0
      %3055 = vmatprep.subr.bf16.mxu0 0
      %3056 = vmatpush1.bf16.msra.mxu0 %v3053
      %3057 = vmatprep.subr.bf16.mxu0 0
      %3058 = vmatpush1.bf16.msra.mxu0 0
      %3059 = vmatprep.subr.bf16.mxu0 0
      %3060 = vmatpush1.bf16.msra.mxu0 0
      %3061 = vmatprep.subr.bf16.mxu0 0
      %3062 = vmatpush1.bf16.msra.mxu0 0
      %3063 = vmatprep.subr.bf16.mxu0 0
      %3064 = vmatpush1.bf16.msra.mxu0 0
      %3065 = vmatprep.subr.bf16.mxu0 0
      %3066 = vmatpush1.bf16.msra.mxu0 0
      %3067 = vmatprep.subr.bf16.mxu0 0
      %3068 = vmatpush1.bf16.msra.mxu0 0
      %3069 = vmatprep.subr.bf16.mxu0 0
      %3070 = vmatpush1.bf16.msra.mxu0 0
      %3071 = vmatprep.subr.bf16.mxu0 0
      %3072 = vmatpush1.bf16.msra.mxu0 0
      %3073 = vmatprep.subr.bf16.mxu0 0
      %3074 = vmatpush1.bf16.msra.mxu0 0
      %3075 = vmatprep.subr.bf16.mxu0 0
      %3076 = vmatpush1.bf16.msra.mxu0 0
      %3077 = vmatprep.subr.bf16.mxu0 0
      %3078 = vmatpush1.bf16.msra.mxu0 0
      %3079 = vmatprep.subr.bf16.mxu0 0
      %3080 = vmatpush1.bf16.msra.mxu0 0
      %3081 = vmatprep.subr.bf16.mxu0 0
      %3082 = vmatpush1.bf16.msra.mxu0 0
      %3083 = vmatprep.subr.bf16.mxu0 0
      %3084 = vmatpush1.bf16.msra.mxu0 0
      %3085 = vmatprep.subr.bf16.mxu0 0
      %3086 = vmatpush1.bf16.msra.mxu0 0
      %3087 = vmatprep.mubr.bf16.mxu0 0
      %3088 = vmatmul.mubr.bf16.gmra.mrb[0].mxu0 %v3005
      %v3089 = vpop.f32.mrb[0].mxu0
      %v3090 = vadd.f32 0.0, %v3089
      %v3091 = vpop.f32.mrb[0].mxu0
      %v3092 = vpop.f32.mrb[0].mxu0
      %v3093 = vadd.f32 0.0, %v3092
      %v3094 = vpop.f32.mrb[0].mxu0
      %3095 = vmatprep.mubr.bf16.mxu0 0
      %3096 = vmatmul.mubr.bf16.gmra.mrb[0].mxu0 %v3008
      %v3097 = vpop.f32.mrb[0].mxu0
      %v3098 = vadd.f32 0.0, %v3097
      %v3099 = vpop.f32.mrb[0].mxu0
      %v3100 = vpop.f32.mrb[0].mxu0
      %v3101 = vadd.f32 0.0, %v3100
      %v3102 = vpop.f32.mrb[0].mxu0
      %3103 = vmatprep.mubr.bf16.mxu0 0
      %3104 = vmatmul.mubr.bf16.gmra.mrb[0].mxu0 %v3011
      %v3105 = vpop.f32.mrb[0].mxu0
      %v3106 = vadd.f32 0.0, %v3105
      %v3107 = vpop.f32.mrb[0].mxu0
      %v3108 = vpop.f32.mrb[0].mxu0
      %v3109 = vadd.f32 0.0, %v3108
      %v3110 = vpop.f32.mrb[0].mxu0
      %3111 = vmatprep.mubr.bf16.mxu0 0
      %3112 = vmatmul.mubr.bf16.gmra.mrb[0].mxu0 %v3014
      %v3113 = vpop.f32.mrb[0].mxu0
      %v3114 = vadd.f32 0.0, %v3113
      %v3115 = vpop.f32.mrb[0].mxu0
      %v3116 = vpop.f32.mrb[0].mxu0
      %v3117 = vadd.f32 0.0, %v3116
      %v3118 = vpop.f32.mrb[0].mxu0
      %3119 = vmatprep.mubr.bf16.mxu0 0
      %3120 = vmatmul.mubr.bf16.gmra.mrb[0].mxu0 %v3017
      %v3121 = vpop.f32.mrb[0].mxu0
      %v3122 = vadd.f32 0.0, %v3121
      %v3123 = vpop.f32.mrb[0].mxu0
      %v3124 = vpop.f32.mrb[0].mxu0
      %v3125 = vadd.f32 0.0, %v3124
      %v3126 = vpop.f32.mrb[0].mxu0
      %3127 = vmatprep.mubr.bf16.mxu0 0
      %3128 = vmatmul.mubr.bf16.gmra.mrb[0].mxu0 %v3020
      %v3129 = vpop.f32.mrb[0].mxu0
      %v3130 = vadd.f32 0.0, %v3129
      %v3131 = vpop.f32.mrb[0].mxu0
      %v3132 = vpop.f32.mrb[0].mxu0
      %v3133 = vadd.f32 0.0, %v3132
      %v3134 = vpop.f32.mrb[0].mxu0
      %3135 = vmatprep.mubr.bf16.mxu0 0
      %3136 = vmatmul.mubr.bf16.gmra.mrb[0].mxu0 %v3023
      %v3137 = vpop.f32.mrb[0].mxu0
      %v3138 = vadd.f32 0.0, %v3137
      %v3139 = vpop.f32.mrb[0].mxu0
      %v3140 = vpop.f32.mrb[0].mxu0
      %v3141 = vadd.f32 0.0, %v3140
      %v3142 = vpop.f32.mrb[0].mxu0
      %3143 = vmatprep.mubr.bf16.mxu0 0
      %3144 = vmatmul.mubr.bf16.gmra.mrb[0].mxu0 %v3026
      %v3145 = vpop.f32.mrb[0].mxu0
      %v3146 = vadd.f32 0.0, %v3145
      %v3147 = vpop.f32.mrb[0].mxu0
      %v3148 = vpop.f32.mrb[0].mxu0
      %v3149 = vadd.f32 0.0, %v3148
      %v3150 = vpop.f32.mrb[0].mxu0
      %3151 = vmatprep.mubr.bf16.mxu0 0
      %3152 = vmatmul.mubr.bf16.gmra.mrb[0].mxu0 %v3029
      %v3153 = vpop.f32.mrb[0].mxu0
      %v3154 = vadd.f32 0.0, %v3153
      %v3155 = vpop.f32.mrb[0].mxu0
      %v3156 = vpop.f32.mrb[0].mxu0
      %v3157 = vadd.f32 0.0, %v3156
      %v3158 = vpop.f32.mrb[0].mxu0
      %3159 = vmatprep.mubr.bf16.mxu0 0
      %3160 = vmatmul.mubr.bf16.gmra.mrb[0].mxu0 %v3032
      %v3161 = vpop.f32.mrb[0].mxu0
      %v3162 = vadd.f32 0.0, %v3161
      %v3163 = vpop.f32.mrb[0].mxu0
      %v3164 = vpop.f32.mrb[0].mxu0
      %v3165 = vadd.f32 0.0, %v3164
      %v3166 = vpop.f32.mrb[0].mxu0
      %3167 = vmatprep.mubr.bf16.mxu0 0
      %3168 = vmatmul.mubr.bf16.gmra.mrb[0].mxu0 %v3035
      %v3169 = vpop.f32.mrb[0].mxu0
      %v3170 = vadd.f32 0.0, %v3169
      %v3171 = vpop.f32.mrb[0].mxu0
      %v3172 = vpop.f32.mrb[0].mxu0
      %v3173 = vadd.f32 0.0, %v3172
      %v3174 = vpop.f32.mrb[0].mxu0
      %3175 = vmatprep.mubr.bf16.mxu0 0
      %3176 = vmatmul.mubr.bf16.gmra.mrb[0].mxu0 %v3038
      %v3177 = vpop.f32.mrb[0].mxu0
      %v3178 = vadd.f32 0.0, %v3177
      %v3179 = vpop.f32.mrb[0].mxu0
      %v3180 = vpop.f32.mrb[0].mxu0
      %v3181 = vadd.f32 0.0, %v3180
      %v3182 = vpop.f32.mrb[0].mxu0
      %3183 = vmatprep.mubr.bf16.mxu0 0
      %3184 = vmatmul.mubr.bf16.gmra.mrb[0].mxu0 %v3041
      %v3185 = vpop.f32.mrb[0].mxu0
      %v3186 = vadd.f32 0.0, %v3185
      %v3187 = vpop.f32.mrb[0].mxu0
      %v3188 = vpop.f32.mrb[0].mxu0
      %v3189 = vadd.f32 0.0, %v3188
      %v3190 = vpop.f32.mrb[0].mxu0
      %3191 = vmatprep.mubr.bf16.mxu0 0
      %3192 = vmatmul.mubr.bf16.gmra.mrb[0].mxu0 %v3044
      %v3193 = vpop.f32.mrb[0].mxu0
      %v3194 = vadd.f32 0.0, %v3193
      %v3195 = vpop.f32.mrb[0].mxu0
      %v3196 = vpop.f32.mrb[0].mxu0
      %v3197 = vadd.f32 0.0, %v3196
      %v3198 = vpop.f32.mrb[0].mxu0
      %3199 = vmatprep.mubr.bf16.mxu0 0
      %3200 = vmatmul.mubr.bf16.gmra.mrb[0].mxu0 %v3047
      %v3201 = vpop.f32.mrb[0].mxu0
      %v3202 = vadd.f32 0.0, %v3201
      %v3203 = vpop.f32.mrb[0].mxu0
      %v3204 = vpop.f32.mrb[0].mxu0
      %v3205 = vadd.f32 0.0, %v3204
      %v3206 = vpop.f32.mrb[0].mxu0
      %3207 = vmatprep.mubr.bf16.mxu0 0
      %3208 = vmatmul.mubr.bf16.gmra.mrb[0].mxu0 %v3050
      %v3209 = vpop.f32.mrb[0].mxu0
      %v3210 = vadd.f32 0.0, %v3209
      %v3211 = vpop.f32.mrb[0].mxu0
      %v3212 = vpop.f32.mrb[0].mxu0
      %v3213 = vadd.f32 0.0, %v3212
      %v3214 = vpop.f32.mrb[0].mxu0
      %3215 = vdwg.mxu0
      %v3216 = vadd.f32 %v2794, %v3090
      %v3217 = vadd.f32 %v2795, %v3093
      %v3218 = vadd.f32 %v2796, %v3098
      %v3219 = vadd.f32 %v2797, %v3101
      %v3220 = vadd.f32 %v2798, %v3106
      %v3221 = vadd.f32 %v2799, %v3109
      %v3222 = vadd.f32 %v2800, %v3114
      %v3223 = vadd.f32 %v2801, %v3117
      %v3224 = vadd.f32 %v2802, %v3122
      %v3225 = vadd.f32 %v2803, %v3125
      %v3226 = vadd.f32 %v2804, %v3130
      %v3227 = vadd.f32 %v2805, %v3133
      %v3228 = vadd.f32 %v2806, %v3138
      %v3229 = vadd.f32 %v2807, %v3141
      %v3230 = vadd.f32 %v2808, %v3146
      %v3231 = vadd.f32 %v2809, %v3149
      %v3232 = vadd.f32 %v2810, %v3154
      %v3233 = vadd.f32 %v2811, %v3157
      %v3234 = vadd.f32 %v2812, %v3162
      %v3235 = vadd.f32 %v2813, %v3165
      %v3236 = vadd.f32 %v2814, %v3170
      %v3237 = vadd.f32 %v2815, %v3173
      %v3238 = vadd.f32 %v2816, %v3178
      %v3239 = vadd.f32 %v2817, %v3181
      %v3240 = vadd.f32 %v2818, %v3186
      %v3241 = vadd.f32 %v2819, %v3189
      %v3242 = vadd.f32 %v2820, %v3194
      %v3243 = vadd.f32 %v2821, %v3197
      %v3244 = vadd.f32 %v2822, %v3202
      %v3245 = vadd.f32 %v2823, %v3205
      %v3246 = vadd.f32 %v2824, %v3210
      %v3247 = vadd.f32 %v2825, %v3213
      %v3248 = vld [vmem:[%s340] sm:$0xf]
      %v3249 = vld [vmem:[%s340 + $0x4] sm:$0xf]
      %v3250 = vld [vmem:[%s340 + $0x8] sm:$0x1]
      %v3251 = vld [vmem:[%s340 + $0xc] sm:$0xf]
      %v3252 = vld [vmem:[%s340 + $0x10] sm:$0xf]
      %v3253 = vld [vmem:[%s340 + $0x14] sm:$0x1]
      %v3254 = vld [vmem:[%s340 + $0x18] sm:$0xf]
      %v3255 = vld [vmem:[%s340 + $0x1c] sm:$0xf]
      %v3256 = vld [vmem:[%s340 + $0x20] sm:$0x1]
      %v3257 = vld [vmem:[%s340 + $0x24] sm:$0xf]
      %v3258 = vld [vmem:[%s340 + $0x28] sm:$0xf]
      %v3259 = vld [vmem:[%s340 + $0x2c] sm:$0x1]
      %v3260 = vld [vmem:[%s340 + $0x30] sm:$0xf]
      %v3261 = vld [vmem:[%s340 + $0x34] sm:$0xf]
      %v3262 = vld [vmem:[%s340 + $0x38] sm:$0x1]
      %v3263 = vld [vmem:[%s340 + $0x3c] sm:$0xf]
      %v3264 = vld [vmem:[%s340 + $0x40] sm:$0xf]
      %v3265 = vld [vmem:[%s340 + $0x44] sm:$0x1]
      %v3266 = vld [vmem:[%s340 + $0x48] sm:$0xf]
      %v3267 = vld [vmem:[%s340 + $0x4c] sm:$0xf]
      %v3268 = vld [vmem:[%s340 + $0x50] sm:$0x1]
      %v3269 = vld [vmem:[%s340 + $0x54] sm:$0xf]
      %v3270 = vld [vmem:[%s340 + $0x58] sm:$0xf]
      %v3271 = vld [vmem:[%s340 + $0x5c] sm:$0x1]
      %v3272 = vld [vmem:[%s340 + $0x60] sm:$0xf]
      %v3273 = vld [vmem:[%s340 + $0x64] sm:$0xf]
      %v3274 = vld [vmem:[%s340 + $0x68] sm:$0x1]
      %v3275 = vld [vmem:[%s340 + $0x6c] sm:$0xf]
      %v3276 = vld [vmem:[%s340 + $0x70] sm:$0xf]
      %v3277 = vld [vmem:[%s340 + $0x74] sm:$0x1]
      %v3278 = vld [vmem:[%s340 + $0x78] sm:$0xf]
      %v3279 = vld [vmem:[%s340 + $0x7c] sm:$0xf]
      %v3280 = vld [vmem:[%s340 + $0x80] sm:$0x1]
      %v3281 = vld [vmem:[%s340 + $0x84] sm:$0xf]
      %v3282 = vld [vmem:[%s340 + $0x88] sm:$0xf]
      %v3283 = vld [vmem:[%s340 + $0x8c] sm:$0x1]
      %v3284 = vld [vmem:[%s340 + $0x90] sm:$0xf]
      %v3285 = vld [vmem:[%s340 + $0x94] sm:$0xf]
      %v3286 = vld [vmem:[%s340 + $0x98] sm:$0x1]
      %v3287 = vld [vmem:[%s340 + $0x9c] sm:$0xf]
      %v3288 = vld [vmem:[%s340 + $0xa0] sm:$0xf]
      %v3289 = vld [vmem:[%s340 + $0xa4] sm:$0x1]
      %v3290 = vld [vmem:[%s340 + $0xa8] sm:$0xf]
      %v3291 = vld [vmem:[%s340 + $0xac] sm:$0xf]
      %v3292 = vld [vmem:[%s340 + $0xb0] sm:$0x1]
      %v3293 = vld [vmem:[%s340 + $0xb4] sm:$0xf]
      %v3294 = vld [vmem:[%s340 + $0xb8] sm:$0xf]
      %v3295 = vld [vmem:[%s340 + $0xbc] sm:$0x1]
      %s3296 = scalar_lea.vmem %s3, 24
      %v3297 = vld [vmem:[%s3296] sm:$0xf]
      %v3330 = vunpack.c.l.b16 %v3248
      %v3331 = vunpack.c.l.b16 %v3249
      %v3332 = vunpack.c.l.b16 %v3251
      %v3333 = vunpack.c.l.b16 %v3252
      %v3334 = vunpack.c.l.b16 %v3254
      %v3335 = vunpack.c.l.b16 %v3255
      %v3336 = vunpack.c.l.b16 %v3257
      %v3337 = vunpack.c.l.b16 %v3258
      %v3338 = vunpack.c.l.b16 %v3260
      %v3339 = vunpack.c.l.b16 %v3261
      %v3340 = vunpack.c.l.b16 %v3263
      %v3341 = vunpack.c.l.b16 %v3264
      %v3342 = vunpack.c.l.b16 %v3266
      %v3343 = vunpack.c.l.b16 %v3267
      %v3344 = vunpack.c.l.b16 %v3269
      %v3345 = vunpack.c.l.b16 %v3270
      %v3346 = vunpack.c.l.b16 %v3272
      %v3347 = vunpack.c.l.b16 %v3273
      %v3348 = vunpack.c.l.b16 %v3275
      %v3349 = vunpack.c.l.b16 %v3276
      %v3350 = vunpack.c.l.b16 %v3278
      %v3351 = vunpack.c.l.b16 %v3279
      %v3352 = vunpack.c.l.b16 %v3281
      %v3353 = vunpack.c.l.b16 %v3282
      %v3354 = vunpack.c.l.b16 %v3284
      %v3355 = vunpack.c.l.b16 %v3285
      %v3356 = vunpack.c.l.b16 %v3287
      %v3357 = vunpack.c.l.b16 %v3288
      %v3358 = vunpack.c.l.b16 %v3290
      %v3359 = vunpack.c.l.b16 %v3291
      %v3360 = vunpack.c.l.b16 %v3293
      %v3361 = vunpack.c.l.b16 %v3294
      %v3362 = vpack.c.b16 %v3331, %v3330
      %v3363 = vpack.c.b16 %v3333, %v3332
      %v3364 = vpack.c.b16 %v3335, %v3334
      %v3365 = vpack.c.b16 %v3337, %v3336
      %v3366 = vpack.c.b16 %v3339, %v3338
      %v3367 = vpack.c.b16 %v3341, %v3340
      %v3368 = vpack.c.b16 %v3343, %v3342
      %v3369 = vpack.c.b16 %v3345, %v3344
      %v3370 = vpack.c.b16 %v3347, %v3346
      %v3371 = vpack.c.b16 %v3349, %v3348
      %v3372 = vpack.c.b16 %v3351, %v3350
      %v3373 = vpack.c.b16 %v3353, %v3352
      %v3374 = vpack.c.b16 %v3355, %v3354
      %v3375 = vpack.c.b16 %v3357, %v3356
      %v3376 = vpack.c.b16 %v3359, %v3358
      %v3377 = vpack.c.b16 %v3361, %v3360
      %v3379 = vsel %vm843, %v3362, 0
      %v3382 = vsel %vm843, %v3363, 0
      %v3385 = vsel %vm843, %v3364, 0
      %v3388 = vsel %vm843, %v3365, 0
      %v3391 = vsel %vm843, %v3366, 0
      %v3394 = vsel %vm843, %v3367, 0
      %v3397 = vsel %vm843, %v3368, 0
      %v3400 = vsel %vm843, %v3369, 0
      %v3403 = vsel %vm843, %v3370, 0
      %v3406 = vsel %vm843, %v3371, 0
      %v3409 = vsel %vm843, %v3372, 0
      %v3412 = vsel %vm843, %v3373, 0
      %v3415 = vsel %vm843, %v3374, 0
      %v3418 = vsel %vm843, %v3375, 0
      %v3421 = vsel %vm843, %v3376, 0
      %v3424 = vsel %vm843, %v3377, 0
      %v3427 = vsel %vm892, %v3297, 0
      %3429 = vmatprep.subr.bf16.mxu0 0
      %3430 = vmatpush1.bf16.msra.mxu0 %v3427
      %3431 = vmatprep.subr.bf16.mxu0 0
      %3432 = vmatpush1.bf16.msra.mxu0 0
      %3433 = vmatprep.subr.bf16.mxu0 0
      %3434 = vmatpush1.bf16.msra.mxu0 0
      %3435 = vmatprep.subr.bf16.mxu0 0
      %3436 = vmatpush1.bf16.msra.mxu0 0
      %3437 = vmatprep.subr.bf16.mxu0 0
      %3438 = vmatpush1.bf16.msra.mxu0 0
      %3439 = vmatprep.subr.bf16.mxu0 0
      %3440 = vmatpush1.bf16.msra.mxu0 0
      %3441 = vmatprep.subr.bf16.mxu0 0
      %3442 = vmatpush1.bf16.msra.mxu0 0
      %3443 = vmatprep.subr.bf16.mxu0 0
      %3444 = vmatpush1.bf16.msra.mxu0 0
      %3445 = vmatprep.subr.bf16.mxu0 0
      %3446 = vmatpush1.bf16.msra.mxu0 0
      %3447 = vmatprep.subr.bf16.mxu0 0
      %3448 = vmatpush1.bf16.msra.mxu0 0
      %3449 = vmatprep.subr.bf16.mxu0 0
      %3450 = vmatpush1.bf16.msra.mxu0 0
      %3451 = vmatprep.subr.bf16.mxu0 0
      %3452 = vmatpush1.bf16.msra.mxu0 0
      %3453 = vmatprep.subr.bf16.mxu0 0
      %3454 = vmatpush1.bf16.msra.mxu0 0
      %3455 = vmatprep.subr.bf16.mxu0 0
      %3456 = vmatpush1.bf16.msra.mxu0 0
      %3457 = vmatprep.subr.bf16.mxu0 0
      %3458 = vmatpush1.bf16.msra.mxu0 0
      %3459 = vmatprep.subr.bf16.mxu0 0
      %3460 = vmatpush1.bf16.msra.mxu0 0
      %3461 = vmatprep.mubr.bf16.mxu0 0
      %3462 = vmatmul.mubr.bf16.gmra.mrb[0].mxu0 %v3379
      %v3463 = vpop.f32.mrb[0].mxu0
      %v3464 = vadd.f32 0.0, %v3463
      %v3465 = vpop.f32.mrb[0].mxu0
      %v3466 = vpop.f32.mrb[0].mxu0
      %v3467 = vadd.f32 0.0, %v3466
      %v3468 = vpop.f32.mrb[0].mxu0
      %3469 = vmatprep.mubr.bf16.mxu0 0
      %3470 = vmatmul.mubr.bf16.gmra.mrb[0].mxu0 %v3382
      %v3471 = vpop.f32.mrb[0].mxu0
      %v3472 = vadd.f32 0.0, %v3471
      %v3473 = vpop.f32.mrb[0].mxu0
      %v3474 = vpop.f32.mrb[0].mxu0
      %v3475 = vadd.f32 0.0, %v3474
      %v3476 = vpop.f32.mrb[0].mxu0
      %3477 = vmatprep.mubr.bf16.mxu0 0
      %3478 = vmatmul.mubr.bf16.gmra.mrb[0].mxu0 %v3385
      %v3479 = vpop.f32.mrb[0].mxu0
      %v3480 = vadd.f32 0.0, %v3479
      %v3481 = vpop.f32.mrb[0].mxu0
      %v3482 = vpop.f32.mrb[0].mxu0
      %v3483 = vadd.f32 0.0, %v3482
      %v3484 = vpop.f32.mrb[0].mxu0
      %3485 = vmatprep.mubr.bf16.mxu0 0
      %3486 = vmatmul.mubr.bf16.gmra.mrb[0].mxu0 %v3388
      %v3487 = vpop.f32.mrb[0].mxu0
      %v3488 = vadd.f32 0.0, %v3487
      %v3489 = vpop.f32.mrb[0].mxu0
      %v3490 = vpop.f32.mrb[0].mxu0
      %v3491 = vadd.f32 0.0, %v3490
      %v3492 = vpop.f32.mrb[0].mxu0
      %3493 = vmatprep.mubr.bf16.mxu0 0
      %3494 = vmatmul.mubr.bf16.gmra.mrb[0].mxu0 %v3391
      %v3495 = vpop.f32.mrb[0].mxu0
      %v3496 = vadd.f32 0.0, %v3495
      %v3497 = vpop.f32.mrb[0].mxu0
      %v3498 = vpop.f32.mrb[0].mxu0
      %v3499 = vadd.f32 0.0, %v3498
      %v3500 = vpop.f32.mrb[0].mxu0
      %3501 = vmatprep.mubr.bf16.mxu0 0
      %3502 = vmatmul.mubr.bf16.gmra.mrb[0].mxu0 %v3394
      %v3503 = vpop.f32.mrb[0].mxu0
      %v3504 = vadd.f32 0.0, %v3503
      %v3505 = vpop.f32.mrb[0].mxu0
      %v3506 = vpop.f32.mrb[0].mxu0
      %v3507 = vadd.f32 0.0, %v3506
      %v3508 = vpop.f32.mrb[0].mxu0
      %3509 = vmatprep.mubr.bf16.mxu0 0
      %3510 = vmatmul.mubr.bf16.gmra.mrb[0].mxu0 %v3397
      %v3511 = vpop.f32.mrb[0].mxu0
      %v3512 = vadd.f32 0.0, %v3511
      %v3513 = vpop.f32.mrb[0].mxu0
      %v3514 = vpop.f32.mrb[0].mxu0
      %v3515 = vadd.f32 0.0, %v3514
      %v3516 = vpop.f32.mrb[0].mxu0
      %3517 = vmatprep.mubr.bf16.mxu0 0
      %3518 = vmatmul.mubr.bf16.gmra.mrb[0].mxu0 %v3400
      %v3519 = vpop.f32.mrb[0].mxu0
      %v3520 = vadd.f32 0.0, %v3519
      %v3521 = vpop.f32.mrb[0].mxu0
      %v3522 = vpop.f32.mrb[0].mxu0
      %v3523 = vadd.f32 0.0, %v3522
      %v3524 = vpop.f32.mrb[0].mxu0
      %3525 = vmatprep.mubr.bf16.mxu0 0
      %3526 = vmatmul.mubr.bf16.gmra.mrb[0].mxu0 %v3403
      %v3527 = vpop.f32.mrb[0].mxu0
      %v3528 = vadd.f32 0.0, %v3527
      %v3529 = vpop.f32.mrb[0].mxu0
      %v3530 = vpop.f32.mrb[0].mxu0
      %v3531 = vadd.f32 0.0, %v3530
      %v3532 = vpop.f32.mrb[0].mxu0
      %3533 = vmatprep.mubr.bf16.mxu0 0
      %3534 = vmatmul.mubr.bf16.gmra.mrb[0].mxu0 %v3406
      %v3535 = vpop.f32.mrb[0].mxu0
      %v3536 = vadd.f32 0.0, %v3535
      %v3537 = vpop.f32.mrb[0].mxu0
      %v3538 = vpop.f32.mrb[0].mxu0
      %v3539 = vadd.f32 0.0, %v3538
      %v3540 = vpop.f32.mrb[0].mxu0
      %3541 = vmatprep.mubr.bf16.mxu0 0
      %3542 = vmatmul.mubr.bf16.gmra.mrb[0].mxu0 %v3409
      %v3543 = vpop.f32.mrb[0].mxu0
      %v3544 = vadd.f32 0.0, %v3543
      %v3545 = vpop.f32.mrb[0].mxu0
      %v3546 = vpop.f32.mrb[0].mxu0
      %v3547 = vadd.f32 0.0, %v3546
      %v3548 = vpop.f32.mrb[0].mxu0
      %3549 = vmatprep.mubr.bf16.mxu0 0
      %3550 = vmatmul.mubr.bf16.gmra.mrb[0].mxu0 %v3412
      %v3551 = vpop.f32.mrb[0].mxu0
      %v3552 = vadd.f32 0.0, %v3551
      %v3553 = vpop.f32.mrb[0].mxu0
      %v3554 = vpop.f32.mrb[0].mxu0
      %v3555 = vadd.f32 0.0, %v3554
      %v3556 = vpop.f32.mrb[0].mxu0
      %3557 = vmatprep.mubr.bf16.mxu0 0
      %3558 = vmatmul.mubr.bf16.gmra.mrb[0].mxu0 %v3415
      %v3559 = vpop.f32.mrb[0].mxu0
      %v3560 = vadd.f32 0.0, %v3559
      %v3561 = vpop.f32.mrb[0].mxu0
      %v3562 = vpop.f32.mrb[0].mxu0
      %v3563 = vadd.f32 0.0, %v3562
      %v3564 = vpop.f32.mrb[0].mxu0
      %3565 = vmatprep.mubr.bf16.mxu0 0
      %3566 = vmatmul.mubr.bf16.gmra.mrb[0].mxu0 %v3418
      %v3567 = vpop.f32.mrb[0].mxu0
      %v3568 = vadd.f32 0.0, %v3567
      %v3569 = vpop.f32.mrb[0].mxu0
      %v3570 = vpop.f32.mrb[0].mxu0
      %v3571 = vadd.f32 0.0, %v3570
      %v3572 = vpop.f32.mrb[0].mxu0
      %3573 = vmatprep.mubr.bf16.mxu0 0
      %3574 = vmatmul.mubr.bf16.gmra.mrb[0].mxu0 %v3421
      %v3575 = vpop.f32.mrb[0].mxu0
      %v3576 = vadd.f32 0.0, %v3575
      %v3577 = vpop.f32.mrb[0].mxu0
      %v3578 = vpop.f32.mrb[0].mxu0
      %v3579 = vadd.f32 0.0, %v3578
      %v3580 = vpop.f32.mrb[0].mxu0
      %3581 = vmatprep.mubr.bf16.mxu0 0
      %3582 = vmatmul.mubr.bf16.gmra.mrb[0].mxu0 %v3424
      %v3583 = vpop.f32.mrb[0].mxu0
      %v3584 = vadd.f32 0.0, %v3583
      %v3585 = vpop.f32.mrb[0].mxu0
      %v3586 = vpop.f32.mrb[0].mxu0
      %v3587 = vadd.f32 0.0, %v3586
      %v3588 = vpop.f32.mrb[0].mxu0
      %3589 = vdwg.mxu0
      %v3590 = vadd.f32 %v3216, %v3464
      %v3591 = vadd.f32 %v3217, %v3467
      %v3592 = vadd.f32 %v3218, %v3472
      %v3593 = vadd.f32 %v3219, %v3475
      %v3594 = vadd.f32 %v3220, %v3480
      %v3595 = vadd.f32 %v3221, %v3483
      %v3596 = vadd.f32 %v3222, %v3488
      %v3597 = vadd.f32 %v3223, %v3491
      %v3598 = vadd.f32 %v3224, %v3496
      %v3599 = vadd.f32 %v3225, %v3499
      %v3600 = vadd.f32 %v3226, %v3504
      %v3601 = vadd.f32 %v3227, %v3507
      %v3602 = vadd.f32 %v3228, %v3512
      %v3603 = vadd.f32 %v3229, %v3515
      %v3604 = vadd.f32 %v3230, %v3520
      %v3605 = vadd.f32 %v3231, %v3523
      %v3606 = vadd.f32 %v3232, %v3528
      %v3607 = vadd.f32 %v3233, %v3531
      %v3608 = vadd.f32 %v3234, %v3536
      %v3609 = vadd.f32 %v3235, %v3539
      %v3610 = vadd.f32 %v3236, %v3544
      %v3611 = vadd.f32 %v3237, %v3547
      %v3612 = vadd.f32 %v3238, %v3552
      %v3613 = vadd.f32 %v3239, %v3555
      %v3614 = vadd.f32 %v3240, %v3560
      %v3615 = vadd.f32 %v3241, %v3563
      %v3616 = vadd.f32 %v3242, %v3568
      %v3617 = vadd.f32 %v3243, %v3571
      %v3618 = vadd.f32 %v3244, %v3576
      %v3619 = vadd.f32 %v3245, %v3579
      %v3620 = vadd.f32 %v3246, %v3584
      %v3621 = vadd.f32 %v3247, %v3587
      %v3623 = vshrl.u32 %v3248, 16
      %v3625 = vrot.slane %v3623, 4
      %v3626 = vshll.u32 %v3248, 16
      %v3628 = vrot.slane %v3626, 5
      %v3629 = vor.u32 %v3625, %v3628
      %v3630 = vrot.slane %v3629, 4
      %v3632 = vshll.u32 %v3249, 16
      %v3634 = vrot.slane %v3632, 5
      %v3635 = vsel %vm408, %v3630, %v3634
      %v3636 = vshrl.u32 %v3249, 16
      %v3638 = vrot.slane %v3636, 4
      %v3639 = vor.u32 %v3638, %v3634
      %v3640 = vrot.slane %v3639, 4
      %v3642 = vshll.u32 %v3250, 16
      %v3644 = vrot.slane %v3642, 5
      %v3645 = vsel %vm408, %v3640, %v3644
      %v3647 = vshrl.u32 %v3251, 16
      %v3649 = vrot.slane %v3647, 4
      %v3650 = vshll.u32 %v3251, 16
      %v3652 = vrot.slane %v3650, 5
      %v3653 = vor.u32 %v3649, %v3652
      %v3654 = vrot.slane %v3653, 4
      %v3656 = vshll.u32 %v3252, 16
      %v3658 = vrot.slane %v3656, 5
      %v3659 = vsel %vm408, %v3654, %v3658
      %v3660 = vshrl.u32 %v3252, 16
      %v3662 = vrot.slane %v3660, 4
      %v3663 = vor.u32 %v3662, %v3658
      %v3664 = vrot.slane %v3663, 4
      %v3666 = vshll.u32 %v3253, 16
      %v3668 = vrot.slane %v3666, 5
      %v3669 = vsel %vm408, %v3664, %v3668
      %v3671 = vshrl.u32 %v3254, 16
      %v3673 = vrot.slane %v3671, 4
      %v3674 = vshll.u32 %v3254, 16
      %v3676 = vrot.slane %v3674, 5
      %v3677 = vor.u32 %v3673, %v3676
      %v3678 = vrot.slane %v3677, 4
      %v3680 = vshll.u32 %v3255, 16
      %v3682 = vrot.slane %v3680, 5
      %v3683 = vsel %vm408, %v3678, %v3682
      %v3684 = vshrl.u32 %v3255, 16
      %v3686 = vrot.slane %v3684, 4
      %v3687 = vor.u32 %v3686, %v3682
      %v3688 = vrot.slane %v3687, 4
      %v3690 = vshll.u32 %v3256, 16
      %v3692 = vrot.slane %v3690, 5
      %v3693 = vsel %vm408, %v3688, %v3692
      %v3695 = vshrl.u32 %v3257, 16
      %v3697 = vrot.slane %v3695, 4
      %v3698 = vshll.u32 %v3257, 16
      %v3700 = vrot.slane %v3698, 5
      %v3701 = vor.u32 %v3697, %v3700
      %v3702 = vrot.slane %v3701, 4
      %v3704 = vshll.u32 %v3258, 16
      %v3706 = vrot.slane %v3704, 5
      %v3707 = vsel %vm408, %v3702, %v3706
      %v3708 = vshrl.u32 %v3258, 16
      %v3710 = vrot.slane %v3708, 4
      %v3711 = vor.u32 %v3710, %v3706
      %v3712 = vrot.slane %v3711, 4
      %v3714 = vshll.u32 %v3259, 16
      %v3716 = vrot.slane %v3714, 5
      %v3717 = vsel %vm408, %v3712, %v3716
      %v3719 = vshrl.u32 %v3260, 16
      %v3721 = vrot.slane %v3719, 4
      %v3722 = vshll.u32 %v3260, 16
      %v3724 = vrot.slane %v3722, 5
      %v3725 = vor.u32 %v3721, %v3724
      %v3726 = vrot.slane %v3725, 4
      %v3728 = vshll.u32 %v3261, 16
      %v3730 = vrot.slane %v3728, 5
      %v3731 = vsel %vm408, %v3726, %v3730
      %v3732 = vshrl.u32 %v3261, 16
      %v3734 = vrot.slane %v3732, 4
      %v3735 = vor.u32 %v3734, %v3730
      %v3736 = vrot.slane %v3735, 4
      %v3738 = vshll.u32 %v3262, 16
      %v3740 = vrot.slane %v3738, 5
      %v3741 = vsel %vm408, %v3736, %v3740
      %v3743 = vshrl.u32 %v3263, 16
      %v3745 = vrot.slane %v3743, 4
      %v3746 = vshll.u32 %v3263, 16
      %v3748 = vrot.slane %v3746, 5
      %v3749 = vor.u32 %v3745, %v3748
      %v3750 = vrot.slane %v3749, 4
      %v3752 = vshll.u32 %v3264, 16
      %v3754 = vrot.slane %v3752, 5
      %v3755 = vsel %vm408, %v3750, %v3754
      %v3756 = vshrl.u32 %v3264, 16
      %v3758 = vrot.slane %v3756, 4
      %v3759 = vor.u32 %v3758, %v3754
      %v3760 = vrot.slane %v3759, 4
      %v3762 = vshll.u32 %v3265, 16
      %v3764 = vrot.slane %v3762, 5
      %v3765 = vsel %vm408, %v3760, %v3764
      %v3767 = vshrl.u32 %v3266, 16
      %v3769 = vrot.slane %v3767, 4
      %v3770 = vshll.u32 %v3266, 16
      %v3772 = vrot.slane %v3770, 5
      %v3773 = vor.u32 %v3769, %v3772
      %v3774 = vrot.slane %v3773, 4
      %v3776 = vshll.u32 %v3267, 16
      %v3778 = vrot.slane %v3776, 5
      %v3779 = vsel %vm408, %v3774, %v3778
      %v3780 = vshrl.u32 %v3267, 16
      %v3782 = vrot.slane %v3780, 4
      %v3783 = vor.u32 %v3782, %v3778
      %v3784 = vrot.slane %v3783, 4
      %v3786 = vshll.u32 %v3268, 16
      %v3788 = vrot.slane %v3786, 5
      %v3789 = vsel %vm408, %v3784, %v3788
      %v3791 = vshrl.u32 %v3269, 16
      %v3793 = vrot.slane %v3791, 4
      %v3794 = vshll.u32 %v3269, 16
      %v3796 = vrot.slane %v3794, 5
      %v3797 = vor.u32 %v3793, %v3796
      %v3798 = vrot.slane %v3797, 4
      %v3800 = vshll.u32 %v3270, 16
      %v3802 = vrot.slane %v3800, 5
      %v3803 = vsel %vm408, %v3798, %v3802
      %v3804 = vshrl.u32 %v3270, 16
      %v3806 = vrot.slane %v3804, 4
      %v3807 = vor.u32 %v3806, %v3802
      %v3808 = vrot.slane %v3807, 4
      %v3810 = vshll.u32 %v3271, 16
      %v3812 = vrot.slane %v3810, 5
      %v3813 = vsel %vm408, %v3808, %v3812
      %v3815 = vshrl.u32 %v3272, 16
      %v3817 = vrot.slane %v3815, 4
      %v3818 = vshll.u32 %v3272, 16
      %v3820 = vrot.slane %v3818, 5
      %v3821 = vor.u32 %v3817, %v3820
      %v3822 = vrot.slane %v3821, 4
      %v3824 = vshll.u32 %v3273, 16
      %v3826 = vrot.slane %v3824, 5
      %v3827 = vsel %vm408, %v3822, %v3826
      %v3828 = vshrl.u32 %v3273, 16
      %v3830 = vrot.slane %v3828, 4
      %v3831 = vor.u32 %v3830, %v3826
      %v3832 = vrot.slane %v3831, 4
      %v3834 = vshll.u32 %v3274, 16
      %v3836 = vrot.slane %v3834, 5
      %v3837 = vsel %vm408, %v3832, %v3836
      %v3839 = vshrl.u32 %v3275, 16
      %v3841 = vrot.slane %v3839, 4
      %v3842 = vshll.u32 %v3275, 16
      %v3844 = vrot.slane %v3842, 5
      %v3845 = vor.u32 %v3841, %v3844
      %v3846 = vrot.slane %v3845, 4
      %v3848 = vshll.u32 %v3276, 16
      %v3850 = vrot.slane %v3848, 5
      %v3851 = vsel %vm408, %v3846, %v3850
      %v3852 = vshrl.u32 %v3276, 16
      %v3854 = vrot.slane %v3852, 4
      %v3855 = vor.u32 %v3854, %v3850
      %v3856 = vrot.slane %v3855, 4
      %v3858 = vshll.u32 %v3277, 16
      %v3860 = vrot.slane %v3858, 5
      %v3861 = vsel %vm408, %v3856, %v3860
      %v3863 = vshrl.u32 %v3278, 16
      %v3865 = vrot.slane %v3863, 4
      %v3866 = vshll.u32 %v3278, 16
      %v3868 = vrot.slane %v3866, 5
      %v3869 = vor.u32 %v3865, %v3868
      %v3870 = vrot.slane %v3869, 4
      %v3872 = vshll.u32 %v3279, 16
      %v3874 = vrot.slane %v3872, 5
      %v3875 = vsel %vm408, %v3870, %v3874
      %v3876 = vshrl.u32 %v3279, 16
      %v3878 = vrot.slane %v3876, 4
      %v3879 = vor.u32 %v3878, %v3874
      %v3880 = vrot.slane %v3879, 4
      %v3882 = vshll.u32 %v3280, 16
      %v3884 = vrot.slane %v3882, 5
      %v3885 = vsel %vm408, %v3880, %v3884
      %v3887 = vshrl.u32 %v3281, 16
      %v3889 = vrot.slane %v3887, 4
      %v3890 = vshll.u32 %v3281, 16
      %v3892 = vrot.slane %v3890, 5
      %v3893 = vor.u32 %v3889, %v3892
      %v3894 = vrot.slane %v3893, 4
      %v3896 = vshll.u32 %v3282, 16
      %v3898 = vrot.slane %v3896, 5
      %v3899 = vsel %vm408, %v3894, %v3898
      %v3900 = vshrl.u32 %v3282, 16
      %v3902 = vrot.slane %v3900, 4
      %v3903 = vor.u32 %v3902, %v3898
      %v3904 = vrot.slane %v3903, 4
      %v3906 = vshll.u32 %v3283, 16
      %v3908 = vrot.slane %v3906, 5
      %v3909 = vsel %vm408, %v3904, %v3908
      %v3911 = vshrl.u32 %v3284, 16
      %v3913 = vrot.slane %v3911, 4
      %v3914 = vshll.u32 %v3284, 16
      %v3916 = vrot.slane %v3914, 5
      %v3917 = vor.u32 %v3913, %v3916
      %v3918 = vrot.slane %v3917, 4
      %v3920 = vshll.u32 %v3285, 16
      %v3922 = vrot.slane %v3920, 5
      %v3923 = vsel %vm408, %v3918, %v3922
      %v3924 = vshrl.u32 %v3285, 16
      %v3926 = vrot.slane %v3924, 4
      %v3927 = vor.u32 %v3926, %v3922
      %v3928 = vrot.slane %v3927, 4
      %v3930 = vshll.u32 %v3286, 16
      %v3932 = vrot.slane %v3930, 5
      %v3933 = vsel %vm408, %v3928, %v3932
      %v3935 = vshrl.u32 %v3287, 16
      %v3937 = vrot.slane %v3935, 4
      %v3938 = vshll.u32 %v3287, 16
      %v3940 = vrot.slane %v3938, 5
      %v3941 = vor.u32 %v3937, %v3940
      %v3942 = vrot.slane %v3941, 4
      %v3944 = vshll.u32 %v3288, 16
      %v3946 = vrot.slane %v3944, 5
      %v3947 = vsel %vm408, %v3942, %v3946
      %v3948 = vshrl.u32 %v3288, 16
      %v3950 = vrot.slane %v3948, 4
      %v3951 = vor.u32 %v3950, %v3946
      %v3952 = vrot.slane %v3951, 4
      %v3954 = vshll.u32 %v3289, 16
      %v3956 = vrot.slane %v3954, 5
      %v3957 = vsel %vm408, %v3952, %v3956
      %v3959 = vshrl.u32 %v3290, 16
      %v3961 = vrot.slane %v3959, 4
      %v3962 = vshll.u32 %v3290, 16
      %v3964 = vrot.slane %v3962, 5
      %v3965 = vor.u32 %v3961, %v3964
      %v3966 = vrot.slane %v3965, 4
      %v3968 = vshll.u32 %v3291, 16
      %v3970 = vrot.slane %v3968, 5
      %v3971 = vsel %vm408, %v3966, %v3970
      %v3972 = vshrl.u32 %v3291, 16
      %v3974 = vrot.slane %v3972, 4
      %v3975 = vor.u32 %v3974, %v3970
      %v3976 = vrot.slane %v3975, 4
      %v3978 = vshll.u32 %v3292, 16
      %v3980 = vrot.slane %v3978, 5
      %v3981 = vsel %vm408, %v3976, %v3980
      %v3983 = vshrl.u32 %v3293, 16
      %v3985 = vrot.slane %v3983, 4
      %v3986 = vshll.u32 %v3293, 16
      %v3988 = vrot.slane %v3986, 5
      %v3989 = vor.u32 %v3985, %v3988
      %v3990 = vrot.slane %v3989, 4
      %v3992 = vshll.u32 %v3294, 16
      %v3994 = vrot.slane %v3992, 5
      %v3995 = vsel %vm408, %v3990, %v3994
      %v3996 = vshrl.u32 %v3294, 16
      %v3998 = vrot.slane %v3996, 4
      %v3999 = vor.u32 %v3998, %v3994
      %v4000 = vrot.slane %v3999, 4
      %v4002 = vshll.u32 %v3295, 16
      %v4004 = vrot.slane %v4002, 5
      %v4005 = vsel %vm408, %v4000, %v4004
      %s4006 = scalar_lea.vmem %s3, 28
      %v4007 = vld [vmem:[%s4006] sm:$0xf]
      %v4008 = vunpack.c.l.b16 %v3635
      %v4009 = vunpack.c.l.b16 %v3645
      %v4010 = vunpack.c.l.b16 %v3659
      %v4011 = vunpack.c.l.b16 %v3669
      %v4012 = vunpack.c.l.b16 %v3683
      %v4013 = vunpack.c.l.b16 %v3693
      %v4014 = vunpack.c.l.b16 %v3707
      %v4015 = vunpack.c.l.b16 %v3717
      %v4016 = vunpack.c.l.b16 %v3731
      %v4017 = vunpack.c.l.b16 %v3741
      %v4018 = vunpack.c.l.b16 %v3755
      %v4019 = vunpack.c.l.b16 %v3765
      %v4020 = vunpack.c.l.b16 %v3779
      %v4021 = vunpack.c.l.b16 %v3789
      %v4022 = vunpack.c.l.b16 %v3803
      %v4023 = vunpack.c.l.b16 %v3813
      %v4024 = vunpack.c.l.b16 %v3827
      %v4025 = vunpack.c.l.b16 %v3837
      %v4026 = vunpack.c.l.b16 %v3851
      %v4027 = vunpack.c.l.b16 %v3861
      %v4028 = vunpack.c.l.b16 %v3875
      %v4029 = vunpack.c.l.b16 %v3885
      %v4030 = vunpack.c.l.b16 %v3899
      %v4031 = vunpack.c.l.b16 %v3909
      %v4032 = vunpack.c.l.b16 %v3923
      %v4033 = vunpack.c.l.b16 %v3933
      %v4034 = vunpack.c.l.b16 %v3947
      %v4035 = vunpack.c.l.b16 %v3957
      %v4036 = vunpack.c.l.b16 %v3971
      %v4037 = vunpack.c.l.b16 %v3981
      %v4038 = vunpack.c.l.b16 %v3995
      %v4039 = vunpack.c.l.b16 %v4005
      %v4040 = vpack.c.b16 %v4009, %v4008
      %v4041 = vpack.c.b16 %v4011, %v4010
      %v4042 = vpack.c.b16 %v4013, %v4012
      %v4043 = vpack.c.b16 %v4015, %v4014
      %v4044 = vpack.c.b16 %v4017, %v4016
      %v4045 = vpack.c.b16 %v4019, %v4018
      %v4046 = vpack.c.b16 %v4021, %v4020
      %v4047 = vpack.c.b16 %v4023, %v4022
      %v4048 = vpack.c.b16 %v4025, %v4024
      %v4049 = vpack.c.b16 %v4027, %v4026
      %v4050 = vpack.c.b16 %v4029, %v4028
      %v4051 = vpack.c.b16 %v4031, %v4030
      %v4052 = vpack.c.b16 %v4033, %v4032
      %v4053 = vpack.c.b16 %v4035, %v4034
      %v4054 = vpack.c.b16 %v4037, %v4036
      %v4055 = vpack.c.b16 %v4039, %v4038
      %v4057 = vsel %vm843, %v4040, 0
      %v4060 = vsel %vm843, %v4041, 0
      %v4063 = vsel %vm843, %v4042, 0
      %v4066 = vsel %vm843, %v4043, 0
      %v4069 = vsel %vm843, %v4044, 0
      %v4072 = vsel %vm843, %v4045, 0
      %v4075 = vsel %vm843, %v4046, 0
      %v4078 = vsel %vm843, %v4047, 0
      %v4081 = vsel %vm843, %v4048, 0
      %v4084 = vsel %vm843, %v4049, 0
      %v4087 = vsel %vm843, %v4050, 0
      %v4090 = vsel %vm843, %v4051, 0
      %v4093 = vsel %vm843, %v4052, 0
      %v4096 = vsel %vm843, %v4053, 0
      %v4099 = vsel %vm843, %v4054, 0
      %v4102 = vsel %vm843, %v4055, 0
      %v4105 = vsel %vm892, %v4007, 0
      %4107 = vmatprep.subr.bf16.mxu0 0
      %4108 = vmatpush1.bf16.msra.mxu0 %v4105
      %4109 = vmatprep.subr.bf16.mxu0 0
      %4110 = vmatpush1.bf16.msra.mxu0 0
      %4111 = vmatprep.subr.bf16.mxu0 0
      %4112 = vmatpush1.bf16.msra.mxu0 0
      %4113 = vmatprep.subr.bf16.mxu0 0
      %4114 = vmatpush1.bf16.msra.mxu0 0
      %4115 = vmatprep.subr.bf16.mxu0 0
      %4116 = vmatpush1.bf16.msra.mxu0 0
      %4117 = vmatprep.subr.bf16.mxu0 0
      %4118 = vmatpush1.bf16.msra.mxu0 0
      %4119 = vmatprep.subr.bf16.mxu0 0
      %4120 = vmatpush1.bf16.msra.mxu0 0
      %4121 = vmatprep.subr.bf16.mxu0 0
      %4122 = vmatpush1.bf16.msra.mxu0 0
      %4123 = vmatprep.subr.bf16.mxu0 0
      %4124 = vmatpush1.bf16.msra.mxu0 0
      %4125 = vmatprep.subr.bf16.mxu0 0
      %4126 = vmatpush1.bf16.msra.mxu0 0
      %4127 = vmatprep.subr.bf16.mxu0 0
      %4128 = vmatpush1.bf16.msra.mxu0 0
      %4129 = vmatprep.subr.bf16.mxu0 0
      %4130 = vmatpush1.bf16.msra.mxu0 0
      %4131 = vmatprep.subr.bf16.mxu0 0
      %4132 = vmatpush1.bf16.msra.mxu0 0
      %4133 = vmatprep.subr.bf16.mxu0 0
      %4134 = vmatpush1.bf16.msra.mxu0 0
      %4135 = vmatprep.subr.bf16.mxu0 0
      %4136 = vmatpush1.bf16.msra.mxu0 0
      %4137 = vmatprep.subr.bf16.mxu0 0
      %4138 = vmatpush1.bf16.msra.mxu0 0
      %4139 = vmatprep.mubr.bf16.mxu0 0
      %4140 = vmatmul.mubr.bf16.gmra.mrb[0].mxu0 %v4057
      %v4141 = vpop.f32.mrb[0].mxu0
      %v4142 = vadd.f32 0.0, %v4141
      %v4143 = vpop.f32.mrb[0].mxu0
      %v4144 = vpop.f32.mrb[0].mxu0
      %v4145 = vadd.f32 0.0, %v4144
      %v4146 = vpop.f32.mrb[0].mxu0
      %4147 = vmatprep.mubr.bf16.mxu0 0
      %4148 = vmatmul.mubr.bf16.gmra.mrb[0].mxu0 %v4060
      %v4149 = vpop.f32.mrb[0].mxu0
      %v4150 = vadd.f32 0.0, %v4149
      %v4151 = vpop.f32.mrb[0].mxu0
      %v4152 = vpop.f32.mrb[0].mxu0
      %v4153 = vadd.f32 0.0, %v4152
      %v4154 = vpop.f32.mrb[0].mxu0
      %4155 = vmatprep.mubr.bf16.mxu0 0
      %4156 = vmatmul.mubr.bf16.gmra.mrb[0].mxu0 %v4063
      %v4157 = vpop.f32.mrb[0].mxu0
      %v4158 = vadd.f32 0.0, %v4157
      %v4159 = vpop.f32.mrb[0].mxu0
      %v4160 = vpop.f32.mrb[0].mxu0
      %v4161 = vadd.f32 0.0, %v4160
      %v4162 = vpop.f32.mrb[0].mxu0
      %4163 = vmatprep.mubr.bf16.mxu0 0
      %4164 = vmatmul.mubr.bf16.gmra.mrb[0].mxu0 %v4066
      %v4165 = vpop.f32.mrb[0].mxu0
      %v4166 = vadd.f32 0.0, %v4165
      %v4167 = vpop.f32.mrb[0].mxu0
      %v4168 = vpop.f32.mrb[0].mxu0
      %v4169 = vadd.f32 0.0, %v4168
      %v4170 = vpop.f32.mrb[0].mxu0
      %4171 = vmatprep.mubr.bf16.mxu0 0
      %4172 = vmatmul.mubr.bf16.gmra.mrb[0].mxu0 %v4069
      %v4173 = vpop.f32.mrb[0].mxu0
      %v4174 = vadd.f32 0.0, %v4173
      %v4175 = vpop.f32.mrb[0].mxu0
      %v4176 = vpop.f32.mrb[0].mxu0
      %v4177 = vadd.f32 0.0, %v4176
      %v4178 = vpop.f32.mrb[0].mxu0
      %4179 = vmatprep.mubr.bf16.mxu0 0
      %4180 = vmatmul.mubr.bf16.gmra.mrb[0].mxu0 %v4072
      %v4181 = vpop.f32.mrb[0].mxu0
      %v4182 = vadd.f32 0.0, %v4181
      %v4183 = vpop.f32.mrb[0].mxu0
      %v4184 = vpop.f32.mrb[0].mxu0
      %v4185 = vadd.f32 0.0, %v4184
      %v4186 = vpop.f32.mrb[0].mxu0
      %4187 = vmatprep.mubr.bf16.mxu0 0
      %4188 = vmatmul.mubr.bf16.gmra.mrb[0].mxu0 %v4075
      %v4189 = vpop.f32.mrb[0].mxu0
      %v4190 = vadd.f32 0.0, %v4189
      %v4191 = vpop.f32.mrb[0].mxu0
      %v4192 = vpop.f32.mrb[0].mxu0
      %v4193 = vadd.f32 0.0, %v4192
      %v4194 = vpop.f32.mrb[0].mxu0
      %4195 = vmatprep.mubr.bf16.mxu0 0
      %4196 = vmatmul.mubr.bf16.gmra.mrb[0].mxu0 %v4078
      %v4197 = vpop.f32.mrb[0].mxu0
      %v4198 = vadd.f32 0.0, %v4197
      %v4199 = vpop.f32.mrb[0].mxu0
      %v4200 = vpop.f32.mrb[0].mxu0
      %v4201 = vadd.f32 0.0, %v4200
      %v4202 = vpop.f32.mrb[0].mxu0
      %4203 = vmatprep.mubr.bf16.mxu0 0
      %4204 = vmatmul.mubr.bf16.gmra.mrb[0].mxu0 %v4081
      %v4205 = vpop.f32.mrb[0].mxu0
      %v4206 = vadd.f32 0.0, %v4205
      %v4207 = vpop.f32.mrb[0].mxu0
      %v4208 = vpop.f32.mrb[0].mxu0
      %v4209 = vadd.f32 0.0, %v4208
      %v4210 = vpop.f32.mrb[0].mxu0
      %4211 = vmatprep.mubr.bf16.mxu0 0
      %4212 = vmatmul.mubr.bf16.gmra.mrb[0].mxu0 %v4084
      %v4213 = vpop.f32.mrb[0].mxu0
      %v4214 = vadd.f32 0.0, %v4213
      %v4215 = vpop.f32.mrb[0].mxu0
      %v4216 = vpop.f32.mrb[0].mxu0
      %v4217 = vadd.f32 0.0, %v4216
      %v4218 = vpop.f32.mrb[0].mxu0
      %4219 = vmatprep.mubr.bf16.mxu0 0
      %4220 = vmatmul.mubr.bf16.gmra.mrb[0].mxu0 %v4087
      %v4221 = vpop.f32.mrb[0].mxu0
      %v4222 = vadd.f32 0.0, %v4221
      %v4223 = vpop.f32.mrb[0].mxu0
      %v4224 = vpop.f32.mrb[0].mxu0
      %v4225 = vadd.f32 0.0, %v4224
      %v4226 = vpop.f32.mrb[0].mxu0
      %4227 = vmatprep.mubr.bf16.mxu0 0
      %4228 = vmatmul.mubr.bf16.gmra.mrb[0].mxu0 %v4090
      %v4229 = vpop.f32.mrb[0].mxu0
      %v4230 = vadd.f32 0.0, %v4229
      %v4231 = vpop.f32.mrb[0].mxu0
      %v4232 = vpop.f32.mrb[0].mxu0
      %v4233 = vadd.f32 0.0, %v4232
      %v4234 = vpop.f32.mrb[0].mxu0
      %4235 = vmatprep.mubr.bf16.mxu0 0
      %4236 = vmatmul.mubr.bf16.gmra.mrb[0].mxu0 %v4093
      %v4237 = vpop.f32.mrb[0].mxu0
      %v4238 = vadd.f32 0.0, %v4237
      %v4239 = vpop.f32.mrb[0].mxu0
      %v4240 = vpop.f32.mrb[0].mxu0
      %v4241 = vadd.f32 0.0, %v4240
      %v4242 = vpop.f32.mrb[0].mxu0
      %4243 = vmatprep.mubr.bf16.mxu0 0
      %4244 = vmatmul.mubr.bf16.gmra.mrb[0].mxu0 %v4096
      %v4245 = vpop.f32.mrb[0].mxu0
      %v4246 = vadd.f32 0.0, %v4245
      %v4247 = vpop.f32.mrb[0].mxu0
      %v4248 = vpop.f32.mrb[0].mxu0
      %v4249 = vadd.f32 0.0, %v4248
      %v4250 = vpop.f32.mrb[0].mxu0
      %4251 = vmatprep.mubr.bf16.mxu0 0
      %4252 = vmatmul.mubr.bf16.gmra.mrb[0].mxu0 %v4099
      %v4253 = vpop.f32.mrb[0].mxu0
      %v4254 = vadd.f32 0.0, %v4253
      %v4255 = vpop.f32.mrb[0].mxu0
      %v4256 = vpop.f32.mrb[0].mxu0
      %v4257 = vadd.f32 0.0, %v4256
      %v4258 = vpop.f32.mrb[0].mxu0
      %4259 = vmatprep.mubr.bf16.mxu0 0
      %4260 = vmatmul.mubr.bf16.gmra.mrb[0].mxu0 %v4102
      %v4261 = vpop.f32.mrb[0].mxu0
      %v4262 = vadd.f32 0.0, %v4261
      %v4263 = vpop.f32.mrb[0].mxu0
      %v4264 = vpop.f32.mrb[0].mxu0
      %v4265 = vadd.f32 0.0, %v4264
      %v4266 = vpop.f32.mrb[0].mxu0
      %4267 = vdwg.mxu0
      %v4268 = vadd.f32 %v3590, %v4142
      %v4269 = vadd.f32 %v3591, %v4145
      %v4270 = vadd.f32 %v3592, %v4150
      %v4271 = vadd.f32 %v3593, %v4153
      %v4272 = vadd.f32 %v3594, %v4158
      %v4273 = vadd.f32 %v3595, %v4161
      %v4274 = vadd.f32 %v3596, %v4166
      %v4275 = vadd.f32 %v3597, %v4169
      %v4276 = vadd.f32 %v3598, %v4174
      %v4277 = vadd.f32 %v3599, %v4177
      %v4278 = vadd.f32 %v3600, %v4182
      %v4279 = vadd.f32 %v3601, %v4185
      %v4280 = vadd.f32 %v3602, %v4190
      %v4281 = vadd.f32 %v3603, %v4193
      %v4282 = vadd.f32 %v3604, %v4198
      %v4283 = vadd.f32 %v3605, %v4201
      %v4284 = vadd.f32 %v3606, %v4206
      %v4285 = vadd.f32 %v3607, %v4209
      %v4286 = vadd.f32 %v3608, %v4214
      %v4287 = vadd.f32 %v3609, %v4217
      %v4288 = vadd.f32 %v3610, %v4222
      %v4289 = vadd.f32 %v3611, %v4225
      %v4290 = vadd.f32 %v3612, %v4230
      %v4291 = vadd.f32 %v3613, %v4233
      %v4292 = vadd.f32 %v3614, %v4238
      %v4293 = vadd.f32 %v3615, %v4241
      %v4294 = vadd.f32 %v3616, %v4246
      %v4295 = vadd.f32 %v3617, %v4249
      %v4296 = vadd.f32 %v3618, %v4254
      %v4297 = vadd.f32 %v3619, %v4257
      %v4298 = vadd.f32 %v3620, %v4262
      %v4299 = vadd.f32 %v3621, %v4265
      %v4316 = vrot.slane %v3248, 5
      %v4317 = vrot.slane %v4316, 4
      %v4318 = vrot.slane %v3249, 5
      %v4319 = vsel %vm1367, %v4317, %v4318
      %v4320 = vrot.slane %v4318, 4
      %v4321 = vrot.slane %v3250, 5
      %v4322 = vsel %vm1367, %v4320, %v4321
      %v4323 = vrot.slane %v3251, 5
      %v4324 = vrot.slane %v4323, 4
      %v4325 = vrot.slane %v3252, 5
      %v4326 = vsel %vm1367, %v4324, %v4325
      %v4327 = vrot.slane %v4325, 4
      %v4328 = vrot.slane %v3253, 5
      %v4329 = vsel %vm1367, %v4327, %v4328
      %v4330 = vrot.slane %v3254, 5
      %v4331 = vrot.slane %v4330, 4
      %v4332 = vrot.slane %v3255, 5
      %v4333 = vsel %vm1367, %v4331, %v4332
      %v4334 = vrot.slane %v4332, 4
      %v4335 = vrot.slane %v3256, 5
      %v4336 = vsel %vm1367, %v4334, %v4335
      %v4337 = vrot.slane %v3257, 5
      %v4338 = vrot.slane %v4337, 4
      %v4339 = vrot.slane %v3258, 5
      %v4340 = vsel %vm1367, %v4338, %v4339
      %v4341 = vrot.slane %v4339, 4
      %v4342 = vrot.slane %v3259, 5
      %v4343 = vsel %vm1367, %v4341, %v4342
      %v4344 = vrot.slane %v3260, 5
      %v4345 = vrot.slane %v4344, 4
      %v4346 = vrot.slane %v3261, 5
      %v4347 = vsel %vm1367, %v4345, %v4346
      %v4348 = vrot.slane %v4346, 4
      %v4349 = vrot.slane %v3262, 5
      %v4350 = vsel %vm1367, %v4348, %v4349
      %v4351 = vrot.slane %v3263, 5
      %v4352 = vrot.slane %v4351, 4
      %v4353 = vrot.slane %v3264, 5
      %v4354 = vsel %vm1367, %v4352, %v4353
      %v4355 = vrot.slane %v4353, 4
      %v4356 = vrot.slane %v3265, 5
      %v4357 = vsel %vm1367, %v4355, %v4356
      %v4358 = vrot.slane %v3266, 5
      %v4359 = vrot.slane %v4358, 4
      %v4360 = vrot.slane %v3267, 5
      %v4361 = vsel %vm1367, %v4359, %v4360
      %v4362 = vrot.slane %v4360, 4
      %v4363 = vrot.slane %v3268, 5
      %v4364 = vsel %vm1367, %v4362, %v4363
      %v4365 = vrot.slane %v3269, 5
      %v4366 = vrot.slane %v4365, 4
      %v4367 = vrot.slane %v3270, 5
      %v4368 = vsel %vm1367, %v4366, %v4367
      %v4369 = vrot.slane %v4367, 4
      %v4370 = vrot.slane %v3271, 5
      %v4371 = vsel %vm1367, %v4369, %v4370
      %v4372 = vrot.slane %v3272, 5
      %v4373 = vrot.slane %v4372, 4
      %v4374 = vrot.slane %v3273, 5
      %v4375 = vsel %vm1367, %v4373, %v4374
      %v4376 = vrot.slane %v4374, 4
      %v4377 = vrot.slane %v3274, 5
      %v4378 = vsel %vm1367, %v4376, %v4377
      %v4379 = vrot.slane %v3275, 5
      %v4380 = vrot.slane %v4379, 4
      %v4381 = vrot.slane %v3276, 5
      %v4382 = vsel %vm1367, %v4380, %v4381
      %v4383 = vrot.slane %v4381, 4
      %v4384 = vrot.slane %v3277, 5
      %v4385 = vsel %vm1367, %v4383, %v4384
      %v4386 = vrot.slane %v3278, 5
      %v4387 = vrot.slane %v4386, 4
      %v4388 = vrot.slane %v3279, 5
      %v4389 = vsel %vm1367, %v4387, %v4388
      %v4390 = vrot.slane %v4388, 4
      %v4391 = vrot.slane %v3280, 5
      %v4392 = vsel %vm1367, %v4390, %v4391
      %v4393 = vrot.slane %v3281, 5
      %v4394 = vrot.slane %v4393, 4
      %v4395 = vrot.slane %v3282, 5
      %v4396 = vsel %vm1367, %v4394, %v4395
      %v4397 = vrot.slane %v4395, 4
      %v4398 = vrot.slane %v3283, 5
      %v4399 = vsel %vm1367, %v4397, %v4398
      %v4400 = vrot.slane %v3284, 5
      %v4401 = vrot.slane %v4400, 4
      %v4402 = vrot.slane %v3285, 5
      %v4403 = vsel %vm1367, %v4401, %v4402
      %v4404 = vrot.slane %v4402, 4
      %v4405 = vrot.slane %v3286, 5
      %v4406 = vsel %vm1367, %v4404, %v4405
      %v4407 = vrot.slane %v3287, 5
      %v4408 = vrot.slane %v4407, 4
      %v4409 = vrot.slane %v3288, 5
      %v4410 = vsel %vm1367, %v4408, %v4409
      %v4411 = vrot.slane %v4409, 4
      %v4412 = vrot.slane %v3289, 5
      %v4413 = vsel %vm1367, %v4411, %v4412
      %v4414 = vrot.slane %v3290, 5
      %v4415 = vrot.slane %v4414, 4
      %v4416 = vrot.slane %v3291, 5
      %v4417 = vsel %vm1367, %v4415, %v4416
      %v4418 = vrot.slane %v4416, 4
      %v4419 = vrot.slane %v3292, 5
      %v4420 = vsel %vm1367, %v4418, %v4419
      %v4421 = vrot.slane %v3293, 5
      %v4422 = vrot.slane %v4421, 4
      %v4423 = vrot.slane %v3294, 5
      %v4424 = vsel %vm1367, %v4422, %v4423
      %v4425 = vrot.slane %v4423, 4
      %v4426 = vrot.slane %v3295, 5
      %v4427 = vsel %vm1367, %v4425, %v4426
      %s4428 = scalar_lea.vmem %s3, 32
      %v4429 = vld [vmem:[%s4428] sm:$0xf]
      %v4430 = vunpack.c.l.b16 %v4319
      %v4431 = vunpack.c.l.b16 %v4322
      %v4432 = vunpack.c.l.b16 %v4326
      %v4433 = vunpack.c.l.b16 %v4329
      %v4434 = vunpack.c.l.b16 %v4333
      %v4435 = vunpack.c.l.b16 %v4336
      %v4436 = vunpack.c.l.b16 %v4340
      %v4437 = vunpack.c.l.b16 %v4343
      %v4438 = vunpack.c.l.b16 %v4347
      %v4439 = vunpack.c.l.b16 %v4350
      %v4440 = vunpack.c.l.b16 %v4354
      %v4441 = vunpack.c.l.b16 %v4357
      %v4442 = vunpack.c.l.b16 %v4361
      %v4443 = vunpack.c.l.b16 %v4364
      %v4444 = vunpack.c.l.b16 %v4368
      %v4445 = vunpack.c.l.b16 %v4371
      %v4446 = vunpack.c.l.b16 %v4375
      %v4447 = vunpack.c.l.b16 %v4378
      %v4448 = vunpack.c.l.b16 %v4382
      %v4449 = vunpack.c.l.b16 %v4385
      %v4450 = vunpack.c.l.b16 %v4389
      %v4451 = vunpack.c.l.b16 %v4392
      %v4452 = vunpack.c.l.b16 %v4396
      %v4453 = vunpack.c.l.b16 %v4399
      %v4454 = vunpack.c.l.b16 %v4403
      %v4455 = vunpack.c.l.b16 %v4406
      %v4456 = vunpack.c.l.b16 %v4410
      %v4457 = vunpack.c.l.b16 %v4413
      %v4458 = vunpack.c.l.b16 %v4417
      %v4459 = vunpack.c.l.b16 %v4420
      %v4460 = vunpack.c.l.b16 %v4424
      %v4461 = vunpack.c.l.b16 %v4427
      %v4462 = vpack.c.b16 %v4431, %v4430
      %v4463 = vpack.c.b16 %v4433, %v4432
      %v4464 = vpack.c.b16 %v4435, %v4434
      %v4465 = vpack.c.b16 %v4437, %v4436
      %v4466 = vpack.c.b16 %v4439, %v4438
      %v4467 = vpack.c.b16 %v4441, %v4440
      %v4468 = vpack.c.b16 %v4443, %v4442
      %v4469 = vpack.c.b16 %v4445, %v4444
      %v4470 = vpack.c.b16 %v4447, %v4446
      %v4471 = vpack.c.b16 %v4449, %v4448
      %v4472 = vpack.c.b16 %v4451, %v4450
      %v4473 = vpack.c.b16 %v4453, %v4452
      %v4474 = vpack.c.b16 %v4455, %v4454
      %v4475 = vpack.c.b16 %v4457, %v4456
      %v4476 = vpack.c.b16 %v4459, %v4458
      %v4477 = vpack.c.b16 %v4461, %v4460
      %v4479 = vsel %vm843, %v4462, 0
      %v4482 = vsel %vm843, %v4463, 0
      %v4485 = vsel %vm843, %v4464, 0
      %v4488 = vsel %vm843, %v4465, 0
      %v4491 = vsel %vm843, %v4466, 0
      %v4494 = vsel %vm843, %v4467, 0
      %v4497 = vsel %vm843, %v4468, 0
      %v4500 = vsel %vm843, %v4469, 0
      %v4503 = vsel %vm843, %v4470, 0
      %v4506 = vsel %vm843, %v4471, 0
      %v4509 = vsel %vm843, %v4472, 0
      %v4512 = vsel %vm843, %v4473, 0
      %v4515 = vsel %vm843, %v4474, 0
      %v4518 = vsel %vm843, %v4475, 0
      %v4521 = vsel %vm843, %v4476, 0
      %v4524 = vsel %vm843, %v4477, 0
      %v4527 = vsel %vm892, %v4429, 0
      %4529 = vmatprep.subr.bf16.mxu0 0
      %4530 = vmatpush1.bf16.msra.mxu0 %v4527
      %4531 = vmatprep.subr.bf16.mxu0 0
      %4532 = vmatpush1.bf16.msra.mxu0 0
      %4533 = vmatprep.subr.bf16.mxu0 0
      %4534 = vmatpush1.bf16.msra.mxu0 0
      %4535 = vmatprep.subr.bf16.mxu0 0
      %4536 = vmatpush1.bf16.msra.mxu0 0
      %4537 = vmatprep.subr.bf16.mxu0 0
      %4538 = vmatpush1.bf16.msra.mxu0 0
      %4539 = vmatprep.subr.bf16.mxu0 0
      %4540 = vmatpush1.bf16.msra.mxu0 0
      %4541 = vmatprep.subr.bf16.mxu0 0
      %4542 = vmatpush1.bf16.msra.mxu0 0
      %4543 = vmatprep.subr.bf16.mxu0 0
      %4544 = vmatpush1.bf16.msra.mxu0 0
      %4545 = vmatprep.subr.bf16.mxu0 0
      %4546 = vmatpush1.bf16.msra.mxu0 0
      %4547 = vmatprep.subr.bf16.mxu0 0
      %4548 = vmatpush1.bf16.msra.mxu0 0
      %4549 = vmatprep.subr.bf16.mxu0 0
      %4550 = vmatpush1.bf16.msra.mxu0 0
      %4551 = vmatprep.subr.bf16.mxu0 0
      %4552 = vmatpush1.bf16.msra.mxu0 0
      %4553 = vmatprep.subr.bf16.mxu0 0
      %4554 = vmatpush1.bf16.msra.mxu0 0
      %4555 = vmatprep.subr.bf16.mxu0 0
      %4556 = vmatpush1.bf16.msra.mxu0 0
      %4557 = vmatprep.subr.bf16.mxu0 0
      %4558 = vmatpush1.bf16.msra.mxu0 0
      %4559 = vmatprep.subr.bf16.mxu0 0
      %4560 = vmatpush1.bf16.msra.mxu0 0
      %4561 = vmatprep.mubr.bf16.mxu0 0
      %4562 = vmatmul.mubr.bf16.gmra.mrb[0].mxu0 %v4479
      %v4563 = vpop.f32.mrb[0].mxu0
      %v4564 = vadd.f32 0.0, %v4563
      %v4565 = vpop.f32.mrb[0].mxu0
      %v4566 = vpop.f32.mrb[0].mxu0
      %v4567 = vadd.f32 0.0, %v4566
      %v4568 = vpop.f32.mrb[0].mxu0
      %4569 = vmatprep.mubr.bf16.mxu0 0
      %4570 = vmatmul.mubr.bf16.gmra.mrb[0].mxu0 %v4482
      %v4571 = vpop.f32.mrb[0].mxu0
      %v4572 = vadd.f32 0.0, %v4571
      %v4573 = vpop.f32.mrb[0].mxu0
      %v4574 = vpop.f32.mrb[0].mxu0
      %v4575 = vadd.f32 0.0, %v4574
      %v4576 = vpop.f32.mrb[0].mxu0
      %4577 = vmatprep.mubr.bf16.mxu0 0
      %4578 = vmatmul.mubr.bf16.gmra.mrb[0].mxu0 %v4485
      %v4579 = vpop.f32.mrb[0].mxu0
      %v4580 = vadd.f32 0.0, %v4579
      %v4581 = vpop.f32.mrb[0].mxu0
      %v4582 = vpop.f32.mrb[0].mxu0
      %v4583 = vadd.f32 0.0, %v4582
      %v4584 = vpop.f32.mrb[0].mxu0
      %4585 = vmatprep.mubr.bf16.mxu0 0
      %4586 = vmatmul.mubr.bf16.gmra.mrb[0].mxu0 %v4488
      %v4587 = vpop.f32.mrb[0].mxu0
      %v4588 = vadd.f32 0.0, %v4587
      %v4589 = vpop.f32.mrb[0].mxu0
      %v4590 = vpop.f32.mrb[0].mxu0
      %v4591 = vadd.f32 0.0, %v4590
      %v4592 = vpop.f32.mrb[0].mxu0
      %4593 = vmatprep.mubr.bf16.mxu0 0
      %4594 = vmatmul.mubr.bf16.gmra.mrb[0].mxu0 %v4491
      %v4595 = vpop.f32.mrb[0].mxu0
      %v4596 = vadd.f32 0.0, %v4595
      %v4597 = vpop.f32.mrb[0].mxu0
      %v4598 = vpop.f32.mrb[0].mxu0
      %v4599 = vadd.f32 0.0, %v4598
      %v4600 = vpop.f32.mrb[0].mxu0
      %4601 = vmatprep.mubr.bf16.mxu0 0
      %4602 = vmatmul.mubr.bf16.gmra.mrb[0].mxu0 %v4494
      %v4603 = vpop.f32.mrb[0].mxu0
      %v4604 = vadd.f32 0.0, %v4603
      %v4605 = vpop.f32.mrb[0].mxu0
      %v4606 = vpop.f32.mrb[0].mxu0
      %v4607 = vadd.f32 0.0, %v4606
      %v4608 = vpop.f32.mrb[0].mxu0
      %4609 = vmatprep.mubr.bf16.mxu0 0
      %4610 = vmatmul.mubr.bf16.gmra.mrb[0].mxu0 %v4497
      %v4611 = vpop.f32.mrb[0].mxu0
      %v4612 = vadd.f32 0.0, %v4611
      %v4613 = vpop.f32.mrb[0].mxu0
      %v4614 = vpop.f32.mrb[0].mxu0
      %v4615 = vadd.f32 0.0, %v4614
      %v4616 = vpop.f32.mrb[0].mxu0
      %4617 = vmatprep.mubr.bf16.mxu0 0
      %4618 = vmatmul.mubr.bf16.gmra.mrb[0].mxu0 %v4500
      %v4619 = vpop.f32.mrb[0].mxu0
      %v4620 = vadd.f32 0.0, %v4619
      %v4621 = vpop.f32.mrb[0].mxu0
      %v4622 = vpop.f32.mrb[0].mxu0
      %v4623 = vadd.f32 0.0, %v4622
      %v4624 = vpop.f32.mrb[0].mxu0
      %4625 = vmatprep.mubr.bf16.mxu0 0
      %4626 = vmatmul.mubr.bf16.gmra.mrb[0].mxu0 %v4503
      %v4627 = vpop.f32.mrb[0].mxu0
      %v4628 = vadd.f32 0.0, %v4627
      %v4629 = vpop.f32.mrb[0].mxu0
      %v4630 = vpop.f32.mrb[0].mxu0
      %v4631 = vadd.f32 0.0, %v4630
      %v4632 = vpop.f32.mrb[0].mxu0
      %4633 = vmatprep.mubr.bf16.mxu0 0
      %4634 = vmatmul.mubr.bf16.gmra.mrb[0].mxu0 %v4506
      %v4635 = vpop.f32.mrb[0].mxu0
      %v4636 = vadd.f32 0.0, %v4635
      %v4637 = vpop.f32.mrb[0].mxu0
      %v4638 = vpop.f32.mrb[0].mxu0
      %v4639 = vadd.f32 0.0, %v4638
      %v4640 = vpop.f32.mrb[0].mxu0
      %4641 = vmatprep.mubr.bf16.mxu0 0
      %4642 = vmatmul.mubr.bf16.gmra.mrb[0].mxu0 %v4509
      %v4643 = vpop.f32.mrb[0].mxu0
      %v4644 = vadd.f32 0.0, %v4643
      %v4645 = vpop.f32.mrb[0].mxu0
      %v4646 = vpop.f32.mrb[0].mxu0
      %v4647 = vadd.f32 0.0, %v4646
      %v4648 = vpop.f32.mrb[0].mxu0
      %4649 = vmatprep.mubr.bf16.mxu0 0
      %4650 = vmatmul.mubr.bf16.gmra.mrb[0].mxu0 %v4512
      %v4651 = vpop.f32.mrb[0].mxu0
      %v4652 = vadd.f32 0.0, %v4651
      %v4653 = vpop.f32.mrb[0].mxu0
      %v4654 = vpop.f32.mrb[0].mxu0
      %v4655 = vadd.f32 0.0, %v4654
      %v4656 = vpop.f32.mrb[0].mxu0
      %4657 = vmatprep.mubr.bf16.mxu0 0
      %4658 = vmatmul.mubr.bf16.gmra.mrb[0].mxu0 %v4515
      %v4659 = vpop.f32.mrb[0].mxu0
      %v4660 = vadd.f32 0.0, %v4659
      %v4661 = vpop.f32.mrb[0].mxu0
      %v4662 = vpop.f32.mrb[0].mxu0
      %v4663 = vadd.f32 0.0, %v4662
      %v4664 = vpop.f32.mrb[0].mxu0
      %4665 = vmatprep.mubr.bf16.mxu0 0
      %4666 = vmatmul.mubr.bf16.gmra.mrb[0].mxu0 %v4518
      %v4667 = vpop.f32.mrb[0].mxu0
      %v4668 = vadd.f32 0.0, %v4667
      %v4669 = vpop.f32.mrb[0].mxu0
      %v4670 = vpop.f32.mrb[0].mxu0
      %v4671 = vadd.f32 0.0, %v4670
      %v4672 = vpop.f32.mrb[0].mxu0
      %4673 = vmatprep.mubr.bf16.mxu0 0
      %4674 = vmatmul.mubr.bf16.gmra.mrb[0].mxu0 %v4521
      %v4675 = vpop.f32.mrb[0].mxu0
      %v4676 = vadd.f32 0.0, %v4675
      %v4677 = vpop.f32.mrb[0].mxu0
      %v4678 = vpop.f32.mrb[0].mxu0
      %v4679 = vadd.f32 0.0, %v4678
      %v4680 = vpop.f32.mrb[0].mxu0
      %4681 = vmatprep.mubr.bf16.mxu0 0
      %4682 = vmatmul.mubr.bf16.gmra.mrb[0].mxu0 %v4524
      %v4683 = vpop.f32.mrb[0].mxu0
      %v4684 = vadd.f32 0.0, %v4683
      %v4685 = vpop.f32.mrb[0].mxu0
      %v4686 = vpop.f32.mrb[0].mxu0
      %v4687 = vadd.f32 0.0, %v4686
      %v4688 = vpop.f32.mrb[0].mxu0
      %4689 = vdwg.mxu0
      %v4690 = vadd.f32 %v4268, %v4564
      %v4691 = vadd.f32 %v4269, %v4567
      %v4692 = vadd.f32 %v4270, %v4572
      %v4693 = vadd.f32 %v4271, %v4575
      %v4694 = vadd.f32 %v4272, %v4580
      %v4695 = vadd.f32 %v4273, %v4583
      %v4696 = vadd.f32 %v4274, %v4588
      %v4697 = vadd.f32 %v4275, %v4591
      %v4698 = vadd.f32 %v4276, %v4596
      %v4699 = vadd.f32 %v4277, %v4599
      %v4700 = vadd.f32 %v4278, %v4604
      %v4701 = vadd.f32 %v4279, %v4607
      %v4702 = vadd.f32 %v4280, %v4612
      %v4703 = vadd.f32 %v4281, %v4615
      %v4704 = vadd.f32 %v4282, %v4620
      %v4705 = vadd.f32 %v4283, %v4623
      %v4706 = vadd.f32 %v4284, %v4628
      %v4707 = vadd.f32 %v4285, %v4631
      %v4708 = vadd.f32 %v4286, %v4636
      %v4709 = vadd.f32 %v4287, %v4639
      %v4710 = vadd.f32 %v4288, %v4644
      %v4711 = vadd.f32 %v4289, %v4647
      %v4712 = vadd.f32 %v4290, %v4652
      %v4713 = vadd.f32 %v4291, %v4655
      %v4714 = vadd.f32 %v4292, %v4660
      %v4715 = vadd.f32 %v4293, %v4663
      %v4716 = vadd.f32 %v4294, %v4668
      %v4717 = vadd.f32 %v4295, %v4671
      %v4718 = vadd.f32 %v4296, %v4676
      %v4719 = vadd.f32 %v4297, %v4679
      %v4720 = vadd.f32 %v4298, %v4684
      %v4721 = vadd.f32 %v4299, %v4687
      %4722 = vst [vmem:[%s347] sm:$0xff] %v4690
      %4723 = vst [vmem:[%s347 + $0x8] sm:$0xff] %v4691
      %4724 = vst [vmem:[%s347 + $0x10] sm:$0xff] %v4692
      %4725 = vst [vmem:[%s347 + $0x18] sm:$0xff] %v4693
      %4726 = vst [vmem:[%s347 + $0x20] sm:$0xff] %v4694
      %4727 = vst [vmem:[%s347 + $0x28] sm:$0xff] %v4695
      %4728 = vst [vmem:[%s347 + $0x30] sm:$0xff] %v4696
      %4729 = vst [vmem:[%s347 + $0x38] sm:$0xff] %v4697
      %4730 = vst [vmem:[%s347 + $0x40] sm:$0xff] %v4698
      %4731 = vst [vmem:[%s347 + $0x48] sm:$0xff] %v4699
      %4732 = vst [vmem:[%s347 + $0x50] sm:$0xff] %v4700
      %4733 = vst [vmem:[%s347 + $0x58] sm:$0xff] %v4701
      %4734 = vst [vmem:[%s347 + $0x60] sm:$0xff] %v4702
      %4735 = vst [vmem:[%s347 + $0x68] sm:$0xff] %v4703
      %4736 = vst [vmem:[%s347 + $0x70] sm:$0xff] %v4704
      %4737 = vst [vmem:[%s347 + $0x78] sm:$0xff] %v4705
      %4738 = vst [vmem:[%s347 + $0x80] sm:$0xff] %v4706
      %4739 = vst [vmem:[%s347 + $0x88] sm:$0xff] %v4707
      %4740 = vst [vmem:[%s347 + $0x90] sm:$0xff] %v4708
      %4741 = vst [vmem:[%s347 + $0x98] sm:$0xff] %v4709
      %4742 = vst [vmem:[%s347 + $0xa0] sm:$0xff] %v4710
      %4743 = vst [vmem:[%s347 + $0xa8] sm:$0xff] %v4711
      %4744 = vst [vmem:[%s347 + $0xb0] sm:$0xff] %v4712
      %4745 = vst [vmem:[%s347 + $0xb8] sm:$0xff] %v4713
      %4746 = vst [vmem:[%s347 + $0xc0] sm:$0xff] %v4714
      %4747 = vst [vmem:[%s347 + $0xc8] sm:$0xff] %v4715
      %4748 = vst [vmem:[%s347 + $0xd0] sm:$0xff] %v4716
      %4749 = vst [vmem:[%s347 + $0xd8] sm:$0xff] %v4717
      %4750 = vst [vmem:[%s347 + $0xe0] sm:$0xff] %v4718
      %4751 = vst [vmem:[%s347 + $0xe8] sm:$0xff] %v4719
      %4752 = vst [vmem:[%s347 + $0xf0] sm:$0xff] %v4720
      %4753 = vst [vmem:[%s347 + $0xf8] sm:$0xff] %v4721
      %v4754 = vadd.f32 %v4690, %v4691
      %v4755 = vadd.f32 %v4754, %v4692
      %v4756 = vadd.f32 %v4755, %v4693
      %v4757 = vadd.f32 %v4756, %v4694
      %v4758 = vadd.f32 %v4757, %v4695
      %v4759 = vadd.f32 %v4758, %v4696
      %v4760 = vadd.f32 %v4759, %v4697
      %v4761 = vadd.f32 %v4760, %v4698
      %v4762 = vadd.f32 %v4761, %v4699
      %v4763 = vadd.f32 %v4762, %v4700
      %v4764 = vadd.f32 %v4763, %v4701
      %v4765 = vadd.f32 %v4764, %v4702
      %v4766 = vadd.f32 %v4765, %v4703
      %v4767 = vadd.f32 %v4766, %v4704
      %v4768 = vadd.f32 %v4767, %v4705
      %v4769 = vadd.f32 %v4768, %v4706
      %v4770 = vadd.f32 %v4769, %v4707
      %v4771 = vadd.f32 %v4770, %v4708
      %v4772 = vadd.f32 %v4771, %v4709
      %v4773 = vadd.f32 %v4772, %v4710
      %v4774 = vadd.f32 %v4773, %v4711
      %v4775 = vadd.f32 %v4774, %v4712
      %v4776 = vadd.f32 %v4775, %v4713
      %v4777 = vadd.f32 %v4776, %v4714
      %v4778 = vadd.f32 %v4777, %v4715
      %v4779 = vadd.f32 %v4778, %v4716
      %v4780 = vadd.f32 %v4779, %v4717
      %v4781 = vadd.f32 %v4780, %v4718
      %v4782 = vadd.f32 %v4781, %v4719
      %v4783 = vadd.f32 %v4782, %v4720
      %v4784 = vadd.f32 %v4783, %v4721
      %v4785 = vrot.slane %v4784, 4
      %v4786 = vadd.f32 %v4784, %v4785
      %v4787 = vrot.slane %v4786, 2
      %v4788 = vadd.f32 %v4786, %v4787
      %v4789 = vrot.slane %v4788, 1
      %v4790 = vadd.f32 %v4788, %v4789
      %v4791 = vmul.f32 %v4690, %v4690
      %v4792 = vmul.f32 %v4691, %v4691
      %v4793 = vmul.f32 %v4692, %v4692
      %v4794 = vmul.f32 %v4693, %v4693
      %v4795 = vmul.f32 %v4694, %v4694
      %v4796 = vmul.f32 %v4695, %v4695
      %v4797 = vmul.f32 %v4696, %v4696
      %v4798 = vmul.f32 %v4697, %v4697
      %v4799 = vmul.f32 %v4698, %v4698
      %v4800 = vmul.f32 %v4699, %v4699
      %v4801 = vmul.f32 %v4700, %v4700
      %v4802 = vmul.f32 %v4701, %v4701
      %v4803 = vmul.f32 %v4702, %v4702
      %v4804 = vmul.f32 %v4703, %v4703
      %v4805 = vmul.f32 %v4704, %v4704
      %v4806 = vmul.f32 %v4705, %v4705
      %v4807 = vmul.f32 %v4706, %v4706
      %v4808 = vmul.f32 %v4707, %v4707
      %v4809 = vmul.f32 %v4708, %v4708
      %v4810 = vmul.f32 %v4709, %v4709
      %v4811 = vmul.f32 %v4710, %v4710
      %v4812 = vmul.f32 %v4711, %v4711
      %v4813 = vmul.f32 %v4712, %v4712
      %v4814 = vmul.f32 %v4713, %v4713
      %v4815 = vmul.f32 %v4714, %v4714
      %v4816 = vmul.f32 %v4715, %v4715
      %v4817 = vmul.f32 %v4716, %v4716
      %v4818 = vmul.f32 %v4717, %v4717
      %v4819 = vmul.f32 %v4718, %v4718
      %v4820 = vmul.f32 %v4719, %v4719
      %v4821 = vmul.f32 %v4720, %v4720
      %v4822 = vmul.f32 %v4721, %v4721
      %v4823 = vadd.f32 %v4791, %v4792
      %v4824 = vadd.f32 %v4823, %v4793
      %v4825 = vadd.f32 %v4824, %v4794
      %v4826 = vadd.f32 %v4825, %v4795
      %v4827 = vadd.f32 %v4826, %v4796
      %v4828 = vadd.f32 %v4827, %v4797
      %v4829 = vadd.f32 %v4828, %v4798
      %v4830 = vadd.f32 %v4829, %v4799
      %v4831 = vadd.f32 %v4830, %v4800
      %v4832 = vadd.f32 %v4831, %v4801
      %v4833 = vadd.f32 %v4832, %v4802
      %v4834 = vadd.f32 %v4833, %v4803
      %v4835 = vadd.f32 %v4834, %v4804
      %v4836 = vadd.f32 %v4835, %v4805
      %v4837 = vadd.f32 %v4836, %v4806
      %v4838 = vadd.f32 %v4837, %v4807
      %v4839 = vadd.f32 %v4838, %v4808
      %v4840 = vadd.f32 %v4839, %v4809
      %v4841 = vadd.f32 %v4840, %v4810
      %v4842 = vadd.f32 %v4841, %v4811
      %v4843 = vadd.f32 %v4842, %v4812
      %v4844 = vadd.f32 %v4843, %v4813
      %v4845 = vadd.f32 %v4844, %v4814
      %v4846 = vadd.f32 %v4845, %v4815
      %v4847 = vadd.f32 %v4846, %v4816
      %v4848 = vadd.f32 %v4847, %v4817
      %v4849 = vadd.f32 %v4848, %v4818
      %v4850 = vadd.f32 %v4849, %v4819
      %v4851 = vadd.f32 %v4850, %v4820
      %v4852 = vadd.f32 %v4851, %v4821
      %v4853 = vadd.f32 %v4852, %v4822
      %v4854 = vrot.slane %v4853, 4
      %v4855 = vadd.f32 %v4853, %v4854
      %v4856 = vrot.slane %v4855, 2
      %v4857 = vadd.f32 %v4855, %v4856
      %v4858 = vrot.slane %v4857, 1
      %v4859 = vadd.f32 %v4857, %v4858
      %vm4860 = vcmask 1040384
      %v4861 = vsel %vm4860, %v4790, %v4859
      %4862 = vst [vmem:[%s354] sm:$0x3] %v4861
      %s4863 = sadd.s32 %s21, %s22
      %s4864 = smul.u32 32, %s4863
      %p4865 = scmp.lt.s32.totalorder %s4864, 63
      %s4866 = scalar_select %p4865, %s4864, 63
      %s4867 = smul.addr %s4866, 8
      %s4868 = scalar_lea.vmem %s4, %s4867
      %s4869 = sadd.s32 %s21, %s22
      %p4870 = scmp.lt.s32.totalorder %s4869, 1
      %s4871 = scalar_select %p4870, %s4869, 1
      %s4872 = smul.addr %s4871, 2
      %s4873 = scalar_lea.vmem %s5, %s4872
      // Predicated region
      $region37: #{conv_block.6} parent=35 // pred_check
        %p4874 = pneg %p154
      $region38: #{conv_block.6} parent=35 // pred_check_branch
        %4876 = sbr.rel (%p4874) target = $region40
      $region39: #{conv_block.6} parent=35 // pred_region
        %s4877 = sadd.s32 %s21, %s22
        %s4878 = smul.u32 32, %s4877
      $region40: #{conv_block.6} parent=35 // pred_fallthru
        _
      // Predicated region
      $region41: #{conv_block.6} parent=35 // pred_check
        %p4879 = pneg %p182
      $region42: #{conv_block.6} parent=35 // pred_check_branch
        %4881 = sbr.rel (%p4879) target = $region44
      $region43: #{conv_block.6} parent=35 // pred_region
        %s4882 = sadd.s32 %s21, %s22
      $region44: #{conv_block.6} parent=35 // pred_fallthru
        _
    $region36: #{conv_block.6} parent=5 // pred_fallthru
      _
    %p4883 = scmp.le.s32.totalorder 2, %s12
    // Predicated region
    $region45: #{conv_block.6} parent=5 // pred_check
      %p4884 = pneg %p4883
    $region46: #{conv_block.6} parent=5 // pred_check_branch
      %4886 = sbr.rel (%p4884) target = $region48
    $region47: #{conv_block.6} parent=5 // pred_region
      %s4887 = ssub.s32 %s12, 2
      // Predicated region
      $region49: #{conv_block.6} parent=47 // pred_check
        %p4888 = pneg %p160
      $region50: #{conv_block.6} parent=47 // pred_check_branch
        %4890 = sbr.rel (%p4888) target = $region52
      $region51: #{conv_block.6} parent=47 // pred_region
        %s4891 = sadd.s32 %s23, %s24
        %s4892 = smul.u32 32, %s4891
        %p4893 = scmp.lt.s32.totalorder %s4892, 63
        %s4894 = scalar_select %p4893, %s4892, 63
        %s4895 = smul.addr %s4894, 8
        %s4896 = scalar_lea.vmem %s4, %s4895
      $region52: #{conv_block.6} parent=47 // pred_fallthru
        _
      // Predicated region
      $region53: #{conv_block.6} parent=47 // pred_check
        %p4897 = pneg %p188
      $region54: #{conv_block.6} parent=47 // pred_check_branch
        %4899 = sbr.rel (%p4897) target = $region56
      $region55: #{conv_block.6} parent=47 // pred_region
        %s4900 = sadd.s32 %s23, %s24
        %p4901 = scmp.lt.s32.totalorder %s4900, 1
        %s4902 = scalar_select %p4901, %s4900, 1
        %s4903 = smul.addr %s4902, 2
        %s4904 = scalar_lea.vmem %s5, %s4903
      $region56: #{conv_block.6} parent=47 // pred_fallthru
        _
    $region48: #{conv_block.6} parent=5 // pred_fallthru
      _
  $region6: #{conv_block.6} parent=0 // loop_footer
    %s16 = sadd.s32 1, %s12
  $region7: #{conv_block.6} parent=0 // loop_footer_branch
    %11 = sbr.rel target = $region3
  $region8: #{conv_block.6} parent=0 // loop_exit
    _

</llo_original>
